<compile_context>
chip_gen: v5e
topology: v5e:2x2
jax: 0.10.0
libtpu: 0.0.40
codegen_flags: <defaults>
</compile_context>

<pallas_src>
import numpy as np
import jax
import jax.numpy as jnp
from jax.experimental import pallas as pl
from jax.experimental.pallas import tpu as pltpu

VMEM_SPEC = pl.BlockSpec(memory_space=pltpu.MemorySpace.VMEM)

BN_EPS = 1e-5
N = 2                 # batch
H0 = W0 = 28          # MNIST spatial
K = 3                 # conv kernel size
C1, C2 = 16, 64       # conv out channels
S1 = H0 - K + 1       # 26  conv1 output spatial
P1 = S1 // 2          # 13  after pool1
S2 = P1 - K + 1       # 11  conv2 output spatial
P2 = S2 // 2          # 5   after pool2
FC_IN = C2 * P2 * P2  # 1600
FC_HID = 256
FC_OUT = 10

# lane-padded even/odd-half layouts of the conv outputs
HALF1 = 256           # layer1 half width (valid 13*16 = 208, zero-padded to 2*128)
W1PAD = 2 * HALF1     # 512
HALF2 = 384           # layer2 half width (even half 6*64 = 384 exactly, odd 5*64=320 padded)
W2PAD = 2 * HALF2     # 768

CNT1 = float(N * S1 * S1)   # BN1 element count per channel
CNT2 = float(N * S2 * S2)   # BN2 element count per channel


def _col1(x, c=0):
    """conv1 output column for spatial x, channel c (even/odd halves, padded)."""
    return (x % 2) * HALF1 + (x // 2) * C1 + c


def _col2(x, c=0):
    """conv2 output column for spatial x, channel c (even/odd halves, padded)."""
    if x % 2 == 0:
        return (x // 2) * C2 + c
    return HALF2 + ((x - 1) // 2) * C2 + c


# ------------------------------ the fused kernel ------------------------------

def fused_forward_kernel(x_ref, wc1_ref, wc2_ref, fw1_ref,
                         sel1_ref, sel1t_ref, sel2_ref, sel2t_ref,
                         hs1_ref, hs2_ref,
                         g1_ref, be1_ref, g2_ref, be2_ref,
                         fb1_ref, fw2_ref, fb2_ref,
                         out_ref,
                         y1_scr, y2_scr, h_scr):
    f32 = jnp.float32
    bf16 = jnp.bfloat16

    # ---------------- conv1: K accumulating row-block GEMMs per image ----------
    rs1 = jnp.zeros((1, W1PAD), f32)
    rq1 = jnp.zeros((1, W1PAD), f32)
    for n in range(N):
        img = x_ref[n]                                                 # (28, 28)
        y = jnp.dot(img[0:S1, :].astype(bf16), wc1_ref[0],
                    preferred_element_type=f32)                        # (26, 512)
        for i in range(1, K):
            y = y + jnp.dot(img[i:i + S1, :].astype(bf16), wc1_ref[i],
                            preferred_element_type=f32)
        y1_scr[n] = y                                                  # park in VMEM
        rs1 = rs1 + jnp.sum(y, axis=0, keepdims=True)
        rq1 = rq1 + jnp.sum(y * y, axis=0, keepdims=True)

    # -------- BN1 (training-mode batch stats) via selector matmuls on MXU -------
    ch_s = jnp.dot(rs1.astype(bf16), sel1_ref[...], preferred_element_type=f32)  # (1,16)
    ch_q = jnp.dot(rq1.astype(bf16), sel1_ref[...], preferred_element_type=f32)
    mean = ch_s * (1.0 / CNT1)
    var = ch_q * (1.0 / CNT1) - mean * mean      # biased var (PyTorch forward)
    scale = g1_ref[...] * jax.lax.rsqrt(var + BN_EPS)
    shift = be1_ref[...] - mean * scale
    scale_t = jnp.dot(scale.astype(bf16), sel1t_ref[...], preferred_element_type=f32)  # (1,512)
    shift_t = jnp.dot(shift.astype(bf16), sel1t_ref[...], preferred_element_type=f32)

    hs1 = hs1_ref[...]                                                 # (26, 26)
    hs2 = hs2_ref[...]                                                 # (10, 11)

    # -------- BN1 apply + ReLU + 2x2 pool + conv2, per image --------------------
    rs2 = jnp.zeros((1, W2PAD), f32)
    rq2 = jnp.zeros((1, W2PAD), f32)
    for n in range(N):
        a = jnp.maximum(y1_scr[n] * scale_t + shift_t, 0.0)            # (26, 512)
        wp = jnp.maximum(a[:, :HALF1], a[:, HALF1:])                   # W-pool  (26, 256)
        # H-pool: row-parity permutation on the MXU, then one two-slab max
        t = jnp.dot(hs1, wp.astype(bf16), preferred_element_type=f32)  # (26, 256)
        hp = jnp.maximum(t[:P1, :], t[P1:, :])                         # (13, 256)

        y = jnp.dot(hp[0:S2, :].astype(bf16), wc2_ref[0],
                    preferred_element_type=f32)                        # (11, 768)
        for i in range(1, K):
            y = y + jnp.dot(hp[i:i + S2, :].astype(bf16), wc2_ref[i],
                            preferred_element_type=f32)
        y2_scr[n] = y
        rs2 = rs2 + jnp.sum(y, axis=0, keepdims=True)
        rq2 = rq2 + jnp.sum(y * y, axis=0, keepdims=True)

    # ---------------- BN2 ----------------
    ch_s = jnp.dot(rs2.astype(bf16), sel2_ref[...], preferred_element_type=f32)  # (1,64)
    ch_q = jnp.dot(rq2.astype(bf16), sel2_ref[...], preferred_element_type=f32)
    mean = ch_s * (1.0 / CNT2)
    var = ch_q * (1.0 / CNT2) - mean * mean
    scale = g2_ref[...] * jax.lax.rsqrt(var + BN_EPS)
    shift = be2_ref[...] - mean * scale
    scale_t = jnp.dot(scale.astype(bf16), sel2t_ref[...], preferred_element_type=f32)  # (1,768)
    shift_t = jnp.dot(shift.astype(bf16), sel2t_ref[...], preferred_element_type=f32)

    # -------- BN2 apply + ReLU + 2x2 pool + fc1 (block GEMMs), per image --------
    fb1 = fb1_ref[...]
    for n in range(N):
        a = jnp.maximum(y2_scr[n] * scale_t + shift_t, 0.0)            # (11, 768)
        wp = jnp.maximum(a[:, :HALF2], a[:, HALF2:])                   # (11, 384)
        t = jnp.dot(hs2, wp.astype(bf16), preferred_element_type=f32)  # (10, 384)
        hp = jnp.maximum(t[:P2, :], t[P2:, :])                         # (5, 384)

        # fc1 without the flatten concat: accumulate over the 5 pooled rows
        acc = jnp.dot(hp[0:1, :].astype(bf16), fw1_ref[0],
                      preferred_element_type=f32)                      # (1, 256)
        for yy in range(1, P2):
            acc = acc + jnp.dot(hp[yy:yy + 1, :].astype(bf16), fw1_ref[yy],
                                preferred_element_type=f32)
        h_scr[n:n + 1, :] = jnp.maximum(acc + fb1, 0.0)

    # ---------------- fc2: both images in one GEMM ----------------
    out_ref[...] = (jnp.dot(h_scr[...], fw2_ref[...], preferred_element_type=f32)
                    + fb2_ref[...])


# ------------------------------ weight preparation ------------------------------

def prepare_params(p):
    """One-time (host-side) weight preprocessing:
       * conv weights -> K row-block banded GEMM matrices with even/odd-half,
         128-lane-padded output column layout (bf16),
       * fc1 weight -> 5 row blocks permuted from PyTorch (c,y,x) flatten order
         to the kernel's pooled (y, x, c) column layout (bf16),
       * 0/1 selector matrices for BN channel reduce / broadcast and for the
         row-parity H-pool permutation.
       Conv biases are unused: under training-mode BN they cancel against the
       batch-mean subtraction."""
    # conv1 row-blocks: (K, 28, 512)
    w1 = np.asarray(p["conv1_w"], np.float32)                # (C1, 1, 3, 3)
    wc1 = np.zeros((K, W0, W1PAD), np.float32)
    for i in range(K):
        for x in range(S1):
            c0 = _col1(x)
            for j in range(K):
                wc1[i, x + j, c0:c0 + C1] = w1[:, 0, i, j]

    # conv2 row-blocks: (K, 256, 768); input rows laid out as x_in*C1 + c_in
    w2 = np.asarray(p["conv2_w"], np.float32)                # (C2, C1, 3, 3)
    wc2 = np.zeros((K, HALF1, W2PAD), np.float32)
    for i in range(K):
        for x in range(S2):
            c0 = _col2(x)
            for j in range(K):
                r0 = (x + j) * C1
                wc2[i, r0:r0 + C1, c0:c0 + C2] = w2[:, :, i, j].T

    # fc1 row blocks: (P2, 384, 256); rows x*C2 + c, pad rows (>=320) stay zero
    fw1 = np.asarray(p["fc1_w"], np.float32).reshape(FC_HID, C2, P2, P2)  # (o,c,y,x)
    f1b = np.zeros((P2, HALF2, FC_HID), np.float32)
    for y in range(P2):
        for x in range(P2):
            f1b[y, x * C2:(x + 1) * C2, :] = fw1[:, :, y, x].T

    # BN channel selectors (reduce: cols->channels, broadcast: channels->cols)
    sel1 = np.zeros((W1PAD, C1), np.float32)
    for x in range(S1):
        sel1[_col1(x):_col1(x) + C1, :] = np.eye(C1, dtype=np.float32)
    sel2 = np.zeros((W2PAD, C2), np.float32)
    for x in range(S2):
        sel2[_col2(x):_col2(x) + C2, :] = np.eye(C2, dtype=np.float32)

    # row-parity permutation matrices for the H-direction max-pool
    hs1 = np.zeros((2 * P1, S1), np.float32)                 # (26, 26)
    for t in range(P1):
        hs1[t, 2 * t] = 1.0
        hs1[P1 + t, 2 * t + 1] = 1.0
    hs2 = np.zeros((2 * P2, S2), np.float32)                 # (10, 11): row 10 dropped by pool
    for t in range(P2):
        hs2[t, 2 * t] = 1.0
        hs2[P2 + t, 2 * t + 1] = 1.0

    bf = jnp.bfloat16
    return {
        "wc1": jnp.asarray(wc1, bf),
        "wc2": jnp.asarray(wc2, bf),
        "fw1": jnp.asarray(f1b, bf),
        "sel1": jnp.asarray(sel1, bf), "sel1t": jnp.asarray(sel1.T.copy(), bf),
        "sel2": jnp.asarray(sel2, bf), "sel2t": jnp.asarray(sel2.T.copy(), bf),
        "hs1": jnp.asarray(hs1, bf), "hs2": jnp.asarray(hs2, bf),
        "g1": jnp.reshape(p["bn1_g"], (1, C1)).astype(jnp.float32),
        "be1": jnp.reshape(p["bn1_b"], (1, C1)).astype(jnp.float32),
        "g2": jnp.reshape(p["bn2_g"], (1, C2)).astype(jnp.float32),
        "be2": jnp.reshape(p["bn2_b"], (1, C2)).astype(jnp.float32),
        "fb1": jnp.reshape(p["fc1_b"], (1, FC_HID)).astype(jnp.float32),
        "fw2": jnp.transpose(p["fc2_w"]).astype(jnp.float32),
        "fb2": jnp.reshape(p["fc2_b"], (1, FC_OUT)).astype(jnp.float32),
    }


@jax.jit
def model_forward(x_nchw, prep):
    # Cin == 1: NCHW -> (N, H, W) is a pure metadata reshape.
    x = x_nchw.reshape(N, H0, W0).astype(jnp.float32)
    return pl.pallas_call(
        fused_forward_kernel,
        out_shape=jax.ShapeDtypeStruct((N, FC_OUT), jnp.float32),
        in_specs=[VMEM_SPEC] * 17,
        out_specs=VMEM_SPEC,
        scratch_shapes=[
            pltpu.VMEM((N, S1, W1PAD), jnp.float32),   # conv1 outputs (BN barrier)
            pltpu.VMEM((N, S2, W2PAD), jnp.float32),   # conv2 outputs (BN barrier)
            pltpu.VMEM((N, FC_HID), jnp.float32),      # fc1 activations
        ],
    )(x, prep["wc1"], prep["wc2"], prep["fw1"],
      prep["sel1"], prep["sel1t"], prep["sel2"], prep["sel2t"],
      prep["hs1"], prep["hs2"],
      prep["g1"], prep["be1"], prep["g2"], prep["be2"],
      prep["fb1"], prep["fw2"], prep["fb2"])


def init_params(key):
    """Parameters in PyTorch-module layouts (Conv: OIHW, Linear: (out, in))."""
    ks = jax.random.split(key, 8)
    return {
        "conv1_w": jax.random.normal(ks[0], (C1, 1, K, K), jnp.float32) * 0.1,
        "conv1_b": jax.random.normal(ks[1], (C1,), jnp.float32) * 0.1,   # cancelled by train-mode BN
        "bn1_g": jnp.ones((C1,), jnp.float32),
        "bn1_b": jnp.zeros((C1,), jnp.float32),
        "conv2_w": jax.random.normal(ks[2], (C2, C1, K, K), jnp.float32) * 0.05,
        "conv2_b": jax.random.normal(ks[3], (C2,), jnp.float32) * 0.05,  # cancelled by train-mode BN
        "bn2_g": jnp.ones((C2,), jnp.float32),
        "bn2_b": jnp.zeros((C2,), jnp.float32),
        "fc1_w": jax.random.normal(ks[4], (FC_HID, FC_IN), jnp.float32) * 0.02,
        "fc1_b": jax.random.normal(ks[5], (FC_HID,), jnp.float32) * 0.02,
        "fc2_w": jax.random.normal(ks[6], (FC_OUT, FC_HID), jnp.float32) * 0.05,
        "fc2_b": jax.random.normal(ks[7], (FC_OUT,), jnp.float32) * 0.05,
    }


if __name__ == "__main__":
    key = jax.random.PRNGKey(0)
    kx, kp = jax.random.split(key)
    # MNIST-shaped input (the fc layer requires 28x28x1), small batch = 2
    x = jax.random.normal(kx, (N, 1, H0, W0), jnp.float32)
    params = init_params(kp)
    prepared = prepare_params(params)

    out = model_forward(x, prepared)
    out = jax.block_until_ready(out)
    assert out.shape == (N, FC_OUT), out.shape
    assert bool(jnp.all(jnp.isfinite(out)))
    print("KERNEL_OK")
</pallas_src>

<mosaic_0001>
module attributes {stable_mosaic.version = 11 : i64} {
  func.func @fused_forward_kernel(%arg0: memref<2x28x28xf32, #tpu.memory_space<vmem>>, %arg1: memref<3x28x512xbf16, #tpu.memory_space<vmem>>, %arg2: memref<3x256x768xbf16, #tpu.memory_space<vmem>>, %arg3: memref<5x384x256xbf16, #tpu.memory_space<vmem>>, %arg4: memref<512x16xbf16, #tpu.memory_space<vmem>>, %arg5: memref<16x512xbf16, #tpu.memory_space<vmem>>, %arg6: memref<768x64xbf16, #tpu.memory_space<vmem>>, %arg7: memref<64x768xbf16, #tpu.memory_space<vmem>>, %arg8: memref<26x26xbf16, #tpu.memory_space<vmem>>, %arg9: memref<10x11xbf16, #tpu.memory_space<vmem>>, %arg10: memref<1x16xf32, #tpu.memory_space<vmem>>, %arg11: memref<1x16xf32, #tpu.memory_space<vmem>>, %arg12: memref<1x64xf32, #tpu.memory_space<vmem>>, %arg13: memref<1x64xf32, #tpu.memory_space<vmem>>, %arg14: memref<1x256xf32, #tpu.memory_space<vmem>>, %arg15: memref<256x10xf32, #tpu.memory_space<vmem>>, %arg16: memref<1x10xf32, #tpu.memory_space<vmem>>, %arg17: memref<2x10xf32, #tpu.memory_space<vmem>>, %arg18: memref<2x26x512xf32, #tpu.memory_space<vmem>>, %arg19: memref<2x11x768xf32, #tpu.memory_space<vmem>>, %arg20: memref<2x256xf32, #tpu.memory_space<vmem>>) attributes {dimension_semantics = [], scalar_prefetch = 0 : i64, scratch_operands = 3 : i64, tpu.core_type = #tpu.core_type<tc>} {
    %cst = arith.constant 0.000000e+00 : f32
    %0 = vector.broadcast %cst : f32 to vector<1x512xf32>
    %cst_0 = arith.constant 0.000000e+00 : f32
    %1 = vector.broadcast %cst_0 : f32 to vector<1x512xf32>
    %c0 = arith.constant 0 : index
    %c0_1 = arith.constant 0 : index
    %c0_2 = arith.constant 0 : index
    %2 = vector.load %arg0[%c0, %c0_1, %c0_2] : memref<2x28x28xf32, #tpu.memory_space<vmem>>, vector<1x28x28xf32>
    %3 = vector.shape_cast %2 : vector<1x28x28xf32> to vector<28x28xf32>
    %4 = vector.extract_strided_slice %3 {offsets = [0, 0], sizes = [26, 28], strides = [1, 1]} : vector<28x28xf32> to vector<26x28xf32>
    %5 = arith.truncf %4 : vector<26x28xf32> to vector<26x28xbf16>
    %c0_3 = arith.constant 0 : index
    %c0_4 = arith.constant 0 : index
    %c0_5 = arith.constant 0 : index
    %6 = vector.load %arg1[%c0_3, %c0_4, %c0_5] : memref<3x28x512xbf16, #tpu.memory_space<vmem>>, vector<1x28x512xbf16>
    %7 = vector.shape_cast %6 : vector<1x28x512xbf16> to vector<28x512xbf16>
    %cst_6 = arith.constant dense<0.000000e+00> : vector<26x512xf32>
    %8 = tpu.matmul %5, %7, %cst_6 {dimension_numbers = #tpu.dot_dimension_numbers<[1], [0], [0], [1], [0, 0, 1, 1], [], []>} : vector<26x28xbf16>, vector<28x512xbf16>, vector<26x512xf32> -> vector<26x512xf32>
    %9 = vector.extract_strided_slice %3 {offsets = [1, 0], sizes = [26, 28], strides = [1, 1]} : vector<28x28xf32> to vector<26x28xf32>
    %10 = arith.truncf %9 : vector<26x28xf32> to vector<26x28xbf16>
    %c1 = arith.constant 1 : index
    %c0_7 = arith.constant 0 : index
    %c0_8 = arith.constant 0 : index
    %11 = vector.load %arg1[%c1, %c0_7, %c0_8] : memref<3x28x512xbf16, #tpu.memory_space<vmem>>, vector<1x28x512xbf16>
    %12 = vector.shape_cast %11 : vector<1x28x512xbf16> to vector<28x512xbf16>
    %cst_9 = arith.constant dense<0.000000e+00> : vector<26x512xf32>
    %13 = tpu.matmul %10, %12, %cst_9 {dimension_numbers = #tpu.dot_dimension_numbers<[1], [0], [0], [1], [0, 0, 1, 1], [], []>} : vector<26x28xbf16>, vector<28x512xbf16>, vector<26x512xf32> -> vector<26x512xf32>
    %14 = arith.addf %8, %13 : vector<26x512xf32>
    %15 = vector.extract_strided_slice %3 {offsets = [2, 0], sizes = [26, 28], strides = [1, 1]} : vector<28x28xf32> to vector<26x28xf32>
    %16 = arith.truncf %15 : vector<26x28xf32> to vector<26x28xbf16>
    %c2 = arith.constant 2 : index
    %c0_10 = arith.constant 0 : index
    %c0_11 = arith.constant 0 : index
    %17 = vector.load %arg1[%c2, %c0_10, %c0_11] : memref<3x28x512xbf16, #tpu.memory_space<vmem>>, vector<1x28x512xbf16>
    %18 = vector.shape_cast %17 : vector<1x28x512xbf16> to vector<28x512xbf16>
    %cst_12 = arith.constant dense<0.000000e+00> : vector<26x512xf32>
    %19 = tpu.matmul %16, %18, %cst_12 {dimension_numbers = #tpu.dot_dimension_numbers<[1], [0], [0], [1], [0, 0, 1, 1], [], []>} : vector<26x28xbf16>, vector<28x512xbf16>, vector<26x512xf32> -> vector<26x512xf32>
    %20 = arith.addf %14, %19 : vector<26x512xf32>
    %c0_13 = arith.constant 0 : index
    %c0_14 = arith.constant 0 : index
    %c0_15 = arith.constant 0 : index
    %21 = vector.load %arg18[%c0_13, %c0_14, %c0_15] : memref<2x26x512xf32, #tpu.memory_space<vmem>>, vector<1x26x512xf32>
    %22 = vector.shape_cast %21 : vector<1x26x512xf32> to vector<26x512xf32>
    %23 = vector.shape_cast %20 : vector<26x512xf32> to vector<1x26x512xf32>
    tpu.vector_store %arg18[%c0_13, %c0_14, %c0_15], %23 {strides = array<i32>} : memref<2x26x512xf32, #tpu.memory_space<vmem>>, vector<1x26x512xf32>,
    %cst_16 = arith.constant dense<0.000000e+00> : vector<512xf32>
    %24 = vector.multi_reduction <add>, %20, %cst_16 [0] : vector<26x512xf32> to vector<512xf32>
    %25 = vector.shape_cast %24 : vector<512xf32> to vector<1x512xf32>
    %26 = arith.addf %0, %25 : vector<1x512xf32>
    %27 = arith.mulf %20, %20 : vector<26x512xf32>
    %cst_17 = arith.constant dense<0.000000e+00> : vector<512xf32>
    %28 = vector.multi_reduction <add>, %27, %cst_17 [0] : vector<26x512xf32> to vector<512xf32>
    %29 = vector.shape_cast %28 : vector<512xf32> to vector<1x512xf32>
    %30 = arith.addf %1, %29 : vector<1x512xf32>
    %c1_18 = arith.constant 1 : index
    %c0_19 = arith.constant 0 : index
    %c0_20 = arith.constant 0 : index
    %31 = vector.load %arg0[%c1_18, %c0_19, %c0_20] : memref<2x28x28xf32, #tpu.memory_space<vmem>>, vector<1x28x28xf32>
    %32 = vector.shape_cast %31 : vector<1x28x28xf32> to vector<28x28xf32>
    %33 = vector.extract_strided_slice %32 {offsets = [0, 0], sizes = [26, 28], strides = [1, 1]} : vector<28x28xf32> to vector<26x28xf32>
    %34 = arith.truncf %33 : vector<26x28xf32> to vector<26x28xbf16>
    %c0_21 = arith.constant 0 : index
    %c0_22 = arith.constant 0 : index
    %c0_23 = arith.constant 0 : index
    %35 = vector.load %arg1[%c0_21, %c0_22, %c0_23] : memref<3x28x512xbf16, #tpu.memory_space<vmem>>, vector<1x28x512xbf16>
    %36 = vector.shape_cast %35 : vector<1x28x512xbf16> to vector<28x512xbf16>
    %cst_24 = arith.constant dense<0.000000e+00> : vector<26x512xf32>
    %37 = tpu.matmul %34, %36, %cst_24 {dimension_numbers = #tpu.dot_dimension_numbers<[1], [0], [0], [1], [0, 0, 1, 1], [], []>} : vector<26x28xbf16>, vector<28x512xbf16>, vector<26x512xf32> -> vector<26x512xf32>
    %38 = vector.extract_strided_slice %32 {offsets = [1, 0], sizes = [26, 28], strides = [1, 1]} : vector<28x28xf32> to vector<26x28xf32>
    %39 = arith.truncf %38 : vector<26x28xf32> to vector<26x28xbf16>
    %c1_25 = arith.constant 1 : index
    %c0_26 = arith.constant 0 : index
    %c0_27 = arith.constant 0 : index
    %40 = vector.load %arg1[%c1_25, %c0_26, %c0_27] : memref<3x28x512xbf16, #tpu.memory_space<vmem>>, vector<1x28x512xbf16>
    %41 = vector.shape_cast %40 : vector<1x28x512xbf16> to vector<28x512xbf16>
    %cst_28 = arith.constant dense<0.000000e+00> : vector<26x512xf32>
    %42 = tpu.matmul %39, %41, %cst_28 {dimension_numbers = #tpu.dot_dimension_numbers<[1], [0], [0], [1], [0, 0, 1, 1], [], []>} : vector<26x28xbf16>, vector<28x512xbf16>, vector<26x512xf32> -> vector<26x512xf32>
    %43 = arith.addf %37, %42 : vector<26x512xf32>
    %44 = vector.extract_strided_slice %32 {offsets = [2, 0], sizes = [26, 28], strides = [1, 1]} : vector<28x28xf32> to vector<26x28xf32>
    %45 = arith.truncf %44 : vector<26x28xf32> to vector<26x28xbf16>
    %c2_29 = arith.constant 2 : index
    %c0_30 = arith.constant 0 : index
    %c0_31 = arith.constant 0 : index
    %46 = vector.load %arg1[%c2_29, %c0_30, %c0_31] : memref<3x28x512xbf16, #tpu.memory_space<vmem>>, vector<1x28x512xbf16>
    %47 = vector.shape_cast %46 : vector<1x28x512xbf16> to vector<28x512xbf16>
    %cst_32 = arith.constant dense<0.000000e+00> : vector<26x512xf32>
    %48 = tpu.matmul %45, %47, %cst_32 {dimension_numbers = #tpu.dot_dimension_numbers<[1], [0], [0], [1], [0, 0, 1, 1], [], []>} : vector<26x28xbf16>, vector<28x512xbf16>, vector<26x512xf32> -> vector<26x512xf32>
    %49 = arith.addf %43, %48 : vector<26x512xf32>
    %c1_33 = arith.constant 1 : index
    %c0_34 = arith.constant 0 : index
    %c0_35 = arith.constant 0 : index
    %50 = vector.load %arg18[%c1_33, %c0_34, %c0_35] : memref<2x26x512xf32, #tpu.memory_space<vmem>>, vector<1x26x512xf32>
    %51 = vector.shape_cast %50 : vector<1x26x512xf32> to vector<26x512xf32>
    %52 = vector.shape_cast %49 : vector<26x512xf32> to vector<1x26x512xf32>
    tpu.vector_store %arg18[%c1_33, %c0_34, %c0_35], %52 {strides = array<i32>} : memref<2x26x512xf32, #tpu.memory_space<vmem>>, vector<1x26x512xf32>,
    %cst_36 = arith.constant dense<0.000000e+00> : vector<512xf32>
    %53 = vector.multi_reduction <add>, %49, %cst_36 [0] : vector<26x512xf32> to vector<512xf32>
    %54 = vector.shape_cast %53 : vector<512xf32> to vector<1x512xf32>
    %55 = arith.addf %26, %54 : vector<1x512xf32>
    %56 = arith.mulf %49, %49 : vector<26x512xf32>
    %cst_37 = arith.constant dense<0.000000e+00> : vector<512xf32>
    %57 = vector.multi_reduction <add>, %56, %cst_37 [0] : vector<26x512xf32> to vector<512xf32>
    %58 = vector.shape_cast %57 : vector<512xf32> to vector<1x512xf32>
    %59 = arith.addf %30, %58 : vector<1x512xf32>
    %60 = arith.truncf %55 : vector<1x512xf32> to vector<1x512xbf16>
    %c0_38 = arith.constant 0 : index
    %c0_39 = arith.constant 0 : index
    %61 = vector.load %arg4[%c0_38, %c0_39] : memref<512x16xbf16, #tpu.memory_space<vmem>>, vector<512x16xbf16>
    %cst_40 = arith.constant dense<0.000000e+00> : vector<1x16xf32>
    %62 = tpu.matmul %60, %61, %cst_40 {dimension_numbers = #tpu.dot_dimension_numbers<[1], [0], [0], [1], [0, 0, 1, 1], [], []>} : vector<1x512xbf16>, vector<512x16xbf16>, vector<1x16xf32> -> vector<1x16xf32>
    %63 = arith.truncf %59 : vector<1x512xf32> to vector<1x512xbf16>
    %c0_41 = arith.constant 0 : index
    %c0_42 = arith.constant 0 : index
    %64 = vector.load %arg4[%c0_41, %c0_42] : memref<512x16xbf16, #tpu.memory_space<vmem>>, vector<512x16xbf16>
    %cst_43 = arith.constant dense<0.000000e+00> : vector<1x16xf32>
    %65 = tpu.matmul %63, %64, %cst_43 {dimension_numbers = #tpu.dot_dimension_numbers<[1], [0], [0], [1], [0, 0, 1, 1], [], []>} : vector<1x512xbf16>, vector<512x16xbf16>, vector<1x16xf32> -> vector<1x16xf32>
    %cst_44 = arith.constant 7.396450e-04 : f32
    %66 = vector.broadcast %cst_44 : f32 to vector<1x16xf32>
    %67 = arith.mulf %62, %66 : vector<1x16xf32>
    %cst_45 = arith.constant 7.396450e-04 : f32
    %68 = vector.broadcast %cst_45 : f32 to vector<1x16xf32>
    %69 = arith.mulf %65, %68 : vector<1x16xf32>
    %70 = arith.mulf %67, %67 : vector<1x16xf32>
    %71 = arith.subf %69, %70 : vector<1x16xf32>
    %c0_46 = arith.constant 0 : index
    %c0_47 = arith.constant 0 : index
    %72 = vector.load %arg10[%c0_46, %c0_47] : memref<1x16xf32, #tpu.memory_space<vmem>>, vector<1x16xf32>
    %cst_48 = arith.constant 9.99999974E-6 : f32
    %73 = vector.broadcast %cst_48 : f32 to vector<1x16xf32>
    %74 = arith.addf %71, %73 : vector<1x16xf32>
    %75 = math.rsqrt %74 : vector<1x16xf32>
    %76 = arith.mulf %72, %75 : vector<1x16xf32>
    %c0_49 = arith.constant 0 : index
    %c0_50 = arith.constant 0 : index
    %77 = vector.load %arg11[%c0_49, %c0_50] : memref<1x16xf32, #tpu.memory_space<vmem>>, vector<1x16xf32>
    %78 = arith.mulf %67, %76 : vector<1x16xf32>
    %79 = arith.subf %77, %78 : vector<1x16xf32>
    %80 = arith.truncf %76 : vector<1x16xf32> to vector<1x16xbf16>
    %c0_51 = arith.constant 0 : index
    %c0_52 = arith.constant 0 : index
    %81 = vector.load %arg5[%c0_51, %c0_52] : memref<16x512xbf16, #tpu.memory_space<vmem>>, vector<16x512xbf16>
    %cst_53 = arith.constant dense<0.000000e+00> : vector<1x512xf32>
    %82 = tpu.matmul %80, %81, %cst_53 {dimension_numbers = #tpu.dot_dimension_numbers<[1], [0], [0], [1], [0, 0, 1, 1], [], []>} : vector<1x16xbf16>, vector<16x512xbf16>, vector<1x512xf32> -> vector<1x512xf32>
    %83 = arith.truncf %79 : vector<1x16xf32> to vector<1x16xbf16>
    %c0_54 = arith.constant 0 : index
    %c0_55 = arith.constant 0 : index
    %84 = vector.load %arg5[%c0_54, %c0_55] : memref<16x512xbf16, #tpu.memory_space<vmem>>, vector<16x512xbf16>
    %cst_56 = arith.constant dense<0.000000e+00> : vector<1x512xf32>
    %85 = tpu.matmul %83, %84, %cst_56 {dimension_numbers = #tpu.dot_dimension_numbers<[1], [0], [0], [1], [0, 0, 1, 1], [], []>} : vector<1x16xbf16>, vector<16x512xbf16>, vector<1x512xf32> -> vector<1x512xf32>
    %c0_57 = arith.constant 0 : index
    %c0_58 = arith.constant 0 : index
    %86 = vector.load %arg8[%c0_57, %c0_58] : memref<26x26xbf16, #tpu.memory_space<vmem>>, vector<26x26xbf16>
    %c0_59 = arith.constant 0 : index
    %c0_60 = arith.constant 0 : index
    %87 = vector.load %arg9[%c0_59, %c0_60] : memref<10x11xbf16, #tpu.memory_space<vmem>>, vector<10x11xbf16>
    %cst_61 = arith.constant 0.000000e+00 : f32
    %88 = vector.broadcast %cst_61 : f32 to vector<1x768xf32>
    %cst_62 = arith.constant 0.000000e+00 : f32
    %89 = vector.broadcast %cst_62 : f32 to vector<1x768xf32>
    %c0_63 = arith.constant 0 : index
    %c0_64 = arith.constant 0 : index
    %c0_65 = arith.constant 0 : index
    %90 = vector.load %arg18[%c0_63, %c0_64, %c0_65] : memref<2x26x512xf32, #tpu.memory_space<vmem>>, vector<1x26x512xf32>
    %91 = vector.shape_cast %90 : vector<1x26x512xf32> to vector<26x512xf32>
    %92 = vector.broadcast %82 : vector<1x512xf32> to vector<26x512xf32>
    %93 = arith.mulf %91, %92 : vector<26x512xf32>
    %94 = vector.broadcast %85 : vector<1x512xf32> to vector<26x512xf32>
    %95 = arith.addf %93, %94 : vector<26x512xf32>
    %cst_66 = arith.constant 0.000000e+00 : f32
    %96 = vector.broadcast %cst_66 : f32 to vector<26x512xf32>
    %97 = arith.maximumf %95, %96 : vector<26x512xf32>
    %98 = vector.extract_strided_slice %97 {offsets = [0, 0], sizes = [26, 256], strides = [1, 1]} : vector<26x512xf32> to vector<26x256xf32>
    %99 = vector.extract_strided_slice %97 {offsets = [0, 256], sizes = [26, 256], strides = [1, 1]} : vector<26x512xf32> to vector<26x256xf32>
    %100 = arith.maximumf %98, %99 : vector<26x256xf32>
    %101 = arith.truncf %100 : vector<26x256xf32> to vector<26x256xbf16>
    %cst_67 = arith.constant dense<0.000000e+00> : vector<26x256xf32>
    %102 = tpu.matmul %86, %101, %cst_67 {dimension_numbers = #tpu.dot_dimension_numbers<[1], [0], [0], [1], [0, 0, 1, 1], [], []>} : vector<26x26xbf16>, vector<26x256xbf16>, vector<26x256xf32> -> vector<26x256xf32>
    %103 = vector.extract_strided_slice %102 {offsets = [0, 0], sizes = [13, 256], strides = [1, 1]} : vector<26x256xf32> to vector<13x256xf32>
    %104 = vector.extract_strided_slice %102 {offsets = [13, 0], sizes = [13, 256], strides = [1, 1]} : vector<26x256xf32> to vector<13x256xf32>
    %105 = arith.maximumf %103, %104 : vector<13x256xf32>
    %106 = vector.extract_strided_slice %105 {offsets = [0, 0], sizes = [11, 256], strides = [1, 1]} : vector<13x256xf32> to vector<11x256xf32>
    %107 = arith.truncf %106 : vector<11x256xf32> to vector<11x256xbf16>
    %c0_68 = arith.constant 0 : index
    %c0_69 = arith.constant 0 : index
    %c0_70 = arith.constant 0 : index
    %108 = vector.load %arg2[%c0_68, %c0_69, %c0_70] : memref<3x256x768xbf16, #tpu.memory_space<vmem>>, vector<1x256x768xbf16>
    %109 = vector.shape_cast %108 : vector<1x256x768xbf16> to vector<256x768xbf16>
    %cst_71 = arith.constant dense<0.000000e+00> : vector<11x768xf32>
    %110 = tpu.matmul %107, %109, %cst_71 {dimension_numbers = #tpu.dot_dimension_numbers<[1], [0], [0], [1], [0, 0, 1, 1], [], []>} : vector<11x256xbf16>, vector<256x768xbf16>, vector<11x768xf32> -> vector<11x768xf32>
    %111 = vector.extract_strided_slice %105 {offsets = [1, 0], sizes = [11, 256], strides = [1, 1]} : vector<13x256xf32> to vector<11x256xf32>
    %112 = arith.truncf %111 : vector<11x256xf32> to vector<11x256xbf16>
    %c1_72 = arith.constant 1 : index
    %c0_73 = arith.constant 0 : index
    %c0_74 = arith.constant 0 : index
    %113 = vector.load %arg2[%c1_72, %c0_73, %c0_74] : memref<3x256x768xbf16, #tpu.memory_space<vmem>>, vector<1x256x768xbf16>
    %114 = vector.shape_cast %113 : vector<1x256x768xbf16> to vector<256x768xbf16>
    %cst_75 = arith.constant dense<0.000000e+00> : vector<11x768xf32>
    %115 = tpu.matmul %112, %114, %cst_75 {dimension_numbers = #tpu.dot_dimension_numbers<[1], [0], [0], [1], [0, 0, 1, 1], [], []>} : vector<11x256xbf16>, vector<256x768xbf16>, vector<11x768xf32> -> vector<11x768xf32>
    %116 = arith.addf %110, %115 : vector<11x768xf32>
    %117 = vector.extract_strided_slice %105 {offsets = [2, 0], sizes = [11, 256], strides = [1, 1]} : vector<13x256xf32> to vector<11x256xf32>
    %118 = arith.truncf %117 : vector<11x256xf32> to vector<11x256xbf16>
    %c2_76 = arith.constant 2 : index
    %c0_77 = arith.constant 0 : index
    %c0_78 = arith.constant 0 : index
    %119 = vector.load %arg2[%c2_76, %c0_77, %c0_78] : memref<3x256x768xbf16, #tpu.memory_space<vmem>>, vector<1x256x768xbf16>
    %120 = vector.shape_cast %119 : vector<1x256x768xbf16> to vector<256x768xbf16>
    %cst_79 = arith.constant dense<0.000000e+00> : vector<11x768xf32>
    %121 = tpu.matmul %118, %120, %cst_79 {dimension_numbers = #tpu.dot_dimension_numbers<[1], [0], [0], [1], [0, 0, 1, 1], [], []>} : vector<11x256xbf16>, vector<256x768xbf16>, vector<11x768xf32> -> vector<11x768xf32>
    %122 = arith.addf %116, %121 : vector<11x768xf32>
    %c0_80 = arith.constant 0 : index
    %c0_81 = arith.constant 0 : index
    %c0_82 = arith.constant 0 : index
    %123 = vector.load %arg19[%c0_80, %c0_81, %c0_82] : memref<2x11x768xf32, #tpu.memory_space<vmem>>, vector<1x11x768xf32>
    %124 = vector.shape_cast %123 : vector<1x11x768xf32> to vector<11x768xf32>
    %125 = vector.shape_cast %122 : vector<11x768xf32> to vector<1x11x768xf32>
    tpu.vector_store %arg19[%c0_80, %c0_81, %c0_82], %125 {strides = array<i32>} : memref<2x11x768xf32, #tpu.memory_space<vmem>>, vector<1x11x768xf32>,
    %cst_83 = arith.constant dense<0.000000e+00> : vector<768xf32>
    %126 = vector.multi_reduction <add>, %122, %cst_83 [0] : vector<11x768xf32> to vector<768xf32>
    %127 = vector.shape_cast %126 : vector<768xf32> to vector<1x768xf32>
    %128 = arith.addf %88, %127 : vector<1x768xf32>
    %129 = arith.mulf %122, %122 : vector<11x768xf32>
    %cst_84 = arith.constant dense<0.000000e+00> : vector<768xf32>
    %130 = vector.multi_reduction <add>, %129, %cst_84 [0] : vector<11x768xf32> to vector<768xf32>
    %131 = vector.shape_cast %130 : vector<768xf32> to vector<1x768xf32>
    %132 = arith.addf %89, %131 : vector<1x768xf32>
    %c1_85 = arith.constant 1 : index
    %c0_86 = arith.constant 0 : index
    %c0_87 = arith.constant 0 : index
    %133 = vector.load %arg18[%c1_85, %c0_86, %c0_87] : memref<2x26x512xf32, #tpu.memory_space<vmem>>, vector<1x26x512xf32>
    %134 = vector.shape_cast %133 : vector<1x26x512xf32> to vector<26x512xf32>
    %135 = vector.broadcast %82 : vector<1x512xf32> to vector<26x512xf32>
    %136 = arith.mulf %134, %135 : vector<26x512xf32>
    %137 = vector.broadcast %85 : vector<1x512xf32> to vector<26x512xf32>
    %138 = arith.addf %136, %137 : vector<26x512xf32>
    %cst_88 = arith.constant 0.000000e+00 : f32
    %139 = vector.broadcast %cst_88 : f32 to vector<26x512xf32>
    %140 = arith.maximumf %138, %139 : vector<26x512xf32>
    %141 = vector.extract_strided_slice %140 {offsets = [0, 0], sizes = [26, 256], strides = [1, 1]} : vector<26x512xf32> to vector<26x256xf32>
    %142 = vector.extract_strided_slice %140 {offsets = [0, 256], sizes = [26, 256], strides = [1, 1]} : vector<26x512xf32> to vector<26x256xf32>
    %143 = arith.maximumf %141, %142 : vector<26x256xf32>
    %144 = arith.truncf %143 : vector<26x256xf32> to vector<26x256xbf16>
    %cst_89 = arith.constant dense<0.000000e+00> : vector<26x256xf32>
    %145 = tpu.matmul %86, %144, %cst_89 {dimension_numbers = #tpu.dot_dimension_numbers<[1], [0], [0], [1], [0, 0, 1, 1], [], []>} : vector<26x26xbf16>, vector<26x256xbf16>, vector<26x256xf32> -> vector<26x256xf32>
    %146 = vector.extract_strided_slice %145 {offsets = [0, 0], sizes = [13, 256], strides = [1, 1]} : vector<26x256xf32> to vector<13x256xf32>
    %147 = vector.extract_strided_slice %145 {offsets = [13, 0], sizes = [13, 256], strides = [1, 1]} : vector<26x256xf32> to vector<13x256xf32>
    %148 = arith.maximumf %146, %147 : vector<13x256xf32>
    %149 = vector.extract_strided_slice %148 {offsets = [0, 0], sizes = [11, 256], strides = [1, 1]} : vector<13x256xf32> to vector<11x256xf32>
    %150 = arith.truncf %149 : vector<11x256xf32> to vector<11x256xbf16>
    %c0_90 = arith.constant 0 : index
    %c0_91 = arith.constant 0 : index
    %c0_92 = arith.constant 0 : index
    %151 = vector.load %arg2[%c0_90, %c0_91, %c0_92] : memref<3x256x768xbf16, #tpu.memory_space<vmem>>, vector<1x256x768xbf16>
    %152 = vector.shape_cast %151 : vector<1x256x768xbf16> to vector<256x768xbf16>
    %cst_93 = arith.constant dense<0.000000e+00> : vector<11x768xf32>
    %153 = tpu.matmul %150, %152, %cst_93 {dimension_numbers = #tpu.dot_dimension_numbers<[1], [0], [0], [1], [0, 0, 1, 1], [], []>} : vector<11x256xbf16>, vector<256x768xbf16>, vector<11x768xf32> -> vector<11x768xf32>
    %154 = vector.extract_strided_slice %148 {offsets = [1, 0], sizes = [11, 256], strides = [1, 1]} : vector<13x256xf32> to vector<11x256xf32>
    %155 = arith.truncf %154 : vector<11x256xf32> to vector<11x256xbf16>
    %c1_94 = arith.constant 1 : index
    %c0_95 = arith.constant 0 : index
    %c0_96 = arith.constant 0 : index
    %156 = vector.load %arg2[%c1_94, %c0_95, %c0_96] : memref<3x256x768xbf16, #tpu.memory_space<vmem>>, vector<1x256x768xbf16>
    %157 = vector.shape_cast %156 : vector<1x256x768xbf16> to vector<256x768xbf16>
    %cst_97 = arith.constant dense<0.000000e+00> : vector<11x768xf32>
    %158 = tpu.matmul %155, %157, %cst_97 {dimension_numbers = #tpu.dot_dimension_numbers<[1], [0], [0], [1], [0, 0, 1, 1], [], []>} : vector<11x256xbf16>, vector<256x768xbf16>, vector<11x768xf32> -> vector<11x768xf32>
    %159 = arith.addf %153, %158 : vector<11x768xf32>
    %160 = vector.extract_strided_slice %148 {offsets = [2, 0], sizes = [11, 256], strides = [1, 1]} : vector<13x256xf32> to vector<11x256xf32>
    %161 = arith.truncf %160 : vector<11x256xf32> to vector<11x256xbf16>
    %c2_98 = arith.constant 2 : index
    %c0_99 = arith.constant 0 : index
    %c0_100 = arith.constant 0 : index
    %162 = vector.load %arg2[%c2_98, %c0_99, %c0_100] : memref<3x256x768xbf16, #tpu.memory_space<vmem>>, vector<1x256x768xbf16>
    %163 = vector.shape_cast %162 : vector<1x256x768xbf16> to vector<256x768xbf16>
    %cst_101 = arith.constant dense<0.000000e+00> : vector<11x768xf32>
    %164 = tpu.matmul %161, %163, %cst_101 {dimension_numbers = #tpu.dot_dimension_numbers<[1], [0], [0], [1], [0, 0, 1, 1], [], []>} : vector<11x256xbf16>, vector<256x768xbf16>, vector<11x768xf32> -> vector<11x768xf32>
    %165 = arith.addf %159, %164 : vector<11x768xf32>
    %c1_102 = arith.constant 1 : index
    %c0_103 = arith.constant 0 : index
    %c0_104 = arith.constant 0 : index
    %166 = vector.load %arg19[%c1_102, %c0_103, %c0_104] : memref<2x11x768xf32, #tpu.memory_space<vmem>>, vector<1x11x768xf32>
    %167 = vector.shape_cast %166 : vector<1x11x768xf32> to vector<11x768xf32>
    %168 = vector.shape_cast %165 : vector<11x768xf32> to vector<1x11x768xf32>
    tpu.vector_store %arg19[%c1_102, %c0_103, %c0_104], %168 {strides = array<i32>} : memref<2x11x768xf32, #tpu.memory_space<vmem>>, vector<1x11x768xf32>,
    %cst_105 = arith.constant dense<0.000000e+00> : vector<768xf32>
    %169 = vector.multi_reduction <add>, %165, %cst_105 [0] : vector<11x768xf32> to vector<768xf32>
    %170 = vector.shape_cast %169 : vector<768xf32> to vector<1x768xf32>
    %171 = arith.addf %128, %170 : vector<1x768xf32>
    %172 = arith.mulf %165, %165 : vector<11x768xf32>
    %cst_106 = arith.constant dense<0.000000e+00> : vector<768xf32>
    %173 = vector.multi_reduction <add>, %172, %cst_106 [0] : vector<11x768xf32> to vector<768xf32>
    %174 = vector.shape_cast %173 : vector<768xf32> to vector<1x768xf32>
    %175 = arith.addf %132, %174 : vector<1x768xf32>
    %176 = arith.truncf %171 : vector<1x768xf32> to vector<1x768xbf16>
    %c0_107 = arith.constant 0 : index
    %c0_108 = arith.constant 0 : index
    %177 = vector.load %arg6[%c0_107, %c0_108] : memref<768x64xbf16, #tpu.memory_space<vmem>>, vector<768x64xbf16>
    %cst_109 = arith.constant dense<0.000000e+00> : vector<1x64xf32>
    %178 = tpu.matmul %176, %177, %cst_109 {dimension_numbers = #tpu.dot_dimension_numbers<[1], [0], [0], [1], [0, 0, 1, 1], [], []>} : vector<1x768xbf16>, vector<768x64xbf16>, vector<1x64xf32> -> vector<1x64xf32>
    %179 = arith.truncf %175 : vector<1x768xf32> to vector<1x768xbf16>
    %c0_110 = arith.constant 0 : index
    %c0_111 = arith.constant 0 : index
    %180 = vector.load %arg6[%c0_110, %c0_111] : memref<768x64xbf16, #tpu.memory_space<vmem>>, vector<768x64xbf16>
    %cst_112 = arith.constant dense<0.000000e+00> : vector<1x64xf32>
    %181 = tpu.matmul %179, %180, %cst_112 {dimension_numbers = #tpu.dot_dimension_numbers<[1], [0], [0], [1], [0, 0, 1, 1], [], []>} : vector<1x768xbf16>, vector<768x64xbf16>, vector<1x64xf32> -> vector<1x64xf32>
    %cst_113 = arith.constant 0.00413223123 : f32
    %182 = vector.broadcast %cst_113 : f32 to vector<1x64xf32>
    %183 = arith.mulf %178, %182 : vector<1x64xf32>
    %cst_114 = arith.constant 0.00413223123 : f32
    %184 = vector.broadcast %cst_114 : f32 to vector<1x64xf32>
    %185 = arith.mulf %181, %184 : vector<1x64xf32>
    %186 = arith.mulf %183, %183 : vector<1x64xf32>
    %187 = arith.subf %185, %186 : vector<1x64xf32>
    %c0_115 = arith.constant 0 : index
    %c0_116 = arith.constant 0 : index
    %188 = vector.load %arg12[%c0_115, %c0_116] : memref<1x64xf32, #tpu.memory_space<vmem>>, vector<1x64xf32>
    %cst_117 = arith.constant 9.99999974E-6 : f32
    %189 = vector.broadcast %cst_117 : f32 to vector<1x64xf32>
    %190 = arith.addf %187, %189 : vector<1x64xf32>
    %191 = math.rsqrt %190 : vector<1x64xf32>
    %192 = arith.mulf %188, %191 : vector<1x64xf32>
    %c0_118 = arith.constant 0 : index
    %c0_119 = arith.constant 0 : index
    %193 = vector.load %arg13[%c0_118, %c0_119] : memref<1x64xf32, #tpu.memory_space<vmem>>, vector<1x64xf32>
    %194 = arith.mulf %183, %192 : vector<1x64xf32>
    %195 = arith.subf %193, %194 : vector<1x64xf32>
    %196 = arith.truncf %192 : vector<1x64xf32> to vector<1x64xbf16>
    %c0_120 = arith.constant 0 : index
    %c0_121 = arith.constant 0 : index
    %197 = vector.load %arg7[%c0_120, %c0_121] : memref<64x768xbf16, #tpu.memory_space<vmem>>, vector<64x768xbf16>
    %cst_122 = arith.constant dense<0.000000e+00> : vector<1x768xf32>
    %198 = tpu.matmul %196, %197, %cst_122 {dimension_numbers = #tpu.dot_dimension_numbers<[1], [0], [0], [1], [0, 0, 1, 1], [], []>} : vector<1x64xbf16>, vector<64x768xbf16>, vector<1x768xf32> -> vector<1x768xf32>
    %199 = arith.truncf %195 : vector<1x64xf32> to vector<1x64xbf16>
    %c0_123 = arith.constant 0 : index
    %c0_124 = arith.constant 0 : index
    %200 = vector.load %arg7[%c0_123, %c0_124] : memref<64x768xbf16, #tpu.memory_space<vmem>>, vector<64x768xbf16>
    %cst_125 = arith.constant dense<0.000000e+00> : vector<1x768xf32>
    %201 = tpu.matmul %199, %200, %cst_125 {dimension_numbers = #tpu.dot_dimension_numbers<[1], [0], [0], [1], [0, 0, 1, 1], [], []>} : vector<1x64xbf16>, vector<64x768xbf16>, vector<1x768xf32> -> vector<1x768xf32>
    %c0_126 = arith.constant 0 : index
    %c0_127 = arith.constant 0 : index
    %202 = vector.load %arg14[%c0_126, %c0_127] : memref<1x256xf32, #tpu.memory_space<vmem>>, vector<1x256xf32>
    %c0_128 = arith.constant 0 : index
    %c0_129 = arith.constant 0 : index
    %c0_130 = arith.constant 0 : index
    %203 = vector.load %arg19[%c0_128, %c0_129, %c0_130] : memref<2x11x768xf32, #tpu.memory_space<vmem>>, vector<1x11x768xf32>
    %204 = vector.shape_cast %203 : vector<1x11x768xf32> to vector<11x768xf32>
    %205 = vector.broadcast %198 : vector<1x768xf32> to vector<11x768xf32>
    %206 = arith.mulf %204, %205 : vector<11x768xf32>
    %207 = vector.broadcast %201 : vector<1x768xf32> to vector<11x768xf32>
    %208 = arith.addf %206, %207 : vector<11x768xf32>
    %cst_131 = arith.constant 0.000000e+00 : f32
    %209 = vector.broadcast %cst_131 : f32 to vector<11x768xf32>
    %210 = arith.maximumf %208, %209 : vector<11x768xf32>
    %211 = vector.extract_strided_slice %210 {offsets = [0, 0], sizes = [11, 384], strides = [1, 1]} : vector<11x768xf32> to vector<11x384xf32>
    %212 = vector.extract_strided_slice %210 {offsets = [0, 384], sizes = [11, 384], strides = [1, 1]} : vector<11x768xf32> to vector<11x384xf32>
    %213 = arith.maximumf %211, %212 : vector<11x384xf32>
    %214 = arith.truncf %213 : vector<11x384xf32> to vector<11x384xbf16>
    %cst_132 = arith.constant dense<0.000000e+00> : vector<10x384xf32>
    %215 = tpu.matmul %87, %214, %cst_132 {dimension_numbers = #tpu.dot_dimension_numbers<[1], [0], [0], [1], [0, 0, 1, 1], [], []>} : vector<10x11xbf16>, vector<11x384xbf16>, vector<10x384xf32> -> vector<10x384xf32>
    %216 = vector.extract_strided_slice %215 {offsets = [0, 0], sizes = [5, 384], strides = [1, 1]} : vector<10x384xf32> to vector<5x384xf32>
    %217 = vector.extract_strided_slice %215 {offsets = [5, 0], sizes = [5, 384], strides = [1, 1]} : vector<10x384xf32> to vector<5x384xf32>
    %218 = arith.maximumf %216, %217 : vector<5x384xf32>
    %219 = vector.extract_strided_slice %218 {offsets = [0, 0], sizes = [1, 384], strides = [1, 1]} : vector<5x384xf32> to vector<1x384xf32>
    %220 = arith.truncf %219 : vector<1x384xf32> to vector<1x384xbf16>
    %c0_133 = arith.constant 0 : index
    %c0_134 = arith.constant 0 : index
    %c0_135 = arith.constant 0 : index
    %221 = vector.load %arg3[%c0_133, %c0_134, %c0_135] : memref<5x384x256xbf16, #tpu.memory_space<vmem>>, vector<1x384x256xbf16>
    %222 = vector.shape_cast %221 : vector<1x384x256xbf16> to vector<384x256xbf16>
    %cst_136 = arith.constant dense<0.000000e+00> : vector<1x256xf32>
    %223 = tpu.matmul %220, %222, %cst_136 {dimension_numbers = #tpu.dot_dimension_numbers<[1], [0], [0], [1], [0, 0, 1, 1], [], []>} : vector<1x384xbf16>, vector<384x256xbf16>, vector<1x256xf32> -> vector<1x256xf32>
    %224 = vector.extract_strided_slice %218 {offsets = [1, 0], sizes = [1, 384], strides = [1, 1]} : vector<5x384xf32> to vector<1x384xf32>
    %225 = arith.truncf %224 : vector<1x384xf32> to vector<1x384xbf16>
    %c1_137 = arith.constant 1 : index
    %c0_138 = arith.constant 0 : index
    %c0_139 = arith.constant 0 : index
    %226 = vector.load %arg3[%c1_137, %c0_138, %c0_139] : memref<5x384x256xbf16, #tpu.memory_space<vmem>>, vector<1x384x256xbf16>
    %227 = vector.shape_cast %226 : vector<1x384x256xbf16> to vector<384x256xbf16>
    %cst_140 = arith.constant dense<0.000000e+00> : vector<1x256xf32>
    %228 = tpu.matmul %225, %227, %cst_140 {dimension_numbers = #tpu.dot_dimension_numbers<[1], [0], [0], [1], [0, 0, 1, 1], [], []>} : vector<1x384xbf16>, vector<384x256xbf16>, vector<1x256xf32> -> vector<1x256xf32>
    %229 = arith.addf %223, %228 : vector<1x256xf32>
    %230 = vector.extract_strided_slice %218 {offsets = [2, 0], sizes = [1, 384], strides = [1, 1]} : vector<5x384xf32> to vector<1x384xf32>
    %231 = arith.truncf %230 : vector<1x384xf32> to vector<1x384xbf16>
    %c2_141 = arith.constant 2 : index
    %c0_142 = arith.constant 0 : index
    %c0_143 = arith.constant 0 : index
    %232 = vector.load %arg3[%c2_141, %c0_142, %c0_143] : memref<5x384x256xbf16, #tpu.memory_space<vmem>>, vector<1x384x256xbf16>
    %233 = vector.shape_cast %232 : vector<1x384x256xbf16> to vector<384x256xbf16>
    %cst_144 = arith.constant dense<0.000000e+00> : vector<1x256xf32>
    %234 = tpu.matmul %231, %233, %cst_144 {dimension_numbers = #tpu.dot_dimension_numbers<[1], [0], [0], [1], [0, 0, 1, 1], [], []>} : vector<1x384xbf16>, vector<384x256xbf16>, vector<1x256xf32> -> vector<1x256xf32>
    %235 = arith.addf %229, %234 : vector<1x256xf32>
    %236 = vector.extract_strided_slice %218 {offsets = [3, 0], sizes = [1, 384], strides = [1, 1]} : vector<5x384xf32> to vector<1x384xf32>
    %237 = arith.truncf %236 : vector<1x384xf32> to vector<1x384xbf16>
    %c3 = arith.constant 3 : index
    %c0_145 = arith.constant 0 : index
    %c0_146 = arith.constant 0 : index
    %238 = vector.load %arg3[%c3, %c0_145, %c0_146] : memref<5x384x256xbf16, #tpu.memory_space<vmem>>, vector<1x384x256xbf16>
    %239 = vector.shape_cast %238 : vector<1x384x256xbf16> to vector<384x256xbf16>
    %cst_147 = arith.constant dense<0.000000e+00> : vector<1x256xf32>
    %240 = tpu.matmul %237, %239, %cst_147 {dimension_numbers = #tpu.dot_dimension_numbers<[1], [0], [0], [1], [0, 0, 1, 1], [], []>} : vector<1x384xbf16>, vector<384x256xbf16>, vector<1x256xf32> -> vector<1x256xf32>
    %241 = arith.addf %235, %240 : vector<1x256xf32>
    %242 = vector.extract_strided_slice %218 {offsets = [4, 0], sizes = [1, 384], strides = [1, 1]} : vector<5x384xf32> to vector<1x384xf32>
    %243 = arith.truncf %242 : vector<1x384xf32> to vector<1x384xbf16>
    %c4 = arith.constant 4 : index
    %c0_148 = arith.constant 0 : index
    %c0_149 = arith.constant 0 : index
    %244 = vector.load %arg3[%c4, %c0_148, %c0_149] : memref<5x384x256xbf16, #tpu.memory_space<vmem>>, vector<1x384x256xbf16>
    %245 = vector.shape_cast %244 : vector<1x384x256xbf16> to vector<384x256xbf16>
    %cst_150 = arith.constant dense<0.000000e+00> : vector<1x256xf32>
    %246 = tpu.matmul %243, %245, %cst_150 {dimension_numbers = #tpu.dot_dimension_numbers<[1], [0], [0], [1], [0, 0, 1, 1], [], []>} : vector<1x384xbf16>, vector<384x256xbf16>, vector<1x256xf32> -> vector<1x256xf32>
    %247 = arith.addf %241, %246 : vector<1x256xf32>
    %248 = arith.addf %247, %202 : vector<1x256xf32>
    %cst_151 = arith.constant 0.000000e+00 : f32
    %249 = vector.broadcast %cst_151 : f32 to vector<1x256xf32>
    %250 = arith.maximumf %248, %249 : vector<1x256xf32>
    %c0_152 = arith.constant 0 : index
    %c0_153 = arith.constant 0 : index
    %251 = vector.load %arg20[%c0_152, %c0_153] : memref<2x256xf32, #tpu.memory_space<vmem>>, vector<1x256xf32>
    tpu.vector_store %arg20[%c0_152, %c0_153], %250 {strides = array<i32>} : memref<2x256xf32, #tpu.memory_space<vmem>>, vector<1x256xf32>,
    %c1_154 = arith.constant 1 : index
    %c0_155 = arith.constant 0 : index
    %c0_156 = arith.constant 0 : index
    %252 = vector.load %arg19[%c1_154, %c0_155, %c0_156] : memref<2x11x768xf32, #tpu.memory_space<vmem>>, vector<1x11x768xf32>
    %253 = vector.shape_cast %252 : vector<1x11x768xf32> to vector<11x768xf32>
    %254 = vector.broadcast %198 : vector<1x768xf32> to vector<11x768xf32>
    %255 = arith.mulf %253, %254 : vector<11x768xf32>
    %256 = vector.broadcast %201 : vector<1x768xf32> to vector<11x768xf32>
    %257 = arith.addf %255, %256 : vector<11x768xf32>
    %cst_157 = arith.constant 0.000000e+00 : f32
    %258 = vector.broadcast %cst_157 : f32 to vector<11x768xf32>
    %259 = arith.maximumf %257, %258 : vector<11x768xf32>
    %260 = vector.extract_strided_slice %259 {offsets = [0, 0], sizes = [11, 384], strides = [1, 1]} : vector<11x768xf32> to vector<11x384xf32>
    %261 = vector.extract_strided_slice %259 {offsets = [0, 384], sizes = [11, 384], strides = [1, 1]} : vector<11x768xf32> to vector<11x384xf32>
    %262 = arith.maximumf %260, %261 : vector<11x384xf32>
    %263 = arith.truncf %262 : vector<11x384xf32> to vector<11x384xbf16>
    %cst_158 = arith.constant dense<0.000000e+00> : vector<10x384xf32>
    %264 = tpu.matmul %87, %263, %cst_158 {dimension_numbers = #tpu.dot_dimension_numbers<[1], [0], [0], [1], [0, 0, 1, 1], [], []>} : vector<10x11xbf16>, vector<11x384xbf16>, vector<10x384xf32> -> vector<10x384xf32>
    %265 = vector.extract_strided_slice %264 {offsets = [0, 0], sizes = [5, 384], strides = [1, 1]} : vector<10x384xf32> to vector<5x384xf32>
    %266 = vector.extract_strided_slice %264 {offsets = [5, 0], sizes = [5, 384], strides = [1, 1]} : vector<10x384xf32> to vector<5x384xf32>
    %267 = arith.maximumf %265, %266 : vector<5x384xf32>
    %268 = vector.extract_strided_slice %267 {offsets = [0, 0], sizes = [1, 384], strides = [1, 1]} : vector<5x384xf32> to vector<1x384xf32>
    %269 = arith.truncf %268 : vector<1x384xf32> to vector<1x384xbf16>
    %c0_159 = arith.constant 0 : index
    %c0_160 = arith.constant 0 : index
    %c0_161 = arith.constant 0 : index
    %270 = vector.load %arg3[%c0_159, %c0_160, %c0_161] : memref<5x384x256xbf16, #tpu.memory_space<vmem>>, vector<1x384x256xbf16>
    %271 = vector.shape_cast %270 : vector<1x384x256xbf16> to vector<384x256xbf16>
    %cst_162 = arith.constant dense<0.000000e+00> : vector<1x256xf32>
    %272 = tpu.matmul %269, %271, %cst_162 {dimension_numbers = #tpu.dot_dimension_numbers<[1], [0], [0], [1], [0, 0, 1, 1], [], []>} : vector<1x384xbf16>, vector<384x256xbf16>, vector<1x256xf32> -> vector<1x256xf32>
    %273 = vector.extract_strided_slice %267 {offsets = [1, 0], sizes = [1, 384], strides = [1, 1]} : vector<5x384xf32> to vector<1x384xf32>
    %274 = arith.truncf %273 : vector<1x384xf32> to vector<1x384xbf16>
    %c1_163 = arith.constant 1 : index
    %c0_164 = arith.constant 0 : index
    %c0_165 = arith.constant 0 : index
    %275 = vector.load %arg3[%c1_163, %c0_164, %c0_165] : memref<5x384x256xbf16, #tpu.memory_space<vmem>>, vector<1x384x256xbf16>
    %276 = vector.shape_cast %275 : vector<1x384x256xbf16> to vector<384x256xbf16>
    %cst_166 = arith.constant dense<0.000000e+00> : vector<1x256xf32>
    %277 = tpu.matmul %274, %276, %cst_166 {dimension_numbers = #tpu.dot_dimension_numbers<[1], [0], [0], [1], [0, 0, 1, 1], [], []>} : vector<1x384xbf16>, vector<384x256xbf16>, vector<1x256xf32> -> vector<1x256xf32>
    %278 = arith.addf %272, %277 : vector<1x256xf32>
    %279 = vector.extract_strided_slice %267 {offsets = [2, 0], sizes = [1, 384], strides = [1, 1]} : vector<5x384xf32> to vector<1x384xf32>
    %280 = arith.truncf %279 : vector<1x384xf32> to vector<1x384xbf16>
    %c2_167 = arith.constant 2 : index
    %c0_168 = arith.constant 0 : index
    %c0_169 = arith.constant 0 : index
    %281 = vector.load %arg3[%c2_167, %c0_168, %c0_169] : memref<5x384x256xbf16, #tpu.memory_space<vmem>>, vector<1x384x256xbf16>
    %282 = vector.shape_cast %281 : vector<1x384x256xbf16> to vector<384x256xbf16>
    %cst_170 = arith.constant dense<0.000000e+00> : vector<1x256xf32>
    %283 = tpu.matmul %280, %282, %cst_170 {dimension_numbers = #tpu.dot_dimension_numbers<[1], [0], [0], [1], [0, 0, 1, 1], [], []>} : vector<1x384xbf16>, vector<384x256xbf16>, vector<1x256xf32> -> vector<1x256xf32>
    %284 = arith.addf %278, %283 : vector<1x256xf32>
    %285 = vector.extract_strided_slice %267 {offsets = [3, 0], sizes = [1, 384], strides = [1, 1]} : vector<5x384xf32> to vector<1x384xf32>
    %286 = arith.truncf %285 : vector<1x384xf32> to vector<1x384xbf16>
    %c3_171 = arith.constant 3 : index
    %c0_172 = arith.constant 0 : index
    %c0_173 = arith.constant 0 : index
    %287 = vector.load %arg3[%c3_171, %c0_172, %c0_173] : memref<5x384x256xbf16, #tpu.memory_space<vmem>>, vector<1x384x256xbf16>
    %288 = vector.shape_cast %287 : vector<1x384x256xbf16> to vector<384x256xbf16>
    %cst_174 = arith.constant dense<0.000000e+00> : vector<1x256xf32>
    %289 = tpu.matmul %286, %288, %cst_174 {dimension_numbers = #tpu.dot_dimension_numbers<[1], [0], [0], [1], [0, 0, 1, 1], [], []>} : vector<1x384xbf16>, vector<384x256xbf16>, vector<1x256xf32> -> vector<1x256xf32>
    %290 = arith.addf %284, %289 : vector<1x256xf32>
    %291 = vector.extract_strided_slice %267 {offsets = [4, 0], sizes = [1, 384], strides = [1, 1]} : vector<5x384xf32> to vector<1x384xf32>
    %292 = arith.truncf %291 : vector<1x384xf32> to vector<1x384xbf16>
    %c4_175 = arith.constant 4 : index
    %c0_176 = arith.constant 0 : index
    %c0_177 = arith.constant 0 : index
    %293 = vector.load %arg3[%c4_175, %c0_176, %c0_177] : memref<5x384x256xbf16, #tpu.memory_space<vmem>>, vector<1x384x256xbf16>
    %294 = vector.shape_cast %293 : vector<1x384x256xbf16> to vector<384x256xbf16>
    %cst_178 = arith.constant dense<0.000000e+00> : vector<1x256xf32>
    %295 = tpu.matmul %292, %294, %cst_178 {dimension_numbers = #tpu.dot_dimension_numbers<[1], [0], [0], [1], [0, 0, 1, 1], [], []>} : vector<1x384xbf16>, vector<384x256xbf16>, vector<1x256xf32> -> vector<1x256xf32>
    %296 = arith.addf %290, %295 : vector<1x256xf32>
    %297 = arith.addf %296, %202 : vector<1x256xf32>
    %cst_179 = arith.constant 0.000000e+00 : f32
    %298 = vector.broadcast %cst_179 : f32 to vector<1x256xf32>
    %299 = arith.maximumf %297, %298 : vector<1x256xf32>
    %c1_180 = arith.constant 1 : index
    %c0_181 = arith.constant 0 : index
    %300 = vector.load %arg20[%c1_180, %c0_181] : memref<2x256xf32, #tpu.memory_space<vmem>>, vector<1x256xf32>
    tpu.vector_store %arg20[%c1_180, %c0_181], %299 {strides = array<i32>} : memref<2x256xf32, #tpu.memory_space<vmem>>, vector<1x256xf32>,
    %c0_182 = arith.constant 0 : index
    %c0_183 = arith.constant 0 : index
    %301 = vector.load %arg20[%c0_182, %c0_183] : memref<2x256xf32, #tpu.memory_space<vmem>>, vector<2x256xf32>
    %c0_184 = arith.constant 0 : index
    %c0_185 = arith.constant 0 : index
    %302 = vector.load %arg15[%c0_184, %c0_185] : memref<256x10xf32, #tpu.memory_space<vmem>>, vector<256x10xf32>
    %cst_186 = arith.constant dense<0.000000e+00> : vector<2x10xf32>
    %303 = tpu.matmul %301, %302, %cst_186 {dimension_numbers = #tpu.dot_dimension_numbers<[1], [0], [0], [1], [0, 0, 1, 1], [], []>} : vector<2x256xf32>, vector<256x10xf32>, vector<2x10xf32> -> vector<2x10xf32>
    %c0_187 = arith.constant 0 : index
    %c0_188 = arith.constant 0 : index
    %304 = vector.load %arg16[%c0_187, %c0_188] : memref<1x10xf32, #tpu.memory_space<vmem>>, vector<1x10xf32>
    %305 = vector.broadcast %304 : vector<1x10xf32> to vector<2x10xf32>
    %306 = arith.addf %303, %305 : vector<2x10xf32>
    %c0_189 = arith.constant 0 : index
    %c0_190 = arith.constant 0 : index
    %307 = vector.load %arg17[%c0_189, %c0_190] : memref<2x10xf32, #tpu.memory_space<vmem>>, vector<2x10xf32>
    tpu.vector_store %arg17[%c0_189, %c0_190], %306 {strides = array<i32>} : memref<2x10xf32, #tpu.memory_space<vmem>>, vector<2x10xf32>,
    return
  }
}

</mosaic_0001>

<llo_original>
// kernel: model_forward.1
$region0: #{model_forward.1}
  #allocation0 [shape = 'u32[]', space=smem, size = 0x4, offset = 0x4, fixed_abs, tag = 'smem constant byte address 0x4 - core index']
  #allocation1 [shape = 'u32[72,128]{1,0:T(1,128)}', space=vmem, size = 0x9000, scoped, tag = 'internal scratch']
  #allocation2 [shape = 'f32[2,26,512]{2,1,0:T(8,128)}', space=vmem, size = 0x20000, scoped, tag = 'scratch operand']
  #allocation3 [shape = 'f32[2,11,768]{2,1,0:T(8,128)}', space=vmem, size = 0x18000, scoped, tag = 'scratch operand']
  #allocation4 [shape = 'f32[2,256]{1,0:T(2,128)}', space=vmem, size = 0x800, scoped, tag = 'scratch operand']
  %s0 = inlined_call_operand.vmem [shape: f32[2,28,28], index: 0, kind: input, shape index: {}]
  %s1 = inlined_call_operand.hbm [shape: bf16[3,28,512], index: 1, kind: input, shape index: {}]
  %s2 = inlined_call_operand.hbm [shape: bf16[3,256,768], index: 2, kind: input, shape index: {}]
  %s3 = inlined_call_operand.hbm [shape: bf16[5,384,256], index: 3, kind: input, shape index: {}]
  %s4 = inlined_call_operand.vmem [shape: bf16[512,16], index: 4, kind: input, shape index: {}]
  %s5 = inlined_call_operand.hbm [shape: bf16[16,512], index: 5, kind: input, shape index: {}]
  %s6 = inlined_call_operand.vmem [shape: bf16[768,64], index: 6, kind: input, shape index: {}]
  %s7 = inlined_call_operand.hbm [shape: bf16[64,768], index: 7, kind: input, shape index: {}]
  %s8 = inlined_call_operand.hbm [shape: bf16[26,26], index: 8, kind: input, shape index: {}]
  %s9 = inlined_call_operand.hbm [shape: bf16[10,11], index: 9, kind: input, shape index: {}]
  %s10 = inlined_call_operand.hbm [shape: f32[1,16], index: 10, kind: input, shape index: {}]
  %s11 = inlined_call_operand.hbm [shape: f32[1,16], index: 11, kind: input, shape index: {}]
  %s12 = inlined_call_operand.hbm [shape: f32[1,64], index: 12, kind: input, shape index: {}]
  %s13 = inlined_call_operand.hbm [shape: f32[1,64], index: 13, kind: input, shape index: {}]
  %s14 = inlined_call_operand.hbm [shape: f32[1,256], index: 14, kind: input, shape index: {}]
  %s15 = inlined_call_operand.vmem [shape: f32[256,10], index: 15, kind: input, shape index: {}]
  %s16 = inlined_call_operand.hbm [shape: f32[1,10], index: 16, kind: input, shape index: {}]
  %s17 = inlined_call_operand.hbm [shape: f32[2,10], index: 17, kind: output, shape index: {}]
  %s18 = sld [smem:[#allocation0]]
  $region130: #{model_forward.1} parent=0
    _
  %s20 = ssub.s32 1, %s18
  %s21 = scalar_select 0, %s20, %s18
  $region1: #{model_forward.1} parent=0
    #allocation5 [shape = 'u8[98304]{0}', space=vmem, size = 0x18000, scoped, tag = 'input window, operand 1, single buffered']
    #allocation6 [shape = 's32[1]{0}', space=sflag, size = 0x4, scoped, tag = 'scoped memory for model_forward.1']
    #allocation7 [shape = 's32[1]{0}', space=sflag, size = 0x4, scoped, tag = 'scoped memory for model_forward.1']
    #allocation8 [shape = 'u8[1179648]{0}', space=vmem, size = 0x120000, scoped, tag = 'input window, operand 2, single buffered']
    #allocation9 [shape = 's32[1]{0}', space=sflag, size = 0x4, scoped, tag = 'scoped memory for model_forward.1']
    #allocation10 [shape = 'u8[983040]{0}', space=vmem, size = 0xf0000, scoped, tag = 'input window, operand 3, single buffered']
    #allocation11 [shape = 'u8[16384]{0}', space=vmem, size = 0x4000, scoped, tag = 'input window, operand 5, single buffered']
    #allocation12 [shape = 's32[1]{0}', space=sflag, size = 0x4, scoped, tag = 'scoped memory for model_forward.1']
    #allocation13 [shape = 'u8[98304]{0}', space=vmem, size = 0x18000, scoped, tag = 'input window, operand 7, single buffered']
    #allocation14 [shape = 'u8[8192]{0}', space=vmem, size = 0x2000, scoped, tag = 'input window, operand 8, single buffered']
    #allocation15 [shape = 's32[1]{0}', space=sflag, size = 0x4, scoped, tag = 'scoped memory for model_forward.1']
    #allocation16 [shape = 'u8[4096]{0}', space=vmem, size = 0x1000, scoped, tag = 'input window, operand 9, single buffered']
    #allocation17 [shape = 'u8[512]{0}', space=vmem, size = 0x400, scoped, tag = 'input window, operand 10, single buffered']
    #allocation18 [shape = 's32[1]{0}', space=sflag, size = 0x4, scoped, tag = 'scoped memory for model_forward.1']
    #allocation19 [shape = 'u8[512]{0}', space=vmem, size = 0x400, scoped, tag = 'input window, operand 11, single buffered']
    #allocation20 [shape = 'u8[512]{0}', space=vmem, size = 0x400, scoped, tag = 'input window, operand 12, single buffered']
    #allocation21 [shape = 's32[1]{0}', space=sflag, size = 0x4, scoped, tag = 'scoped memory for model_forward.1']
    #allocation22 [shape = 'u8[512]{0}', space=vmem, size = 0x400, scoped, tag = 'input window, operand 13, single buffered']
    #allocation23 [shape = 'u8[1024]{0}', space=vmem, size = 0x400, scoped, tag = 'input window, operand 14, single buffered']
    #allocation24 [shape = 's32[1]{0}', space=sflag, size = 0x4, scoped, tag = 'scoped memory for model_forward.1']
    #allocation25 [shape = 'u8[512]{0}', space=vmem, size = 0x400, scoped, tag = 'input window, operand 16, single buffered']
    #allocation26 [shape = 'u8[1024]{0}', space=vmem, size = 0x400, scoped, tag = 'output window, operand 0, single buffered']
    %22 = vsyncpa [#allocation6], 0
    %23 = vsyncpa [#allocation9], 0
    %24 = vsyncpa [#allocation12], 0
    %25 = vsyncpa [#allocation15], 0
    %26 = vsyncpa [#allocation18], 0
    %27 = vsyncpa [#allocation21], 0
    %28 = vsyncpa [#allocation24], 0
    %29 = vsyncpa [#allocation7], 0
    // Predicated region
    $region2: #{model_forward.1} parent=1 // pred_check
      _
    $region3: #{model_forward.1} parent=1 // pred_check_branch
      %31 = sbr.rel (0) target = $region5
    $region4: #{model_forward.1} parent=1 // pred_region
      _
    $region5: #{model_forward.1} parent=1 // pred_fallthru
      _
    // Predicated region
    $region6: #{model_forward.1} parent=1 // pred_check
      _
    $region7: #{model_forward.1} parent=1 // pred_check_branch
      %33 = sbr.rel (0) target = $region9
    $region8: #{model_forward.1} parent=1 // pred_region
      %35 = vsyncadd [#allocation6], 0
      %s36 = sshll.u32 %s1, 4
      %s37 = int_to_ptr.hbm [resolvable:$true] %s36
      %s38 = sshll.u32 [#allocation5], 4
      %s39 = int_to_ptr.vmem [resolvable:$true] %s38
      %44 = dma.hbm_to_vmem [thread:$0]  %s37, 3072, %s39, [#allocation6], 256, 256, 16
    $region9: #{model_forward.1} parent=1 // pred_fallthru
      _
    // Predicated region
    $region10: #{model_forward.1} parent=1 // pred_check
      _
    $region11: #{model_forward.1} parent=1 // pred_check_branch
      %46 = sbr.rel (0) target = $region13
    $region12: #{model_forward.1} parent=1 // pred_region
      %48 = vsyncadd [#allocation9], 0
      %s49 = sshll.u32 %s2, 4
      %s50 = int_to_ptr.hbm [resolvable:$true] %s49
      %s51 = sshll.u32 [#allocation8], 4
      %s52 = int_to_ptr.vmem [resolvable:$true] %s51
      %57 = dma.hbm_to_vmem [thread:$0]  %s50, 36864, %s52, [#allocation9], 384, 384, 24
    $region13: #{model_forward.1} parent=1 // pred_fallthru
      _
    // Predicated region
    $region14: #{model_forward.1} parent=1 // pred_check
      _
    $region15: #{model_forward.1} parent=1 // pred_check_branch
      %59 = sbr.rel (0) target = $region17
    $region16: #{model_forward.1} parent=1 // pred_region
      %61 = vsyncadd [#allocation9], 0
      %s62 = sshll.u32 %s3, 4
      %s63 = int_to_ptr.hbm [resolvable:$true] %s62
      %s64 = sshll.u32 [#allocation10], 4
      %s65 = int_to_ptr.vmem [resolvable:$true] %s64
      %70 = dma.hbm_to_vmem [thread:$0]  %s63, 30720, %s65, [#allocation9], 128, 128, 8
    $region17: #{model_forward.1} parent=1 // pred_fallthru
      _
    // Predicated region
    $region18: #{model_forward.1} parent=1 // pred_check
      _
    $region19: #{model_forward.1} parent=1 // pred_check_branch
      %72 = sbr.rel (0) target = $region21
    $region20: #{model_forward.1} parent=1 // pred_region
      _
    $region21: #{model_forward.1} parent=1 // pred_fallthru
      _
    // Predicated region
    $region22: #{model_forward.1} parent=1 // pred_check
      _
    $region23: #{model_forward.1} parent=1 // pred_check_branch
      %74 = sbr.rel (0) target = $region25
    $region24: #{model_forward.1} parent=1 // pred_region
      %76 = vsyncadd [#allocation12], 0
      %s77 = sshll.u32 %s5, 4
      %s78 = int_to_ptr.hbm [resolvable:$true] %s77
      %s79 = sshll.u32 [#allocation11], 4
      %s80 = int_to_ptr.vmem [resolvable:$true] %s79
      %85 = dma.hbm_to_vmem [thread:$0]  %s78, 512, %s80, [#allocation12], 256, 256, 16
    $region25: #{model_forward.1} parent=1 // pred_fallthru
      _
    // Predicated region
    $region26: #{model_forward.1} parent=1 // pred_check
      _
    $region27: #{model_forward.1} parent=1 // pred_check_branch
      %87 = sbr.rel (0) target = $region29
    $region28: #{model_forward.1} parent=1 // pred_region
      _
    $region29: #{model_forward.1} parent=1 // pred_fallthru
      _
    // Predicated region
    $region30: #{model_forward.1} parent=1 // pred_check
      _
    $region31: #{model_forward.1} parent=1 // pred_check_branch
      %89 = sbr.rel (0) target = $region33
    $region32: #{model_forward.1} parent=1 // pred_region
      %91 = vsyncadd [#allocation12], 0
      %s92 = sshll.u32 %s7, 4
      %s93 = int_to_ptr.hbm [resolvable:$true] %s92
      %s94 = sshll.u32 [#allocation13], 4
      %s95 = int_to_ptr.vmem [resolvable:$true] %s94
      %100 = dma.hbm_to_vmem [thread:$0]  %s93, 3072, %s95, [#allocation12], 384, 384, 24
    $region33: #{model_forward.1} parent=1 // pred_fallthru
      _
    // Predicated region
    $region34: #{model_forward.1} parent=1 // pred_check
      _
    $region35: #{model_forward.1} parent=1 // pred_check_branch
      %102 = sbr.rel (0) target = $region37
    $region36: #{model_forward.1} parent=1 // pred_region
      %104 = vsyncadd [#allocation15], 0
      %s105 = sshll.u32 %s8, 4
      %s106 = int_to_ptr.hbm [resolvable:$true] %s105
      %s107 = sshll.u32 [#allocation14], 4
      %s108 = int_to_ptr.vmem [resolvable:$true] %s107
      %113 = dma.hbm_to_vmem [thread:$0]  %s106, 256, %s108, [#allocation15], 64, 64, 4
    $region37: #{model_forward.1} parent=1 // pred_fallthru
      _
    // Predicated region
    $region38: #{model_forward.1} parent=1 // pred_check
      _
    $region39: #{model_forward.1} parent=1 // pred_check_branch
      %115 = sbr.rel (0) target = $region41
    $region40: #{model_forward.1} parent=1 // pred_region
      %117 = vsyncadd [#allocation15], 0
      %s118 = sshll.u32 %s9, 4
      %s119 = int_to_ptr.hbm [resolvable:$true] %s118
      %s120 = sshll.u32 [#allocation16], 4
      %s121 = int_to_ptr.vmem [resolvable:$true] %s120
      %126 = dma.hbm_to_vmem [thread:$0]  %s119, 128, %s121, [#allocation15], 64, 64, 4
    $region41: #{model_forward.1} parent=1 // pred_fallthru
      _
    // Predicated region
    $region42: #{model_forward.1} parent=1 // pred_check
      _
    $region43: #{model_forward.1} parent=1 // pred_check_branch
      %128 = sbr.rel (0) target = $region45
    $region44: #{model_forward.1} parent=1 // pred_region
      %130 = vsyncadd [#allocation18], 0
      %s132 = sshll.u32 %s10, 4
      %s133 = int_to_ptr.hbm [resolvable:$true] %s132
      %s134 = sshll.u32 [#allocation17], 4
      %s135 = int_to_ptr.vmem [resolvable:$true] %s134
      %137 = dma.hbm_to_vmem [thread:$0]  %s133, 16, %s135, [#allocation18]
    $region45: #{model_forward.1} parent=1 // pred_fallthru
      _
    // Predicated region
    $region46: #{model_forward.1} parent=1 // pred_check
      _
    $region47: #{model_forward.1} parent=1 // pred_check_branch
      %139 = sbr.rel (0) target = $region49
    $region48: #{model_forward.1} parent=1 // pred_region
      %141 = vsyncadd [#allocation18], 0
      %s143 = sshll.u32 %s11, 4
      %s144 = int_to_ptr.hbm [resolvable:$true] %s143
      %s145 = sshll.u32 [#allocation19], 4
      %s146 = int_to_ptr.vmem [resolvable:$true] %s145
      %148 = dma.hbm_to_vmem [thread:$0]  %s144, 16, %s146, [#allocation18]
    $region49: #{model_forward.1} parent=1 // pred_fallthru
      _
    // Predicated region
    $region50: #{model_forward.1} parent=1 // pred_check
      _
    $region51: #{model_forward.1} parent=1 // pred_check_branch
      %150 = sbr.rel (0) target = $region53
    $region52: #{model_forward.1} parent=1 // pred_region
      %152 = vsyncadd [#allocation21], 0
      %s154 = sshll.u32 %s12, 4
      %s155 = int_to_ptr.hbm [resolvable:$true] %s154
      %s156 = sshll.u32 [#allocation20], 4
      %s157 = int_to_ptr.vmem [resolvable:$true] %s156
      %159 = dma.hbm_to_vmem [thread:$0]  %s155, 16, %s157, [#allocation21]
    $region53: #{model_forward.1} parent=1 // pred_fallthru
      _
    // Predicated region
    $region54: #{model_forward.1} parent=1 // pred_check
      _
    $region55: #{model_forward.1} parent=1 // pred_check_branch
      %161 = sbr.rel (0) target = $region57
    $region56: #{model_forward.1} parent=1 // pred_region
      %163 = vsyncadd [#allocation21], 0
      %s165 = sshll.u32 %s13, 4
      %s166 = int_to_ptr.hbm [resolvable:$true] %s165
      %s167 = sshll.u32 [#allocation22], 4
      %s168 = int_to_ptr.vmem [resolvable:$true] %s167
      %170 = dma.hbm_to_vmem [thread:$0]  %s166, 16, %s168, [#allocation21]
    $region57: #{model_forward.1} parent=1 // pred_fallthru
      _
    // Predicated region
    $region58: #{model_forward.1} parent=1 // pred_check
      _
    $region59: #{model_forward.1} parent=1 // pred_check_branch
      %172 = sbr.rel (0) target = $region61
    $region60: #{model_forward.1} parent=1 // pred_region
      %174 = vsyncadd [#allocation24], 0
      %s176 = sshll.u32 %s14, 4
      %s177 = int_to_ptr.hbm [resolvable:$true] %s176
      %s178 = sshll.u32 [#allocation23], 4
      %s179 = int_to_ptr.vmem [resolvable:$true] %s178
      %181 = dma.hbm_to_vmem [thread:$0]  %s177, 32, %s179, [#allocation24]
    $region61: #{model_forward.1} parent=1 // pred_fallthru
      _
    // Predicated region
    $region62: #{model_forward.1} parent=1 // pred_check
      _
    $region63: #{model_forward.1} parent=1 // pred_check_branch
      %183 = sbr.rel (0) target = $region65
    $region64: #{model_forward.1} parent=1 // pred_region
      _
    $region65: #{model_forward.1} parent=1 // pred_fallthru
      _
    // Predicated region
    $region66: #{model_forward.1} parent=1 // pred_check
      _
    $region67: #{model_forward.1} parent=1 // pred_check_branch
      %185 = sbr.rel (0) target = $region69
    $region68: #{model_forward.1} parent=1 // pred_region
      %187 = vsyncadd [#allocation24], 0
      %s189 = sshll.u32 %s16, 4
      %s190 = int_to_ptr.hbm [resolvable:$true] %s189
      %s191 = sshll.u32 [#allocation25], 4
      %s192 = int_to_ptr.vmem [resolvable:$true] %s191
      %194 = dma.hbm_to_vmem [thread:$0]  %s190, 16, %s192, [#allocation24]
    $region69: #{model_forward.1} parent=1 // pred_fallthru
      _
    // Predicated region
    $region70: #{model_forward.1} parent=1 // pred_check
      _
    $region71: #{model_forward.1} parent=1 // pred_check_branch
      %196 = sbr.rel (0) target = $region73
    $region72: #{model_forward.1} parent=1 // pred_region
      %198 = dma.done [#allocation6], 3072
    $region73: #{model_forward.1} parent=1 // pred_fallthru
      _
    // Predicated region
    $region74: #{model_forward.1} parent=1 // pred_check
      _
    $region75: #{model_forward.1} parent=1 // pred_check_branch
      %200 = sbr.rel (0) target = $region77
    $region76: #{model_forward.1} parent=1 // pred_region
      %202 = dma.done [#allocation9], 36864
    $region77: #{model_forward.1} parent=1 // pred_fallthru
      _
    // Predicated region
    $region78: #{model_forward.1} parent=1 // pred_check
      _
    $region79: #{model_forward.1} parent=1 // pred_check_branch
      %204 = sbr.rel (0) target = $region81
    $region80: #{model_forward.1} parent=1 // pred_region
      %206 = dma.done [#allocation9], 30720
    $region81: #{model_forward.1} parent=1 // pred_fallthru
      _
    // Predicated region
    $region82: #{model_forward.1} parent=1 // pred_check
      _
    $region83: #{model_forward.1} parent=1 // pred_check_branch
      %208 = sbr.rel (0) target = $region85
    $region84: #{model_forward.1} parent=1 // pred_region
      %210 = dma.done [#allocation12], 512
    $region85: #{model_forward.1} parent=1 // pred_fallthru
      _
    // Predicated region
    $region86: #{model_forward.1} parent=1 // pred_check
      _
    $region87: #{model_forward.1} parent=1 // pred_check_branch
      %212 = sbr.rel (0) target = $region89
    $region88: #{model_forward.1} parent=1 // pred_region
      %214 = dma.done [#allocation12], 3072
    $region89: #{model_forward.1} parent=1 // pred_fallthru
      _
    // Predicated region
    $region90: #{model_forward.1} parent=1 // pred_check
      _
    $region91: #{model_forward.1} parent=1 // pred_check_branch
      %216 = sbr.rel (0) target = $region93
    $region92: #{model_forward.1} parent=1 // pred_region
      %218 = dma.done [#allocation15], 256
    $region93: #{model_forward.1} parent=1 // pred_fallthru
      _
    // Predicated region
    $region94: #{model_forward.1} parent=1 // pred_check
      _
    $region95: #{model_forward.1} parent=1 // pred_check_branch
      %220 = sbr.rel (0) target = $region97
    $region96: #{model_forward.1} parent=1 // pred_region
      %222 = dma.done [#allocation15], 128
    $region97: #{model_forward.1} parent=1 // pred_fallthru
      _
    // Predicated region
    $region98: #{model_forward.1} parent=1 // pred_check
      _
    $region99: #{model_forward.1} parent=1 // pred_check_branch
      %224 = sbr.rel (0) target = $region101
    $region100: #{model_forward.1} parent=1 // pred_region
      %226 = dma.done [#allocation18], 16
    $region101: #{model_forward.1} parent=1 // pred_fallthru
      _
    // Predicated region
    $region102: #{model_forward.1} parent=1 // pred_check
      _
    $region103: #{model_forward.1} parent=1 // pred_check_branch
      %228 = sbr.rel (0) target = $region105
    $region104: #{model_forward.1} parent=1 // pred_region
      %230 = dma.done [#allocation18], 16
    $region105: #{model_forward.1} parent=1 // pred_fallthru
      _
    // Predicated region
    $region106: #{model_forward.1} parent=1 // pred_check
      _
    $region107: #{model_forward.1} parent=1 // pred_check_branch
      %232 = sbr.rel (0) target = $region109
    $region108: #{model_forward.1} parent=1 // pred_region
      %234 = dma.done [#allocation21], 16
    $region109: #{model_forward.1} parent=1 // pred_fallthru
      _
    // Predicated region
    $region110: #{model_forward.1} parent=1 // pred_check
      _
    $region111: #{model_forward.1} parent=1 // pred_check_branch
      %236 = sbr.rel (0) target = $region113
    $region112: #{model_forward.1} parent=1 // pred_region
      %238 = dma.done [#allocation21], 16
    $region113: #{model_forward.1} parent=1 // pred_fallthru
      _
    // Predicated region
    $region114: #{model_forward.1} parent=1 // pred_check
      _
    $region115: #{model_forward.1} parent=1 // pred_check_branch
      %240 = sbr.rel (0) target = $region117
    $region116: #{model_forward.1} parent=1 // pred_region
      %242 = dma.done [#allocation24], 32
    $region117: #{model_forward.1} parent=1 // pred_fallthru
      _
    // Predicated region
    $region118: #{model_forward.1} parent=1 // pred_check
      _
    $region119: #{model_forward.1} parent=1 // pred_check_branch
      %244 = sbr.rel (0) target = $region121
    $region120: #{model_forward.1} parent=1 // pred_region
      %246 = dma.done [#allocation24], 16
    $region121: #{model_forward.1} parent=1 // pred_fallthru
      _
    %v248 = vld [vmem:[%s0] sm:$0xff]
    %v249 = vld [vmem:[%s0 + $0x8] sm:$0xff]
    %v250 = vld [vmem:[%s0 + $0x10] sm:$0xff]
    %v251 = vld [vmem:[%s0 + $0x18] sm:$0xf]
    %v252 = vpack.c.bf16 %v249, %v248
    %v253 = vpack.c.bf16 %v251, %v250
    %v254 = vld [vmem:[#allocation5] sm:$0xff]
    %v255 = vld [vmem:[#allocation5 + $0x8] sm:$0xff]
    %v256 = vld [vmem:[#allocation5 + $0x10] sm:$0xff]
    %v257 = vld [vmem:[#allocation5 + $0x18] sm:$0xff]
    %v258 = vld [vmem:[#allocation5 + $0x20] sm:$0xff]
    %v259 = vld [vmem:[#allocation5 + $0x28] sm:$0xff]
    %v260 = vld [vmem:[#allocation5 + $0x30] sm:$0x33]
    %v261 = vld [vmem:[#allocation5 + $0x38] sm:$0x33]
    %s262 = scalar_lea.vmem [#allocation5], 64
    %v263 = vld [vmem:[%s262] sm:$0xff]
    %v264 = vld [vmem:[%s262 + $0x8] sm:$0xff]
    %v265 = vld [vmem:[%s262 + $0x10] sm:$0xff]
    %v266 = vld [vmem:[%s262 + $0x18] sm:$0xff]
    %v267 = vld [vmem:[%s262 + $0x20] sm:$0xff]
    %v268 = vld [vmem:[%s262 + $0x28] sm:$0xff]
    %v269 = vld [vmem:[%s262 + $0x30] sm:$0x33]
    %v270 = vld [vmem:[%s262 + $0x38] sm:$0x33]
    %vm271 = vsmask.f32 7424
    %v273 = vshrl.u32 %v252, 16
    %v275 = vshll.u32 %v252, 16
    %v277 = vrot.slane %v275, 1
    %v278 = vor.u32 %v273, %v277
    %v280 = vshll.u32 %v253, 16
    %v282 = vrot.slane %v280, 1
    %v283 = vsel %vm271, %v278, %v282
    %v284 = vshrl.u32 %v253, 16
    %v286 = vor.u32 %v284, %v282
    %v295 = vunpack.c.l.b16 %v263
    %v296 = vunpack.c.h.b16 %v263
    %v297 = vunpack.c.l.b16 %v264
    %v298 = vunpack.c.h.b16 %v264
    %v299 = vunpack.c.l.b16 %v265
    %v300 = vunpack.c.h.b16 %v265
    %v301 = vunpack.c.l.b16 %v266
    %v302 = vunpack.c.h.b16 %v266
    %v303 = vunpack.c.l.b16 %v267
    %v304 = vunpack.c.h.b16 %v267
    %v305 = vunpack.c.l.b16 %v268
    %v306 = vunpack.c.h.b16 %v268
    %v307 = vunpack.c.l.b16 %v269
    %v308 = vunpack.c.h.b16 %v269
    %v309 = vunpack.c.l.b16 %v270
    %v310 = vunpack.c.h.b16 %v270
    %v311 = vpack.c.b16 %v299, %v295
    %v312 = vpack.c.b16 %v300, %v296
    %v313 = vpack.c.b16 %v301, %v297
    %v314 = vpack.c.b16 %v302, %v298
    %v315 = vpack.c.b16 %v307, %v303
    %v316 = vpack.c.b16 %v308, %v304
    %v317 = vpack.c.b16 %v309, %v305
    %v318 = vpack.c.b16 %v310, %v306
    %vm323 = vcmask 228352
    %v325 = vsel %vm323, %v283, 0
    %v328 = vsel %vm323, %v286, 0
    %vm330 = vcmask 1045504
    %v332 = vsel %vm330, %v315, 0
    %v335 = vsel %vm330, %v316, 0
    %v338 = vsel %vm330, %v317, 0
    %v341 = vsel %vm330, %v318, 0
    %343 = vmatpush.bf16.msra.mxu0 0
    %344 = vmatpush.bf16.msra.mxu0 0
    %345 = vmatpush.bf16.msra.mxu0 0
    %346 = vmatpush.bf16.msra.mxu0 0
    %347 = vmatpush.bf16.msra.mxu0 0
    %348 = vmatpush.bf16.msra.mxu0 0
    %349 = vmatpush.bf16.msra.mxu0 %v332
    %350 = vmatpush.bf16.msra.mxu0 %v311
    %351 = vmatmul.bf16.gmra.mxu0 %v325
    %v352 = vpop.f32.mrf.mxu0
    %v353 = vadd.f32 0.0, %v352
    %v354 = vpop.f32.mrf.mxu0
    %v355 = vadd.f32 0.0, %v354
    %356 = vmatmul.bf16.gmra.mxu0 %v328
    %v357 = vpop.f32.mrf.mxu0
    %v358 = vadd.f32 0.0, %v357
    %v359 = vpop.f32.mrf.mxu0
    %v360 = vadd.f32 0.0, %v359
    %361 = vdwg.mxu0
    %362 = vmatpush.bf16.msra.mxu0 0
    %363 = vmatpush.bf16.msra.mxu0 0
    %364 = vmatpush.bf16.msra.mxu0 0
    %365 = vmatpush.bf16.msra.mxu0 0
    %366 = vmatpush.bf16.msra.mxu0 0
    %367 = vmatpush.bf16.msra.mxu0 0
    %368 = vmatpush.bf16.msra.mxu0 %v335
    %369 = vmatpush.bf16.msra.mxu0 %v312
    %370 = vmatmul.bf16.gmra.mxu0 %v325
    %v371 = vpop.f32.mrf.mxu0
    %v372 = vadd.f32 0.0, %v371
    %v373 = vpop.f32.mrf.mxu0
    %v374 = vadd.f32 0.0, %v373
    %375 = vmatmul.bf16.gmra.mxu0 %v328
    %v376 = vpop.f32.mrf.mxu0
    %v377 = vadd.f32 0.0, %v376
    %v378 = vpop.f32.mrf.mxu0
    %v379 = vadd.f32 0.0, %v378
    %380 = vdwg.mxu0
    %381 = vmatpush.bf16.msra.mxu0 0
    %382 = vmatpush.bf16.msra.mxu0 0
    %383 = vmatpush.bf16.msra.mxu0 0
    %384 = vmatpush.bf16.msra.mxu0 0
    %385 = vmatpush.bf16.msra.mxu0 0
    %386 = vmatpush.bf16.msra.mxu0 0
    %387 = vmatpush.bf16.msra.mxu0 %v338
    %388 = vmatpush.bf16.msra.mxu0 %v313
    %389 = vmatmul.bf16.gmra.mxu0 %v325
    %v390 = vpop.f32.mrf.mxu0
    %v391 = vadd.f32 0.0, %v390
    %v392 = vpop.f32.mrf.mxu0
    %v393 = vadd.f32 0.0, %v392
    %394 = vmatmul.bf16.gmra.mxu0 %v328
    %v395 = vpop.f32.mrf.mxu0
    %v396 = vadd.f32 0.0, %v395
    %v397 = vpop.f32.mrf.mxu0
    %v398 = vadd.f32 0.0, %v397
    %399 = vdwg.mxu0
    %400 = vmatpush.bf16.msra.mxu0 0
    %401 = vmatpush.bf16.msra.mxu0 0
    %402 = vmatpush.bf16.msra.mxu0 0
    %403 = vmatpush.bf16.msra.mxu0 0
    %404 = vmatpush.bf16.msra.mxu0 0
    %405 = vmatpush.bf16.msra.mxu0 0
    %406 = vmatpush.bf16.msra.mxu0 %v341
    %407 = vmatpush.bf16.msra.mxu0 %v314
    %408 = vmatmul.bf16.gmra.mxu0 %v325
    %v409 = vpop.f32.mrf.mxu0
    %v410 = vadd.f32 0.0, %v409
    %v411 = vpop.f32.mrf.mxu0
    %v412 = vadd.f32 0.0, %v411
    %413 = vmatmul.bf16.gmra.mxu0 %v328
    %v414 = vpop.f32.mrf.mxu0
    %v415 = vadd.f32 0.0, %v414
    %v416 = vpop.f32.mrf.mxu0
    %v417 = vadd.f32 0.0, %v416
    %418 = vdwg.mxu0
    %v427 = vunpack.c.l.b16 %v254
    %v428 = vunpack.c.h.b16 %v254
    %v429 = vunpack.c.l.b16 %v255
    %v430 = vunpack.c.h.b16 %v255
    %v431 = vunpack.c.l.b16 %v256
    %v432 = vunpack.c.h.b16 %v256
    %v433 = vunpack.c.l.b16 %v257
    %v434 = vunpack.c.h.b16 %v257
    %v435 = vunpack.c.l.b16 %v258
    %v436 = vunpack.c.h.b16 %v258
    %v437 = vunpack.c.l.b16 %v259
    %v438 = vunpack.c.h.b16 %v259
    %v439 = vunpack.c.l.b16 %v260
    %v440 = vunpack.c.h.b16 %v260
    %v441 = vunpack.c.l.b16 %v261
    %v442 = vunpack.c.h.b16 %v261
    %v443 = vpack.c.b16 %v431, %v427
    %v444 = vpack.c.b16 %v432, %v428
    %v445 = vpack.c.b16 %v433, %v429
    %v446 = vpack.c.b16 %v434, %v430
    %v447 = vpack.c.b16 %v439, %v435
    %v448 = vpack.c.b16 %v440, %v436
    %v449 = vpack.c.b16 %v441, %v437
    %v450 = vpack.c.b16 %v442, %v438
    %v455 = vsel %vm323, %v252, 0
    %v457 = vsel %vm323, %v253, 0
    %v460 = vsel %vm330, %v447, 0
    %v463 = vsel %vm330, %v448, 0
    %v466 = vsel %vm330, %v449, 0
    %v469 = vsel %vm330, %v450, 0
    %471 = vmatpush.bf16.msra.mxu0 0
    %472 = vmatpush.bf16.msra.mxu0 0
    %473 = vmatpush.bf16.msra.mxu0 0
    %474 = vmatpush.bf16.msra.mxu0 0
    %475 = vmatpush.bf16.msra.mxu0 0
    %476 = vmatpush.bf16.msra.mxu0 0
    %477 = vmatpush.bf16.msra.mxu0 %v460
    %478 = vmatpush.bf16.msra.mxu0 %v443
    %479 = vmatmul.bf16.gmra.mxu0 %v455
    %v480 = vpop.f32.mrf.mxu0
    %v481 = vadd.f32 %v353, %v480
    %v482 = vpop.f32.mrf.mxu0
    %v483 = vadd.f32 %v355, %v482
    %484 = vmatmul.bf16.gmra.mxu0 %v457
    %v485 = vpop.f32.mrf.mxu0
    %v486 = vadd.f32 %v358, %v485
    %v487 = vpop.f32.mrf.mxu0
    %v488 = vadd.f32 %v360, %v487
    %489 = vdwg.mxu0
    %490 = vmatpush.bf16.msra.mxu0 0
    %491 = vmatpush.bf16.msra.mxu0 0
    %492 = vmatpush.bf16.msra.mxu0 0
    %493 = vmatpush.bf16.msra.mxu0 0
    %494 = vmatpush.bf16.msra.mxu0 0
    %495 = vmatpush.bf16.msra.mxu0 0
    %496 = vmatpush.bf16.msra.mxu0 %v463
    %497 = vmatpush.bf16.msra.mxu0 %v444
    %498 = vmatmul.bf16.gmra.mxu0 %v455
    %v499 = vpop.f32.mrf.mxu0
    %v500 = vadd.f32 %v372, %v499
    %v501 = vpop.f32.mrf.mxu0
    %v502 = vadd.f32 %v374, %v501
    %503 = vmatmul.bf16.gmra.mxu0 %v457
    %v504 = vpop.f32.mrf.mxu0
    %v505 = vadd.f32 %v377, %v504
    %v506 = vpop.f32.mrf.mxu0
    %v507 = vadd.f32 %v379, %v506
    %508 = vdwg.mxu0
    %509 = vmatpush.bf16.msra.mxu0 0
    %510 = vmatpush.bf16.msra.mxu0 0
    %511 = vmatpush.bf16.msra.mxu0 0
    %512 = vmatpush.bf16.msra.mxu0 0
    %513 = vmatpush.bf16.msra.mxu0 0
    %514 = vmatpush.bf16.msra.mxu0 0
    %515 = vmatpush.bf16.msra.mxu0 %v466
    %516 = vmatpush.bf16.msra.mxu0 %v445
    %517 = vmatmul.bf16.gmra.mxu0 %v455
    %v518 = vpop.f32.mrf.mxu0
    %v519 = vadd.f32 %v391, %v518
    %v520 = vpop.f32.mrf.mxu0
    %v521 = vadd.f32 %v393, %v520
    %522 = vmatmul.bf16.gmra.mxu0 %v457
    %v523 = vpop.f32.mrf.mxu0
    %v524 = vadd.f32 %v396, %v523
    %v525 = vpop.f32.mrf.mxu0
    %v526 = vadd.f32 %v398, %v525
    %527 = vdwg.mxu0
    %528 = vmatpush.bf16.msra.mxu0 0
    %529 = vmatpush.bf16.msra.mxu0 0
    %530 = vmatpush.bf16.msra.mxu0 0
    %531 = vmatpush.bf16.msra.mxu0 0
    %532 = vmatpush.bf16.msra.mxu0 0
    %533 = vmatpush.bf16.msra.mxu0 0
    %534 = vmatpush.bf16.msra.mxu0 %v469
    %535 = vmatpush.bf16.msra.mxu0 %v446
    %536 = vmatmul.bf16.gmra.mxu0 %v455
    %v537 = vpop.f32.mrf.mxu0
    %v538 = vadd.f32 %v410, %v537
    %v539 = vpop.f32.mrf.mxu0
    %v540 = vadd.f32 %v412, %v539
    %541 = vmatmul.bf16.gmra.mxu0 %v457
    %v542 = vpop.f32.mrf.mxu0
    %v543 = vadd.f32 %v415, %v542
    %v544 = vpop.f32.mrf.mxu0
    %v545 = vadd.f32 %v417, %v544
    %546 = vdwg.mxu0
    %s547 = scalar_lea.vmem [#allocation5], 128
    %v548 = vld [vmem:[%s547] sm:$0xff]
    %v549 = vld [vmem:[%s547 + $0x8] sm:$0xff]
    %v550 = vld [vmem:[%s547 + $0x10] sm:$0xff]
    %v551 = vld [vmem:[%s547 + $0x18] sm:$0xff]
    %v552 = vld [vmem:[%s547 + $0x20] sm:$0xff]
    %v553 = vld [vmem:[%s547 + $0x28] sm:$0xff]
    %v554 = vld [vmem:[%s547 + $0x30] sm:$0x33]
    %v555 = vld [vmem:[%s547 + $0x38] sm:$0x33]
    %vm558 = vcmask 1046528
    %v559 = vrot.slane %v252, 1
    %v560 = vrot.slane %v253, 1
    %v561 = vsel %vm558, %v559, %v560
    %v570 = vunpack.c.l.b16 %v548
    %v571 = vunpack.c.h.b16 %v548
    %v572 = vunpack.c.l.b16 %v549
    %v573 = vunpack.c.h.b16 %v549
    %v574 = vunpack.c.l.b16 %v550
    %v575 = vunpack.c.h.b16 %v550
    %v576 = vunpack.c.l.b16 %v551
    %v577 = vunpack.c.h.b16 %v551
    %v578 = vunpack.c.l.b16 %v552
    %v579 = vunpack.c.h.b16 %v552
    %v580 = vunpack.c.l.b16 %v553
    %v581 = vunpack.c.h.b16 %v553
    %v582 = vunpack.c.l.b16 %v554
    %v583 = vunpack.c.h.b16 %v554
    %v584 = vunpack.c.l.b16 %v555
    %v585 = vunpack.c.h.b16 %v555
    %v586 = vpack.c.b16 %v574, %v570
    %v587 = vpack.c.b16 %v575, %v571
    %v588 = vpack.c.b16 %v576, %v572
    %v589 = vpack.c.b16 %v577, %v573
    %v590 = vpack.c.b16 %v582, %v578
    %v591 = vpack.c.b16 %v583, %v579
    %v592 = vpack.c.b16 %v584, %v580
    %v593 = vpack.c.b16 %v585, %v581
    %v599 = vsel %vm323, %v561, 0
    %v602 = vsel %vm323, %v560, 0
    %v605 = vsel %vm330, %v590, 0
    %v608 = vsel %vm330, %v591, 0
    %v611 = vsel %vm330, %v592, 0
    %v614 = vsel %vm330, %v593, 0
    %616 = vmatpush.bf16.msra.mxu0 0
    %617 = vmatpush.bf16.msra.mxu0 0
    %618 = vmatpush.bf16.msra.mxu0 0
    %619 = vmatpush.bf16.msra.mxu0 0
    %620 = vmatpush.bf16.msra.mxu0 0
    %621 = vmatpush.bf16.msra.mxu0 0
    %622 = vmatpush.bf16.msra.mxu0 %v605
    %623 = vmatpush.bf16.msra.mxu0 %v586
    %624 = vmatmul.bf16.gmra.mxu0 %v599
    %v625 = vpop.f32.mrf.mxu0
    %v626 = vadd.f32 0.0, %v625
    %v627 = vpop.f32.mrf.mxu0
    %v628 = vadd.f32 0.0, %v627
    %629 = vmatmul.bf16.gmra.mxu0 %v602
    %v630 = vpop.f32.mrf.mxu0
    %v631 = vadd.f32 0.0, %v630
    %v632 = vpop.f32.mrf.mxu0
    %v633 = vadd.f32 0.0, %v632
    %634 = vdwg.mxu0
    %635 = vmatpush.bf16.msra.mxu0 0
    %636 = vmatpush.bf16.msra.mxu0 0
    %637 = vmatpush.bf16.msra.mxu0 0
    %638 = vmatpush.bf16.msra.mxu0 0
    %639 = vmatpush.bf16.msra.mxu0 0
    %640 = vmatpush.bf16.msra.mxu0 0
    %641 = vmatpush.bf16.msra.mxu0 %v608
    %642 = vmatpush.bf16.msra.mxu0 %v587
    %643 = vmatmul.bf16.gmra.mxu0 %v599
    %v644 = vpop.f32.mrf.mxu0
    %v645 = vadd.f32 0.0, %v644
    %v646 = vpop.f32.mrf.mxu0
    %v647 = vadd.f32 0.0, %v646
    %648 = vmatmul.bf16.gmra.mxu0 %v602
    %v649 = vpop.f32.mrf.mxu0
    %v650 = vadd.f32 0.0, %v649
    %v651 = vpop.f32.mrf.mxu0
    %v652 = vadd.f32 0.0, %v651
    %653 = vdwg.mxu0
    %654 = vmatpush.bf16.msra.mxu0 0
    %655 = vmatpush.bf16.msra.mxu0 0
    %656 = vmatpush.bf16.msra.mxu0 0
    %657 = vmatpush.bf16.msra.mxu0 0
    %658 = vmatpush.bf16.msra.mxu0 0
    %659 = vmatpush.bf16.msra.mxu0 0
    %660 = vmatpush.bf16.msra.mxu0 %v611
    %661 = vmatpush.bf16.msra.mxu0 %v588
    %662 = vmatmul.bf16.gmra.mxu0 %v599
    %v663 = vpop.f32.mrf.mxu0
    %v664 = vadd.f32 0.0, %v663
    %v665 = vpop.f32.mrf.mxu0
    %v666 = vadd.f32 0.0, %v665
    %667 = vmatmul.bf16.gmra.mxu0 %v602
    %v668 = vpop.f32.mrf.mxu0
    %v669 = vadd.f32 0.0, %v668
    %v670 = vpop.f32.mrf.mxu0
    %v671 = vadd.f32 0.0, %v670
    %672 = vdwg.mxu0
    %673 = vmatpush.bf16.msra.mxu0 0
    %674 = vmatpush.bf16.msra.mxu0 0
    %675 = vmatpush.bf16.msra.mxu0 0
    %676 = vmatpush.bf16.msra.mxu0 0
    %677 = vmatpush.bf16.msra.mxu0 0
    %678 = vmatpush.bf16.msra.mxu0 0
    %679 = vmatpush.bf16.msra.mxu0 %v614
    %680 = vmatpush.bf16.msra.mxu0 %v589
    %681 = vmatmul.bf16.gmra.mxu0 %v599
    %v682 = vpop.f32.mrf.mxu0
    %v683 = vadd.f32 0.0, %v682
    %v684 = vpop.f32.mrf.mxu0
    %v685 = vadd.f32 0.0, %v684
    %686 = vmatmul.bf16.gmra.mxu0 %v602
    %v687 = vpop.f32.mrf.mxu0
    %v688 = vadd.f32 0.0, %v687
    %v689 = vpop.f32.mrf.mxu0
    %v690 = vadd.f32 0.0, %v689
    %691 = vdwg.mxu0
    %v692 = vadd.f32 %v481, %v626
    %v693 = vadd.f32 %v500, %v645
    %v694 = vadd.f32 %v519, %v664
    %v695 = vadd.f32 %v538, %v683
    %v696 = vadd.f32 %v483, %v628
    %v697 = vadd.f32 %v502, %v647
    %v698 = vadd.f32 %v521, %v666
    %v699 = vadd.f32 %v540, %v685
    %v700 = vadd.f32 %v486, %v631
    %v701 = vadd.f32 %v505, %v650
    %v702 = vadd.f32 %v524, %v669
    %v703 = vadd.f32 %v543, %v688
    %v704 = vadd.f32 %v488, %v633
    %v705 = vadd.f32 %v507, %v652
    %v706 = vadd.f32 %v526, %v671
    %v707 = vadd.f32 %v545, %v690
    %708 = vst [vmem:[#allocation2] sm:$0xff] %v692
    %709 = vst [vmem:[#allocation2 + $0x8] sm:$0xff] %v693
    %710 = vst [vmem:[#allocation2 + $0x10] sm:$0xff] %v694
    %711 = vst [vmem:[#allocation2 + $0x18] sm:$0xff] %v695
    %712 = vst [vmem:[#allocation2 + $0x20] sm:$0xff] %v696
    %713 = vst [vmem:[#allocation2 + $0x28] sm:$0xff] %v697
    %714 = vst [vmem:[#allocation2 + $0x30] sm:$0xff] %v698
    %715 = vst [vmem:[#allocation2 + $0x38] sm:$0xff] %v699
    %716 = vst [vmem:[#allocation2 + $0x40] sm:$0xff] %v700
    %717 = vst [vmem:[#allocation2 + $0x48] sm:$0xff] %v701
    %718 = vst [vmem:[#allocation2 + $0x50] sm:$0xff] %v702
    %719 = vst [vmem:[#allocation2 + $0x58] sm:$0xff] %v703
    %720 = vst [vmem:[#allocation2 + $0x60] sm:$0x3] %v704
    %721 = vst [vmem:[#allocation2 + $0x68] sm:$0x3] %v705
    %722 = vst [vmem:[#allocation2 + $0x70] sm:$0x3] %v706
    %723 = vst [vmem:[#allocation2 + $0x78] sm:$0x3] %v707
    %v724 = vadd.f32 %v692, %v696
    %v725 = vadd.f32 %v724, %v700
    %vm726 = vcmask 1041408
    %v727 = vsel %vm726, %v704, 0.0
    %v728 = vadd.f32 %v725, %v727
    %v729 = vrot.slane %v728, 4
    %v730 = vadd.f32 %v728, %v729
    %v731 = vrot.slane %v730, 2
    %v732 = vadd.f32 %v730, %v731
    %v733 = vrot.slane %v732, 1
    %v734 = vadd.f32 %v732, %v733
    %v735 = vadd.f32 %v693, %v697
    %v736 = vadd.f32 %v735, %v701
    %v737 = vsel %vm726, %v705, 0.0
    %v738 = vadd.f32 %v736, %v737
    %v739 = vrot.slane %v738, 4
    %v740 = vadd.f32 %v738, %v739
    %v741 = vrot.slane %v740, 2
    %v742 = vadd.f32 %v740, %v741
    %v743 = vrot.slane %v742, 1
    %v744 = vadd.f32 %v742, %v743
    %v745 = vadd.f32 %v694, %v698
    %v746 = vadd.f32 %v745, %v702
    %v747 = vsel %vm726, %v706, 0.0
    %v748 = vadd.f32 %v746, %v747
    %v749 = vrot.slane %v748, 4
    %v750 = vadd.f32 %v748, %v749
    %v751 = vrot.slane %v750, 2
    %v752 = vadd.f32 %v750, %v751
    %v753 = vrot.slane %v752, 1
    %v754 = vadd.f32 %v752, %v753
    %v755 = vadd.f32 %v695, %v699
    %v756 = vadd.f32 %v755, %v703
    %v757 = vsel %vm726, %v707, 0.0
    %v758 = vadd.f32 %v756, %v757
    %v759 = vrot.slane %v758, 4
    %v760 = vadd.f32 %v758, %v759
    %v761 = vrot.slane %v760, 2
    %v762 = vadd.f32 %v760, %v761
    %v763 = vrot.slane %v762, 1
    %v764 = vadd.f32 %v762, %v763
    %v765 = vadd.f32 %v734, 0.0
    %v766 = vadd.f32 %v744, 0.0
    %v767 = vadd.f32 %v754, 0.0
    %v768 = vadd.f32 %v764, 0.0
    %v769 = vmul.f32 %v692, %v692
    %v770 = vmul.f32 %v693, %v693
    %v771 = vmul.f32 %v694, %v694
    %v772 = vmul.f32 %v695, %v695
    %v773 = vmul.f32 %v696, %v696
    %v774 = vmul.f32 %v697, %v697
    %v775 = vmul.f32 %v698, %v698
    %v776 = vmul.f32 %v699, %v699
    %v777 = vmul.f32 %v700, %v700
    %v778 = vmul.f32 %v701, %v701
    %v779 = vmul.f32 %v702, %v702
    %v780 = vmul.f32 %v703, %v703
    %v781 = vmul.f32 %v704, %v704
    %v782 = vmul.f32 %v705, %v705
    %v783 = vmul.f32 %v706, %v706
    %v784 = vmul.f32 %v707, %v707
    %v785 = vadd.f32 %v769, %v773
    %v786 = vadd.f32 %v785, %v777
    %v787 = vsel %vm726, %v781, 0.0
    %v788 = vadd.f32 %v786, %v787
    %v789 = vrot.slane %v788, 4
    %v790 = vadd.f32 %v788, %v789
    %v791 = vrot.slane %v790, 2
    %v792 = vadd.f32 %v790, %v791
    %v793 = vrot.slane %v792, 1
    %v794 = vadd.f32 %v792, %v793
    %v795 = vadd.f32 %v770, %v774
    %v796 = vadd.f32 %v795, %v778
    %v797 = vsel %vm726, %v782, 0.0
    %v798 = vadd.f32 %v796, %v797
    %v799 = vrot.slane %v798, 4
    %v800 = vadd.f32 %v798, %v799
    %v801 = vrot.slane %v800, 2
    %v802 = vadd.f32 %v800, %v801
    %v803 = vrot.slane %v802, 1
    %v804 = vadd.f32 %v802, %v803
    %v805 = vadd.f32 %v771, %v775
    %v806 = vadd.f32 %v805, %v779
    %v807 = vsel %vm726, %v783, 0.0
    %v808 = vadd.f32 %v806, %v807
    %v809 = vrot.slane %v808, 4
    %v810 = vadd.f32 %v808, %v809
    %v811 = vrot.slane %v810, 2
    %v812 = vadd.f32 %v810, %v811
    %v813 = vrot.slane %v812, 1
    %v814 = vadd.f32 %v812, %v813
    %v815 = vadd.f32 %v772, %v776
    %v816 = vadd.f32 %v815, %v780
    %v817 = vsel %vm726, %v784, 0.0
    %v818 = vadd.f32 %v816, %v817
    %v819 = vrot.slane %v818, 4
    %v820 = vadd.f32 %v818, %v819
    %v821 = vrot.slane %v820, 2
    %v822 = vadd.f32 %v820, %v821
    %v823 = vrot.slane %v822, 1
    %v824 = vadd.f32 %v822, %v823
    %v825 = vadd.f32 %v794, 0.0
    %v826 = vadd.f32 %v804, 0.0
    %v827 = vadd.f32 %v814, 0.0
    %v828 = vadd.f32 %v824, 0.0
    %s829 = scalar_lea.vmem %s0, 32
    %v830 = vld [vmem:[%s829] sm:$0xff]
    %v831 = vld [vmem:[%s829 + $0x8] sm:$0xff]
    %v832 = vld [vmem:[%s829 + $0x10] sm:$0xff]
    %v833 = vld [vmem:[%s829 + $0x18] sm:$0xf]
    %v834 = vpack.c.bf16 %v831, %v830
    %v835 = vpack.c.bf16 %v833, %v832
    %v836 = vld [vmem:[#allocation5] sm:$0xff]
    %v837 = vld [vmem:[#allocation5 + $0x8] sm:$0xff]
    %v838 = vld [vmem:[#allocation5 + $0x10] sm:$0xff]
    %v839 = vld [vmem:[#allocation5 + $0x18] sm:$0xff]
    %v840 = vld [vmem:[#allocation5 + $0x20] sm:$0xff]
    %v841 = vld [vmem:[#allocation5 + $0x28] sm:$0xff]
    %v842 = vld [vmem:[#allocation5 + $0x30] sm:$0x33]
    %v843 = vld [vmem:[#allocation5 + $0x38] sm:$0x33]
    %v844 = vld [vmem:[%s262] sm:$0xff]
    %v845 = vld [vmem:[%s262 + $0x8] sm:$0xff]
    %v846 = vld [vmem:[%s262 + $0x10] sm:$0xff]
    %v847 = vld [vmem:[%s262 + $0x18] sm:$0xff]
    %v848 = vld [vmem:[%s262 + $0x20] sm:$0xff]
    %v849 = vld [vmem:[%s262 + $0x28] sm:$0xff]
    %v850 = vld [vmem:[%s262 + $0x30] sm:$0x33]
    %v851 = vld [vmem:[%s262 + $0x38] sm:$0x33]
    %v853 = vshrl.u32 %v834, 16
    %v855 = vshll.u32 %v834, 16
    %v857 = vrot.slane %v855, 1
    %v858 = vor.u32 %v853, %v857
    %v860 = vshll.u32 %v835, 16
    %v862 = vrot.slane %v860, 1
    %v863 = vsel %vm271, %v858, %v862
    %v864 = vshrl.u32 %v835, 16
    %v866 = vor.u32 %v864, %v862
    %v875 = vunpack.c.l.b16 %v844
    %v876 = vunpack.c.h.b16 %v844
    %v877 = vunpack.c.l.b16 %v845
    %v878 = vunpack.c.h.b16 %v845
    %v879 = vunpack.c.l.b16 %v846
    %v880 = vunpack.c.h.b16 %v846
    %v881 = vunpack.c.l.b16 %v847
    %v882 = vunpack.c.h.b16 %v847
    %v883 = vunpack.c.l.b16 %v848
    %v884 = vunpack.c.h.b16 %v848
    %v885 = vunpack.c.l.b16 %v849
    %v886 = vunpack.c.h.b16 %v849
    %v887 = vunpack.c.l.b16 %v850
    %v888 = vunpack.c.h.b16 %v850
    %v889 = vunpack.c.l.b16 %v851
    %v890 = vunpack.c.h.b16 %v851
    %v891 = vpack.c.b16 %v879, %v875
    %v892 = vpack.c.b16 %v880, %v876
    %v893 = vpack.c.b16 %v881, %v877
    %v894 = vpack.c.b16 %v882, %v878
    %v895 = vpack.c.b16 %v887, %v883
    %v896 = vpack.c.b16 %v888, %v884
    %v897 = vpack.c.b16 %v889, %v885
    %v898 = vpack.c.b16 %v890, %v886
    %v904 = vsel %vm323, %v863, 0
    %v907 = vsel %vm323, %v866, 0
    %v910 = vsel %vm330, %v895, 0
    %v913 = vsel %vm330, %v896, 0
    %v916 = vsel %vm330, %v897, 0
    %v919 = vsel %vm330, %v898, 0
    %921 = vmatpush.bf16.msra.mxu0 0
    %922 = vmatpush.bf16.msra.mxu0 0
    %923 = vmatpush.bf16.msra.mxu0 0
    %924 = vmatpush.bf16.msra.mxu0 0
    %925 = vmatpush.bf16.msra.mxu0 0
    %926 = vmatpush.bf16.msra.mxu0 0
    %927 = vmatpush.bf16.msra.mxu0 %v910
    %928 = vmatpush.bf16.msra.mxu0 %v891
    %929 = vmatmul.bf16.gmra.mxu0 %v904
    %v930 = vpop.f32.mrf.mxu0
    %v931 = vadd.f32 0.0, %v930
    %v932 = vpop.f32.mrf.mxu0
    %v933 = vadd.f32 0.0, %v932
    %934 = vmatmul.bf16.gmra.mxu0 %v907
    %v935 = vpop.f32.mrf.mxu0
    %v936 = vadd.f32 0.0, %v935
    %v937 = vpop.f32.mrf.mxu0
    %v938 = vadd.f32 0.0, %v937
    %939 = vdwg.mxu0
    %940 = vmatpush.bf16.msra.mxu0 0
    %941 = vmatpush.bf16.msra.mxu0 0
    %942 = vmatpush.bf16.msra.mxu0 0
    %943 = vmatpush.bf16.msra.mxu0 0
    %944 = vmatpush.bf16.msra.mxu0 0
    %945 = vmatpush.bf16.msra.mxu0 0
    %946 = vmatpush.bf16.msra.mxu0 %v913
    %947 = vmatpush.bf16.msra.mxu0 %v892
    %948 = vmatmul.bf16.gmra.mxu0 %v904
    %v949 = vpop.f32.mrf.mxu0
    %v950 = vadd.f32 0.0, %v949
    %v951 = vpop.f32.mrf.mxu0
    %v952 = vadd.f32 0.0, %v951
    %953 = vmatmul.bf16.gmra.mxu0 %v907
    %v954 = vpop.f32.mrf.mxu0
    %v955 = vadd.f32 0.0, %v954
    %v956 = vpop.f32.mrf.mxu0
    %v957 = vadd.f32 0.0, %v956
    %958 = vdwg.mxu0
    %959 = vmatpush.bf16.msra.mxu0 0
    %960 = vmatpush.bf16.msra.mxu0 0
    %961 = vmatpush.bf16.msra.mxu0 0
    %962 = vmatpush.bf16.msra.mxu0 0
    %963 = vmatpush.bf16.msra.mxu0 0
    %964 = vmatpush.bf16.msra.mxu0 0
    %965 = vmatpush.bf16.msra.mxu0 %v916
    %966 = vmatpush.bf16.msra.mxu0 %v893
    %967 = vmatmul.bf16.gmra.mxu0 %v904
    %v968 = vpop.f32.mrf.mxu0
    %v969 = vadd.f32 0.0, %v968
    %v970 = vpop.f32.mrf.mxu0
    %v971 = vadd.f32 0.0, %v970
    %972 = vmatmul.bf16.gmra.mxu0 %v907
    %v973 = vpop.f32.mrf.mxu0
    %v974 = vadd.f32 0.0, %v973
    %v975 = vpop.f32.mrf.mxu0
    %v976 = vadd.f32 0.0, %v975
    %977 = vdwg.mxu0
    %978 = vmatpush.bf16.msra.mxu0 0
    %979 = vmatpush.bf16.msra.mxu0 0
    %980 = vmatpush.bf16.msra.mxu0 0
    %981 = vmatpush.bf16.msra.mxu0 0
    %982 = vmatpush.bf16.msra.mxu0 0
    %983 = vmatpush.bf16.msra.mxu0 0
    %984 = vmatpush.bf16.msra.mxu0 %v919
    %985 = vmatpush.bf16.msra.mxu0 %v894
    %986 = vmatmul.bf16.gmra.mxu0 %v904
    %v987 = vpop.f32.mrf.mxu0
    %v988 = vadd.f32 0.0, %v987
    %v989 = vpop.f32.mrf.mxu0
    %v990 = vadd.f32 0.0, %v989
    %991 = vmatmul.bf16.gmra.mxu0 %v907
    %v992 = vpop.f32.mrf.mxu0
    %v993 = vadd.f32 0.0, %v992
    %v994 = vpop.f32.mrf.mxu0
    %v995 = vadd.f32 0.0, %v994
    %996 = vdwg.mxu0
    %v1005 = vunpack.c.l.b16 %v836
    %v1006 = vunpack.c.h.b16 %v836
    %v1007 = vunpack.c.l.b16 %v837
    %v1008 = vunpack.c.h.b16 %v837
    %v1009 = vunpack.c.l.b16 %v838
    %v1010 = vunpack.c.h.b16 %v838
    %v1011 = vunpack.c.l.b16 %v839
    %v1012 = vunpack.c.h.b16 %v839
    %v1013 = vunpack.c.l.b16 %v840
    %v1014 = vunpack.c.h.b16 %v840
    %v1015 = vunpack.c.l.b16 %v841
    %v1016 = vunpack.c.h.b16 %v841
    %v1017 = vunpack.c.l.b16 %v842
    %v1018 = vunpack.c.h.b16 %v842
    %v1019 = vunpack.c.l.b16 %v843
    %v1020 = vunpack.c.h.b16 %v843
    %v1021 = vpack.c.b16 %v1009, %v1005
    %v1022 = vpack.c.b16 %v1010, %v1006
    %v1023 = vpack.c.b16 %v1011, %v1007
    %v1024 = vpack.c.b16 %v1012, %v1008
    %v1025 = vpack.c.b16 %v1017, %v1013
    %v1026 = vpack.c.b16 %v1018, %v1014
    %v1027 = vpack.c.b16 %v1019, %v1015
    %v1028 = vpack.c.b16 %v1020, %v1016
    %v1033 = vsel %vm323, %v834, 0
    %v1035 = vsel %vm323, %v835, 0
    %v1038 = vsel %vm330, %v1025, 0
    %v1041 = vsel %vm330, %v1026, 0
    %v1044 = vsel %vm330, %v1027, 0
    %v1047 = vsel %vm330, %v1028, 0
    %1049 = vmatpush.bf16.msra.mxu0 0
    %1050 = vmatpush.bf16.msra.mxu0 0
    %1051 = vmatpush.bf16.msra.mxu0 0
    %1052 = vmatpush.bf16.msra.mxu0 0
    %1053 = vmatpush.bf16.msra.mxu0 0
    %1054 = vmatpush.bf16.msra.mxu0 0
    %1055 = vmatpush.bf16.msra.mxu0 %v1038
    %1056 = vmatpush.bf16.msra.mxu0 %v1021
    %1057 = vmatmul.bf16.gmra.mxu0 %v1033
    %v1058 = vpop.f32.mrf.mxu0
    %v1059 = vadd.f32 %v931, %v1058
    %v1060 = vpop.f32.mrf.mxu0
    %v1061 = vadd.f32 %v933, %v1060
    %1062 = vmatmul.bf16.gmra.mxu0 %v1035
    %v1063 = vpop.f32.mrf.mxu0
    %v1064 = vadd.f32 %v936, %v1063
    %v1065 = vpop.f32.mrf.mxu0
    %v1066 = vadd.f32 %v938, %v1065
    %1067 = vdwg.mxu0
    %1068 = vmatpush.bf16.msra.mxu0 0
    %1069 = vmatpush.bf16.msra.mxu0 0
    %1070 = vmatpush.bf16.msra.mxu0 0
    %1071 = vmatpush.bf16.msra.mxu0 0
    %1072 = vmatpush.bf16.msra.mxu0 0
    %1073 = vmatpush.bf16.msra.mxu0 0
    %1074 = vmatpush.bf16.msra.mxu0 %v1041
    %1075 = vmatpush.bf16.msra.mxu0 %v1022
    %1076 = vmatmul.bf16.gmra.mxu0 %v1033
    %v1077 = vpop.f32.mrf.mxu0
    %v1078 = vadd.f32 %v950, %v1077
    %v1079 = vpop.f32.mrf.mxu0
    %v1080 = vadd.f32 %v952, %v1079
    %1081 = vmatmul.bf16.gmra.mxu0 %v1035
    %v1082 = vpop.f32.mrf.mxu0
    %v1083 = vadd.f32 %v955, %v1082
    %v1084 = vpop.f32.mrf.mxu0
    %v1085 = vadd.f32 %v957, %v1084
    %1086 = vdwg.mxu0
    %1087 = vmatpush.bf16.msra.mxu0 0
    %1088 = vmatpush.bf16.msra.mxu0 0
    %1089 = vmatpush.bf16.msra.mxu0 0
    %1090 = vmatpush.bf16.msra.mxu0 0
    %1091 = vmatpush.bf16.msra.mxu0 0
    %1092 = vmatpush.bf16.msra.mxu0 0
    %1093 = vmatpush.bf16.msra.mxu0 %v1044
    %1094 = vmatpush.bf16.msra.mxu0 %v1023
    %1095 = vmatmul.bf16.gmra.mxu0 %v1033
    %v1096 = vpop.f32.mrf.mxu0
    %v1097 = vadd.f32 %v969, %v1096
    %v1098 = vpop.f32.mrf.mxu0
    %v1099 = vadd.f32 %v971, %v1098
    %1100 = vmatmul.bf16.gmra.mxu0 %v1035
    %v1101 = vpop.f32.mrf.mxu0
    %v1102 = vadd.f32 %v974, %v1101
    %v1103 = vpop.f32.mrf.mxu0
    %v1104 = vadd.f32 %v976, %v1103
    %1105 = vdwg.mxu0
    %1106 = vmatpush.bf16.msra.mxu0 0
    %1107 = vmatpush.bf16.msra.mxu0 0
    %1108 = vmatpush.bf16.msra.mxu0 0
    %1109 = vmatpush.bf16.msra.mxu0 0
    %1110 = vmatpush.bf16.msra.mxu0 0
    %1111 = vmatpush.bf16.msra.mxu0 0
    %1112 = vmatpush.bf16.msra.mxu0 %v1047
    %1113 = vmatpush.bf16.msra.mxu0 %v1024
    %1114 = vmatmul.bf16.gmra.mxu0 %v1033
    %v1115 = vpop.f32.mrf.mxu0
    %v1116 = vadd.f32 %v988, %v1115
    %v1117 = vpop.f32.mrf.mxu0
    %v1118 = vadd.f32 %v990, %v1117
    %1119 = vmatmul.bf16.gmra.mxu0 %v1035
    %v1120 = vpop.f32.mrf.mxu0
    %v1121 = vadd.f32 %v993, %v1120
    %v1122 = vpop.f32.mrf.mxu0
    %v1123 = vadd.f32 %v995, %v1122
    %1124 = vdwg.mxu0
    %v1125 = vld [vmem:[%s547] sm:$0xff]
    %v1126 = vld [vmem:[%s547 + $0x8] sm:$0xff]
    %v1127 = vld [vmem:[%s547 + $0x10] sm:$0xff]
    %v1128 = vld [vmem:[%s547 + $0x18] sm:$0xff]
    %v1129 = vld [vmem:[%s547 + $0x20] sm:$0xff]
    %v1130 = vld [vmem:[%s547 + $0x28] sm:$0xff]
    %v1131 = vld [vmem:[%s547 + $0x30] sm:$0x33]
    %v1132 = vld [vmem:[%s547 + $0x38] sm:$0x33]
    %v1135 = vrot.slane %v834, 1
    %v1136 = vrot.slane %v835, 1
    %v1137 = vsel %vm558, %v1135, %v1136
    %v1146 = vunpack.c.l.b16 %v1125
    %v1147 = vunpack.c.h.b16 %v1125
    %v1148 = vunpack.c.l.b16 %v1126
    %v1149 = vunpack.c.h.b16 %v1126
    %v1150 = vunpack.c.l.b16 %v1127
    %v1151 = vunpack.c.h.b16 %v1127
    %v1152 = vunpack.c.l.b16 %v1128
    %v1153 = vunpack.c.h.b16 %v1128
    %v1154 = vunpack.c.l.b16 %v1129
    %v1155 = vunpack.c.h.b16 %v1129
    %v1156 = vunpack.c.l.b16 %v1130
    %v1157 = vunpack.c.h.b16 %v1130
    %v1158 = vunpack.c.l.b16 %v1131
    %v1159 = vunpack.c.h.b16 %v1131
    %v1160 = vunpack.c.l.b16 %v1132
    %v1161 = vunpack.c.h.b16 %v1132
    %v1162 = vpack.c.b16 %v1150, %v1146
    %v1163 = vpack.c.b16 %v1151, %v1147
    %v1164 = vpack.c.b16 %v1152, %v1148
    %v1165 = vpack.c.b16 %v1153, %v1149
    %v1166 = vpack.c.b16 %v1158, %v1154
    %v1167 = vpack.c.b16 %v1159, %v1155
    %v1168 = vpack.c.b16 %v1160, %v1156
    %v1169 = vpack.c.b16 %v1161, %v1157
    %v1175 = vsel %vm323, %v1137, 0
    %v1178 = vsel %vm323, %v1136, 0
    %v1181 = vsel %vm330, %v1166, 0
    %v1184 = vsel %vm330, %v1167, 0
    %v1187 = vsel %vm330, %v1168, 0
    %v1190 = vsel %vm330, %v1169, 0
    %1192 = vmatpush.bf16.msra.mxu0 0
    %1193 = vmatpush.bf16.msra.mxu0 0
    %1194 = vmatpush.bf16.msra.mxu0 0
    %1195 = vmatpush.bf16.msra.mxu0 0
    %1196 = vmatpush.bf16.msra.mxu0 0
    %1197 = vmatpush.bf16.msra.mxu0 0
    %1198 = vmatpush.bf16.msra.mxu0 %v1181
    %1199 = vmatpush.bf16.msra.mxu0 %v1162
    %1200 = vmatmul.bf16.gmra.mxu0 %v1175
    %v1201 = vpop.f32.mrf.mxu0
    %v1202 = vadd.f32 0.0, %v1201
    %v1203 = vpop.f32.mrf.mxu0
    %v1204 = vadd.f32 0.0, %v1203
    %1205 = vmatmul.bf16.gmra.mxu0 %v1178
    %v1206 = vpop.f32.mrf.mxu0
    %v1207 = vadd.f32 0.0, %v1206
    %v1208 = vpop.f32.mrf.mxu0
    %v1209 = vadd.f32 0.0, %v1208
    %1210 = vdwg.mxu0
    %1211 = vmatpush.bf16.msra.mxu0 0
    %1212 = vmatpush.bf16.msra.mxu0 0
    %1213 = vmatpush.bf16.msra.mxu0 0
    %1214 = vmatpush.bf16.msra.mxu0 0
    %1215 = vmatpush.bf16.msra.mxu0 0
    %1216 = vmatpush.bf16.msra.mxu0 0
    %1217 = vmatpush.bf16.msra.mxu0 %v1184
    %1218 = vmatpush.bf16.msra.mxu0 %v1163
    %1219 = vmatmul.bf16.gmra.mxu0 %v1175
    %v1220 = vpop.f32.mrf.mxu0
    %v1221 = vadd.f32 0.0, %v1220
    %v1222 = vpop.f32.mrf.mxu0
    %v1223 = vadd.f32 0.0, %v1222
    %1224 = vmatmul.bf16.gmra.mxu0 %v1178
    %v1225 = vpop.f32.mrf.mxu0
    %v1226 = vadd.f32 0.0, %v1225
    %v1227 = vpop.f32.mrf.mxu0
    %v1228 = vadd.f32 0.0, %v1227
    %1229 = vdwg.mxu0
    %1230 = vmatpush.bf16.msra.mxu0 0
    %1231 = vmatpush.bf16.msra.mxu0 0
    %1232 = vmatpush.bf16.msra.mxu0 0
    %1233 = vmatpush.bf16.msra.mxu0 0
    %1234 = vmatpush.bf16.msra.mxu0 0
    %1235 = vmatpush.bf16.msra.mxu0 0
    %1236 = vmatpush.bf16.msra.mxu0 %v1187
    %1237 = vmatpush.bf16.msra.mxu0 %v1164
    %1238 = vmatmul.bf16.gmra.mxu0 %v1175
    %v1239 = vpop.f32.mrf.mxu0
    %v1240 = vadd.f32 0.0, %v1239
    %v1241 = vpop.f32.mrf.mxu0
    %v1242 = vadd.f32 0.0, %v1241
    %1243 = vmatmul.bf16.gmra.mxu0 %v1178
    %v1244 = vpop.f32.mrf.mxu0
    %v1245 = vadd.f32 0.0, %v1244
    %v1246 = vpop.f32.mrf.mxu0
    %v1247 = vadd.f32 0.0, %v1246
    %1248 = vdwg.mxu0
    %1249 = vmatpush.bf16.msra.mxu0 0
    %1250 = vmatpush.bf16.msra.mxu0 0
    %1251 = vmatpush.bf16.msra.mxu0 0
    %1252 = vmatpush.bf16.msra.mxu0 0
    %1253 = vmatpush.bf16.msra.mxu0 0
    %1254 = vmatpush.bf16.msra.mxu0 0
    %1255 = vmatpush.bf16.msra.mxu0 %v1190
    %1256 = vmatpush.bf16.msra.mxu0 %v1165
    %1257 = vmatmul.bf16.gmra.mxu0 %v1175
    %v1258 = vpop.f32.mrf.mxu0
    %v1259 = vadd.f32 0.0, %v1258
    %v1260 = vpop.f32.mrf.mxu0
    %v1261 = vadd.f32 0.0, %v1260
    %1262 = vmatmul.bf16.gmra.mxu0 %v1178
    %v1263 = vpop.f32.mrf.mxu0
    %v1264 = vadd.f32 0.0, %v1263
    %v1265 = vpop.f32.mrf.mxu0
    %v1266 = vadd.f32 0.0, %v1265
    %1267 = vdwg.mxu0
    %v1268 = vadd.f32 %v1059, %v1202
    %v1269 = vadd.f32 %v1078, %v1221
    %v1270 = vadd.f32 %v1097, %v1240
    %v1271 = vadd.f32 %v1116, %v1259
    %v1272 = vadd.f32 %v1061, %v1204
    %v1273 = vadd.f32 %v1080, %v1223
    %v1274 = vadd.f32 %v1099, %v1242
    %v1275 = vadd.f32 %v1118, %v1261
    %v1276 = vadd.f32 %v1064, %v1207
    %v1277 = vadd.f32 %v1083, %v1226
    %v1278 = vadd.f32 %v1102, %v1245
    %v1279 = vadd.f32 %v1121, %v1264
    %v1280 = vadd.f32 %v1066, %v1209
    %v1281 = vadd.f32 %v1085, %v1228
    %v1282 = vadd.f32 %v1104, %v1247
    %v1283 = vadd.f32 %v1123, %v1266
    %s1284 = scalar_lea.vmem [#allocation2], 128
    %1285 = vst [vmem:[%s1284] sm:$0xff] %v1268
    %1286 = vst [vmem:[%s1284 + $0x8] sm:$0xff] %v1269
    %1287 = vst [vmem:[%s1284 + $0x10] sm:$0xff] %v1270
    %1288 = vst [vmem:[%s1284 + $0x18] sm:$0xff] %v1271
    %1289 = vst [vmem:[%s1284 + $0x20] sm:$0xff] %v1272
    %1290 = vst [vmem:[%s1284 + $0x28] sm:$0xff] %v1273
    %1291 = vst [vmem:[%s1284 + $0x30] sm:$0xff] %v1274
    %1292 = vst [vmem:[%s1284 + $0x38] sm:$0xff] %v1275
    %1293 = vst [vmem:[%s1284 + $0x40] sm:$0xff] %v1276
    %1294 = vst [vmem:[%s1284 + $0x48] sm:$0xff] %v1277
    %1295 = vst [vmem:[%s1284 + $0x50] sm:$0xff] %v1278
    %1296 = vst [vmem:[%s1284 + $0x58] sm:$0xff] %v1279
    %1297 = vst [vmem:[%s1284 + $0x60] sm:$0x3] %v1280
    %1298 = vst [vmem:[%s1284 + $0x68] sm:$0x3] %v1281
    %1299 = vst [vmem:[%s1284 + $0x70] sm:$0x3] %v1282
    %1300 = vst [vmem:[%s1284 + $0x78] sm:$0x3] %v1283
    %v1301 = vadd.f32 %v1268, %v1272
    %v1302 = vadd.f32 %v1301, %v1276
    %v1303 = vsel %vm726, %v1280, 0.0
    %v1304 = vadd.f32 %v1302, %v1303
    %v1305 = vrot.slane %v1304, 4
    %v1306 = vadd.f32 %v1304, %v1305
    %v1307 = vrot.slane %v1306, 2
    %v1308 = vadd.f32 %v1306, %v1307
    %v1309 = vrot.slane %v1308, 1
    %v1310 = vadd.f32 %v1308, %v1309
    %v1311 = vadd.f32 %v1269, %v1273
    %v1312 = vadd.f32 %v1311, %v1277
    %v1313 = vsel %vm726, %v1281, 0.0
    %v1314 = vadd.f32 %v1312, %v1313
    %v1315 = vrot.slane %v1314, 4
    %v1316 = vadd.f32 %v1314, %v1315
    %v1317 = vrot.slane %v1316, 2
    %v1318 = vadd.f32 %v1316, %v1317
    %v1319 = vrot.slane %v1318, 1
    %v1320 = vadd.f32 %v1318, %v1319
    %v1321 = vadd.f32 %v1270, %v1274
    %v1322 = vadd.f32 %v1321, %v1278
    %v1323 = vsel %vm726, %v1282, 0.0
    %v1324 = vadd.f32 %v1322, %v1323
    %v1325 = vrot.slane %v1324, 4
    %v1326 = vadd.f32 %v1324, %v1325
    %v1327 = vrot.slane %v1326, 2
    %v1328 = vadd.f32 %v1326, %v1327
    %v1329 = vrot.slane %v1328, 1
    %v1330 = vadd.f32 %v1328, %v1329
    %v1331 = vadd.f32 %v1271, %v1275
    %v1332 = vadd.f32 %v1331, %v1279
    %v1333 = vsel %vm726, %v1283, 0.0
    %v1334 = vadd.f32 %v1332, %v1333
    %v1335 = vrot.slane %v1334, 4
    %v1336 = vadd.f32 %v1334, %v1335
    %v1337 = vrot.slane %v1336, 2
    %v1338 = vadd.f32 %v1336, %v1337
    %v1339 = vrot.slane %v1338, 1
    %v1340 = vadd.f32 %v1338, %v1339
    %v1341 = vadd.f32 %v765, %v1310
    %v1342 = vadd.f32 %v766, %v1320
    %v1343 = vadd.f32 %v767, %v1330
    %v1344 = vadd.f32 %v768, %v1340
    %v1345 = vmul.f32 %v1268, %v1268
    %v1346 = vmul.f32 %v1269, %v1269
    %v1347 = vmul.f32 %v1270, %v1270
    %v1348 = vmul.f32 %v1271, %v1271
    %v1349 = vmul.f32 %v1272, %v1272
    %v1350 = vmul.f32 %v1273, %v1273
    %v1351 = vmul.f32 %v1274, %v1274
    %v1352 = vmul.f32 %v1275, %v1275
    %v1353 = vmul.f32 %v1276, %v1276
    %v1354 = vmul.f32 %v1277, %v1277
    %v1355 = vmul.f32 %v1278, %v1278
    %v1356 = vmul.f32 %v1279, %v1279
    %v1357 = vmul.f32 %v1280, %v1280
    %v1358 = vmul.f32 %v1281, %v1281
    %v1359 = vmul.f32 %v1282, %v1282
    %v1360 = vmul.f32 %v1283, %v1283
    %v1361 = vadd.f32 %v1345, %v1349
    %v1362 = vadd.f32 %v1361, %v1353
    %v1363 = vsel %vm726, %v1357, 0.0
    %v1364 = vadd.f32 %v1362, %v1363
    %v1365 = vrot.slane %v1364, 4
    %v1366 = vadd.f32 %v1364, %v1365
    %v1367 = vrot.slane %v1366, 2
    %v1368 = vadd.f32 %v1366, %v1367
    %v1369 = vrot.slane %v1368, 1
    %v1370 = vadd.f32 %v1368, %v1369
    %v1371 = vadd.f32 %v1346, %v1350
    %v1372 = vadd.f32 %v1371, %v1354
    %v1373 = vsel %vm726, %v1358, 0.0
    %v1374 = vadd.f32 %v1372, %v1373
    %v1375 = vrot.slane %v1374, 4
    %v1376 = vadd.f32 %v1374, %v1375
    %v1377 = vrot.slane %v1376, 2
    %v1378 = vadd.f32 %v1376, %v1377
    %v1379 = vrot.slane %v1378, 1
    %v1380 = vadd.f32 %v1378, %v1379
    %v1381 = vadd.f32 %v1347, %v1351
    %v1382 = vadd.f32 %v1381, %v1355
    %v1383 = vsel %vm726, %v1359, 0.0
    %v1384 = vadd.f32 %v1382, %v1383
    %v1385 = vrot.slane %v1384, 4
    %v1386 = vadd.f32 %v1384, %v1385
    %v1387 = vrot.slane %v1386, 2
    %v1388 = vadd.f32 %v1386, %v1387
    %v1389 = vrot.slane %v1388, 1
    %v1390 = vadd.f32 %v1388, %v1389
    %v1391 = vadd.f32 %v1348, %v1352
    %v1392 = vadd.f32 %v1391, %v1356
    %v1393 = vsel %vm726, %v1360, 0.0
    %v1394 = vadd.f32 %v1392, %v1393
    %v1395 = vrot.slane %v1394, 4
    %v1396 = vadd.f32 %v1394, %v1395
    %v1397 = vrot.slane %v1396, 2
    %v1398 = vadd.f32 %v1396, %v1397
    %v1399 = vrot.slane %v1398, 1
    %v1400 = vadd.f32 %v1398, %v1399
    %v1401 = vadd.f32 %v825, %v1370
    %v1402 = vadd.f32 %v826, %v1380
    %v1403 = vadd.f32 %v827, %v1390
    %v1404 = vadd.f32 %v828, %v1400
    %v1405 = vpack.c.bf16 %v1341, %v1341
    %v1406 = vpack.c.bf16 %v1342, %v1342
    %v1407 = vpack.c.bf16 %v1343, %v1343
    %v1408 = vpack.c.bf16 %v1344, %v1344
    %v1409 = vld [vmem:[%s4] sm:$0xf]
    %v1410 = vld [vmem:[%s4 + $0x4] sm:$0xf]
    %v1411 = vld [vmem:[%s4 + $0x8] sm:$0xf]
    %v1412 = vld [vmem:[%s4 + $0xc] sm:$0xf]
    %v1413 = vld [vmem:[%s4 + $0x10] sm:$0xf]
    %v1414 = vld [vmem:[%s4 + $0x14] sm:$0xf]
    %v1415 = vld [vmem:[%s4 + $0x18] sm:$0xf]
    %v1416 = vld [vmem:[%s4 + $0x1c] sm:$0xf]
    %v1417 = vld [vmem:[%s4 + $0x20] sm:$0xf]
    %v1418 = vld [vmem:[%s4 + $0x24] sm:$0xf]
    %v1419 = vld [vmem:[%s4 + $0x28] sm:$0xf]
    %v1420 = vld [vmem:[%s4 + $0x2c] sm:$0xf]
    %v1421 = vld [vmem:[%s4 + $0x30] sm:$0xf]
    %v1422 = vld [vmem:[%s4 + $0x34] sm:$0xf]
    %v1423 = vld [vmem:[%s4 + $0x38] sm:$0xf]
    %v1424 = vld [vmem:[%s4 + $0x3c] sm:$0xf]
    %v1425 = vld [vmem:[%s4 + $0x40] sm:$0xf]
    %v1426 = vld [vmem:[%s4 + $0x44] sm:$0xf]
    %v1427 = vld [vmem:[%s4 + $0x48] sm:$0xf]
    %v1428 = vld [vmem:[%s4 + $0x4c] sm:$0xf]
    %v1429 = vld [vmem:[%s4 + $0x50] sm:$0xf]
    %v1430 = vld [vmem:[%s4 + $0x54] sm:$0xf]
    %v1431 = vld [vmem:[%s4 + $0x58] sm:$0xf]
    %v1432 = vld [vmem:[%s4 + $0x5c] sm:$0xf]
    %v1433 = vld [vmem:[%s4 + $0x60] sm:$0xf]
    %v1434 = vld [vmem:[%s4 + $0x64] sm:$0xf]
    %v1435 = vld [vmem:[%s4 + $0x68] sm:$0xf]
    %v1436 = vld [vmem:[%s4 + $0x6c] sm:$0xf]
    %v1437 = vld [vmem:[%s4 + $0x70] sm:$0xf]
    %v1438 = vld [vmem:[%s4 + $0x74] sm:$0xf]
    %v1439 = vld [vmem:[%s4 + $0x78] sm:$0xf]
    %v1440 = vld [vmem:[%s4 + $0x7c] sm:$0xf]
    %v1441 = vld [vmem:[%s4 + $0x80] sm:$0xf]
    %v1442 = vld [vmem:[%s4 + $0x84] sm:$0xf]
    %v1443 = vld [vmem:[%s4 + $0x88] sm:$0xf]
    %v1444 = vld [vmem:[%s4 + $0x8c] sm:$0xf]
    %v1445 = vld [vmem:[%s4 + $0x90] sm:$0xf]
    %v1446 = vld [vmem:[%s4 + $0x94] sm:$0xf]
    %v1447 = vld [vmem:[%s4 + $0x98] sm:$0xf]
    %v1448 = vld [vmem:[%s4 + $0x9c] sm:$0xf]
    %v1449 = vld [vmem:[%s4 + $0xa0] sm:$0xf]
    %v1450 = vld [vmem:[%s4 + $0xa4] sm:$0xf]
    %v1451 = vld [vmem:[%s4 + $0xa8] sm:$0xf]
    %v1452 = vld [vmem:[%s4 + $0xac] sm:$0xf]
    %v1453 = vld [vmem:[%s4 + $0xb0] sm:$0xf]
    %v1454 = vld [vmem:[%s4 + $0xb4] sm:$0xf]
    %v1455 = vld [vmem:[%s4 + $0xb8] sm:$0xf]
    %v1456 = vld [vmem:[%s4 + $0xbc] sm:$0xf]
    %v1457 = vld [vmem:[%s4 + $0xc0] sm:$0xf]
    %v1458 = vld [vmem:[%s4 + $0xc4] sm:$0xf]
    %v1459 = vld [vmem:[%s4 + $0xc8] sm:$0xf]
    %v1460 = vld [vmem:[%s4 + $0xcc] sm:$0xf]
    %v1461 = vld [vmem:[%s4 + $0xd0] sm:$0xf]
    %v1462 = vld [vmem:[%s4 + $0xd4] sm:$0xf]
    %v1463 = vld [vmem:[%s4 + $0xd8] sm:$0xf]
    %v1464 = vld [vmem:[%s4 + $0xdc] sm:$0xf]
    %v1465 = vld [vmem:[%s4 + $0xe0] sm:$0xf]
    %v1466 = vld [vmem:[%s4 + $0xe4] sm:$0xf]
    %v1467 = vld [vmem:[%s4 + $0xe8] sm:$0xf]
    %v1468 = vld [vmem:[%s4 + $0xec] sm:$0xf]
    %v1469 = vld [vmem:[%s4 + $0xf0] sm:$0xf]
    %v1470 = vld [vmem:[%s4 + $0xf4] sm:$0xf]
    %v1471 = vld [vmem:[%s4 + $0xf8] sm:$0xf]
    %v1472 = vld [vmem:[%s4 + $0xfc] sm:$0xf]
    %v1537 = vunpack.c.l.b16 %v1409
    %v1538 = vunpack.c.l.b16 %v1410
    %v1539 = vunpack.c.l.b16 %v1411
    %v1540 = vunpack.c.l.b16 %v1412
    %v1541 = vunpack.c.l.b16 %v1413
    %v1542 = vunpack.c.l.b16 %v1414
    %v1543 = vunpack.c.l.b16 %v1415
    %v1544 = vunpack.c.l.b16 %v1416
    %v1545 = vunpack.c.l.b16 %v1417
    %v1546 = vunpack.c.l.b16 %v1418
    %v1547 = vunpack.c.l.b16 %v1419
    %v1548 = vunpack.c.l.b16 %v1420
    %v1549 = vunpack.c.l.b16 %v1421
    %v1550 = vunpack.c.l.b16 %v1422
    %v1551 = vunpack.c.l.b16 %v1423
    %v1552 = vunpack.c.l.b16 %v1424
    %v1553 = vunpack.c.l.b16 %v1425
    %v1554 = vunpack.c.l.b16 %v1426
    %v1555 = vunpack.c.l.b16 %v1427
    %v1556 = vunpack.c.l.b16 %v1428
    %v1557 = vunpack.c.l.b16 %v1429
    %v1558 = vunpack.c.l.b16 %v1430
    %v1559 = vunpack.c.l.b16 %v1431
    %v1560 = vunpack.c.l.b16 %v1432
    %v1561 = vunpack.c.l.b16 %v1433
    %v1562 = vunpack.c.l.b16 %v1434
    %v1563 = vunpack.c.l.b16 %v1435
    %v1564 = vunpack.c.l.b16 %v1436
    %v1565 = vunpack.c.l.b16 %v1437
    %v1566 = vunpack.c.l.b16 %v1438
    %v1567 = vunpack.c.l.b16 %v1439
    %v1568 = vunpack.c.l.b16 %v1440
    %v1569 = vunpack.c.l.b16 %v1441
    %v1570 = vunpack.c.l.b16 %v1442
    %v1571 = vunpack.c.l.b16 %v1443
    %v1572 = vunpack.c.l.b16 %v1444
    %v1573 = vunpack.c.l.b16 %v1445
    %v1574 = vunpack.c.l.b16 %v1446
    %v1575 = vunpack.c.l.b16 %v1447
    %v1576 = vunpack.c.l.b16 %v1448
    %v1577 = vunpack.c.l.b16 %v1449
    %v1578 = vunpack.c.l.b16 %v1450
    %v1579 = vunpack.c.l.b16 %v1451
    %v1580 = vunpack.c.l.b16 %v1452
    %v1581 = vunpack.c.l.b16 %v1453
    %v1582 = vunpack.c.l.b16 %v1454
    %v1583 = vunpack.c.l.b16 %v1455
    %v1584 = vunpack.c.l.b16 %v1456
    %v1585 = vunpack.c.l.b16 %v1457
    %v1586 = vunpack.c.l.b16 %v1458
    %v1587 = vunpack.c.l.b16 %v1459
    %v1588 = vunpack.c.l.b16 %v1460
    %v1589 = vunpack.c.l.b16 %v1461
    %v1590 = vunpack.c.l.b16 %v1462
    %v1591 = vunpack.c.l.b16 %v1463
    %v1592 = vunpack.c.l.b16 %v1464
    %v1593 = vunpack.c.l.b16 %v1465
    %v1594 = vunpack.c.l.b16 %v1466
    %v1595 = vunpack.c.l.b16 %v1467
    %v1596 = vunpack.c.l.b16 %v1468
    %v1597 = vunpack.c.l.b16 %v1469
    %v1598 = vunpack.c.l.b16 %v1470
    %v1599 = vunpack.c.l.b16 %v1471
    %v1600 = vunpack.c.l.b16 %v1472
    %v1601 = vpack.c.b16 %v1538, %v1537
    %v1602 = vpack.c.b16 %v1540, %v1539
    %v1603 = vpack.c.b16 %v1542, %v1541
    %v1604 = vpack.c.b16 %v1544, %v1543
    %v1605 = vpack.c.b16 %v1546, %v1545
    %v1606 = vpack.c.b16 %v1548, %v1547
    %v1607 = vpack.c.b16 %v1550, %v1549
    %v1608 = vpack.c.b16 %v1552, %v1551
    %v1609 = vpack.c.b16 %v1554, %v1553
    %v1610 = vpack.c.b16 %v1556, %v1555
    %v1611 = vpack.c.b16 %v1558, %v1557
    %v1612 = vpack.c.b16 %v1560, %v1559
    %v1613 = vpack.c.b16 %v1562, %v1561
    %v1614 = vpack.c.b16 %v1564, %v1563
    %v1615 = vpack.c.b16 %v1566, %v1565
    %v1616 = vpack.c.b16 %v1568, %v1567
    %v1617 = vpack.c.b16 %v1570, %v1569
    %v1618 = vpack.c.b16 %v1572, %v1571
    %v1619 = vpack.c.b16 %v1574, %v1573
    %v1620 = vpack.c.b16 %v1576, %v1575
    %v1621 = vpack.c.b16 %v1578, %v1577
    %v1622 = vpack.c.b16 %v1580, %v1579
    %v1623 = vpack.c.b16 %v1582, %v1581
    %v1624 = vpack.c.b16 %v1584, %v1583
    %v1625 = vpack.c.b16 %v1586, %v1585
    %v1626 = vpack.c.b16 %v1588, %v1587
    %v1627 = vpack.c.b16 %v1590, %v1589
    %v1628 = vpack.c.b16 %v1592, %v1591
    %v1629 = vpack.c.b16 %v1594, %v1593
    %v1630 = vpack.c.b16 %v1596, %v1595
    %v1631 = vpack.c.b16 %v1598, %v1597
    %v1632 = vpack.c.b16 %v1600, %v1599
    %1665 = vmatpush.bf16.msra.mxu0 %v1608
    %1666 = vmatpush.bf16.msra.mxu0 %v1607
    %1667 = vmatpush.bf16.msra.mxu0 %v1606
    %1668 = vmatpush.bf16.msra.mxu0 %v1605
    %1669 = vmatpush.bf16.msra.mxu0 %v1604
    %1670 = vmatpush.bf16.msra.mxu0 %v1603
    %1671 = vmatpush.bf16.msra.mxu0 %v1602
    %1672 = vmatpush.bf16.msra.mxu0 %v1601
    %1673 = vmatmul.bf16.gmra.mxu0 %v1405
    %v1674 = vpop.f32.mrf.mxu0
    %v1675 = vadd.f32 0.0, %v1674
    %v1676 = vpop.f32.mrf.mxu0
    %1677 = vdwg.mxu0
    %1678 = vmatpush.bf16.msra.mxu0 %v1616
    %1679 = vmatpush.bf16.msra.mxu0 %v1615
    %1680 = vmatpush.bf16.msra.mxu0 %v1614
    %1681 = vmatpush.bf16.msra.mxu0 %v1613
    %1682 = vmatpush.bf16.msra.mxu0 %v1612
    %1683 = vmatpush.bf16.msra.mxu0 %v1611
    %1684 = vmatpush.bf16.msra.mxu0 %v1610
    %1685 = vmatpush.bf16.msra.mxu0 %v1609
    %1686 = vmatmul.bf16.gmra.mxu0 %v1406
    %v1687 = vpop.f32.mrf.mxu0
    %v1688 = vadd.f32 %v1675, %v1687
    %v1689 = vpop.f32.mrf.mxu0
    %1690 = vdwg.mxu0
    %1691 = vmatpush.bf16.msra.mxu0 %v1624
    %1692 = vmatpush.bf16.msra.mxu0 %v1623
    %1693 = vmatpush.bf16.msra.mxu0 %v1622
    %1694 = vmatpush.bf16.msra.mxu0 %v1621
    %1695 = vmatpush.bf16.msra.mxu0 %v1620
    %1696 = vmatpush.bf16.msra.mxu0 %v1619
    %1697 = vmatpush.bf16.msra.mxu0 %v1618
    %1698 = vmatpush.bf16.msra.mxu0 %v1617
    %1699 = vmatmul.bf16.gmra.mxu0 %v1407
    %v1700 = vpop.f32.mrf.mxu0
    %v1701 = vadd.f32 %v1688, %v1700
    %v1702 = vpop.f32.mrf.mxu0
    %1703 = vdwg.mxu0
    %1704 = vmatpush.bf16.msra.mxu0 %v1632
    %1705 = vmatpush.bf16.msra.mxu0 %v1631
    %1706 = vmatpush.bf16.msra.mxu0 %v1630
    %1707 = vmatpush.bf16.msra.mxu0 %v1629
    %1708 = vmatpush.bf16.msra.mxu0 %v1628
    %1709 = vmatpush.bf16.msra.mxu0 %v1627
    %1710 = vmatpush.bf16.msra.mxu0 %v1626
    %1711 = vmatpush.bf16.msra.mxu0 %v1625
    %1712 = vmatmul.bf16.gmra.mxu0 %v1408
    %v1713 = vpop.f32.mrf.mxu0
    %v1714 = vadd.f32 %v1701, %v1713
    %v1715 = vpop.f32.mrf.mxu0
    %1716 = vdwg.mxu0
    %v1717 = vpack.c.bf16 %v1401, %v1401
    %v1718 = vpack.c.bf16 %v1402, %v1402
    %v1719 = vpack.c.bf16 %v1403, %v1403
    %v1720 = vpack.c.bf16 %v1404, %v1404
    %1721 = vmatpush.bf16.msra.mxu0 %v1608
    %1722 = vmatpush.bf16.msra.mxu0 %v1607
    %1723 = vmatpush.bf16.msra.mxu0 %v1606
    %1724 = vmatpush.bf16.msra.mxu0 %v1605
    %1725 = vmatpush.bf16.msra.mxu0 %v1604
    %1726 = vmatpush.bf16.msra.mxu0 %v1603
    %1727 = vmatpush.bf16.msra.mxu0 %v1602
    %1728 = vmatpush.bf16.msra.mxu0 %v1601
    %1729 = vmatmul.bf16.gmra.mxu0 %v1717
    %v1730 = vpop.f32.mrf.mxu0
    %v1731 = vadd.f32 0.0, %v1730
    %v1732 = vpop.f32.mrf.mxu0
    %1733 = vdwg.mxu0
    %1734 = vmatpush.bf16.msra.mxu0 %v1616
    %1735 = vmatpush.bf16.msra.mxu0 %v1615
    %1736 = vmatpush.bf16.msra.mxu0 %v1614
    %1737 = vmatpush.bf16.msra.mxu0 %v1613
    %1738 = vmatpush.bf16.msra.mxu0 %v1612
    %1739 = vmatpush.bf16.msra.mxu0 %v1611
    %1740 = vmatpush.bf16.msra.mxu0 %v1610
    %1741 = vmatpush.bf16.msra.mxu0 %v1609
    %1742 = vmatmul.bf16.gmra.mxu0 %v1718
    %v1743 = vpop.f32.mrf.mxu0
    %v1744 = vadd.f32 %v1731, %v1743
    %v1745 = vpop.f32.mrf.mxu0
    %1746 = vdwg.mxu0
    %1747 = vmatpush.bf16.msra.mxu0 %v1624
    %1748 = vmatpush.bf16.msra.mxu0 %v1623
    %1749 = vmatpush.bf16.msra.mxu0 %v1622
    %1750 = vmatpush.bf16.msra.mxu0 %v1621
    %1751 = vmatpush.bf16.msra.mxu0 %v1620
    %1752 = vmatpush.bf16.msra.mxu0 %v1619
    %1753 = vmatpush.bf16.msra.mxu0 %v1618
    %1754 = vmatpush.bf16.msra.mxu0 %v1617
    %1755 = vmatmul.bf16.gmra.mxu0 %v1719
    %v1756 = vpop.f32.mrf.mxu0
    %v1757 = vadd.f32 %v1744, %v1756
    %v1758 = vpop.f32.mrf.mxu0
    %1759 = vdwg.mxu0
    %1760 = vmatpush.bf16.msra.mxu0 %v1632
    %1761 = vmatpush.bf16.msra.mxu0 %v1631
    %1762 = vmatpush.bf16.msra.mxu0 %v1630
    %1763 = vmatpush.bf16.msra.mxu0 %v1629
    %1764 = vmatpush.bf16.msra.mxu0 %v1628
    %1765 = vmatpush.bf16.msra.mxu0 %v1627
    %1766 = vmatpush.bf16.msra.mxu0 %v1626
    %1767 = vmatpush.bf16.msra.mxu0 %v1625
    %1768 = vmatmul.bf16.gmra.mxu0 %v1720
    %v1769 = vpop.f32.mrf.mxu0
    %v1770 = vadd.f32 %v1757, %v1769
    %v1771 = vpop.f32.mrf.mxu0
    %1772 = vdwg.mxu0
    %v1773 = vmul.f32 %v1714, 0.000739645
    %v1774 = vmul.f32 %v1770, 0.000739645
    %v1775 = vmul.f32 %v1773, %v1773
    %v1776 = vsub.f32 %v1774, %v1775
    %v1777 = vld [vmem:[#allocation17] sm:$0x1]
    %v1778 = vadd.f32 %v1776, 1e-05
    %v1779 = vrsqrt.pop %v1778
    %v1780 = vmul.f32 %v1779, %v1778
    %v1781 = vmul.f32 %v1780, %v1779
    %v1782 = vmul.f32 0.5, %v1781
    %v1783 = vsub.f32 1.5, %v1782
    %v1784 = vmul.f32 %v1779, %v1783
    %vm1785 = vweird.f32 %v1778
    %vm1786 = vweird.f32 %v1779
    %vm1787 = vmor %vm1785, %vm1786
    %v1788 = vsel %vm1787, %v1779, %v1784
    %v1789 = vmul.f32 %v1777, %v1788
    %v1790 = vld [vmem:[#allocation19] sm:$0x1]
    %v1791 = vmul.f32 %v1773, %v1789
    %v1792 = vsub.f32 %v1790, %v1791
    %v1793 = vpack.c.bf16 %v1789, %v1789
    %v1794 = vld [vmem:[#allocation11] sm:$0xff]
    %v1795 = vld [vmem:[#allocation11 + $0x8] sm:$0xff]
    %v1796 = vld [vmem:[#allocation11 + $0x10] sm:$0xff]
    %v1797 = vld [vmem:[#allocation11 + $0x18] sm:$0xff]
    %v1802 = vunpack.c.l.b16 %v1794
    %v1803 = vunpack.c.h.b16 %v1794
    %v1804 = vunpack.c.l.b16 %v1795
    %v1805 = vunpack.c.h.b16 %v1795
    %v1806 = vunpack.c.l.b16 %v1796
    %v1807 = vunpack.c.h.b16 %v1796
    %v1808 = vunpack.c.l.b16 %v1797
    %v1809 = vunpack.c.h.b16 %v1797
    %v1810 = vpack.c.b16 %v1806, %v1802
    %v1811 = vpack.c.b16 %v1807, %v1803
    %v1812 = vpack.c.b16 %v1808, %v1804
    %v1813 = vpack.c.b16 %v1809, %v1805
    %vm1818 = vcmask 130048
    %v1820 = vsel %vm1818, %v1793, 0
    %1822 = vmatpush.bf16.msra.mxu0 0
    %1823 = vmatpush.bf16.msra.mxu0 0
    %1824 = vmatpush.bf16.msra.mxu0 0
    %1825 = vmatpush.bf16.msra.mxu0 0
    %1826 = vmatpush.bf16.msra.mxu0 0
    %1827 = vmatpush.bf16.msra.mxu0 0
    %1828 = vmatpush.bf16.msra.mxu0 0
    %1829 = vmatpush.bf16.msra.mxu0 %v1810
    %1830 = vmatmul.bf16.gmra.mxu0 %v1820
    %v1831 = vpop.f32.mrf.mxu0
    %v1832 = vadd.f32 0.0, %v1831
    %v1833 = vpop.f32.mrf.mxu0
    %1834 = vdwg.mxu0
    %1835 = vmatpush.bf16.msra.mxu0 0
    %1836 = vmatpush.bf16.msra.mxu0 0
    %1837 = vmatpush.bf16.msra.mxu0 0
    %1838 = vmatpush.bf16.msra.mxu0 0
    %1839 = vmatpush.bf16.msra.mxu0 0
    %1840 = vmatpush.bf16.msra.mxu0 0
    %1841 = vmatpush.bf16.msra.mxu0 0
    %1842 = vmatpush.bf16.msra.mxu0 %v1811
    %1843 = vmatmul.bf16.gmra.mxu0 %v1820
    %v1844 = vpop.f32.mrf.mxu0
    %v1845 = vadd.f32 0.0, %v1844
    %v1846 = vpop.f32.mrf.mxu0
    %1847 = vdwg.mxu0
    %1848 = vmatpush.bf16.msra.mxu0 0
    %1849 = vmatpush.bf16.msra.mxu0 0
    %1850 = vmatpush.bf16.msra.mxu0 0
    %1851 = vmatpush.bf16.msra.mxu0 0
    %1852 = vmatpush.bf16.msra.mxu0 0
    %1853 = vmatpush.bf16.msra.mxu0 0
    %1854 = vmatpush.bf16.msra.mxu0 0
    %1855 = vmatpush.bf16.msra.mxu0 %v1812
    %1856 = vmatmul.bf16.gmra.mxu0 %v1820
    %v1857 = vpop.f32.mrf.mxu0
    %v1858 = vadd.f32 0.0, %v1857
    %v1859 = vpop.f32.mrf.mxu0
    %1860 = vdwg.mxu0
    %1861 = vmatpush.bf16.msra.mxu0 0
    %1862 = vmatpush.bf16.msra.mxu0 0
    %1863 = vmatpush.bf16.msra.mxu0 0
    %1864 = vmatpush.bf16.msra.mxu0 0
    %1865 = vmatpush.bf16.msra.mxu0 0
    %1866 = vmatpush.bf16.msra.mxu0 0
    %1867 = vmatpush.bf16.msra.mxu0 0
    %1868 = vmatpush.bf16.msra.mxu0 %v1813
    %1869 = vmatmul.bf16.gmra.mxu0 %v1820
    %v1870 = vpop.f32.mrf.mxu0
    %v1871 = vadd.f32 0.0, %v1870
    %v1872 = vpop.f32.mrf.mxu0
    %1873 = vdwg.mxu0
    %v1874 = vpack.c.bf16 %v1792, %v1792
    %v1876 = vsel %vm1818, %v1874, 0
    %1878 = vmatpush.bf16.msra.mxu0 0
    %1879 = vmatpush.bf16.msra.mxu0 0
    %1880 = vmatpush.bf16.msra.mxu0 0
    %1881 = vmatpush.bf16.msra.mxu0 0
    %1882 = vmatpush.bf16.msra.mxu0 0
    %1883 = vmatpush.bf16.msra.mxu0 0
    %1884 = vmatpush.bf16.msra.mxu0 0
    %1885 = vmatpush.bf16.msra.mxu0 %v1810
    %1886 = vmatmul.bf16.gmra.mxu0 %v1876
    %v1887 = vpop.f32.mrf.mxu0
    %v1888 = vadd.f32 0.0, %v1887
    %v1889 = vpop.f32.mrf.mxu0
    %1890 = vdwg.mxu0
    %1891 = vmatpush.bf16.msra.mxu0 0
    %1892 = vmatpush.bf16.msra.mxu0 0
    %1893 = vmatpush.bf16.msra.mxu0 0
    %1894 = vmatpush.bf16.msra.mxu0 0
    %1895 = vmatpush.bf16.msra.mxu0 0
    %1896 = vmatpush.bf16.msra.mxu0 0
    %1897 = vmatpush.bf16.msra.mxu0 0
    %1898 = vmatpush.bf16.msra.mxu0 %v1811
    %1899 = vmatmul.bf16.gmra.mxu0 %v1876
    %v1900 = vpop.f32.mrf.mxu0
    %v1901 = vadd.f32 0.0, %v1900
    %v1902 = vpop.f32.mrf.mxu0
    %1903 = vdwg.mxu0
    %1904 = vmatpush.bf16.msra.mxu0 0
    %1905 = vmatpush.bf16.msra.mxu0 0
    %1906 = vmatpush.bf16.msra.mxu0 0
    %1907 = vmatpush.bf16.msra.mxu0 0
    %1908 = vmatpush.bf16.msra.mxu0 0
    %1909 = vmatpush.bf16.msra.mxu0 0
    %1910 = vmatpush.bf16.msra.mxu0 0
    %1911 = vmatpush.bf16.msra.mxu0 %v1812
    %1912 = vmatmul.bf16.gmra.mxu0 %v1876
    %v1913 = vpop.f32.mrf.mxu0
    %v1914 = vadd.f32 0.0, %v1913
    %v1915 = vpop.f32.mrf.mxu0
    %1916 = vdwg.mxu0
    %1917 = vmatpush.bf16.msra.mxu0 0
    %1918 = vmatpush.bf16.msra.mxu0 0
    %1919 = vmatpush.bf16.msra.mxu0 0
    %1920 = vmatpush.bf16.msra.mxu0 0
    %1921 = vmatpush.bf16.msra.mxu0 0
    %1922 = vmatpush.bf16.msra.mxu0 0
    %1923 = vmatpush.bf16.msra.mxu0 0
    %1924 = vmatpush.bf16.msra.mxu0 %v1813
    %1925 = vmatmul.bf16.gmra.mxu0 %v1876
    %v1926 = vpop.f32.mrf.mxu0
    %v1927 = vadd.f32 0.0, %v1926
    %v1928 = vpop.f32.mrf.mxu0
    %1929 = vdwg.mxu0
    %v1930 = vld [vmem:[#allocation14] sm:$0xf]
    %v1931 = vld [vmem:[#allocation14 + $0x4] sm:$0xf]
    %v1932 = vld [vmem:[#allocation14 + $0x8] sm:$0xf]
    %v1933 = vld [vmem:[#allocation14 + $0xc] sm:$0x1]
    %v1934 = vld [vmem:[#allocation16] sm:$0xf]
    %v1935 = vld [vmem:[#allocation16 + $0x4] sm:$0x1]
    %v1936 = vld [vmem:[#allocation2] sm:$0xff]
    %v1937 = vld [vmem:[#allocation2 + $0x8] sm:$0xff]
    %v1938 = vld [vmem:[#allocation2 + $0x10] sm:$0xff]
    %v1939 = vld [vmem:[#allocation2 + $0x18] sm:$0xff]
    %v1940 = vld [vmem:[#allocation2 + $0x20] sm:$0xff]
    %v1941 = vld [vmem:[#allocation2 + $0x28] sm:$0xff]
    %v1942 = vld [vmem:[#allocation2 + $0x30] sm:$0xff]
    %v1943 = vld [vmem:[#allocation2 + $0x38] sm:$0xff]
    %v1944 = vld [vmem:[#allocation2 + $0x40] sm:$0xff]
    %v1945 = vld [vmem:[#allocation2 + $0x48] sm:$0xff]
    %v1946 = vld [vmem:[#allocation2 + $0x50] sm:$0xff]
    %v1947 = vld [vmem:[#allocation2 + $0x58] sm:$0xff]
    %v1948 = vld [vmem:[#allocation2 + $0x60] sm:$0x3]
    %v1949 = vld [vmem:[#allocation2 + $0x68] sm:$0x3]
    %v1950 = vld [vmem:[#allocation2 + $0x70] sm:$0x3]
    %v1951 = vld [vmem:[#allocation2 + $0x78] sm:$0x3]
    %v1952 = vperm.slane %v1832, 0
    %v1953 = vperm.slane %v1845, 0
    %v1954 = vperm.slane %v1858, 0
    %v1955 = vperm.slane %v1871, 0
    %v1956 = vmul.f32 %v1936, %v1952
    %v1957 = vmul.f32 %v1937, %v1953
    %v1958 = vmul.f32 %v1938, %v1954
    %v1959 = vmul.f32 %v1939, %v1955
    %v1960 = vmul.f32 %v1940, %v1952
    %v1961 = vmul.f32 %v1941, %v1953
    %v1962 = vmul.f32 %v1942, %v1954
    %v1963 = vmul.f32 %v1943, %v1955
    %v1964 = vmul.f32 %v1944, %v1952
    %v1965 = vmul.f32 %v1945, %v1953
    %v1966 = vmul.f32 %v1946, %v1954
    %v1967 = vmul.f32 %v1947, %v1955
    %v1968 = vmul.f32 %v1948, %v1952
    %v1969 = vmul.f32 %v1949, %v1953
    %v1970 = vmul.f32 %v1950, %v1954
    %v1971 = vmul.f32 %v1951, %v1955
    %v1972 = vperm.slane %v1888, 0
    %v1973 = vperm.slane %v1901, 0
    %v1974 = vperm.slane %v1914, 0
    %v1975 = vperm.slane %v1927, 0
    %v1976 = vadd.f32 %v1956, %v1972
    %v1977 = vadd.f32 %v1957, %v1973
    %v1978 = vadd.f32 %v1958, %v1974
    %v1979 = vadd.f32 %v1959, %v1975
    %v1980 = vadd.f32 %v1960, %v1972
    %v1981 = vadd.f32 %v1961, %v1973
    %v1982 = vadd.f32 %v1962, %v1974
    %v1983 = vadd.f32 %v1963, %v1975
    %v1984 = vadd.f32 %v1964, %v1972
    %v1985 = vadd.f32 %v1965, %v1973
    %v1986 = vadd.f32 %v1966, %v1974
    %v1987 = vadd.f32 %v1967, %v1975
    %v1988 = vadd.f32 %v1968, %v1972
    %v1989 = vadd.f32 %v1969, %v1973
    %v1990 = vadd.f32 %v1970, %v1974
    %v1991 = vadd.f32 %v1971, %v1975
    %v1992 = vmax.f32 %v1976, 0.0
    %v1993 = vmax.f32 %v1977, 0.0
    %v1994 = vmax.f32 %v1978, 0.0
    %v1995 = vmax.f32 %v1979, 0.0
    %v1996 = vmax.f32 %v1980, 0.0
    %v1997 = vmax.f32 %v1981, 0.0
    %v1998 = vmax.f32 %v1982, 0.0
    %v1999 = vmax.f32 %v1983, 0.0
    %v2000 = vmax.f32 %v1984, 0.0
    %v2001 = vmax.f32 %v1985, 0.0
    %v2002 = vmax.f32 %v1986, 0.0
    %v2003 = vmax.f32 %v1987, 0.0
    %v2004 = vmax.f32 %v1988, 0.0
    %v2005 = vmax.f32 %v1989, 0.0
    %v2006 = vmax.f32 %v1990, 0.0
    %v2007 = vmax.f32 %v1991, 0.0
    %v2008 = vmax.f32 %v1992, %v1994
    %v2009 = vmax.f32 %v1993, %v1995
    %v2010 = vmax.f32 %v1996, %v1998
    %v2011 = vmax.f32 %v1997, %v1999
    %v2012 = vmax.f32 %v2000, %v2002
    %v2013 = vmax.f32 %v2001, %v2003
    %v2014 = vmax.f32 %v2004, %v2006
    %v2015 = vmax.f32 %v2005, %v2007
    %v2016 = vpack.c.bf16 %v2010, %v2008
    %v2017 = vpack.c.bf16 %v2011, %v2009
    %v2018 = vpack.c.bf16 %v2014, %v2012
    %v2019 = vpack.c.bf16 %v2015, %v2013
    %v2024 = vunpack.c.l.b16 %v1930
    %v2025 = vunpack.c.l.b16 %v1931
    %v2026 = vunpack.c.l.b16 %v1932
    %v2027 = vunpack.c.l.b16 %v1933
    %v2028 = vpack.c.b16 %v2025, %v2024
    %v2029 = vpack.c.b16 %v2027, %v2026
    %vm2030 = vcmask 211968
    %v2032 = vsel %vm2030, %v2028, 0
    %v2035 = vsel %vm2030, %v2029, 0
    %vm2037 = vcmask 1044480
    %v2039 = vsel %vm2037, %v2018, 0
    %v2042 = vsel %vm2037, %v2019, 0
    %2044 = vmatpush.bf16.msra.mxu0 0
    %2045 = vmatpush.bf16.msra.mxu0 0
    %2046 = vmatpush.bf16.msra.mxu0 0
    %2047 = vmatpush.bf16.msra.mxu0 0
    %2048 = vmatpush.bf16.msra.mxu0 0
    %2049 = vmatpush.bf16.msra.mxu0 0
    %2050 = vmatpush.bf16.msra.mxu0 %v2039
    %2051 = vmatpush.bf16.msra.mxu0 %v2016
    %2052 = vmatmul.bf16.gmra.mxu0 %v2032
    %v2053 = vpop.f32.mrf.mxu0
    %v2054 = vadd.f32 0.0, %v2053
    %v2055 = vpop.f32.mrf.mxu0
    %v2056 = vadd.f32 0.0, %v2055
    %2057 = vmatmul.bf16.gmra.mxu0 %v2035
    %v2058 = vpop.f32.mrf.mxu0
    %v2059 = vadd.f32 0.0, %v2058
    %v2060 = vpop.f32.mrf.mxu0
    %v2061 = vadd.f32 0.0, %v2060
    %2062 = vdwg.mxu0
    %2063 = vmatpush.bf16.msra.mxu0 0
    %2064 = vmatpush.bf16.msra.mxu0 0
    %2065 = vmatpush.bf16.msra.mxu0 0
    %2066 = vmatpush.bf16.msra.mxu0 0
    %2067 = vmatpush.bf16.msra.mxu0 0
    %2068 = vmatpush.bf16.msra.mxu0 0
    %2069 = vmatpush.bf16.msra.mxu0 %v2042
    %2070 = vmatpush.bf16.msra.mxu0 %v2017
    %2071 = vmatmul.bf16.gmra.mxu0 %v2032
    %v2072 = vpop.f32.mrf.mxu0
    %v2073 = vadd.f32 0.0, %v2072
    %v2074 = vpop.f32.mrf.mxu0
    %v2075 = vadd.f32 0.0, %v2074
    %2076 = vmatmul.bf16.gmra.mxu0 %v2035
    %v2077 = vpop.f32.mrf.mxu0
    %v2078 = vadd.f32 0.0, %v2077
    %v2079 = vpop.f32.mrf.mxu0
    %v2080 = vadd.f32 0.0, %v2079
    %2081 = vdwg.mxu0
    %vm2088 = vcmask 1042432
    %v2089 = vrot.slane %v2056, 5
    %v2090 = vrot.slane %v2059, 5
    %v2091 = vsel %vm2088, %v2089, %v2090
    %v2092 = vrot.slane %v2075, 5
    %v2093 = vrot.slane %v2078, 5
    %v2094 = vsel %vm2088, %v2092, %v2093
    %v2095 = vrot.slane %v2061, 5
    %v2096 = vsel %vm2088, %v2090, %v2095
    %v2097 = vrot.slane %v2080, 5
    %v2098 = vsel %vm2088, %v2093, %v2097
    %v2103 = vmax.f32 %v2054, %v2091
    %v2104 = vmax.f32 %v2073, %v2094
    %v2105 = vmax.f32 %v2056, %v2096
    %v2106 = vmax.f32 %v2075, %v2098
    %v2107 = vpack.c.bf16 %v2105, %v2103
    %v2108 = vpack.c.bf16 %v2106, %v2104
    %v2109 = vld [vmem:[#allocation8] sm:$0xff]
    %v2110 = vld [vmem:[#allocation8 + $0x8] sm:$0xff]
    %v2111 = vld [vmem:[#allocation8 + $0x10] sm:$0xff]
    %v2112 = vld [vmem:[#allocation8 + $0x18] sm:$0xff]
    %v2113 = vld [vmem:[#allocation8 + $0x20] sm:$0xff]
    %v2114 = vld [vmem:[#allocation8 + $0x28] sm:$0xff]
    %v2115 = vld [vmem:[#allocation8 + $0x30] sm:$0xff]
    %v2116 = vld [vmem:[#allocation8 + $0x38] sm:$0xff]
    %v2117 = vld [vmem:[#allocation8 + $0x40] sm:$0xff]
    %v2118 = vld [vmem:[#allocation8 + $0x48] sm:$0xff]
    %v2119 = vld [vmem:[#allocation8 + $0x50] sm:$0xff]
    %v2120 = vld [vmem:[#allocation8 + $0x58] sm:$0xff]
    %v2121 = vld [vmem:[#allocation8 + $0x60] sm:$0xff]
    %v2122 = vld [vmem:[#allocation8 + $0x68] sm:$0xff]
    %v2123 = vld [vmem:[#allocation8 + $0x70] sm:$0xff]
    %v2124 = vld [vmem:[#allocation8 + $0x78] sm:$0xff]
    %v2125 = vld [vmem:[#allocation8 + $0x80] sm:$0xff]
    %v2126 = vld [vmem:[#allocation8 + $0x88] sm:$0xff]
    %v2127 = vld [vmem:[#allocation8 + $0x90] sm:$0xff]
    %v2128 = vld [vmem:[#allocation8 + $0x98] sm:$0xff]
    %v2129 = vld [vmem:[#allocation8 + $0xa0] sm:$0xff]
    %v2130 = vld [vmem:[#allocation8 + $0xa8] sm:$0xff]
    %v2131 = vld [vmem:[#allocation8 + $0xb0] sm:$0xff]
    %v2132 = vld [vmem:[#allocation8 + $0xb8] sm:$0xff]
    %v2133 = vld [vmem:[#allocation8 + $0xc0] sm:$0xff]
    %v2134 = vld [vmem:[#allocation8 + $0xc8] sm:$0xff]
    %v2135 = vld [vmem:[#allocation8 + $0xd0] sm:$0xff]
    %v2136 = vld [vmem:[#allocation8 + $0xd8] sm:$0xff]
    %v2137 = vld [vmem:[#allocation8 + $0xe0] sm:$0xff]
    %v2138 = vld [vmem:[#allocation8 + $0xe8] sm:$0xff]
    %v2139 = vld [vmem:[#allocation8 + $0xf0] sm:$0xff]
    %v2140 = vld [vmem:[#allocation8 + $0xf8] sm:$0xff]
    %v2141 = vld [vmem:[#allocation8 + $0x100] sm:$0xff]
    %v2142 = vld [vmem:[#allocation8 + $0x108] sm:$0xff]
    %v2143 = vld [vmem:[#allocation8 + $0x110] sm:$0xff]
    %v2144 = vld [vmem:[#allocation8 + $0x118] sm:$0xff]
    %v2145 = vld [vmem:[#allocation8 + $0x120] sm:$0xff]
    %v2146 = vld [vmem:[#allocation8 + $0x128] sm:$0xff]
    %v2147 = vld [vmem:[#allocation8 + $0x130] sm:$0xff]
    %v2148 = vld [vmem:[#allocation8 + $0x138] sm:$0xff]
    %v2149 = vld [vmem:[#allocation8 + $0x140] sm:$0xff]
    %v2150 = vld [vmem:[#allocation8 + $0x148] sm:$0xff]
    %v2151 = vld [vmem:[#allocation8 + $0x150] sm:$0xff]
    %v2152 = vld [vmem:[#allocation8 + $0x158] sm:$0xff]
    %v2153 = vld [vmem:[#allocation8 + $0x160] sm:$0xff]
    %v2154 = vld [vmem:[#allocation8 + $0x168] sm:$0xff]
    %v2155 = vld [vmem:[#allocation8 + $0x170] sm:$0xff]
    %v2156 = vld [vmem:[#allocation8 + $0x178] sm:$0xff]
    %v2157 = vld [vmem:[#allocation8 + $0x180] sm:$0xff]
    %v2158 = vld [vmem:[#allocation8 + $0x188] sm:$0xff]
    %v2159 = vld [vmem:[#allocation8 + $0x190] sm:$0xff]
    %v2160 = vld [vmem:[#allocation8 + $0x198] sm:$0xff]
    %v2161 = vld [vmem:[#allocation8 + $0x1a0] sm:$0xff]
    %v2162 = vld [vmem:[#allocation8 + $0x1a8] sm:$0xff]
    %v2163 = vld [vmem:[#allocation8 + $0x1b0] sm:$0xff]
    %v2164 = vld [vmem:[#allocation8 + $0x1b8] sm:$0xff]
    %v2165 = vld [vmem:[#allocation8 + $0x1c0] sm:$0xff]
    %v2166 = vld [vmem:[#allocation8 + $0x1c8] sm:$0xff]
    %v2167 = vld [vmem:[#allocation8 + $0x1d0] sm:$0xff]
    %v2168 = vld [vmem:[#allocation8 + $0x1d8] sm:$0xff]
    %v2169 = vld [vmem:[#allocation8 + $0x1e0] sm:$0xff]
    %v2170 = vld [vmem:[#allocation8 + $0x1e8] sm:$0xff]
    %v2171 = vld [vmem:[#allocation8 + $0x1f0] sm:$0xff]
    %v2172 = vld [vmem:[#allocation8 + $0x1f8] sm:$0xff]
    %v2173 = vld [vmem:[#allocation8 + $0x200] sm:$0xff]
    %v2174 = vld [vmem:[#allocation8 + $0x208] sm:$0xff]
    %v2175 = vld [vmem:[#allocation8 + $0x210] sm:$0xff]
    %v2176 = vld [vmem:[#allocation8 + $0x218] sm:$0xff]
    %v2177 = vld [vmem:[#allocation8 + $0x220] sm:$0xff]
    %v2178 = vld [vmem:[#allocation8 + $0x228] sm:$0xff]
    %v2179 = vld [vmem:[#allocation8 + $0x230] sm:$0xff]
    %v2180 = vld [vmem:[#allocation8 + $0x238] sm:$0xff]
    %v2181 = vld [vmem:[#allocation8 + $0x240] sm:$0xff]
    %v2182 = vld [vmem:[#allocation8 + $0x248] sm:$0xff]
    %v2183 = vld [vmem:[#allocation8 + $0x250] sm:$0xff]
    %v2184 = vld [vmem:[#allocation8 + $0x258] sm:$0xff]
    %v2185 = vld [vmem:[#allocation8 + $0x260] sm:$0xff]
    %v2186 = vld [vmem:[#allocation8 + $0x268] sm:$0xff]
    %v2187 = vld [vmem:[#allocation8 + $0x270] sm:$0xff]
    %v2188 = vld [vmem:[#allocation8 + $0x278] sm:$0xff]
    %v2189 = vld [vmem:[#allocation8 + $0x280] sm:$0xff]
    %v2190 = vld [vmem:[#allocation8 + $0x288] sm:$0xff]
    %v2191 = vld [vmem:[#allocation8 + $0x290] sm:$0xff]
    %v2192 = vld [vmem:[#allocation8 + $0x298] sm:$0xff]
    %v2193 = vld [vmem:[#allocation8 + $0x2a0] sm:$0xff]
    %v2194 = vld [vmem:[#allocation8 + $0x2a8] sm:$0xff]
    %v2195 = vld [vmem:[#allocation8 + $0x2b0] sm:$0xff]
    %v2196 = vld [vmem:[#allocation8 + $0x2b8] sm:$0xff]
    %v2197 = vld [vmem:[#allocation8 + $0x2c0] sm:$0xff]
    %v2198 = vld [vmem:[#allocation8 + $0x2c8] sm:$0xff]
    %v2199 = vld [vmem:[#allocation8 + $0x2d0] sm:$0xff]
    %v2200 = vld [vmem:[#allocation8 + $0x2d8] sm:$0xff]
    %v2201 = vld [vmem:[#allocation8 + $0x2e0] sm:$0xff]
    %v2202 = vld [vmem:[#allocation8 + $0x2e8] sm:$0xff]
    %v2203 = vld [vmem:[#allocation8 + $0x2f0] sm:$0xff]
    %v2204 = vld [vmem:[#allocation8 + $0x2f8] sm:$0xff]
    %s2205 = scalar_lea.vmem [#allocation8], 768
    %v2206 = vld [vmem:[%s2205] sm:$0xff]
    %v2207 = vld [vmem:[%s2205 + $0x8] sm:$0xff]
    %v2208 = vld [vmem:[%s2205 + $0x10] sm:$0xff]
    %v2209 = vld [vmem:[%s2205 + $0x18] sm:$0xff]
    %v2210 = vld [vmem:[%s2205 + $0x20] sm:$0xff]
    %v2211 = vld [vmem:[%s2205 + $0x28] sm:$0xff]
    %v2212 = vld [vmem:[%s2205 + $0x30] sm:$0xff]
    %v2213 = vld [vmem:[%s2205 + $0x38] sm:$0xff]
    %v2214 = vld [vmem:[%s2205 + $0x40] sm:$0xff]
    %v2215 = vld [vmem:[%s2205 + $0x48] sm:$0xff]
    %v2216 = vld [vmem:[%s2205 + $0x50] sm:$0xff]
    %v2217 = vld [vmem:[%s2205 + $0x58] sm:$0xff]
    %v2218 = vld [vmem:[%s2205 + $0x60] sm:$0xff]
    %v2219 = vld [vmem:[%s2205 + $0x68] sm:$0xff]
    %v2220 = vld [vmem:[%s2205 + $0x70] sm:$0xff]
    %v2221 = vld [vmem:[%s2205 + $0x78] sm:$0xff]
    %v2222 = vld [vmem:[%s2205 + $0x80] sm:$0xff]
    %v2223 = vld [vmem:[%s2205 + $0x88] sm:$0xff]
    %v2224 = vld [vmem:[%s2205 + $0x90] sm:$0xff]
    %v2225 = vld [vmem:[%s2205 + $0x98] sm:$0xff]
    %v2226 = vld [vmem:[%s2205 + $0xa0] sm:$0xff]
    %v2227 = vld [vmem:[%s2205 + $0xa8] sm:$0xff]
    %v2228 = vld [vmem:[%s2205 + $0xb0] sm:$0xff]
    %v2229 = vld [vmem:[%s2205 + $0xb8] sm:$0xff]
    %v2230 = vld [vmem:[%s2205 + $0xc0] sm:$0xff]
    %v2231 = vld [vmem:[%s2205 + $0xc8] sm:$0xff]
    %v2232 = vld [vmem:[%s2205 + $0xd0] sm:$0xff]
    %v2233 = vld [vmem:[%s2205 + $0xd8] sm:$0xff]
    %v2234 = vld [vmem:[%s2205 + $0xe0] sm:$0xff]
    %v2235 = vld [vmem:[%s2205 + $0xe8] sm:$0xff]
    %v2236 = vld [vmem:[%s2205 + $0xf0] sm:$0xff]
    %v2237 = vld [vmem:[%s2205 + $0xf8] sm:$0xff]
    %v2238 = vld [vmem:[%s2205 + $0x100] sm:$0xff]
    %v2239 = vld [vmem:[%s2205 + $0x108] sm:$0xff]
    %v2240 = vld [vmem:[%s2205 + $0x110] sm:$0xff]
    %v2241 = vld [vmem:[%s2205 + $0x118] sm:$0xff]
    %v2242 = vld [vmem:[%s2205 + $0x120] sm:$0xff]
    %v2243 = vld [vmem:[%s2205 + $0x128] sm:$0xff]
    %v2244 = vld [vmem:[%s2205 + $0x130] sm:$0xff]
    %v2245 = vld [vmem:[%s2205 + $0x138] sm:$0xff]
    %v2246 = vld [vmem:[%s2205 + $0x140] sm:$0xff]
    %v2247 = vld [vmem:[%s2205 + $0x148] sm:$0xff]
    %v2248 = vld [vmem:[%s2205 + $0x150] sm:$0xff]
    %v2249 = vld [vmem:[%s2205 + $0x158] sm:$0xff]
    %v2250 = vld [vmem:[%s2205 + $0x160] sm:$0xff]
    %v2251 = vld [vmem:[%s2205 + $0x168] sm:$0xff]
    %v2252 = vld [vmem:[%s2205 + $0x170] sm:$0xff]
    %v2253 = vld [vmem:[%s2205 + $0x178] sm:$0xff]
    %v2254 = vld [vmem:[%s2205 + $0x180] sm:$0xff]
    %v2255 = vld [vmem:[%s2205 + $0x188] sm:$0xff]
    %v2256 = vld [vmem:[%s2205 + $0x190] sm:$0xff]
    %v2257 = vld [vmem:[%s2205 + $0x198] sm:$0xff]
    %v2258 = vld [vmem:[%s2205 + $0x1a0] sm:$0xff]
    %v2259 = vld [vmem:[%s2205 + $0x1a8] sm:$0xff]
    %v2260 = vld [vmem:[%s2205 + $0x1b0] sm:$0xff]
    %v2261 = vld [vmem:[%s2205 + $0x1b8] sm:$0xff]
    %v2262 = vld [vmem:[%s2205 + $0x1c0] sm:$0xff]
    %v2263 = vld [vmem:[%s2205 + $0x1c8] sm:$0xff]
    %v2264 = vld [vmem:[%s2205 + $0x1d0] sm:$0xff]
    %v2265 = vld [vmem:[%s2205 + $0x1d8] sm:$0xff]
    %v2266 = vld [vmem:[%s2205 + $0x1e0] sm:$0xff]
    %v2267 = vld [vmem:[%s2205 + $0x1e8] sm:$0xff]
    %v2268 = vld [vmem:[%s2205 + $0x1f0] sm:$0xff]
    %v2269 = vld [vmem:[%s2205 + $0x1f8] sm:$0xff]
    %v2270 = vld [vmem:[%s2205 + $0x200] sm:$0xff]
    %v2271 = vld [vmem:[%s2205 + $0x208] sm:$0xff]
    %v2272 = vld [vmem:[%s2205 + $0x210] sm:$0xff]
    %v2273 = vld [vmem:[%s2205 + $0x218] sm:$0xff]
    %v2274 = vld [vmem:[%s2205 + $0x220] sm:$0xff]
    %v2275 = vld [vmem:[%s2205 + $0x228] sm:$0xff]
    %v2276 = vld [vmem:[%s2205 + $0x230] sm:$0xff]
    %v2277 = vld [vmem:[%s2205 + $0x238] sm:$0xff]
    %v2278 = vld [vmem:[%s2205 + $0x240] sm:$0xff]
    %v2279 = vld [vmem:[%s2205 + $0x248] sm:$0xff]
    %v2280 = vld [vmem:[%s2205 + $0x250] sm:$0xff]
    %v2281 = vld [vmem:[%s2205 + $0x258] sm:$0xff]
    %v2282 = vld [vmem:[%s2205 + $0x260] sm:$0xff]
    %v2283 = vld [vmem:[%s2205 + $0x268] sm:$0xff]
    %v2284 = vld [vmem:[%s2205 + $0x270] sm:$0xff]
    %v2285 = vld [vmem:[%s2205 + $0x278] sm:$0xff]
    %v2286 = vld [vmem:[%s2205 + $0x280] sm:$0xff]
    %v2287 = vld [vmem:[%s2205 + $0x288] sm:$0xff]
    %v2288 = vld [vmem:[%s2205 + $0x290] sm:$0xff]
    %v2289 = vld [vmem:[%s2205 + $0x298] sm:$0xff]
    %v2290 = vld [vmem:[%s2205 + $0x2a0] sm:$0xff]
    %v2291 = vld [vmem:[%s2205 + $0x2a8] sm:$0xff]
    %v2292 = vld [vmem:[%s2205 + $0x2b0] sm:$0xff]
    %v2293 = vld [vmem:[%s2205 + $0x2b8] sm:$0xff]
    %v2294 = vld [vmem:[%s2205 + $0x2c0] sm:$0xff]
    %v2295 = vld [vmem:[%s2205 + $0x2c8] sm:$0xff]
    %v2296 = vld [vmem:[%s2205 + $0x2d0] sm:$0xff]
    %v2297 = vld [vmem:[%s2205 + $0x2d8] sm:$0xff]
    %v2298 = vld [vmem:[%s2205 + $0x2e0] sm:$0xff]
    %v2299 = vld [vmem:[%s2205 + $0x2e8] sm:$0xff]
    %v2300 = vld [vmem:[%s2205 + $0x2f0] sm:$0xff]
    %v2301 = vld [vmem:[%s2205 + $0x2f8] sm:$0xff]
    %v2303 = vshrl.u32 %v2107, 16
    %v2305 = vshll.u32 %v2107, 16
    %v2307 = vrot.slane %v2305, 1
    %v2308 = vor.u32 %v2303, %v2307
    %v2310 = vshrl.u32 %v2108, 16
    %v2312 = vshll.u32 %v2108, 16
    %v2314 = vrot.slane %v2312, 1
    %v2315 = vor.u32 %v2310, %v2314
    %v2414 = vunpack.c.l.b16 %v2206
    %v2415 = vunpack.c.h.b16 %v2206
    %v2416 = vunpack.c.l.b16 %v2207
    %v2417 = vunpack.c.h.b16 %v2207
    %v2418 = vunpack.c.l.b16 %v2208
    %v2419 = vunpack.c.h.b16 %v2208
    %v2420 = vunpack.c.l.b16 %v2209
    %v2421 = vunpack.c.h.b16 %v2209
    %v2422 = vunpack.c.l.b16 %v2210
    %v2423 = vunpack.c.h.b16 %v2210
    %v2424 = vunpack.c.l.b16 %v2211
    %v2425 = vunpack.c.h.b16 %v2211
    %v2426 = vunpack.c.l.b16 %v2212
    %v2427 = vunpack.c.h.b16 %v2212
    %v2428 = vunpack.c.l.b16 %v2213
    %v2429 = vunpack.c.h.b16 %v2213
    %v2430 = vunpack.c.l.b16 %v2214
    %v2431 = vunpack.c.h.b16 %v2214
    %v2432 = vunpack.c.l.b16 %v2215
    %v2433 = vunpack.c.h.b16 %v2215
    %v2434 = vunpack.c.l.b16 %v2216
    %v2435 = vunpack.c.h.b16 %v2216
    %v2436 = vunpack.c.l.b16 %v2217
    %v2437 = vunpack.c.h.b16 %v2217
    %v2438 = vunpack.c.l.b16 %v2218
    %v2439 = vunpack.c.h.b16 %v2218
    %v2440 = vunpack.c.l.b16 %v2219
    %v2441 = vunpack.c.h.b16 %v2219
    %v2442 = vunpack.c.l.b16 %v2220
    %v2443 = vunpack.c.h.b16 %v2220
    %v2444 = vunpack.c.l.b16 %v2221
    %v2445 = vunpack.c.h.b16 %v2221
    %v2446 = vunpack.c.l.b16 %v2222
    %v2447 = vunpack.c.h.b16 %v2222
    %v2448 = vunpack.c.l.b16 %v2223
    %v2449 = vunpack.c.h.b16 %v2223
    %v2450 = vunpack.c.l.b16 %v2224
    %v2451 = vunpack.c.h.b16 %v2224
    %v2452 = vunpack.c.l.b16 %v2225
    %v2453 = vunpack.c.h.b16 %v2225
    %v2454 = vunpack.c.l.b16 %v2226
    %v2455 = vunpack.c.h.b16 %v2226
    %v2456 = vunpack.c.l.b16 %v2227
    %v2457 = vunpack.c.h.b16 %v2227
    %v2458 = vunpack.c.l.b16 %v2228
    %v2459 = vunpack.c.h.b16 %v2228
    %v2460 = vunpack.c.l.b16 %v2229
    %v2461 = vunpack.c.h.b16 %v2229
    %v2462 = vunpack.c.l.b16 %v2230
    %v2463 = vunpack.c.h.b16 %v2230
    %v2464 = vunpack.c.l.b16 %v2231
    %v2465 = vunpack.c.h.b16 %v2231
    %v2466 = vunpack.c.l.b16 %v2232
    %v2467 = vunpack.c.h.b16 %v2232
    %v2468 = vunpack.c.l.b16 %v2233
    %v2469 = vunpack.c.h.b16 %v2233
    %v2470 = vunpack.c.l.b16 %v2234
    %v2471 = vunpack.c.h.b16 %v2234
    %v2472 = vunpack.c.l.b16 %v2235
    %v2473 = vunpack.c.h.b16 %v2235
    %v2474 = vunpack.c.l.b16 %v2236
    %v2475 = vunpack.c.h.b16 %v2236
    %v2476 = vunpack.c.l.b16 %v2237
    %v2477 = vunpack.c.h.b16 %v2237
    %v2478 = vunpack.c.l.b16 %v2238
    %v2479 = vunpack.c.h.b16 %v2238
    %v2480 = vunpack.c.l.b16 %v2239
    %v2481 = vunpack.c.h.b16 %v2239
    %v2482 = vunpack.c.l.b16 %v2240
    %v2483 = vunpack.c.h.b16 %v2240
    %v2484 = vunpack.c.l.b16 %v2241
    %v2485 = vunpack.c.h.b16 %v2241
    %v2486 = vunpack.c.l.b16 %v2242
    %v2487 = vunpack.c.h.b16 %v2242
    %v2488 = vunpack.c.l.b16 %v2243
    %v2489 = vunpack.c.h.b16 %v2243
    %v2490 = vunpack.c.l.b16 %v2244
    %v2491 = vunpack.c.h.b16 %v2244
    %v2492 = vunpack.c.l.b16 %v2245
    %v2493 = vunpack.c.h.b16 %v2245
    %v2494 = vunpack.c.l.b16 %v2246
    %v2495 = vunpack.c.h.b16 %v2246
    %v2496 = vunpack.c.l.b16 %v2247
    %v2497 = vunpack.c.h.b16 %v2247
    %v2498 = vunpack.c.l.b16 %v2248
    %v2499 = vunpack.c.h.b16 %v2248
    %v2500 = vunpack.c.l.b16 %v2249
    %v2501 = vunpack.c.h.b16 %v2249
    %v2502 = vunpack.c.l.b16 %v2250
    %v2503 = vunpack.c.h.b16 %v2250
    %v2504 = vunpack.c.l.b16 %v2251
    %v2505 = vunpack.c.h.b16 %v2251
    %v2506 = vunpack.c.l.b16 %v2252
    %v2507 = vunpack.c.h.b16 %v2252
    %v2508 = vunpack.c.l.b16 %v2253
    %v2509 = vunpack.c.h.b16 %v2253
    %v2510 = vunpack.c.l.b16 %v2254
    %v2511 = vunpack.c.h.b16 %v2254
    %v2512 = vunpack.c.l.b16 %v2255
    %v2513 = vunpack.c.h.b16 %v2255
    %v2514 = vunpack.c.l.b16 %v2256
    %v2515 = vunpack.c.h.b16 %v2256
    %v2516 = vunpack.c.l.b16 %v2257
    %v2517 = vunpack.c.h.b16 %v2257
    %v2518 = vunpack.c.l.b16 %v2258
    %v2519 = vunpack.c.h.b16 %v2258
    %v2520 = vunpack.c.l.b16 %v2259
    %v2521 = vunpack.c.h.b16 %v2259
    %v2522 = vunpack.c.l.b16 %v2260
    %v2523 = vunpack.c.h.b16 %v2260
    %v2524 = vunpack.c.l.b16 %v2261
    %v2525 = vunpack.c.h.b16 %v2261
    %v2526 = vunpack.c.l.b16 %v2262
    %v2527 = vunpack.c.h.b16 %v2262
    %v2528 = vunpack.c.l.b16 %v2263
    %v2529 = vunpack.c.h.b16 %v2263
    %v2530 = vunpack.c.l.b16 %v2264
    %v2531 = vunpack.c.h.b16 %v2264
    %v2532 = vunpack.c.l.b16 %v2265
    %v2533 = vunpack.c.h.b16 %v2265
    %v2534 = vunpack.c.l.b16 %v2266
    %v2535 = vunpack.c.h.b16 %v2266
    %v2536 = vunpack.c.l.b16 %v2267
    %v2537 = vunpack.c.h.b16 %v2267
    %v2538 = vunpack.c.l.b16 %v2268
    %v2539 = vunpack.c.h.b16 %v2268
    %v2540 = vunpack.c.l.b16 %v2269
    %v2541 = vunpack.c.h.b16 %v2269
    %v2542 = vunpack.c.l.b16 %v2270
    %v2543 = vunpack.c.h.b16 %v2270
    %v2544 = vunpack.c.l.b16 %v2271
    %v2545 = vunpack.c.h.b16 %v2271
    %v2546 = vunpack.c.l.b16 %v2272
    %v2547 = vunpack.c.h.b16 %v2272
    %v2548 = vunpack.c.l.b16 %v2273
    %v2549 = vunpack.c.h.b16 %v2273
    %v2550 = vunpack.c.l.b16 %v2274
    %v2551 = vunpack.c.h.b16 %v2274
    %v2552 = vunpack.c.l.b16 %v2275
    %v2553 = vunpack.c.h.b16 %v2275
    %v2554 = vunpack.c.l.b16 %v2276
    %v2555 = vunpack.c.h.b16 %v2276
    %v2556 = vunpack.c.l.b16 %v2277
    %v2557 = vunpack.c.h.b16 %v2277
    %v2558 = vunpack.c.l.b16 %v2278
    %v2559 = vunpack.c.h.b16 %v2278
    %v2560 = vunpack.c.l.b16 %v2279
    %v2561 = vunpack.c.h.b16 %v2279
    %v2562 = vunpack.c.l.b16 %v2280
    %v2563 = vunpack.c.h.b16 %v2280
    %v2564 = vunpack.c.l.b16 %v2281
    %v2565 = vunpack.c.h.b16 %v2281
    %v2566 = vunpack.c.l.b16 %v2282
    %v2567 = vunpack.c.h.b16 %v2282
    %v2568 = vunpack.c.l.b16 %v2283
    %v2569 = vunpack.c.h.b16 %v2283
    %v2570 = vunpack.c.l.b16 %v2284
    %v2571 = vunpack.c.h.b16 %v2284
    %v2572 = vunpack.c.l.b16 %v2285
    %v2573 = vunpack.c.h.b16 %v2285
    %v2574 = vunpack.c.l.b16 %v2286
    %v2575 = vunpack.c.h.b16 %v2286
    %v2576 = vunpack.c.l.b16 %v2287
    %v2577 = vunpack.c.h.b16 %v2287
    %v2578 = vunpack.c.l.b16 %v2288
    %v2579 = vunpack.c.h.b16 %v2288
    %v2580 = vunpack.c.l.b16 %v2289
    %v2581 = vunpack.c.h.b16 %v2289
    %v2582 = vunpack.c.l.b16 %v2290
    %v2583 = vunpack.c.h.b16 %v2290
    %v2584 = vunpack.c.l.b16 %v2291
    %v2585 = vunpack.c.h.b16 %v2291
    %v2586 = vunpack.c.l.b16 %v2292
    %v2587 = vunpack.c.h.b16 %v2292
    %v2588 = vunpack.c.l.b16 %v2293
    %v2589 = vunpack.c.h.b16 %v2293
    %v2590 = vunpack.c.l.b16 %v2294
    %v2591 = vunpack.c.h.b16 %v2294
    %v2592 = vunpack.c.l.b16 %v2295
    %v2593 = vunpack.c.h.b16 %v2295
    %v2594 = vunpack.c.l.b16 %v2296
    %v2595 = vunpack.c.h.b16 %v2296
    %v2596 = vunpack.c.l.b16 %v2297
    %v2597 = vunpack.c.h.b16 %v2297
    %v2598 = vunpack.c.l.b16 %v2298
    %v2599 = vunpack.c.h.b16 %v2298
    %v2600 = vunpack.c.l.b16 %v2299
    %v2601 = vunpack.c.h.b16 %v2299
    %v2602 = vunpack.c.l.b16 %v2300
    %v2603 = vunpack.c.h.b16 %v2300
    %v2604 = vunpack.c.l.b16 %v2301
    %v2605 = vunpack.c.h.b16 %v2301
    %v2606 = vpack.c.b16 %v2420, %v2414
    %v2607 = vpack.c.b16 %v2421, %v2415
    %v2608 = vpack.c.b16 %v2422, %v2416
    %v2609 = vpack.c.b16 %v2423, %v2417
    %v2610 = vpack.c.b16 %v2424, %v2418
    %v2611 = vpack.c.b16 %v2425, %v2419
    %v2612 = vpack.c.b16 %v2432, %v2426
    %v2613 = vpack.c.b16 %v2433, %v2427
    %v2614 = vpack.c.b16 %v2434, %v2428
    %v2615 = vpack.c.b16 %v2435, %v2429
    %v2616 = vpack.c.b16 %v2436, %v2430
    %v2617 = vpack.c.b16 %v2437, %v2431
    %v2618 = vpack.c.b16 %v2444, %v2438
    %v2619 = vpack.c.b16 %v2445, %v2439
    %v2620 = vpack.c.b16 %v2446, %v2440
    %v2621 = vpack.c.b16 %v2447, %v2441
    %v2622 = vpack.c.b16 %v2448, %v2442
    %v2623 = vpack.c.b16 %v2449, %v2443
    %v2624 = vpack.c.b16 %v2456, %v2450
    %v2625 = vpack.c.b16 %v2457, %v2451
    %v2626 = vpack.c.b16 %v2458, %v2452
    %v2627 = vpack.c.b16 %v2459, %v2453
    %v2628 = vpack.c.b16 %v2460, %v2454
    %v2629 = vpack.c.b16 %v2461, %v2455
    %v2630 = vpack.c.b16 %v2468, %v2462
    %v2631 = vpack.c.b16 %v2469, %v2463
    %v2632 = vpack.c.b16 %v2470, %v2464
    %v2633 = vpack.c.b16 %v2471, %v2465
    %v2634 = vpack.c.b16 %v2472, %v2466
    %v2635 = vpack.c.b16 %v2473, %v2467
    %v2636 = vpack.c.b16 %v2480, %v2474
    %v2637 = vpack.c.b16 %v2481, %v2475
    %v2638 = vpack.c.b16 %v2482, %v2476
    %v2639 = vpack.c.b16 %v2483, %v2477
    %v2640 = vpack.c.b16 %v2484, %v2478
    %v2641 = vpack.c.b16 %v2485, %v2479
    %v2642 = vpack.c.b16 %v2492, %v2486
    %v2643 = vpack.c.b16 %v2493, %v2487
    %v2644 = vpack.c.b16 %v2494, %v2488
    %v2645 = vpack.c.b16 %v2495, %v2489
    %v2646 = vpack.c.b16 %v2496, %v2490
    %v2647 = vpack.c.b16 %v2497, %v2491
    %v2648 = vpack.c.b16 %v2504, %v2498
    %v2649 = vpack.c.b16 %v2505, %v2499
    %v2650 = vpack.c.b16 %v2506, %v2500
    %v2651 = vpack.c.b16 %v2507, %v2501
    %v2652 = vpack.c.b16 %v2508, %v2502
    %v2653 = vpack.c.b16 %v2509, %v2503
    %v2654 = vpack.c.b16 %v2516, %v2510
    %v2655 = vpack.c.b16 %v2517, %v2511
    %v2656 = vpack.c.b16 %v2518, %v2512
    %v2657 = vpack.c.b16 %v2519, %v2513
    %v2658 = vpack.c.b16 %v2520, %v2514
    %v2659 = vpack.c.b16 %v2521, %v2515
    %v2660 = vpack.c.b16 %v2528, %v2522
    %v2661 = vpack.c.b16 %v2529, %v2523
    %v2662 = vpack.c.b16 %v2530, %v2524
    %v2663 = vpack.c.b16 %v2531, %v2525
    %v2664 = vpack.c.b16 %v2532, %v2526
    %v2665 = vpack.c.b16 %v2533, %v2527
    %v2666 = vpack.c.b16 %v2540, %v2534
    %v2667 = vpack.c.b16 %v2541, %v2535
    %v2668 = vpack.c.b16 %v2542, %v2536
    %v2669 = vpack.c.b16 %v2543, %v2537
    %v2670 = vpack.c.b16 %v2544, %v2538
    %v2671 = vpack.c.b16 %v2545, %v2539
    %v2672 = vpack.c.b16 %v2552, %v2546
    %v2673 = vpack.c.b16 %v2553, %v2547
    %v2674 = vpack.c.b16 %v2554, %v2548
    %v2675 = vpack.c.b16 %v2555, %v2549
    %v2676 = vpack.c.b16 %v2556, %v2550
    %v2677 = vpack.c.b16 %v2557, %v2551
    %v2678 = vpack.c.b16 %v2564, %v2558
    %v2679 = vpack.c.b16 %v2565, %v2559
    %v2680 = vpack.c.b16 %v2566, %v2560
    %v2681 = vpack.c.b16 %v2567, %v2561
    %v2682 = vpack.c.b16 %v2568, %v2562
    %v2683 = vpack.c.b16 %v2569, %v2563
    %v2684 = vpack.c.b16 %v2576, %v2570
    %v2685 = vpack.c.b16 %v2577, %v2571
    %v2686 = vpack.c.b16 %v2578, %v2572
    %v2687 = vpack.c.b16 %v2579, %v2573
    %v2688 = vpack.c.b16 %v2580, %v2574
    %v2689 = vpack.c.b16 %v2581, %v2575
    %v2690 = vpack.c.b16 %v2588, %v2582
    %v2691 = vpack.c.b16 %v2589, %v2583
    %v2692 = vpack.c.b16 %v2590, %v2584
    %v2693 = vpack.c.b16 %v2591, %v2585
    %v2694 = vpack.c.b16 %v2592, %v2586
    %v2695 = vpack.c.b16 %v2593, %v2587
    %v2696 = vpack.c.b16 %v2600, %v2594
    %v2697 = vpack.c.b16 %v2601, %v2595
    %v2698 = vpack.c.b16 %v2602, %v2596
    %v2699 = vpack.c.b16 %v2603, %v2597
    %v2700 = vpack.c.b16 %v2604, %v2598
    %v2701 = vpack.c.b16 %v2605, %v2599
    %2798 = vmatpush.bf16.msra.mxu0 %v2648
    %2799 = vmatpush.bf16.msra.mxu0 %v2642
    %2800 = vmatpush.bf16.msra.mxu0 %v2636
    %2801 = vmatpush.bf16.msra.mxu0 %v2630
    %2802 = vmatpush.bf16.msra.mxu0 %v2624
    %2803 = vmatpush.bf16.msra.mxu0 %v2618
    %2804 = vmatpush.bf16.msra.mxu0 %v2612
    %2805 = vmatpush.bf16.msra.mxu0 %v2606
    %2806 = vmatmul.bf16.gmra.mxu0 %v2308
    %v2807 = vpop.f32.mrf.mxu0
    %v2808 = vadd.f32 0.0, %v2807
    %v2809 = vpop.f32.mrf.mxu0
    %v2810 = vadd.f32 0.0, %v2809
    %2811 = vdwg.mxu0
    %2812 = vmatpush.bf16.msra.mxu0 %v2696
    %2813 = vmatpush.bf16.msra.mxu0 %v2690
    %2814 = vmatpush.bf16.msra.mxu0 %v2684
    %2815 = vmatpush.bf16.msra.mxu0 %v2678
    %2816 = vmatpush.bf16.msra.mxu0 %v2672
    %2817 = vmatpush.bf16.msra.mxu0 %v2666
    %2818 = vmatpush.bf16.msra.mxu0 %v2660
    %2819 = vmatpush.bf16.msra.mxu0 %v2654
    %2820 = vmatmul.bf16.gmra.mxu0 %v2315
    %v2821 = vpop.f32.mrf.mxu0
    %v2822 = vadd.f32 %v2808, %v2821
    %v2823 = vpop.f32.mrf.mxu0
    %v2824 = vadd.f32 %v2810, %v2823
    %2825 = vdwg.mxu0
    %2826 = vmatpush.bf16.msra.mxu0 %v2649
    %2827 = vmatpush.bf16.msra.mxu0 %v2643
    %2828 = vmatpush.bf16.msra.mxu0 %v2637
    %2829 = vmatpush.bf16.msra.mxu0 %v2631
    %2830 = vmatpush.bf16.msra.mxu0 %v2625
    %2831 = vmatpush.bf16.msra.mxu0 %v2619
    %2832 = vmatpush.bf16.msra.mxu0 %v2613
    %2833 = vmatpush.bf16.msra.mxu0 %v2607
    %2834 = vmatmul.bf16.gmra.mxu0 %v2308
    %v2835 = vpop.f32.mrf.mxu0
    %v2836 = vadd.f32 0.0, %v2835
    %v2837 = vpop.f32.mrf.mxu0
    %v2838 = vadd.f32 0.0, %v2837
    %2839 = vdwg.mxu0
    %2840 = vmatpush.bf16.msra.mxu0 %v2697
    %2841 = vmatpush.bf16.msra.mxu0 %v2691
    %2842 = vmatpush.bf16.msra.mxu0 %v2685
    %2843 = vmatpush.bf16.msra.mxu0 %v2679
    %2844 = vmatpush.bf16.msra.mxu0 %v2673
    %2845 = vmatpush.bf16.msra.mxu0 %v2667
    %2846 = vmatpush.bf16.msra.mxu0 %v2661
    %2847 = vmatpush.bf16.msra.mxu0 %v2655
    %2848 = vmatmul.bf16.gmra.mxu0 %v2315
    %v2849 = vpop.f32.mrf.mxu0
    %v2850 = vadd.f32 %v2836, %v2849
    %v2851 = vpop.f32.mrf.mxu0
    %v2852 = vadd.f32 %v2838, %v2851
    %2853 = vdwg.mxu0
    %2854 = vmatpush.bf16.msra.mxu0 %v2650
    %2855 = vmatpush.bf16.msra.mxu0 %v2644
    %2856 = vmatpush.bf16.msra.mxu0 %v2638
    %2857 = vmatpush.bf16.msra.mxu0 %v2632
    %2858 = vmatpush.bf16.msra.mxu0 %v2626
    %2859 = vmatpush.bf16.msra.mxu0 %v2620
    %2860 = vmatpush.bf16.msra.mxu0 %v2614
    %2861 = vmatpush.bf16.msra.mxu0 %v2608
    %2862 = vmatmul.bf16.gmra.mxu0 %v2308
    %v2863 = vpop.f32.mrf.mxu0
    %v2864 = vadd.f32 0.0, %v2863
    %v2865 = vpop.f32.mrf.mxu0
    %v2866 = vadd.f32 0.0, %v2865
    %2867 = vdwg.mxu0
    %2868 = vmatpush.bf16.msra.mxu0 %v2698
    %2869 = vmatpush.bf16.msra.mxu0 %v2692
    %2870 = vmatpush.bf16.msra.mxu0 %v2686
    %2871 = vmatpush.bf16.msra.mxu0 %v2680
    %2872 = vmatpush.bf16.msra.mxu0 %v2674
    %2873 = vmatpush.bf16.msra.mxu0 %v2668
    %2874 = vmatpush.bf16.msra.mxu0 %v2662
    %2875 = vmatpush.bf16.msra.mxu0 %v2656
    %2876 = vmatmul.bf16.gmra.mxu0 %v2315
    %v2877 = vpop.f32.mrf.mxu0
    %v2878 = vadd.f32 %v2864, %v2877
    %v2879 = vpop.f32.mrf.mxu0
    %v2880 = vadd.f32 %v2866, %v2879
    %2881 = vdwg.mxu0
    %2882 = vmatpush.bf16.msra.mxu0 %v2651
    %2883 = vmatpush.bf16.msra.mxu0 %v2645
    %2884 = vmatpush.bf16.msra.mxu0 %v2639
    %2885 = vmatpush.bf16.msra.mxu0 %v2633
    %2886 = vmatpush.bf16.msra.mxu0 %v2627
    %2887 = vmatpush.bf16.msra.mxu0 %v2621
    %2888 = vmatpush.bf16.msra.mxu0 %v2615
    %2889 = vmatpush.bf16.msra.mxu0 %v2609
    %2890 = vmatmul.bf16.gmra.mxu0 %v2308
    %v2891 = vpop.f32.mrf.mxu0
    %v2892 = vadd.f32 0.0, %v2891
    %v2893 = vpop.f32.mrf.mxu0
    %v2894 = vadd.f32 0.0, %v2893
    %2895 = vdwg.mxu0
    %2896 = vmatpush.bf16.msra.mxu0 %v2699
    %2897 = vmatpush.bf16.msra.mxu0 %v2693
    %2898 = vmatpush.bf16.msra.mxu0 %v2687
    %2899 = vmatpush.bf16.msra.mxu0 %v2681
    %2900 = vmatpush.bf16.msra.mxu0 %v2675
    %2901 = vmatpush.bf16.msra.mxu0 %v2669
    %2902 = vmatpush.bf16.msra.mxu0 %v2663
    %2903 = vmatpush.bf16.msra.mxu0 %v2657
    %2904 = vmatmul.bf16.gmra.mxu0 %v2315
    %v2905 = vpop.f32.mrf.mxu0
    %v2906 = vadd.f32 %v2892, %v2905
    %v2907 = vpop.f32.mrf.mxu0
    %v2908 = vadd.f32 %v2894, %v2907
    %2909 = vdwg.mxu0
    %2910 = vmatpush.bf16.msra.mxu0 %v2652
    %2911 = vmatpush.bf16.msra.mxu0 %v2646
    %2912 = vmatpush.bf16.msra.mxu0 %v2640
    %2913 = vmatpush.bf16.msra.mxu0 %v2634
    %2914 = vmatpush.bf16.msra.mxu0 %v2628
    %2915 = vmatpush.bf16.msra.mxu0 %v2622
    %2916 = vmatpush.bf16.msra.mxu0 %v2616
    %2917 = vmatpush.bf16.msra.mxu0 %v2610
    %2918 = vmatmul.bf16.gmra.mxu0 %v2308
    %v2919 = vpop.f32.mrf.mxu0
    %v2920 = vadd.f32 0.0, %v2919
    %v2921 = vpop.f32.mrf.mxu0
    %v2922 = vadd.f32 0.0, %v2921
    %2923 = vdwg.mxu0
    %2924 = vmatpush.bf16.msra.mxu0 %v2700
    %2925 = vmatpush.bf16.msra.mxu0 %v2694
    %2926 = vmatpush.bf16.msra.mxu0 %v2688
    %2927 = vmatpush.bf16.msra.mxu0 %v2682
    %2928 = vmatpush.bf16.msra.mxu0 %v2676
    %2929 = vmatpush.bf16.msra.mxu0 %v2670
    %2930 = vmatpush.bf16.msra.mxu0 %v2664
    %2931 = vmatpush.bf16.msra.mxu0 %v2658
    %2932 = vmatmul.bf16.gmra.mxu0 %v2315
    %v2933 = vpop.f32.mrf.mxu0
    %v2934 = vadd.f32 %v2920, %v2933
    %v2935 = vpop.f32.mrf.mxu0
    %v2936 = vadd.f32 %v2922, %v2935
    %2937 = vdwg.mxu0
    %2938 = vmatpush.bf16.msra.mxu0 %v2653
    %2939 = vmatpush.bf16.msra.mxu0 %v2647
    %2940 = vmatpush.bf16.msra.mxu0 %v2641
    %2941 = vmatpush.bf16.msra.mxu0 %v2635
    %2942 = vmatpush.bf16.msra.mxu0 %v2629
    %2943 = vmatpush.bf16.msra.mxu0 %v2623
    %2944 = vmatpush.bf16.msra.mxu0 %v2617
    %2945 = vmatpush.bf16.msra.mxu0 %v2611
    %2946 = vmatmul.bf16.gmra.mxu0 %v2308
    %v2947 = vpop.f32.mrf.mxu0
    %v2948 = vadd.f32 0.0, %v2947
    %v2949 = vpop.f32.mrf.mxu0
    %v2950 = vadd.f32 0.0, %v2949
    %2951 = vdwg.mxu0
    %2952 = vmatpush.bf16.msra.mxu0 %v2701
    %2953 = vmatpush.bf16.msra.mxu0 %v2695
    %2954 = vmatpush.bf16.msra.mxu0 %v2689
    %2955 = vmatpush.bf16.msra.mxu0 %v2683
    %2956 = vmatpush.bf16.msra.mxu0 %v2677
    %2957 = vmatpush.bf16.msra.mxu0 %v2671
    %2958 = vmatpush.bf16.msra.mxu0 %v2665
    %2959 = vmatpush.bf16.msra.mxu0 %v2659
    %2960 = vmatmul.bf16.gmra.mxu0 %v2315
    %v2961 = vpop.f32.mrf.mxu0
    %v2962 = vadd.f32 %v2948, %v2961
    %v2963 = vpop.f32.mrf.mxu0
    %v2964 = vadd.f32 %v2950, %v2963
    %2965 = vdwg.mxu0
    %v3062 = vunpack.c.l.b16 %v2109
    %v3063 = vunpack.c.h.b16 %v2109
    %v3064 = vunpack.c.l.b16 %v2110
    %v3065 = vunpack.c.h.b16 %v2110
    %v3066 = vunpack.c.l.b16 %v2111
    %v3067 = vunpack.c.h.b16 %v2111
    %v3068 = vunpack.c.l.b16 %v2112
    %v3069 = vunpack.c.h.b16 %v2112
    %v3070 = vunpack.c.l.b16 %v2113
    %v3071 = vunpack.c.h.b16 %v2113
    %v3072 = vunpack.c.l.b16 %v2114
    %v3073 = vunpack.c.h.b16 %v2114
    %v3074 = vunpack.c.l.b16 %v2115
    %v3075 = vunpack.c.h.b16 %v2115
    %v3076 = vunpack.c.l.b16 %v2116
    %v3077 = vunpack.c.h.b16 %v2116
    %v3078 = vunpack.c.l.b16 %v2117
    %v3079 = vunpack.c.h.b16 %v2117
    %v3080 = vunpack.c.l.b16 %v2118
    %v3081 = vunpack.c.h.b16 %v2118
    %v3082 = vunpack.c.l.b16 %v2119
    %v3083 = vunpack.c.h.b16 %v2119
    %v3084 = vunpack.c.l.b16 %v2120
    %v3085 = vunpack.c.h.b16 %v2120
    %v3086 = vunpack.c.l.b16 %v2121
    %v3087 = vunpack.c.h.b16 %v2121
    %v3088 = vunpack.c.l.b16 %v2122
    %v3089 = vunpack.c.h.b16 %v2122
    %v3090 = vunpack.c.l.b16 %v2123
    %v3091 = vunpack.c.h.b16 %v2123
    %v3092 = vunpack.c.l.b16 %v2124
    %v3093 = vunpack.c.h.b16 %v2124
    %v3094 = vunpack.c.l.b16 %v2125
    %v3095 = vunpack.c.h.b16 %v2125
    %v3096 = vunpack.c.l.b16 %v2126
    %v3097 = vunpack.c.h.b16 %v2126
    %v3098 = vunpack.c.l.b16 %v2127
    %v3099 = vunpack.c.h.b16 %v2127
    %v3100 = vunpack.c.l.b16 %v2128
    %v3101 = vunpack.c.h.b16 %v2128
    %v3102 = vunpack.c.l.b16 %v2129
    %v3103 = vunpack.c.h.b16 %v2129
    %v3104 = vunpack.c.l.b16 %v2130
    %v3105 = vunpack.c.h.b16 %v2130
    %v3106 = vunpack.c.l.b16 %v2131
    %v3107 = vunpack.c.h.b16 %v2131
    %v3108 = vunpack.c.l.b16 %v2132
    %v3109 = vunpack.c.h.b16 %v2132
    %v3110 = vunpack.c.l.b16 %v2133
    %v3111 = vunpack.c.h.b16 %v2133
    %v3112 = vunpack.c.l.b16 %v2134
    %v3113 = vunpack.c.h.b16 %v2134
    %v3114 = vunpack.c.l.b16 %v2135
    %v3115 = vunpack.c.h.b16 %v2135
    %v3116 = vunpack.c.l.b16 %v2136
    %v3117 = vunpack.c.h.b16 %v2136
    %v3118 = vunpack.c.l.b16 %v2137
    %v3119 = vunpack.c.h.b16 %v2137
    %v3120 = vunpack.c.l.b16 %v2138
    %v3121 = vunpack.c.h.b16 %v2138
    %v3122 = vunpack.c.l.b16 %v2139
    %v3123 = vunpack.c.h.b16 %v2139
    %v3124 = vunpack.c.l.b16 %v2140
    %v3125 = vunpack.c.h.b16 %v2140
    %v3126 = vunpack.c.l.b16 %v2141
    %v3127 = vunpack.c.h.b16 %v2141
    %v3128 = vunpack.c.l.b16 %v2142
    %v3129 = vunpack.c.h.b16 %v2142
    %v3130 = vunpack.c.l.b16 %v2143
    %v3131 = vunpack.c.h.b16 %v2143
    %v3132 = vunpack.c.l.b16 %v2144
    %v3133 = vunpack.c.h.b16 %v2144
    %v3134 = vunpack.c.l.b16 %v2145
    %v3135 = vunpack.c.h.b16 %v2145
    %v3136 = vunpack.c.l.b16 %v2146
    %v3137 = vunpack.c.h.b16 %v2146
    %v3138 = vunpack.c.l.b16 %v2147
    %v3139 = vunpack.c.h.b16 %v2147
    %v3140 = vunpack.c.l.b16 %v2148
    %v3141 = vunpack.c.h.b16 %v2148
    %v3142 = vunpack.c.l.b16 %v2149
    %v3143 = vunpack.c.h.b16 %v2149
    %v3144 = vunpack.c.l.b16 %v2150
    %v3145 = vunpack.c.h.b16 %v2150
    %v3146 = vunpack.c.l.b16 %v2151
    %v3147 = vunpack.c.h.b16 %v2151
    %v3148 = vunpack.c.l.b16 %v2152
    %v3149 = vunpack.c.h.b16 %v2152
    %v3150 = vunpack.c.l.b16 %v2153
    %v3151 = vunpack.c.h.b16 %v2153
    %v3152 = vunpack.c.l.b16 %v2154
    %v3153 = vunpack.c.h.b16 %v2154
    %v3154 = vunpack.c.l.b16 %v2155
    %v3155 = vunpack.c.h.b16 %v2155
    %v3156 = vunpack.c.l.b16 %v2156
    %v3157 = vunpack.c.h.b16 %v2156
    %v3158 = vunpack.c.l.b16 %v2157
    %v3159 = vunpack.c.h.b16 %v2157
    %v3160 = vunpack.c.l.b16 %v2158
    %v3161 = vunpack.c.h.b16 %v2158
    %v3162 = vunpack.c.l.b16 %v2159
    %v3163 = vunpack.c.h.b16 %v2159
    %v3164 = vunpack.c.l.b16 %v2160
    %v3165 = vunpack.c.h.b16 %v2160
    %v3166 = vunpack.c.l.b16 %v2161
    %v3167 = vunpack.c.h.b16 %v2161
    %v3168 = vunpack.c.l.b16 %v2162
    %v3169 = vunpack.c.h.b16 %v2162
    %v3170 = vunpack.c.l.b16 %v2163
    %v3171 = vunpack.c.h.b16 %v2163
    %v3172 = vunpack.c.l.b16 %v2164
    %v3173 = vunpack.c.h.b16 %v2164
    %v3174 = vunpack.c.l.b16 %v2165
    %v3175 = vunpack.c.h.b16 %v2165
    %v3176 = vunpack.c.l.b16 %v2166
    %v3177 = vunpack.c.h.b16 %v2166
    %v3178 = vunpack.c.l.b16 %v2167
    %v3179 = vunpack.c.h.b16 %v2167
    %v3180 = vunpack.c.l.b16 %v2168
    %v3181 = vunpack.c.h.b16 %v2168
    %v3182 = vunpack.c.l.b16 %v2169
    %v3183 = vunpack.c.h.b16 %v2169
    %v3184 = vunpack.c.l.b16 %v2170
    %v3185 = vunpack.c.h.b16 %v2170
    %v3186 = vunpack.c.l.b16 %v2171
    %v3187 = vunpack.c.h.b16 %v2171
    %v3188 = vunpack.c.l.b16 %v2172
    %v3189 = vunpack.c.h.b16 %v2172
    %v3190 = vunpack.c.l.b16 %v2173
    %v3191 = vunpack.c.h.b16 %v2173
    %v3192 = vunpack.c.l.b16 %v2174
    %v3193 = vunpack.c.h.b16 %v2174
    %v3194 = vunpack.c.l.b16 %v2175
    %v3195 = vunpack.c.h.b16 %v2175
    %v3196 = vunpack.c.l.b16 %v2176
    %v3197 = vunpack.c.h.b16 %v2176
    %v3198 = vunpack.c.l.b16 %v2177
    %v3199 = vunpack.c.h.b16 %v2177
    %v3200 = vunpack.c.l.b16 %v2178
    %v3201 = vunpack.c.h.b16 %v2178
    %v3202 = vunpack.c.l.b16 %v2179
    %v3203 = vunpack.c.h.b16 %v2179
    %v3204 = vunpack.c.l.b16 %v2180
    %v3205 = vunpack.c.h.b16 %v2180
    %v3206 = vunpack.c.l.b16 %v2181
    %v3207 = vunpack.c.h.b16 %v2181
    %v3208 = vunpack.c.l.b16 %v2182
    %v3209 = vunpack.c.h.b16 %v2182
    %v3210 = vunpack.c.l.b16 %v2183
    %v3211 = vunpack.c.h.b16 %v2183
    %v3212 = vunpack.c.l.b16 %v2184
    %v3213 = vunpack.c.h.b16 %v2184
    %v3214 = vunpack.c.l.b16 %v2185
    %v3215 = vunpack.c.h.b16 %v2185
    %v3216 = vunpack.c.l.b16 %v2186
    %v3217 = vunpack.c.h.b16 %v2186
    %v3218 = vunpack.c.l.b16 %v2187
    %v3219 = vunpack.c.h.b16 %v2187
    %v3220 = vunpack.c.l.b16 %v2188
    %v3221 = vunpack.c.h.b16 %v2188
    %v3222 = vunpack.c.l.b16 %v2189
    %v3223 = vunpack.c.h.b16 %v2189
    %v3224 = vunpack.c.l.b16 %v2190
    %v3225 = vunpack.c.h.b16 %v2190
    %v3226 = vunpack.c.l.b16 %v2191
    %v3227 = vunpack.c.h.b16 %v2191
    %v3228 = vunpack.c.l.b16 %v2192
    %v3229 = vunpack.c.h.b16 %v2192
    %v3230 = vunpack.c.l.b16 %v2193
    %v3231 = vunpack.c.h.b16 %v2193
    %v3232 = vunpack.c.l.b16 %v2194
    %v3233 = vunpack.c.h.b16 %v2194
    %v3234 = vunpack.c.l.b16 %v2195
    %v3235 = vunpack.c.h.b16 %v2195
    %v3236 = vunpack.c.l.b16 %v2196
    %v3237 = vunpack.c.h.b16 %v2196
    %v3238 = vunpack.c.l.b16 %v2197
    %v3239 = vunpack.c.h.b16 %v2197
    %v3240 = vunpack.c.l.b16 %v2198
    %v3241 = vunpack.c.h.b16 %v2198
    %v3242 = vunpack.c.l.b16 %v2199
    %v3243 = vunpack.c.h.b16 %v2199
    %v3244 = vunpack.c.l.b16 %v2200
    %v3245 = vunpack.c.h.b16 %v2200
    %v3246 = vunpack.c.l.b16 %v2201
    %v3247 = vunpack.c.h.b16 %v2201
    %v3248 = vunpack.c.l.b16 %v2202
    %v3249 = vunpack.c.h.b16 %v2202
    %v3250 = vunpack.c.l.b16 %v2203
    %v3251 = vunpack.c.h.b16 %v2203
    %v3252 = vunpack.c.l.b16 %v2204
    %v3253 = vunpack.c.h.b16 %v2204
    %v3254 = vpack.c.b16 %v3068, %v3062
    %v3255 = vpack.c.b16 %v3069, %v3063
    %v3256 = vpack.c.b16 %v3070, %v3064
    %v3257 = vpack.c.b16 %v3071, %v3065
    %v3258 = vpack.c.b16 %v3072, %v3066
    %v3259 = vpack.c.b16 %v3073, %v3067
    %v3260 = vpack.c.b16 %v3080, %v3074
    %v3261 = vpack.c.b16 %v3081, %v3075
    %v3262 = vpack.c.b16 %v3082, %v3076
    %v3263 = vpack.c.b16 %v3083, %v3077
    %v3264 = vpack.c.b16 %v3084, %v3078
    %v3265 = vpack.c.b16 %v3085, %v3079
    %v3266 = vpack.c.b16 %v3092, %v3086
    %v3267 = vpack.c.b16 %v3093, %v3087
    %v3268 = vpack.c.b16 %v3094, %v3088
    %v3269 = vpack.c.b16 %v3095, %v3089
    %v3270 = vpack.c.b16 %v3096, %v3090
    %v3271 = vpack.c.b16 %v3097, %v3091
    %v3272 = vpack.c.b16 %v3104, %v3098
    %v3273 = vpack.c.b16 %v3105, %v3099
    %v3274 = vpack.c.b16 %v3106, %v3100
    %v3275 = vpack.c.b16 %v3107, %v3101
    %v3276 = vpack.c.b16 %v3108, %v3102
    %v3277 = vpack.c.b16 %v3109, %v3103
    %v3278 = vpack.c.b16 %v3116, %v3110
    %v3279 = vpack.c.b16 %v3117, %v3111
    %v3280 = vpack.c.b16 %v3118, %v3112
    %v3281 = vpack.c.b16 %v3119, %v3113
    %v3282 = vpack.c.b16 %v3120, %v3114
    %v3283 = vpack.c.b16 %v3121, %v3115
    %v3284 = vpack.c.b16 %v3128, %v3122
    %v3285 = vpack.c.b16 %v3129, %v3123
    %v3286 = vpack.c.b16 %v3130, %v3124
    %v3287 = vpack.c.b16 %v3131, %v3125
    %v3288 = vpack.c.b16 %v3132, %v3126
    %v3289 = vpack.c.b16 %v3133, %v3127
    %v3290 = vpack.c.b16 %v3140, %v3134
    %v3291 = vpack.c.b16 %v3141, %v3135
    %v3292 = vpack.c.b16 %v3142, %v3136
    %v3293 = vpack.c.b16 %v3143, %v3137
    %v3294 = vpack.c.b16 %v3144, %v3138
    %v3295 = vpack.c.b16 %v3145, %v3139
    %v3296 = vpack.c.b16 %v3152, %v3146
    %v3297 = vpack.c.b16 %v3153, %v3147
    %v3298 = vpack.c.b16 %v3154, %v3148
    %v3299 = vpack.c.b16 %v3155, %v3149
    %v3300 = vpack.c.b16 %v3156, %v3150
    %v3301 = vpack.c.b16 %v3157, %v3151
    %v3302 = vpack.c.b16 %v3164, %v3158
    %v3303 = vpack.c.b16 %v3165, %v3159
    %v3304 = vpack.c.b16 %v3166, %v3160
    %v3305 = vpack.c.b16 %v3167, %v3161
    %v3306 = vpack.c.b16 %v3168, %v3162
    %v3307 = vpack.c.b16 %v3169, %v3163
    %v3308 = vpack.c.b16 %v3176, %v3170
    %v3309 = vpack.c.b16 %v3177, %v3171
    %v3310 = vpack.c.b16 %v3178, %v3172
    %v3311 = vpack.c.b16 %v3179, %v3173
    %v3312 = vpack.c.b16 %v3180, %v3174
    %v3313 = vpack.c.b16 %v3181, %v3175
    %v3314 = vpack.c.b16 %v3188, %v3182
    %v3315 = vpack.c.b16 %v3189, %v3183
    %v3316 = vpack.c.b16 %v3190, %v3184
    %v3317 = vpack.c.b16 %v3191, %v3185
    %v3318 = vpack.c.b16 %v3192, %v3186
    %v3319 = vpack.c.b16 %v3193, %v3187
    %v3320 = vpack.c.b16 %v3200, %v3194
    %v3321 = vpack.c.b16 %v3201, %v3195
    %v3322 = vpack.c.b16 %v3202, %v3196
    %v3323 = vpack.c.b16 %v3203, %v3197
    %v3324 = vpack.c.b16 %v3204, %v3198
    %v3325 = vpack.c.b16 %v3205, %v3199
    %v3326 = vpack.c.b16 %v3212, %v3206
    %v3327 = vpack.c.b16 %v3213, %v3207
    %v3328 = vpack.c.b16 %v3214, %v3208
    %v3329 = vpack.c.b16 %v3215, %v3209
    %v3330 = vpack.c.b16 %v3216, %v3210
    %v3331 = vpack.c.b16 %v3217, %v3211
    %v3332 = vpack.c.b16 %v3224, %v3218
    %v3333 = vpack.c.b16 %v3225, %v3219
    %v3334 = vpack.c.b16 %v3226, %v3220
    %v3335 = vpack.c.b16 %v3227, %v3221
    %v3336 = vpack.c.b16 %v3228, %v3222
    %v3337 = vpack.c.b16 %v3229, %v3223
    %v3338 = vpack.c.b16 %v3236, %v3230
    %v3339 = vpack.c.b16 %v3237, %v3231
    %v3340 = vpack.c.b16 %v3238, %v3232
    %v3341 = vpack.c.b16 %v3239, %v3233
    %v3342 = vpack.c.b16 %v3240, %v3234
    %v3343 = vpack.c.b16 %v3241, %v3235
    %v3344 = vpack.c.b16 %v3248, %v3242
    %v3345 = vpack.c.b16 %v3249, %v3243
    %v3346 = vpack.c.b16 %v3250, %v3244
    %v3347 = vpack.c.b16 %v3251, %v3245
    %v3348 = vpack.c.b16 %v3252, %v3246
    %v3349 = vpack.c.b16 %v3253, %v3247
    %3446 = vmatpush.bf16.msra.mxu0 %v3296
    %3447 = vmatpush.bf16.msra.mxu0 %v3290
    %3448 = vmatpush.bf16.msra.mxu0 %v3284
    %3449 = vmatpush.bf16.msra.mxu0 %v3278
    %3450 = vmatpush.bf16.msra.mxu0 %v3272
    %3451 = vmatpush.bf16.msra.mxu0 %v3266
    %3452 = vmatpush.bf16.msra.mxu0 %v3260
    %3453 = vmatpush.bf16.msra.mxu0 %v3254
    %3454 = vmatmul.bf16.gmra.mxu0 %v2107
    %v3455 = vpop.f32.mrf.mxu0
    %v3456 = vadd.f32 %v2822, %v3455
    %v3457 = vpop.f32.mrf.mxu0
    %v3458 = vadd.f32 %v2824, %v3457
    %3459 = vdwg.mxu0
    %3460 = vmatpush.bf16.msra.mxu0 %v3344
    %3461 = vmatpush.bf16.msra.mxu0 %v3338
    %3462 = vmatpush.bf16.msra.mxu0 %v3332
    %3463 = vmatpush.bf16.msra.mxu0 %v3326
    %3464 = vmatpush.bf16.msra.mxu0 %v3320
    %3465 = vmatpush.bf16.msra.mxu0 %v3314
    %3466 = vmatpush.bf16.msra.mxu0 %v3308
    %3467 = vmatpush.bf16.msra.mxu0 %v3302
    %3468 = vmatmul.bf16.gmra.mxu0 %v2108
    %v3469 = vpop.f32.mrf.mxu0
    %v3470 = vadd.f32 %v3456, %v3469
    %v3471 = vpop.f32.mrf.mxu0
    %v3472 = vadd.f32 %v3458, %v3471
    %3473 = vdwg.mxu0
    %3474 = vmatpush.bf16.msra.mxu0 %v3297
    %3475 = vmatpush.bf16.msra.mxu0 %v3291
    %3476 = vmatpush.bf16.msra.mxu0 %v3285
    %3477 = vmatpush.bf16.msra.mxu0 %v3279
    %3478 = vmatpush.bf16.msra.mxu0 %v3273
    %3479 = vmatpush.bf16.msra.mxu0 %v3267
    %3480 = vmatpush.bf16.msra.mxu0 %v3261
    %3481 = vmatpush.bf16.msra.mxu0 %v3255
    %3482 = vmatmul.bf16.gmra.mxu0 %v2107
    %v3483 = vpop.f32.mrf.mxu0
    %v3484 = vadd.f32 %v2850, %v3483
    %v3485 = vpop.f32.mrf.mxu0
    %v3486 = vadd.f32 %v2852, %v3485
    %3487 = vdwg.mxu0
    %3488 = vmatpush.bf16.msra.mxu0 %v3345
    %3489 = vmatpush.bf16.msra.mxu0 %v3339
    %3490 = vmatpush.bf16.msra.mxu0 %v3333
    %3491 = vmatpush.bf16.msra.mxu0 %v3327
    %3492 = vmatpush.bf16.msra.mxu0 %v3321
    %3493 = vmatpush.bf16.msra.mxu0 %v3315
    %3494 = vmatpush.bf16.msra.mxu0 %v3309
    %3495 = vmatpush.bf16.msra.mxu0 %v3303
    %3496 = vmatmul.bf16.gmra.mxu0 %v2108
    %v3497 = vpop.f32.mrf.mxu0
    %v3498 = vadd.f32 %v3484, %v3497
    %v3499 = vpop.f32.mrf.mxu0
    %v3500 = vadd.f32 %v3486, %v3499
    %3501 = vdwg.mxu0
    %3502 = vmatpush.bf16.msra.mxu0 %v3298
    %3503 = vmatpush.bf16.msra.mxu0 %v3292
    %3504 = vmatpush.bf16.msra.mxu0 %v3286
    %3505 = vmatpush.bf16.msra.mxu0 %v3280
    %3506 = vmatpush.bf16.msra.mxu0 %v3274
    %3507 = vmatpush.bf16.msra.mxu0 %v3268
    %3508 = vmatpush.bf16.msra.mxu0 %v3262
    %3509 = vmatpush.bf16.msra.mxu0 %v3256
    %3510 = vmatmul.bf16.gmra.mxu0 %v2107
    %v3511 = vpop.f32.mrf.mxu0
    %v3512 = vadd.f32 %v2878, %v3511
    %v3513 = vpop.f32.mrf.mxu0
    %v3514 = vadd.f32 %v2880, %v3513
    %3515 = vdwg.mxu0
    %3516 = vmatpush.bf16.msra.mxu0 %v3346
    %3517 = vmatpush.bf16.msra.mxu0 %v3340
    %3518 = vmatpush.bf16.msra.mxu0 %v3334
    %3519 = vmatpush.bf16.msra.mxu0 %v3328
    %3520 = vmatpush.bf16.msra.mxu0 %v3322
    %3521 = vmatpush.bf16.msra.mxu0 %v3316
    %3522 = vmatpush.bf16.msra.mxu0 %v3310
    %3523 = vmatpush.bf16.msra.mxu0 %v3304
    %3524 = vmatmul.bf16.gmra.mxu0 %v2108
    %v3525 = vpop.f32.mrf.mxu0
    %v3526 = vadd.f32 %v3512, %v3525
    %v3527 = vpop.f32.mrf.mxu0
    %v3528 = vadd.f32 %v3514, %v3527
    %3529 = vdwg.mxu0
    %3530 = vmatpush.bf16.msra.mxu0 %v3299
    %3531 = vmatpush.bf16.msra.mxu0 %v3293
    %3532 = vmatpush.bf16.msra.mxu0 %v3287
    %3533 = vmatpush.bf16.msra.mxu0 %v3281
    %3534 = vmatpush.bf16.msra.mxu0 %v3275
    %3535 = vmatpush.bf16.msra.mxu0 %v3269
    %3536 = vmatpush.bf16.msra.mxu0 %v3263
    %3537 = vmatpush.bf16.msra.mxu0 %v3257
    %3538 = vmatmul.bf16.gmra.mxu0 %v2107
    %v3539 = vpop.f32.mrf.mxu0
    %v3540 = vadd.f32 %v2906, %v3539
    %v3541 = vpop.f32.mrf.mxu0
    %v3542 = vadd.f32 %v2908, %v3541
    %3543 = vdwg.mxu0
    %3544 = vmatpush.bf16.msra.mxu0 %v3347
    %3545 = vmatpush.bf16.msra.mxu0 %v3341
    %3546 = vmatpush.bf16.msra.mxu0 %v3335
    %3547 = vmatpush.bf16.msra.mxu0 %v3329
    %3548 = vmatpush.bf16.msra.mxu0 %v3323
    %3549 = vmatpush.bf16.msra.mxu0 %v3317
    %3550 = vmatpush.bf16.msra.mxu0 %v3311
    %3551 = vmatpush.bf16.msra.mxu0 %v3305
    %3552 = vmatmul.bf16.gmra.mxu0 %v2108
    %v3553 = vpop.f32.mrf.mxu0
    %v3554 = vadd.f32 %v3540, %v3553
    %v3555 = vpop.f32.mrf.mxu0
    %v3556 = vadd.f32 %v3542, %v3555
    %3557 = vdwg.mxu0
    %3558 = vmatpush.bf16.msra.mxu0 %v3300
    %3559 = vmatpush.bf16.msra.mxu0 %v3294
    %3560 = vmatpush.bf16.msra.mxu0 %v3288
    %3561 = vmatpush.bf16.msra.mxu0 %v3282
    %3562 = vmatpush.bf16.msra.mxu0 %v3276
    %3563 = vmatpush.bf16.msra.mxu0 %v3270
    %3564 = vmatpush.bf16.msra.mxu0 %v3264
    %3565 = vmatpush.bf16.msra.mxu0 %v3258
    %3566 = vmatmul.bf16.gmra.mxu0 %v2107
    %v3567 = vpop.f32.mrf.mxu0
    %v3568 = vadd.f32 %v2934, %v3567
    %v3569 = vpop.f32.mrf.mxu0
    %v3570 = vadd.f32 %v2936, %v3569
    %3571 = vdwg.mxu0
    %3572 = vmatpush.bf16.msra.mxu0 %v3348
    %3573 = vmatpush.bf16.msra.mxu0 %v3342
    %3574 = vmatpush.bf16.msra.mxu0 %v3336
    %3575 = vmatpush.bf16.msra.mxu0 %v3330
    %3576 = vmatpush.bf16.msra.mxu0 %v3324
    %3577 = vmatpush.bf16.msra.mxu0 %v3318
    %3578 = vmatpush.bf16.msra.mxu0 %v3312
    %3579 = vmatpush.bf16.msra.mxu0 %v3306
    %3580 = vmatmul.bf16.gmra.mxu0 %v2108
    %v3581 = vpop.f32.mrf.mxu0
    %v3582 = vadd.f32 %v3568, %v3581
    %v3583 = vpop.f32.mrf.mxu0
    %v3584 = vadd.f32 %v3570, %v3583
    %3585 = vdwg.mxu0
    %3586 = vmatpush.bf16.msra.mxu0 %v3301
    %3587 = vmatpush.bf16.msra.mxu0 %v3295
    %3588 = vmatpush.bf16.msra.mxu0 %v3289
    %3589 = vmatpush.bf16.msra.mxu0 %v3283
    %3590 = vmatpush.bf16.msra.mxu0 %v3277
    %3591 = vmatpush.bf16.msra.mxu0 %v3271
    %3592 = vmatpush.bf16.msra.mxu0 %v3265
    %3593 = vmatpush.bf16.msra.mxu0 %v3259
    %3594 = vmatmul.bf16.gmra.mxu0 %v2107
    %v3595 = vpop.f32.mrf.mxu0
    %v3596 = vadd.f32 %v2962, %v3595
    %v3597 = vpop.f32.mrf.mxu0
    %v3598 = vadd.f32 %v2964, %v3597
    %3599 = vdwg.mxu0
    %3600 = vmatpush.bf16.msra.mxu0 %v3349
    %3601 = vmatpush.bf16.msra.mxu0 %v3343
    %3602 = vmatpush.bf16.msra.mxu0 %v3337
    %3603 = vmatpush.bf16.msra.mxu0 %v3331
    %3604 = vmatpush.bf16.msra.mxu0 %v3325
    %3605 = vmatpush.bf16.msra.mxu0 %v3319
    %3606 = vmatpush.bf16.msra.mxu0 %v3313
    %3607 = vmatpush.bf16.msra.mxu0 %v3307
    %3608 = vmatmul.bf16.gmra.mxu0 %v2108
    %v3609 = vpop.f32.mrf.mxu0
    %v3610 = vadd.f32 %v3596, %v3609
    %v3611 = vpop.f32.mrf.mxu0
    %v3612 = vadd.f32 %v3598, %v3611
    %3613 = vdwg.mxu0
    %s3614 = scalar_lea.vmem [#allocation8], 1536
    %v3615 = vld [vmem:[%s3614] sm:$0xff]
    %v3616 = vld [vmem:[%s3614 + $0x8] sm:$0xff]
    %v3617 = vld [vmem:[%s3614 + $0x10] sm:$0xff]
    %v3618 = vld [vmem:[%s3614 + $0x18] sm:$0xff]
    %v3619 = vld [vmem:[%s3614 + $0x20] sm:$0xff]
    %v3620 = vld [vmem:[%s3614 + $0x28] sm:$0xff]
    %v3621 = vld [vmem:[%s3614 + $0x30] sm:$0xff]
    %v3622 = vld [vmem:[%s3614 + $0x38] sm:$0xff]
    %v3623 = vld [vmem:[%s3614 + $0x40] sm:$0xff]
    %v3624 = vld [vmem:[%s3614 + $0x48] sm:$0xff]
    %v3625 = vld [vmem:[%s3614 + $0x50] sm:$0xff]
    %v3626 = vld [vmem:[%s3614 + $0x58] sm:$0xff]
    %v3627 = vld [vmem:[%s3614 + $0x60] sm:$0xff]
    %v3628 = vld [vmem:[%s3614 + $0x68] sm:$0xff]
    %v3629 = vld [vmem:[%s3614 + $0x70] sm:$0xff]
    %v3630 = vld [vmem:[%s3614 + $0x78] sm:$0xff]
    %v3631 = vld [vmem:[%s3614 + $0x80] sm:$0xff]
    %v3632 = vld [vmem:[%s3614 + $0x88] sm:$0xff]
    %v3633 = vld [vmem:[%s3614 + $0x90] sm:$0xff]
    %v3634 = vld [vmem:[%s3614 + $0x98] sm:$0xff]
    %v3635 = vld [vmem:[%s3614 + $0xa0] sm:$0xff]
    %v3636 = vld [vmem:[%s3614 + $0xa8] sm:$0xff]
    %v3637 = vld [vmem:[%s3614 + $0xb0] sm:$0xff]
    %v3638 = vld [vmem:[%s3614 + $0xb8] sm:$0xff]
    %v3639 = vld [vmem:[%s3614 + $0xc0] sm:$0xff]
    %v3640 = vld [vmem:[%s3614 + $0xc8] sm:$0xff]
    %v3641 = vld [vmem:[%s3614 + $0xd0] sm:$0xff]
    %v3642 = vld [vmem:[%s3614 + $0xd8] sm:$0xff]
    %v3643 = vld [vmem:[%s3614 + $0xe0] sm:$0xff]
    %v3644 = vld [vmem:[%s3614 + $0xe8] sm:$0xff]
    %v3645 = vld [vmem:[%s3614 + $0xf0] sm:$0xff]
    %v3646 = vld [vmem:[%s3614 + $0xf8] sm:$0xff]
    %v3647 = vld [vmem:[%s3614 + $0x100] sm:$0xff]
    %v3648 = vld [vmem:[%s3614 + $0x108] sm:$0xff]
    %v3649 = vld [vmem:[%s3614 + $0x110] sm:$0xff]
    %v3650 = vld [vmem:[%s3614 + $0x118] sm:$0xff]
    %v3651 = vld [vmem:[%s3614 + $0x120] sm:$0xff]
    %v3652 = vld [vmem:[%s3614 + $0x128] sm:$0xff]
    %v3653 = vld [vmem:[%s3614 + $0x130] sm:$0xff]
    %v3654 = vld [vmem:[%s3614 + $0x138] sm:$0xff]
    %v3655 = vld [vmem:[%s3614 + $0x140] sm:$0xff]
    %v3656 = vld [vmem:[%s3614 + $0x148] sm:$0xff]
    %v3657 = vld [vmem:[%s3614 + $0x150] sm:$0xff]
    %v3658 = vld [vmem:[%s3614 + $0x158] sm:$0xff]
    %v3659 = vld [vmem:[%s3614 + $0x160] sm:$0xff]
    %v3660 = vld [vmem:[%s3614 + $0x168] sm:$0xff]
    %v3661 = vld [vmem:[%s3614 + $0x170] sm:$0xff]
    %v3662 = vld [vmem:[%s3614 + $0x178] sm:$0xff]
    %v3663 = vld [vmem:[%s3614 + $0x180] sm:$0xff]
    %v3664 = vld [vmem:[%s3614 + $0x188] sm:$0xff]
    %v3665 = vld [vmem:[%s3614 + $0x190] sm:$0xff]
    %v3666 = vld [vmem:[%s3614 + $0x198] sm:$0xff]
    %v3667 = vld [vmem:[%s3614 + $0x1a0] sm:$0xff]
    %v3668 = vld [vmem:[%s3614 + $0x1a8] sm:$0xff]
    %v3669 = vld [vmem:[%s3614 + $0x1b0] sm:$0xff]
    %v3670 = vld [vmem:[%s3614 + $0x1b8] sm:$0xff]
    %v3671 = vld [vmem:[%s3614 + $0x1c0] sm:$0xff]
    %v3672 = vld [vmem:[%s3614 + $0x1c8] sm:$0xff]
    %v3673 = vld [vmem:[%s3614 + $0x1d0] sm:$0xff]
    %v3674 = vld [vmem:[%s3614 + $0x1d8] sm:$0xff]
    %v3675 = vld [vmem:[%s3614 + $0x1e0] sm:$0xff]
    %v3676 = vld [vmem:[%s3614 + $0x1e8] sm:$0xff]
    %v3677 = vld [vmem:[%s3614 + $0x1f0] sm:$0xff]
    %v3678 = vld [vmem:[%s3614 + $0x1f8] sm:$0xff]
    %v3679 = vld [vmem:[%s3614 + $0x200] sm:$0xff]
    %v3680 = vld [vmem:[%s3614 + $0x208] sm:$0xff]
    %v3681 = vld [vmem:[%s3614 + $0x210] sm:$0xff]
    %v3682 = vld [vmem:[%s3614 + $0x218] sm:$0xff]
    %v3683 = vld [vmem:[%s3614 + $0x220] sm:$0xff]
    %v3684 = vld [vmem:[%s3614 + $0x228] sm:$0xff]
    %v3685 = vld [vmem:[%s3614 + $0x230] sm:$0xff]
    %v3686 = vld [vmem:[%s3614 + $0x238] sm:$0xff]
    %v3687 = vld [vmem:[%s3614 + $0x240] sm:$0xff]
    %v3688 = vld [vmem:[%s3614 + $0x248] sm:$0xff]
    %v3689 = vld [vmem:[%s3614 + $0x250] sm:$0xff]
    %v3690 = vld [vmem:[%s3614 + $0x258] sm:$0xff]
    %v3691 = vld [vmem:[%s3614 + $0x260] sm:$0xff]
    %v3692 = vld [vmem:[%s3614 + $0x268] sm:$0xff]
    %v3693 = vld [vmem:[%s3614 + $0x270] sm:$0xff]
    %v3694 = vld [vmem:[%s3614 + $0x278] sm:$0xff]
    %v3695 = vld [vmem:[%s3614 + $0x280] sm:$0xff]
    %v3696 = vld [vmem:[%s3614 + $0x288] sm:$0xff]
    %v3697 = vld [vmem:[%s3614 + $0x290] sm:$0xff]
    %v3698 = vld [vmem:[%s3614 + $0x298] sm:$0xff]
    %v3699 = vld [vmem:[%s3614 + $0x2a0] sm:$0xff]
    %v3700 = vld [vmem:[%s3614 + $0x2a8] sm:$0xff]
    %v3701 = vld [vmem:[%s3614 + $0x2b0] sm:$0xff]
    %v3702 = vld [vmem:[%s3614 + $0x2b8] sm:$0xff]
    %v3703 = vld [vmem:[%s3614 + $0x2c0] sm:$0xff]
    %v3704 = vld [vmem:[%s3614 + $0x2c8] sm:$0xff]
    %v3705 = vld [vmem:[%s3614 + $0x2d0] sm:$0xff]
    %v3706 = vld [vmem:[%s3614 + $0x2d8] sm:$0xff]
    %v3707 = vld [vmem:[%s3614 + $0x2e0] sm:$0xff]
    %v3708 = vld [vmem:[%s3614 + $0x2e8] sm:$0xff]
    %v3709 = vld [vmem:[%s3614 + $0x2f0] sm:$0xff]
    %v3710 = vld [vmem:[%s3614 + $0x2f8] sm:$0xff]
    %v3713 = vrot.slane %v2107, 1
    %v3714 = vrot.slane %v2108, 1
    %v3813 = vunpack.c.l.b16 %v3615
    %v3814 = vunpack.c.h.b16 %v3615
    %v3815 = vunpack.c.l.b16 %v3616
    %v3816 = vunpack.c.h.b16 %v3616
    %v3817 = vunpack.c.l.b16 %v3617
    %v3818 = vunpack.c.h.b16 %v3617
    %v3819 = vunpack.c.l.b16 %v3618
    %v3820 = vunpack.c.h.b16 %v3618
    %v3821 = vunpack.c.l.b16 %v3619
    %v3822 = vunpack.c.h.b16 %v3619
    %v3823 = vunpack.c.l.b16 %v3620
    %v3824 = vunpack.c.h.b16 %v3620
    %v3825 = vunpack.c.l.b16 %v3621
    %v3826 = vunpack.c.h.b16 %v3621
    %v3827 = vunpack.c.l.b16 %v3622
    %v3828 = vunpack.c.h.b16 %v3622
    %v3829 = vunpack.c.l.b16 %v3623
    %v3830 = vunpack.c.h.b16 %v3623
    %v3831 = vunpack.c.l.b16 %v3624
    %v3832 = vunpack.c.h.b16 %v3624
    %v3833 = vunpack.c.l.b16 %v3625
    %v3834 = vunpack.c.h.b16 %v3625
    %v3835 = vunpack.c.l.b16 %v3626
    %v3836 = vunpack.c.h.b16 %v3626
    %v3837 = vunpack.c.l.b16 %v3627
    %v3838 = vunpack.c.h.b16 %v3627
    %v3839 = vunpack.c.l.b16 %v3628
    %v3840 = vunpack.c.h.b16 %v3628
    %v3841 = vunpack.c.l.b16 %v3629
    %v3842 = vunpack.c.h.b16 %v3629
    %v3843 = vunpack.c.l.b16 %v3630
    %v3844 = vunpack.c.h.b16 %v3630
    %v3845 = vunpack.c.l.b16 %v3631
    %v3846 = vunpack.c.h.b16 %v3631
    %v3847 = vunpack.c.l.b16 %v3632
    %v3848 = vunpack.c.h.b16 %v3632
    %v3849 = vunpack.c.l.b16 %v3633
    %v3850 = vunpack.c.h.b16 %v3633
    %v3851 = vunpack.c.l.b16 %v3634
    %v3852 = vunpack.c.h.b16 %v3634
    %v3853 = vunpack.c.l.b16 %v3635
    %v3854 = vunpack.c.h.b16 %v3635
    %v3855 = vunpack.c.l.b16 %v3636
    %v3856 = vunpack.c.h.b16 %v3636
    %v3857 = vunpack.c.l.b16 %v3637
    %v3858 = vunpack.c.h.b16 %v3637
    %v3859 = vunpack.c.l.b16 %v3638
    %v3860 = vunpack.c.h.b16 %v3638
    %v3861 = vunpack.c.l.b16 %v3639
    %v3862 = vunpack.c.h.b16 %v3639
    %v3863 = vunpack.c.l.b16 %v3640
    %v3864 = vunpack.c.h.b16 %v3640
    %v3865 = vunpack.c.l.b16 %v3641
    %v3866 = vunpack.c.h.b16 %v3641
    %v3867 = vunpack.c.l.b16 %v3642
    %v3868 = vunpack.c.h.b16 %v3642
    %v3869 = vunpack.c.l.b16 %v3643
    %v3870 = vunpack.c.h.b16 %v3643
    %v3871 = vunpack.c.l.b16 %v3644
    %v3872 = vunpack.c.h.b16 %v3644
    %v3873 = vunpack.c.l.b16 %v3645
    %v3874 = vunpack.c.h.b16 %v3645
    %v3875 = vunpack.c.l.b16 %v3646
    %v3876 = vunpack.c.h.b16 %v3646
    %v3877 = vunpack.c.l.b16 %v3647
    %v3878 = vunpack.c.h.b16 %v3647
    %v3879 = vunpack.c.l.b16 %v3648
    %v3880 = vunpack.c.h.b16 %v3648
    %v3881 = vunpack.c.l.b16 %v3649
    %v3882 = vunpack.c.h.b16 %v3649
    %v3883 = vunpack.c.l.b16 %v3650
    %v3884 = vunpack.c.h.b16 %v3650
    %v3885 = vunpack.c.l.b16 %v3651
    %v3886 = vunpack.c.h.b16 %v3651
    %v3887 = vunpack.c.l.b16 %v3652
    %v3888 = vunpack.c.h.b16 %v3652
    %v3889 = vunpack.c.l.b16 %v3653
    %v3890 = vunpack.c.h.b16 %v3653
    %v3891 = vunpack.c.l.b16 %v3654
    %v3892 = vunpack.c.h.b16 %v3654
    %v3893 = vunpack.c.l.b16 %v3655
    %v3894 = vunpack.c.h.b16 %v3655
    %v3895 = vunpack.c.l.b16 %v3656
    %v3896 = vunpack.c.h.b16 %v3656
    %v3897 = vunpack.c.l.b16 %v3657
    %v3898 = vunpack.c.h.b16 %v3657
    %v3899 = vunpack.c.l.b16 %v3658
    %v3900 = vunpack.c.h.b16 %v3658
    %v3901 = vunpack.c.l.b16 %v3659
    %v3902 = vunpack.c.h.b16 %v3659
    %v3903 = vunpack.c.l.b16 %v3660
    %v3904 = vunpack.c.h.b16 %v3660
    %v3905 = vunpack.c.l.b16 %v3661
    %v3906 = vunpack.c.h.b16 %v3661
    %v3907 = vunpack.c.l.b16 %v3662
    %v3908 = vunpack.c.h.b16 %v3662
    %v3909 = vunpack.c.l.b16 %v3663
    %v3910 = vunpack.c.h.b16 %v3663
    %v3911 = vunpack.c.l.b16 %v3664
    %v3912 = vunpack.c.h.b16 %v3664
    %v3913 = vunpack.c.l.b16 %v3665
    %v3914 = vunpack.c.h.b16 %v3665
    %v3915 = vunpack.c.l.b16 %v3666
    %v3916 = vunpack.c.h.b16 %v3666
    %v3917 = vunpack.c.l.b16 %v3667
    %v3918 = vunpack.c.h.b16 %v3667
    %v3919 = vunpack.c.l.b16 %v3668
    %v3920 = vunpack.c.h.b16 %v3668
    %v3921 = vunpack.c.l.b16 %v3669
    %v3922 = vunpack.c.h.b16 %v3669
    %v3923 = vunpack.c.l.b16 %v3670
    %v3924 = vunpack.c.h.b16 %v3670
    %v3925 = vunpack.c.l.b16 %v3671
    %v3926 = vunpack.c.h.b16 %v3671
    %v3927 = vunpack.c.l.b16 %v3672
    %v3928 = vunpack.c.h.b16 %v3672
    %v3929 = vunpack.c.l.b16 %v3673
    %v3930 = vunpack.c.h.b16 %v3673
    %v3931 = vunpack.c.l.b16 %v3674
    %v3932 = vunpack.c.h.b16 %v3674
    %v3933 = vunpack.c.l.b16 %v3675
    %v3934 = vunpack.c.h.b16 %v3675
    %v3935 = vunpack.c.l.b16 %v3676
    %v3936 = vunpack.c.h.b16 %v3676
    %v3937 = vunpack.c.l.b16 %v3677
    %v3938 = vunpack.c.h.b16 %v3677
    %v3939 = vunpack.c.l.b16 %v3678
    %v3940 = vunpack.c.h.b16 %v3678
    %v3941 = vunpack.c.l.b16 %v3679
    %v3942 = vunpack.c.h.b16 %v3679
    %v3943 = vunpack.c.l.b16 %v3680
    %v3944 = vunpack.c.h.b16 %v3680
    %v3945 = vunpack.c.l.b16 %v3681
    %v3946 = vunpack.c.h.b16 %v3681
    %v3947 = vunpack.c.l.b16 %v3682
    %v3948 = vunpack.c.h.b16 %v3682
    %v3949 = vunpack.c.l.b16 %v3683
    %v3950 = vunpack.c.h.b16 %v3683
    %v3951 = vunpack.c.l.b16 %v3684
    %v3952 = vunpack.c.h.b16 %v3684
    %v3953 = vunpack.c.l.b16 %v3685
    %v3954 = vunpack.c.h.b16 %v3685
    %v3955 = vunpack.c.l.b16 %v3686
    %v3956 = vunpack.c.h.b16 %v3686
    %v3957 = vunpack.c.l.b16 %v3687
    %v3958 = vunpack.c.h.b16 %v3687
    %v3959 = vunpack.c.l.b16 %v3688
    %v3960 = vunpack.c.h.b16 %v3688
    %v3961 = vunpack.c.l.b16 %v3689
    %v3962 = vunpack.c.h.b16 %v3689
    %v3963 = vunpack.c.l.b16 %v3690
    %v3964 = vunpack.c.h.b16 %v3690
    %v3965 = vunpack.c.l.b16 %v3691
    %v3966 = vunpack.c.h.b16 %v3691
    %v3967 = vunpack.c.l.b16 %v3692
    %v3968 = vunpack.c.h.b16 %v3692
    %v3969 = vunpack.c.l.b16 %v3693
    %v3970 = vunpack.c.h.b16 %v3693
    %v3971 = vunpack.c.l.b16 %v3694
    %v3972 = vunpack.c.h.b16 %v3694
    %v3973 = vunpack.c.l.b16 %v3695
    %v3974 = vunpack.c.h.b16 %v3695
    %v3975 = vunpack.c.l.b16 %v3696
    %v3976 = vunpack.c.h.b16 %v3696
    %v3977 = vunpack.c.l.b16 %v3697
    %v3978 = vunpack.c.h.b16 %v3697
    %v3979 = vunpack.c.l.b16 %v3698
    %v3980 = vunpack.c.h.b16 %v3698
    %v3981 = vunpack.c.l.b16 %v3699
    %v3982 = vunpack.c.h.b16 %v3699
    %v3983 = vunpack.c.l.b16 %v3700
    %v3984 = vunpack.c.h.b16 %v3700
    %v3985 = vunpack.c.l.b16 %v3701
    %v3986 = vunpack.c.h.b16 %v3701
    %v3987 = vunpack.c.l.b16 %v3702
    %v3988 = vunpack.c.h.b16 %v3702
    %v3989 = vunpack.c.l.b16 %v3703
    %v3990 = vunpack.c.h.b16 %v3703
    %v3991 = vunpack.c.l.b16 %v3704
    %v3992 = vunpack.c.h.b16 %v3704
    %v3993 = vunpack.c.l.b16 %v3705
    %v3994 = vunpack.c.h.b16 %v3705
    %v3995 = vunpack.c.l.b16 %v3706
    %v3996 = vunpack.c.h.b16 %v3706
    %v3997 = vunpack.c.l.b16 %v3707
    %v3998 = vunpack.c.h.b16 %v3707
    %v3999 = vunpack.c.l.b16 %v3708
    %v4000 = vunpack.c.h.b16 %v3708
    %v4001 = vunpack.c.l.b16 %v3709
    %v4002 = vunpack.c.h.b16 %v3709
    %v4003 = vunpack.c.l.b16 %v3710
    %v4004 = vunpack.c.h.b16 %v3710
    %v4005 = vpack.c.b16 %v3819, %v3813
    %v4006 = vpack.c.b16 %v3820, %v3814
    %v4007 = vpack.c.b16 %v3821, %v3815
    %v4008 = vpack.c.b16 %v3822, %v3816
    %v4009 = vpack.c.b16 %v3823, %v3817
    %v4010 = vpack.c.b16 %v3824, %v3818
    %v4011 = vpack.c.b16 %v3831, %v3825
    %v4012 = vpack.c.b16 %v3832, %v3826
    %v4013 = vpack.c.b16 %v3833, %v3827
    %v4014 = vpack.c.b16 %v3834, %v3828
    %v4015 = vpack.c.b16 %v3835, %v3829
    %v4016 = vpack.c.b16 %v3836, %v3830
    %v4017 = vpack.c.b16 %v3843, %v3837
    %v4018 = vpack.c.b16 %v3844, %v3838
    %v4019 = vpack.c.b16 %v3845, %v3839
    %v4020 = vpack.c.b16 %v3846, %v3840
    %v4021 = vpack.c.b16 %v3847, %v3841
    %v4022 = vpack.c.b16 %v3848, %v3842
    %v4023 = vpack.c.b16 %v3855, %v3849
    %v4024 = vpack.c.b16 %v3856, %v3850
    %v4025 = vpack.c.b16 %v3857, %v3851
    %v4026 = vpack.c.b16 %v3858, %v3852
    %v4027 = vpack.c.b16 %v3859, %v3853
    %v4028 = vpack.c.b16 %v3860, %v3854
    %v4029 = vpack.c.b16 %v3867, %v3861
    %v4030 = vpack.c.b16 %v3868, %v3862
    %v4031 = vpack.c.b16 %v3869, %v3863
    %v4032 = vpack.c.b16 %v3870, %v3864
    %v4033 = vpack.c.b16 %v3871, %v3865
    %v4034 = vpack.c.b16 %v3872, %v3866
    %v4035 = vpack.c.b16 %v3879, %v3873
    %v4036 = vpack.c.b16 %v3880, %v3874
    %v4037 = vpack.c.b16 %v3881, %v3875
    %v4038 = vpack.c.b16 %v3882, %v3876
    %v4039 = vpack.c.b16 %v3883, %v3877
    %v4040 = vpack.c.b16 %v3884, %v3878
    %v4041 = vpack.c.b16 %v3891, %v3885
    %v4042 = vpack.c.b16 %v3892, %v3886
    %v4043 = vpack.c.b16 %v3893, %v3887
    %v4044 = vpack.c.b16 %v3894, %v3888
    %v4045 = vpack.c.b16 %v3895, %v3889
    %v4046 = vpack.c.b16 %v3896, %v3890
    %v4047 = vpack.c.b16 %v3903, %v3897
    %v4048 = vpack.c.b16 %v3904, %v3898
    %v4049 = vpack.c.b16 %v3905, %v3899
    %v4050 = vpack.c.b16 %v3906, %v3900
    %v4051 = vpack.c.b16 %v3907, %v3901
    %v4052 = vpack.c.b16 %v3908, %v3902
    %v4053 = vpack.c.b16 %v3915, %v3909
    %v4054 = vpack.c.b16 %v3916, %v3910
    %v4055 = vpack.c.b16 %v3917, %v3911
    %v4056 = vpack.c.b16 %v3918, %v3912
    %v4057 = vpack.c.b16 %v3919, %v3913
    %v4058 = vpack.c.b16 %v3920, %v3914
    %v4059 = vpack.c.b16 %v3927, %v3921
    %v4060 = vpack.c.b16 %v3928, %v3922
    %v4061 = vpack.c.b16 %v3929, %v3923
    %v4062 = vpack.c.b16 %v3930, %v3924
    %v4063 = vpack.c.b16 %v3931, %v3925
    %v4064 = vpack.c.b16 %v3932, %v3926
    %v4065 = vpack.c.b16 %v3939, %v3933
    %v4066 = vpack.c.b16 %v3940, %v3934
    %v4067 = vpack.c.b16 %v3941, %v3935
    %v4068 = vpack.c.b16 %v3942, %v3936
    %v4069 = vpack.c.b16 %v3943, %v3937
    %v4070 = vpack.c.b16 %v3944, %v3938
    %v4071 = vpack.c.b16 %v3951, %v3945
    %v4072 = vpack.c.b16 %v3952, %v3946
    %v4073 = vpack.c.b16 %v3953, %v3947
    %v4074 = vpack.c.b16 %v3954, %v3948
    %v4075 = vpack.c.b16 %v3955, %v3949
    %v4076 = vpack.c.b16 %v3956, %v3950
    %v4077 = vpack.c.b16 %v3963, %v3957
    %v4078 = vpack.c.b16 %v3964, %v3958
    %v4079 = vpack.c.b16 %v3965, %v3959
    %v4080 = vpack.c.b16 %v3966, %v3960
    %v4081 = vpack.c.b16 %v3967, %v3961
    %v4082 = vpack.c.b16 %v3968, %v3962
    %v4083 = vpack.c.b16 %v3975, %v3969
    %v4084 = vpack.c.b16 %v3976, %v3970
    %v4085 = vpack.c.b16 %v3977, %v3971
    %v4086 = vpack.c.b16 %v3978, %v3972
    %v4087 = vpack.c.b16 %v3979, %v3973
    %v4088 = vpack.c.b16 %v3980, %v3974
    %v4089 = vpack.c.b16 %v3987, %v3981
    %v4090 = vpack.c.b16 %v3988, %v3982
    %v4091 = vpack.c.b16 %v3989, %v3983
    %v4092 = vpack.c.b16 %v3990, %v3984
    %v4093 = vpack.c.b16 %v3991, %v3985
    %v4094 = vpack.c.b16 %v3992, %v3986
    %v4095 = vpack.c.b16 %v3999, %v3993
    %v4096 = vpack.c.b16 %v4000, %v3994
    %v4097 = vpack.c.b16 %v4001, %v3995
    %v4098 = vpack.c.b16 %v4002, %v3996
    %v4099 = vpack.c.b16 %v4003, %v3997
    %v4100 = vpack.c.b16 %v4004, %v3998
    %4197 = vmatpush.bf16.msra.mxu0 %v4047
    %4198 = vmatpush.bf16.msra.mxu0 %v4041
    %4199 = vmatpush.bf16.msra.mxu0 %v4035
    %4200 = vmatpush.bf16.msra.mxu0 %v4029
    %4201 = vmatpush.bf16.msra.mxu0 %v4023
    %4202 = vmatpush.bf16.msra.mxu0 %v4017
    %4203 = vmatpush.bf16.msra.mxu0 %v4011
    %4204 = vmatpush.bf16.msra.mxu0 %v4005
    %4205 = vmatmul.bf16.gmra.mxu0 %v3713
    %v4206 = vpop.f32.mrf.mxu0
    %v4207 = vadd.f32 0.0, %v4206
    %v4208 = vpop.f32.mrf.mxu0
    %v4209 = vadd.f32 0.0, %v4208
    %4210 = vdwg.mxu0
    %4211 = vmatpush.bf16.msra.mxu0 %v4095
    %4212 = vmatpush.bf16.msra.mxu0 %v4089
    %4213 = vmatpush.bf16.msra.mxu0 %v4083
    %4214 = vmatpush.bf16.msra.mxu0 %v4077
    %4215 = vmatpush.bf16.msra.mxu0 %v4071
    %4216 = vmatpush.bf16.msra.mxu0 %v4065
    %4217 = vmatpush.bf16.msra.mxu0 %v4059
    %4218 = vmatpush.bf16.msra.mxu0 %v4053
    %4219 = vmatmul.bf16.gmra.mxu0 %v3714
    %v4220 = vpop.f32.mrf.mxu0
    %v4221 = vadd.f32 %v4207, %v4220
    %v4222 = vpop.f32.mrf.mxu0
    %v4223 = vadd.f32 %v4209, %v4222
    %4224 = vdwg.mxu0
    %4225 = vmatpush.bf16.msra.mxu0 %v4048
    %4226 = vmatpush.bf16.msra.mxu0 %v4042
    %4227 = vmatpush.bf16.msra.mxu0 %v4036
    %4228 = vmatpush.bf16.msra.mxu0 %v4030
    %4229 = vmatpush.bf16.msra.mxu0 %v4024
    %4230 = vmatpush.bf16.msra.mxu0 %v4018
    %4231 = vmatpush.bf16.msra.mxu0 %v4012
    %4232 = vmatpush.bf16.msra.mxu0 %v4006
    %4233 = vmatmul.bf16.gmra.mxu0 %v3713
    %v4234 = vpop.f32.mrf.mxu0
    %v4235 = vadd.f32 0.0, %v4234
    %v4236 = vpop.f32.mrf.mxu0
    %v4237 = vadd.f32 0.0, %v4236
    %4238 = vdwg.mxu0
    %4239 = vmatpush.bf16.msra.mxu0 %v4096
    %4240 = vmatpush.bf16.msra.mxu0 %v4090
    %4241 = vmatpush.bf16.msra.mxu0 %v4084
    %4242 = vmatpush.bf16.msra.mxu0 %v4078
    %4243 = vmatpush.bf16.msra.mxu0 %v4072
    %4244 = vmatpush.bf16.msra.mxu0 %v4066
    %4245 = vmatpush.bf16.msra.mxu0 %v4060
    %4246 = vmatpush.bf16.msra.mxu0 %v4054
    %4247 = vmatmul.bf16.gmra.mxu0 %v3714
    %v4248 = vpop.f32.mrf.mxu0
    %v4249 = vadd.f32 %v4235, %v4248
    %v4250 = vpop.f32.mrf.mxu0
    %v4251 = vadd.f32 %v4237, %v4250
    %4252 = vdwg.mxu0
    %4253 = vmatpush.bf16.msra.mxu0 %v4049
    %4254 = vmatpush.bf16.msra.mxu0 %v4043
    %4255 = vmatpush.bf16.msra.mxu0 %v4037
    %4256 = vmatpush.bf16.msra.mxu0 %v4031
    %4257 = vmatpush.bf16.msra.mxu0 %v4025
    %4258 = vmatpush.bf16.msra.mxu0 %v4019
    %4259 = vmatpush.bf16.msra.mxu0 %v4013
    %4260 = vmatpush.bf16.msra.mxu0 %v4007
    %4261 = vmatmul.bf16.gmra.mxu0 %v3713
    %v4262 = vpop.f32.mrf.mxu0
    %v4263 = vadd.f32 0.0, %v4262
    %v4264 = vpop.f32.mrf.mxu0
    %v4265 = vadd.f32 0.0, %v4264
    %4266 = vdwg.mxu0
    %4267 = vmatpush.bf16.msra.mxu0 %v4097
    %4268 = vmatpush.bf16.msra.mxu0 %v4091
    %4269 = vmatpush.bf16.msra.mxu0 %v4085
    %4270 = vmatpush.bf16.msra.mxu0 %v4079
    %4271 = vmatpush.bf16.msra.mxu0 %v4073
    %4272 = vmatpush.bf16.msra.mxu0 %v4067
    %4273 = vmatpush.bf16.msra.mxu0 %v4061
    %4274 = vmatpush.bf16.msra.mxu0 %v4055
    %4275 = vmatmul.bf16.gmra.mxu0 %v3714
    %v4276 = vpop.f32.mrf.mxu0
    %v4277 = vadd.f32 %v4263, %v4276
    %v4278 = vpop.f32.mrf.mxu0
    %v4279 = vadd.f32 %v4265, %v4278
    %4280 = vdwg.mxu0
    %4281 = vmatpush.bf16.msra.mxu0 %v4050
    %4282 = vmatpush.bf16.msra.mxu0 %v4044
    %4283 = vmatpush.bf16.msra.mxu0 %v4038
    %4284 = vmatpush.bf16.msra.mxu0 %v4032
    %4285 = vmatpush.bf16.msra.mxu0 %v4026
    %4286 = vmatpush.bf16.msra.mxu0 %v4020
    %4287 = vmatpush.bf16.msra.mxu0 %v4014
    %4288 = vmatpush.bf16.msra.mxu0 %v4008
    %4289 = vmatmul.bf16.gmra.mxu0 %v3713
    %v4290 = vpop.f32.mrf.mxu0
    %v4291 = vadd.f32 0.0, %v4290
    %v4292 = vpop.f32.mrf.mxu0
    %v4293 = vadd.f32 0.0, %v4292
    %4294 = vdwg.mxu0
    %4295 = vmatpush.bf16.msra.mxu0 %v4098
    %4296 = vmatpush.bf16.msra.mxu0 %v4092
    %4297 = vmatpush.bf16.msra.mxu0 %v4086
    %4298 = vmatpush.bf16.msra.mxu0 %v4080
    %4299 = vmatpush.bf16.msra.mxu0 %v4074
    %4300 = vmatpush.bf16.msra.mxu0 %v4068
    %4301 = vmatpush.bf16.msra.mxu0 %v4062
    %4302 = vmatpush.bf16.msra.mxu0 %v4056
    %4303 = vmatmul.bf16.gmra.mxu0 %v3714
    %v4304 = vpop.f32.mrf.mxu0
    %v4305 = vadd.f32 %v4291, %v4304
    %v4306 = vpop.f32.mrf.mxu0
    %v4307 = vadd.f32 %v4293, %v4306
    %4308 = vdwg.mxu0
    %4309 = vmatpush.bf16.msra.mxu0 %v4051
    %4310 = vmatpush.bf16.msra.mxu0 %v4045
    %4311 = vmatpush.bf16.msra.mxu0 %v4039
    %4312 = vmatpush.bf16.msra.mxu0 %v4033
    %4313 = vmatpush.bf16.msra.mxu0 %v4027
    %4314 = vmatpush.bf16.msra.mxu0 %v4021
    %4315 = vmatpush.bf16.msra.mxu0 %v4015
    %4316 = vmatpush.bf16.msra.mxu0 %v4009
    %4317 = vmatmul.bf16.gmra.mxu0 %v3713
    %v4318 = vpop.f32.mrf.mxu0
    %v4319 = vadd.f32 0.0, %v4318
    %v4320 = vpop.f32.mrf.mxu0
    %v4321 = vadd.f32 0.0, %v4320
    %4322 = vdwg.mxu0
    %4323 = vmatpush.bf16.msra.mxu0 %v4099
    %4324 = vmatpush.bf16.msra.mxu0 %v4093
    %4325 = vmatpush.bf16.msra.mxu0 %v4087
    %4326 = vmatpush.bf16.msra.mxu0 %v4081
    %4327 = vmatpush.bf16.msra.mxu0 %v4075
    %4328 = vmatpush.bf16.msra.mxu0 %v4069
    %4329 = vmatpush.bf16.msra.mxu0 %v4063
    %4330 = vmatpush.bf16.msra.mxu0 %v4057
    %4331 = vmatmul.bf16.gmra.mxu0 %v3714
    %v4332 = vpop.f32.mrf.mxu0
    %v4333 = vadd.f32 %v4319, %v4332
    %v4334 = vpop.f32.mrf.mxu0
    %v4335 = vadd.f32 %v4321, %v4334
    %4336 = vdwg.mxu0
    %4337 = vmatpush.bf16.msra.mxu0 %v4052
    %4338 = vmatpush.bf16.msra.mxu0 %v4046
    %4339 = vmatpush.bf16.msra.mxu0 %v4040
    %4340 = vmatpush.bf16.msra.mxu0 %v4034
    %4341 = vmatpush.bf16.msra.mxu0 %v4028
    %4342 = vmatpush.bf16.msra.mxu0 %v4022
    %4343 = vmatpush.bf16.msra.mxu0 %v4016
    %4344 = vmatpush.bf16.msra.mxu0 %v4010
    %4345 = vmatmul.bf16.gmra.mxu0 %v3713
    %v4346 = vpop.f32.mrf.mxu0
    %v4347 = vadd.f32 0.0, %v4346
    %v4348 = vpop.f32.mrf.mxu0
    %v4349 = vadd.f32 0.0, %v4348
    %4350 = vdwg.mxu0
    %4351 = vmatpush.bf16.msra.mxu0 %v4100
    %4352 = vmatpush.bf16.msra.mxu0 %v4094
    %4353 = vmatpush.bf16.msra.mxu0 %v4088
    %4354 = vmatpush.bf16.msra.mxu0 %v4082
    %4355 = vmatpush.bf16.msra.mxu0 %v4076
    %4356 = vmatpush.bf16.msra.mxu0 %v4070
    %4357 = vmatpush.bf16.msra.mxu0 %v4064
    %4358 = vmatpush.bf16.msra.mxu0 %v4058
    %4359 = vmatmul.bf16.gmra.mxu0 %v3714
    %v4360 = vpop.f32.mrf.mxu0
    %v4361 = vadd.f32 %v4347, %v4360
    %v4362 = vpop.f32.mrf.mxu0
    %v4363 = vadd.f32 %v4349, %v4362
    %4364 = vdwg.mxu0
    %v4365 = vadd.f32 %v3470, %v4221
    %v4366 = vadd.f32 %v3498, %v4249
    %v4367 = vadd.f32 %v3526, %v4277
    %v4368 = vadd.f32 %v3554, %v4305
    %v4369 = vadd.f32 %v3582, %v4333
    %v4370 = vadd.f32 %v3610, %v4361
    %v4371 = vadd.f32 %v3472, %v4223
    %v4372 = vadd.f32 %v3500, %v4251
    %v4373 = vadd.f32 %v3528, %v4279
    %v4374 = vadd.f32 %v3556, %v4307
    %v4375 = vadd.f32 %v3584, %v4335
    %v4376 = vadd.f32 %v3612, %v4363
    %4377 = vst [vmem:[#allocation3] sm:$0xff] %v4365
    %4378 = vst [vmem:[#allocation3 + $0x8] sm:$0xff] %v4366
    %4379 = vst [vmem:[#allocation3 + $0x10] sm:$0xff] %v4367
    %4380 = vst [vmem:[#allocation3 + $0x18] sm:$0xff] %v4368
    %4381 = vst [vmem:[#allocation3 + $0x20] sm:$0xff] %v4369
    %4382 = vst [vmem:[#allocation3 + $0x28] sm:$0xff] %v4370
    %4383 = vst [vmem:[#allocation3 + $0x30] sm:$0x7] %v4371
    %4384 = vst [vmem:[#allocation3 + $0x38] sm:$0x7] %v4372
    %4385 = vst [vmem:[#allocation3 + $0x40] sm:$0x7] %v4373
    %4386 = vst [vmem:[#allocation3 + $0x48] sm:$0x7] %v4374
    %4387 = vst [vmem:[#allocation3 + $0x50] sm:$0x7] %v4375
    %4388 = vst [vmem:[#allocation3 + $0x58] sm:$0x7] %v4376
    %v4389 = vsel %vm2088, %v4371, 0.0
    %v4390 = vadd.f32 %v4365, %v4389
    %v4391 = vrot.slane %v4390, 4
    %v4392 = vadd.f32 %v4390, %v4391
    %v4393 = vrot.slane %v4392, 2
    %v4394 = vadd.f32 %v4392, %v4393
    %v4395 = vrot.slane %v4394, 1
    %v4396 = vadd.f32 %v4394, %v4395
    %v4397 = vsel %vm2088, %v4372, 0.0
    %v4398 = vadd.f32 %v4366, %v4397
    %v4399 = vrot.slane %v4398, 4
    %v4400 = vadd.f32 %v4398, %v4399
    %v4401 = vrot.slane %v4400, 2
    %v4402 = vadd.f32 %v4400, %v4401
    %v4403 = vrot.slane %v4402, 1
    %v4404 = vadd.f32 %v4402, %v4403
    %v4405 = vsel %vm2088, %v4373, 0.0
    %v4406 = vadd.f32 %v4367, %v4405
    %v4407 = vrot.slane %v4406, 4
    %v4408 = vadd.f32 %v4406, %v4407
    %v4409 = vrot.slane %v4408, 2
    %v4410 = vadd.f32 %v4408, %v4409
    %v4411 = vrot.slane %v4410, 1
    %v4412 = vadd.f32 %v4410, %v4411
    %v4413 = vsel %vm2088, %v4374, 0.0
    %v4414 = vadd.f32 %v4368, %v4413
    %v4415 = vrot.slane %v4414, 4
    %v4416 = vadd.f32 %v4414, %v4415
    %v4417 = vrot.slane %v4416, 2
    %v4418 = vadd.f32 %v4416, %v4417
    %v4419 = vrot.slane %v4418, 1
    %v4420 = vadd.f32 %v4418, %v4419
    %v4421 = vsel %vm2088, %v4375, 0.0
    %v4422 = vadd.f32 %v4369, %v4421
    %v4423 = vrot.slane %v4422, 4
    %v4424 = vadd.f32 %v4422, %v4423
    %v4425 = vrot.slane %v4424, 2
    %v4426 = vadd.f32 %v4424, %v4425
    %v4427 = vrot.slane %v4426, 1
    %v4428 = vadd.f32 %v4426, %v4427
    %v4429 = vsel %vm2088, %v4376, 0.0
    %v4430 = vadd.f32 %v4370, %v4429
    %v4431 = vrot.slane %v4430, 4
    %v4432 = vadd.f32 %v4430, %v4431
    %v4433 = vrot.slane %v4432, 2
    %v4434 = vadd.f32 %v4432, %v4433
    %v4435 = vrot.slane %v4434, 1
    %v4436 = vadd.f32 %v4434, %v4435
    %v4437 = vadd.f32 %v4396, 0.0
    %v4438 = vadd.f32 %v4404, 0.0
    %v4439 = vadd.f32 %v4412, 0.0
    %v4440 = vadd.f32 %v4420, 0.0
    %v4441 = vadd.f32 %v4428, 0.0
    %v4442 = vadd.f32 %v4436, 0.0
    %v4443 = vmul.f32 %v4365, %v4365
    %v4444 = vmul.f32 %v4366, %v4366
    %v4445 = vmul.f32 %v4367, %v4367
    %v4446 = vmul.f32 %v4368, %v4368
    %v4447 = vmul.f32 %v4369, %v4369
    %v4448 = vmul.f32 %v4370, %v4370
    %v4449 = vmul.f32 %v4371, %v4371
    %v4450 = vmul.f32 %v4372, %v4372
    %v4451 = vmul.f32 %v4373, %v4373
    %v4452 = vmul.f32 %v4374, %v4374
    %v4453 = vmul.f32 %v4375, %v4375
    %v4454 = vmul.f32 %v4376, %v4376
    %v4455 = vsel %vm2088, %v4449, 0.0
    %v4456 = vadd.f32 %v4443, %v4455
    %v4457 = vrot.slane %v4456, 4
    %v4458 = vadd.f32 %v4456, %v4457
    %v4459 = vrot.slane %v4458, 2
    %v4460 = vadd.f32 %v4458, %v4459
    %v4461 = vrot.slane %v4460, 1
    %v4462 = vadd.f32 %v4460, %v4461
    %v4463 = vsel %vm2088, %v4450, 0.0
    %v4464 = vadd.f32 %v4444, %v4463
    %v4465 = vrot.slane %v4464, 4
    %v4466 = vadd.f32 %v4464, %v4465
    %v4467 = vrot.slane %v4466, 2
    %v4468 = vadd.f32 %v4466, %v4467
    %v4469 = vrot.slane %v4468, 1
    %v4470 = vadd.f32 %v4468, %v4469
    %v4471 = vsel %vm2088, %v4451, 0.0
    %v4472 = vadd.f32 %v4445, %v4471
    %v4473 = vrot.slane %v4472, 4
    %v4474 = vadd.f32 %v4472, %v4473
    %v4475 = vrot.slane %v4474, 2
    %v4476 = vadd.f32 %v4474, %v4475
    %v4477 = vrot.slane %v4476, 1
    %v4478 = vadd.f32 %v4476, %v4477
    %v4479 = vsel %vm2088, %v4452, 0.0
    %v4480 = vadd.f32 %v4446, %v4479
    %v4481 = vrot.slane %v4480, 4
    %v4482 = vadd.f32 %v4480, %v4481
    %v4483 = vrot.slane %v4482, 2
    %v4484 = vadd.f32 %v4482, %v4483
    %v4485 = vrot.slane %v4484, 1
    %v4486 = vadd.f32 %v4484, %v4485
    %v4487 = vsel %vm2088, %v4453, 0.0
    %v4488 = vadd.f32 %v4447, %v4487
    %v4489 = vrot.slane %v4488, 4
    %v4490 = vadd.f32 %v4488, %v4489
    %v4491 = vrot.slane %v4490, 2
    %v4492 = vadd.f32 %v4490, %v4491
    %v4493 = vrot.slane %v4492, 1
    %v4494 = vadd.f32 %v4492, %v4493
    %v4495 = vsel %vm2088, %v4454, 0.0
    %v4496 = vadd.f32 %v4448, %v4495
    %v4497 = vrot.slane %v4496, 4
    %v4498 = vadd.f32 %v4496, %v4497
    %v4499 = vrot.slane %v4498, 2
    %v4500 = vadd.f32 %v4498, %v4499
    %v4501 = vrot.slane %v4500, 1
    %v4502 = vadd.f32 %v4500, %v4501
    %v4503 = vadd.f32 %v4462, 0.0
    %v4504 = vadd.f32 %v4470, 0.0
    %v4505 = vadd.f32 %v4478, 0.0
    %v4506 = vadd.f32 %v4486, 0.0
    %v4507 = vadd.f32 %v4494, 0.0
    %v4508 = vadd.f32 %v4502, 0.0
    %v4509 = vld [vmem:[%s1284] sm:$0xff]
    %v4510 = vld [vmem:[%s1284 + $0x8] sm:$0xff]
    %v4511 = vld [vmem:[%s1284 + $0x10] sm:$0xff]
    %v4512 = vld [vmem:[%s1284 + $0x18] sm:$0xff]
    %v4513 = vld [vmem:[%s1284 + $0x20] sm:$0xff]
    %v4514 = vld [vmem:[%s1284 + $0x28] sm:$0xff]
    %v4515 = vld [vmem:[%s1284 + $0x30] sm:$0xff]
    %v4516 = vld [vmem:[%s1284 + $0x38] sm:$0xff]
    %v4517 = vld [vmem:[%s1284 + $0x40] sm:$0xff]
    %v4518 = vld [vmem:[%s1284 + $0x48] sm:$0xff]
    %v4519 = vld [vmem:[%s1284 + $0x50] sm:$0xff]
    %v4520 = vld [vmem:[%s1284 + $0x58] sm:$0xff]
    %v4521 = vld [vmem:[%s1284 + $0x60] sm:$0x3]
    %v4522 = vld [vmem:[%s1284 + $0x68] sm:$0x3]
    %v4523 = vld [vmem:[%s1284 + $0x70] sm:$0x3]
    %v4524 = vld [vmem:[%s1284 + $0x78] sm:$0x3]
    %v4525 = vmul.f32 %v4509, %v1952
    %v4526 = vmul.f32 %v4510, %v1953
    %v4527 = vmul.f32 %v4511, %v1954
    %v4528 = vmul.f32 %v4512, %v1955
    %v4529 = vmul.f32 %v4513, %v1952
    %v4530 = vmul.f32 %v4514, %v1953
    %v4531 = vmul.f32 %v4515, %v1954
    %v4532 = vmul.f32 %v4516, %v1955
    %v4533 = vmul.f32 %v4517, %v1952
    %v4534 = vmul.f32 %v4518, %v1953
    %v4535 = vmul.f32 %v4519, %v1954
    %v4536 = vmul.f32 %v4520, %v1955
    %v4537 = vmul.f32 %v4521, %v1952
    %v4538 = vmul.f32 %v4522, %v1953
    %v4539 = vmul.f32 %v4523, %v1954
    %v4540 = vmul.f32 %v4524, %v1955
    %v4541 = vadd.f32 %v4525, %v1972
    %v4542 = vadd.f32 %v4526, %v1973
    %v4543 = vadd.f32 %v4527, %v1974
    %v4544 = vadd.f32 %v4528, %v1975
    %v4545 = vadd.f32 %v4529, %v1972
    %v4546 = vadd.f32 %v4530, %v1973
    %v4547 = vadd.f32 %v4531, %v1974
    %v4548 = vadd.f32 %v4532, %v1975
    %v4549 = vadd.f32 %v4533, %v1972
    %v4550 = vadd.f32 %v4534, %v1973
    %v4551 = vadd.f32 %v4535, %v1974
    %v4552 = vadd.f32 %v4536, %v1975
    %v4553 = vadd.f32 %v4537, %v1972
    %v4554 = vadd.f32 %v4538, %v1973
    %v4555 = vadd.f32 %v4539, %v1974
    %v4556 = vadd.f32 %v4540, %v1975
    %v4557 = vmax.f32 %v4541, 0.0
    %v4558 = vmax.f32 %v4542, 0.0
    %v4559 = vmax.f32 %v4543, 0.0
    %v4560 = vmax.f32 %v4544, 0.0
    %v4561 = vmax.f32 %v4545, 0.0
    %v4562 = vmax.f32 %v4546, 0.0
    %v4563 = vmax.f32 %v4547, 0.0
    %v4564 = vmax.f32 %v4548, 0.0
    %v4565 = vmax.f32 %v4549, 0.0
    %v4566 = vmax.f32 %v4550, 0.0
    %v4567 = vmax.f32 %v4551, 0.0
    %v4568 = vmax.f32 %v4552, 0.0
    %v4569 = vmax.f32 %v4553, 0.0
    %v4570 = vmax.f32 %v4554, 0.0
    %v4571 = vmax.f32 %v4555, 0.0
    %v4572 = vmax.f32 %v4556, 0.0
    %v4573 = vmax.f32 %v4557, %v4559
    %v4574 = vmax.f32 %v4558, %v4560
    %v4575 = vmax.f32 %v4561, %v4563
    %v4576 = vmax.f32 %v4562, %v4564
    %v4577 = vmax.f32 %v4565, %v4567
    %v4578 = vmax.f32 %v4566, %v4568
    %v4579 = vmax.f32 %v4569, %v4571
    %v4580 = vmax.f32 %v4570, %v4572
    %v4581 = vpack.c.bf16 %v4575, %v4573
    %v4582 = vpack.c.bf16 %v4576, %v4574
    %v4583 = vpack.c.bf16 %v4579, %v4577
    %v4584 = vpack.c.bf16 %v4580, %v4578
    %v4586 = vsel %vm2037, %v4583, 0
    %v4589 = vsel %vm2037, %v4584, 0
    %4591 = vmatpush.bf16.msra.mxu0 0
    %4592 = vmatpush.bf16.msra.mxu0 0
    %4593 = vmatpush.bf16.msra.mxu0 0
    %4594 = vmatpush.bf16.msra.mxu0 0
    %4595 = vmatpush.bf16.msra.mxu0 0
    %4596 = vmatpush.bf16.msra.mxu0 0
    %4597 = vmatpush.bf16.msra.mxu0 %v4586
    %4598 = vmatpush.bf16.msra.mxu0 %v4581
    %4599 = vmatmul.bf16.gmra.mxu0 %v2032
    %v4600 = vpop.f32.mrf.mxu0
    %v4601 = vadd.f32 0.0, %v4600
    %v4602 = vpop.f32.mrf.mxu0
    %v4603 = vadd.f32 0.0, %v4602
    %4604 = vmatmul.bf16.gmra.mxu0 %v2035
    %v4605 = vpop.f32.mrf.mxu0
    %v4606 = vadd.f32 0.0, %v4605
    %v4607 = vpop.f32.mrf.mxu0
    %v4608 = vadd.f32 0.0, %v4607
    %4609 = vdwg.mxu0
    %4610 = vmatpush.bf16.msra.mxu0 0
    %4611 = vmatpush.bf16.msra.mxu0 0
    %4612 = vmatpush.bf16.msra.mxu0 0
    %4613 = vmatpush.bf16.msra.mxu0 0
    %4614 = vmatpush.bf16.msra.mxu0 0
    %4615 = vmatpush.bf16.msra.mxu0 0
    %4616 = vmatpush.bf16.msra.mxu0 %v4589
    %4617 = vmatpush.bf16.msra.mxu0 %v4582
    %4618 = vmatmul.bf16.gmra.mxu0 %v2032
    %v4619 = vpop.f32.mrf.mxu0
    %v4620 = vadd.f32 0.0, %v4619
    %v4621 = vpop.f32.mrf.mxu0
    %v4622 = vadd.f32 0.0, %v4621
    %4623 = vmatmul.bf16.gmra.mxu0 %v2035
    %v4624 = vpop.f32.mrf.mxu0
    %v4625 = vadd.f32 0.0, %v4624
    %v4626 = vpop.f32.mrf.mxu0
    %v4627 = vadd.f32 0.0, %v4626
    %4628 = vdwg.mxu0
    %v4635 = vrot.slane %v4603, 5
    %v4636 = vrot.slane %v4606, 5
    %v4637 = vsel %vm2088, %v4635, %v4636
    %v4638 = vrot.slane %v4622, 5
    %v4639 = vrot.slane %v4625, 5
    %v4640 = vsel %vm2088, %v4638, %v4639
    %v4641 = vrot.slane %v4608, 5
    %v4642 = vsel %vm2088, %v4636, %v4641
    %v4643 = vrot.slane %v4627, 5
    %v4644 = vsel %vm2088, %v4639, %v4643
    %v4649 = vmax.f32 %v4601, %v4637
    %v4650 = vmax.f32 %v4620, %v4640
    %v4651 = vmax.f32 %v4603, %v4642
    %v4652 = vmax.f32 %v4622, %v4644
    %v4653 = vpack.c.bf16 %v4651, %v4649
    %v4654 = vpack.c.bf16 %v4652, %v4650
    %v4655 = vld [vmem:[#allocation8] sm:$0xff]
    %v4656 = vld [vmem:[#allocation8 + $0x8] sm:$0xff]
    %v4657 = vld [vmem:[#allocation8 + $0x10] sm:$0xff]
    %v4658 = vld [vmem:[#allocation8 + $0x18] sm:$0xff]
    %v4659 = vld [vmem:[#allocation8 + $0x20] sm:$0xff]
    %v4660 = vld [vmem:[#allocation8 + $0x28] sm:$0xff]
    %v4661 = vld [vmem:[#allocation8 + $0x30] sm:$0xff]
    %v4662 = vld [vmem:[#allocation8 + $0x38] sm:$0xff]
    %v4663 = vld [vmem:[#allocation8 + $0x40] sm:$0xff]
    %v4664 = vld [vmem:[#allocation8 + $0x48] sm:$0xff]
    %v4665 = vld [vmem:[#allocation8 + $0x50] sm:$0xff]
    %v4666 = vld [vmem:[#allocation8 + $0x58] sm:$0xff]
    %v4667 = vld [vmem:[#allocation8 + $0x60] sm:$0xff]
    %v4668 = vld [vmem:[#allocation8 + $0x68] sm:$0xff]
    %v4669 = vld [vmem:[#allocation8 + $0x70] sm:$0xff]
    %v4670 = vld [vmem:[#allocation8 + $0x78] sm:$0xff]
    %v4671 = vld [vmem:[#allocation8 + $0x80] sm:$0xff]
    %v4672 = vld [vmem:[#allocation8 + $0x88] sm:$0xff]
    %v4673 = vld [vmem:[#allocation8 + $0x90] sm:$0xff]
    %v4674 = vld [vmem:[#allocation8 + $0x98] sm:$0xff]
    %v4675 = vld [vmem:[#allocation8 + $0xa0] sm:$0xff]
    %v4676 = vld [vmem:[#allocation8 + $0xa8] sm:$0xff]
    %v4677 = vld [vmem:[#allocation8 + $0xb0] sm:$0xff]
    %v4678 = vld [vmem:[#allocation8 + $0xb8] sm:$0xff]
    %v4679 = vld [vmem:[#allocation8 + $0xc0] sm:$0xff]
    %v4680 = vld [vmem:[#allocation8 + $0xc8] sm:$0xff]
    %v4681 = vld [vmem:[#allocation8 + $0xd0] sm:$0xff]
    %v4682 = vld [vmem:[#allocation8 + $0xd8] sm:$0xff]
    %v4683 = vld [vmem:[#allocation8 + $0xe0] sm:$0xff]
    %v4684 = vld [vmem:[#allocation8 + $0xe8] sm:$0xff]
    %v4685 = vld [vmem:[#allocation8 + $0xf0] sm:$0xff]
    %v4686 = vld [vmem:[#allocation8 + $0xf8] sm:$0xff]
    %v4687 = vld [vmem:[#allocation8 + $0x100] sm:$0xff]
    %v4688 = vld [vmem:[#allocation8 + $0x108] sm:$0xff]
    %v4689 = vld [vmem:[#allocation8 + $0x110] sm:$0xff]
    %v4690 = vld [vmem:[#allocation8 + $0x118] sm:$0xff]
    %v4691 = vld [vmem:[#allocation8 + $0x120] sm:$0xff]
    %v4692 = vld [vmem:[#allocation8 + $0x128] sm:$0xff]
    %v4693 = vld [vmem:[#allocation8 + $0x130] sm:$0xff]
    %v4694 = vld [vmem:[#allocation8 + $0x138] sm:$0xff]
    %v4695 = vld [vmem:[#allocation8 + $0x140] sm:$0xff]
    %v4696 = vld [vmem:[#allocation8 + $0x148] sm:$0xff]
    %v4697 = vld [vmem:[#allocation8 + $0x150] sm:$0xff]
    %v4698 = vld [vmem:[#allocation8 + $0x158] sm:$0xff]
    %v4699 = vld [vmem:[#allocation8 + $0x160] sm:$0xff]
    %v4700 = vld [vmem:[#allocation8 + $0x168] sm:$0xff]
    %v4701 = vld [vmem:[#allocation8 + $0x170] sm:$0xff]
    %v4702 = vld [vmem:[#allocation8 + $0x178] sm:$0xff]
    %v4703 = vld [vmem:[#allocation8 + $0x180] sm:$0xff]
    %v4704 = vld [vmem:[#allocation8 + $0x188] sm:$0xff]
    %v4705 = vld [vmem:[#allocation8 + $0x190] sm:$0xff]
    %v4706 = vld [vmem:[#allocation8 + $0x198] sm:$0xff]
    %v4707 = vld [vmem:[#allocation8 + $0x1a0] sm:$0xff]
    %v4708 = vld [vmem:[#allocation8 + $0x1a8] sm:$0xff]
    %v4709 = vld [vmem:[#allocation8 + $0x1b0] sm:$0xff]
    %v4710 = vld [vmem:[#allocation8 + $0x1b8] sm:$0xff]
    %v4711 = vld [vmem:[#allocation8 + $0x1c0] sm:$0xff]
    %v4712 = vld [vmem:[#allocation8 + $0x1c8] sm:$0xff]
    %v4713 = vld [vmem:[#allocation8 + $0x1d0] sm:$0xff]
    %v4714 = vld [vmem:[#allocation8 + $0x1d8] sm:$0xff]
    %v4715 = vld [vmem:[#allocation8 + $0x1e0] sm:$0xff]
    %v4716 = vld [vmem:[#allocation8 + $0x1e8] sm:$0xff]
    %v4717 = vld [vmem:[#allocation8 + $0x1f0] sm:$0xff]
    %v4718 = vld [vmem:[#allocation8 + $0x1f8] sm:$0xff]
    %v4719 = vld [vmem:[#allocation8 + $0x200] sm:$0xff]
    %v4720 = vld [vmem:[#allocation8 + $0x208] sm:$0xff]
    %v4721 = vld [vmem:[#allocation8 + $0x210] sm:$0xff]
    %v4722 = vld [vmem:[#allocation8 + $0x218] sm:$0xff]
    %v4723 = vld [vmem:[#allocation8 + $0x220] sm:$0xff]
    %v4724 = vld [vmem:[#allocation8 + $0x228] sm:$0xff]
    %v4725 = vld [vmem:[#allocation8 + $0x230] sm:$0xff]
    %v4726 = vld [vmem:[#allocation8 + $0x238] sm:$0xff]
    %v4727 = vld [vmem:[#allocation8 + $0x240] sm:$0xff]
    %v4728 = vld [vmem:[#allocation8 + $0x248] sm:$0xff]
    %v4729 = vld [vmem:[#allocation8 + $0x250] sm:$0xff]
    %v4730 = vld [vmem:[#allocation8 + $0x258] sm:$0xff]
    %v4731 = vld [vmem:[#allocation8 + $0x260] sm:$0xff]
    %v4732 = vld [vmem:[#allocation8 + $0x268] sm:$0xff]
    %v4733 = vld [vmem:[#allocation8 + $0x270] sm:$0xff]
    %v4734 = vld [vmem:[#allocation8 + $0x278] sm:$0xff]
    %v4735 = vld [vmem:[#allocation8 + $0x280] sm:$0xff]
    %v4736 = vld [vmem:[#allocation8 + $0x288] sm:$0xff]
    %v4737 = vld [vmem:[#allocation8 + $0x290] sm:$0xff]
    %v4738 = vld [vmem:[#allocation8 + $0x298] sm:$0xff]
    %v4739 = vld [vmem:[#allocation8 + $0x2a0] sm:$0xff]
    %v4740 = vld [vmem:[#allocation8 + $0x2a8] sm:$0xff]
    %v4741 = vld [vmem:[#allocation8 + $0x2b0] sm:$0xff]
    %v4742 = vld [vmem:[#allocation8 + $0x2b8] sm:$0xff]
    %v4743 = vld [vmem:[#allocation8 + $0x2c0] sm:$0xff]
    %v4744 = vld [vmem:[#allocation8 + $0x2c8] sm:$0xff]
    %v4745 = vld [vmem:[#allocation8 + $0x2d0] sm:$0xff]
    %v4746 = vld [vmem:[#allocation8 + $0x2d8] sm:$0xff]
    %v4747 = vld [vmem:[#allocation8 + $0x2e0] sm:$0xff]
    %v4748 = vld [vmem:[#allocation8 + $0x2e8] sm:$0xff]
    %v4749 = vld [vmem:[#allocation8 + $0x2f0] sm:$0xff]
    %v4750 = vld [vmem:[#allocation8 + $0x2f8] sm:$0xff]
    %v4751 = vld [vmem:[%s2205] sm:$0xff]
    %v4752 = vld [vmem:[%s2205 + $0x8] sm:$0xff]
    %v4753 = vld [vmem:[%s2205 + $0x10] sm:$0xff]
    %v4754 = vld [vmem:[%s2205 + $0x18] sm:$0xff]
    %v4755 = vld [vmem:[%s2205 + $0x20] sm:$0xff]
    %v4756 = vld [vmem:[%s2205 + $0x28] sm:$0xff]
    %v4757 = vld [vmem:[%s2205 + $0x30] sm:$0xff]
    %v4758 = vld [vmem:[%s2205 + $0x38] sm:$0xff]
    %v4759 = vld [vmem:[%s2205 + $0x40] sm:$0xff]
    %v4760 = vld [vmem:[%s2205 + $0x48] sm:$0xff]
    %v4761 = vld [vmem:[%s2205 + $0x50] sm:$0xff]
    %v4762 = vld [vmem:[%s2205 + $0x58] sm:$0xff]
    %v4763 = vld [vmem:[%s2205 + $0x60] sm:$0xff]
    %v4764 = vld [vmem:[%s2205 + $0x68] sm:$0xff]
    %v4765 = vld [vmem:[%s2205 + $0x70] sm:$0xff]
    %v4766 = vld [vmem:[%s2205 + $0x78] sm:$0xff]
    %v4767 = vld [vmem:[%s2205 + $0x80] sm:$0xff]
    %v4768 = vld [vmem:[%s2205 + $0x88] sm:$0xff]
    %v4769 = vld [vmem:[%s2205 + $0x90] sm:$0xff]
    %v4770 = vld [vmem:[%s2205 + $0x98] sm:$0xff]
    %v4771 = vld [vmem:[%s2205 + $0xa0] sm:$0xff]
    %v4772 = vld [vmem:[%s2205 + $0xa8] sm:$0xff]
    %v4773 = vld [vmem:[%s2205 + $0xb0] sm:$0xff]
    %v4774 = vld [vmem:[%s2205 + $0xb8] sm:$0xff]
    %v4775 = vld [vmem:[%s2205 + $0xc0] sm:$0xff]
    %v4776 = vld [vmem:[%s2205 + $0xc8] sm:$0xff]
    %v4777 = vld [vmem:[%s2205 + $0xd0] sm:$0xff]
    %v4778 = vld [vmem:[%s2205 + $0xd8] sm:$0xff]
    %v4779 = vld [vmem:[%s2205 + $0xe0] sm:$0xff]
    %v4780 = vld [vmem:[%s2205 + $0xe8] sm:$0xff]
    %v4781 = vld [vmem:[%s2205 + $0xf0] sm:$0xff]
    %v4782 = vld [vmem:[%s2205 + $0xf8] sm:$0xff]
    %v4783 = vld [vmem:[%s2205 + $0x100] sm:$0xff]
    %v4784 = vld [vmem:[%s2205 + $0x108] sm:$0xff]
    %v4785 = vld [vmem:[%s2205 + $0x110] sm:$0xff]
    %v4786 = vld [vmem:[%s2205 + $0x118] sm:$0xff]
    %v4787 = vld [vmem:[%s2205 + $0x120] sm:$0xff]
    %v4788 = vld [vmem:[%s2205 + $0x128] sm:$0xff]
    %v4789 = vld [vmem:[%s2205 + $0x130] sm:$0xff]
    %v4790 = vld [vmem:[%s2205 + $0x138] sm:$0xff]
    %v4791 = vld [vmem:[%s2205 + $0x140] sm:$0xff]
    %v4792 = vld [vmem:[%s2205 + $0x148] sm:$0xff]
    %v4793 = vld [vmem:[%s2205 + $0x150] sm:$0xff]
    %v4794 = vld [vmem:[%s2205 + $0x158] sm:$0xff]
    %v4795 = vld [vmem:[%s2205 + $0x160] sm:$0xff]
    %v4796 = vld [vmem:[%s2205 + $0x168] sm:$0xff]
    %v4797 = vld [vmem:[%s2205 + $0x170] sm:$0xff]
    %v4798 = vld [vmem:[%s2205 + $0x178] sm:$0xff]
    %v4799 = vld [vmem:[%s2205 + $0x180] sm:$0xff]
    %v4800 = vld [vmem:[%s2205 + $0x188] sm:$0xff]
    %v4801 = vld [vmem:[%s2205 + $0x190] sm:$0xff]
    %v4802 = vld [vmem:[%s2205 + $0x198] sm:$0xff]
    %v4803 = vld [vmem:[%s2205 + $0x1a0] sm:$0xff]
    %v4804 = vld [vmem:[%s2205 + $0x1a8] sm:$0xff]
    %v4805 = vld [vmem:[%s2205 + $0x1b0] sm:$0xff]
    %v4806 = vld [vmem:[%s2205 + $0x1b8] sm:$0xff]
    %v4807 = vld [vmem:[%s2205 + $0x1c0] sm:$0xff]
    %v4808 = vld [vmem:[%s2205 + $0x1c8] sm:$0xff]
    %v4809 = vld [vmem:[%s2205 + $0x1d0] sm:$0xff]
    %v4810 = vld [vmem:[%s2205 + $0x1d8] sm:$0xff]
    %v4811 = vld [vmem:[%s2205 + $0x1e0] sm:$0xff]
    %v4812 = vld [vmem:[%s2205 + $0x1e8] sm:$0xff]
    %v4813 = vld [vmem:[%s2205 + $0x1f0] sm:$0xff]
    %v4814 = vld [vmem:[%s2205 + $0x1f8] sm:$0xff]
    %v4815 = vld [vmem:[%s2205 + $0x200] sm:$0xff]
    %v4816 = vld [vmem:[%s2205 + $0x208] sm:$0xff]
    %v4817 = vld [vmem:[%s2205 + $0x210] sm:$0xff]
    %v4818 = vld [vmem:[%s2205 + $0x218] sm:$0xff]
    %v4819 = vld [vmem:[%s2205 + $0x220] sm:$0xff]
    %v4820 = vld [vmem:[%s2205 + $0x228] sm:$0xff]
    %v4821 = vld [vmem:[%s2205 + $0x230] sm:$0xff]
    %v4822 = vld [vmem:[%s2205 + $0x238] sm:$0xff]
    %v4823 = vld [vmem:[%s2205 + $0x240] sm:$0xff]
    %v4824 = vld [vmem:[%s2205 + $0x248] sm:$0xff]
    %v4825 = vld [vmem:[%s2205 + $0x250] sm:$0xff]
    %v4826 = vld [vmem:[%s2205 + $0x258] sm:$0xff]
    %v4827 = vld [vmem:[%s2205 + $0x260] sm:$0xff]
    %v4828 = vld [vmem:[%s2205 + $0x268] sm:$0xff]
    %v4829 = vld [vmem:[%s2205 + $0x270] sm:$0xff]
    %v4830 = vld [vmem:[%s2205 + $0x278] sm:$0xff]
    %v4831 = vld [vmem:[%s2205 + $0x280] sm:$0xff]
    %v4832 = vld [vmem:[%s2205 + $0x288] sm:$0xff]
    %v4833 = vld [vmem:[%s2205 + $0x290] sm:$0xff]
    %v4834 = vld [vmem:[%s2205 + $0x298] sm:$0xff]
    %v4835 = vld [vmem:[%s2205 + $0x2a0] sm:$0xff]
    %v4836 = vld [vmem:[%s2205 + $0x2a8] sm:$0xff]
    %v4837 = vld [vmem:[%s2205 + $0x2b0] sm:$0xff]
    %v4838 = vld [vmem:[%s2205 + $0x2b8] sm:$0xff]
    %v4839 = vld [vmem:[%s2205 + $0x2c0] sm:$0xff]
    %v4840 = vld [vmem:[%s2205 + $0x2c8] sm:$0xff]
    %v4841 = vld [vmem:[%s2205 + $0x2d0] sm:$0xff]
    %v4842 = vld [vmem:[%s2205 + $0x2d8] sm:$0xff]
    %v4843 = vld [vmem:[%s2205 + $0x2e0] sm:$0xff]
    %v4844 = vld [vmem:[%s2205 + $0x2e8] sm:$0xff]
    %v4845 = vld [vmem:[%s2205 + $0x2f0] sm:$0xff]
    %v4846 = vld [vmem:[%s2205 + $0x2f8] sm:$0xff]
    %v4848 = vshrl.u32 %v4653, 16
    %v4850 = vshll.u32 %v4653, 16
    %v4852 = vrot.slane %v4850, 1
    %v4853 = vor.u32 %v4848, %v4852
    %v4855 = vshrl.u32 %v4654, 16
    %v4857 = vshll.u32 %v4654, 16
    %v4859 = vrot.slane %v4857, 1
    %v4860 = vor.u32 %v4855, %v4859
    %v4959 = vunpack.c.l.b16 %v4751
    %v4960 = vunpack.c.h.b16 %v4751
    %v4961 = vunpack.c.l.b16 %v4752
    %v4962 = vunpack.c.h.b16 %v4752
    %v4963 = vunpack.c.l.b16 %v4753
    %v4964 = vunpack.c.h.b16 %v4753
    %v4965 = vunpack.c.l.b16 %v4754
    %v4966 = vunpack.c.h.b16 %v4754
    %v4967 = vunpack.c.l.b16 %v4755
    %v4968 = vunpack.c.h.b16 %v4755
    %v4969 = vunpack.c.l.b16 %v4756
    %v4970 = vunpack.c.h.b16 %v4756
    %v4971 = vunpack.c.l.b16 %v4757
    %v4972 = vunpack.c.h.b16 %v4757
    %v4973 = vunpack.c.l.b16 %v4758
    %v4974 = vunpack.c.h.b16 %v4758
    %v4975 = vunpack.c.l.b16 %v4759
    %v4976 = vunpack.c.h.b16 %v4759
    %v4977 = vunpack.c.l.b16 %v4760
    %v4978 = vunpack.c.h.b16 %v4760
    %v4979 = vunpack.c.l.b16 %v4761
    %v4980 = vunpack.c.h.b16 %v4761
    %v4981 = vunpack.c.l.b16 %v4762
    %v4982 = vunpack.c.h.b16 %v4762
    %v4983 = vunpack.c.l.b16 %v4763
    %v4984 = vunpack.c.h.b16 %v4763
    %v4985 = vunpack.c.l.b16 %v4764
    %v4986 = vunpack.c.h.b16 %v4764
    %v4987 = vunpack.c.l.b16 %v4765
    %v4988 = vunpack.c.h.b16 %v4765
    %v4989 = vunpack.c.l.b16 %v4766
    %v4990 = vunpack.c.h.b16 %v4766
    %v4991 = vunpack.c.l.b16 %v4767
    %v4992 = vunpack.c.h.b16 %v4767
    %v4993 = vunpack.c.l.b16 %v4768
    %v4994 = vunpack.c.h.b16 %v4768
    %v4995 = vunpack.c.l.b16 %v4769
    %v4996 = vunpack.c.h.b16 %v4769
    %v4997 = vunpack.c.l.b16 %v4770
    %v4998 = vunpack.c.h.b16 %v4770
    %v4999 = vunpack.c.l.b16 %v4771
    %v5000 = vunpack.c.h.b16 %v4771
    %v5001 = vunpack.c.l.b16 %v4772
    %v5002 = vunpack.c.h.b16 %v4772
    %v5003 = vunpack.c.l.b16 %v4773
    %v5004 = vunpack.c.h.b16 %v4773
    %v5005 = vunpack.c.l.b16 %v4774
    %v5006 = vunpack.c.h.b16 %v4774
    %v5007 = vunpack.c.l.b16 %v4775
    %v5008 = vunpack.c.h.b16 %v4775
    %v5009 = vunpack.c.l.b16 %v4776
    %v5010 = vunpack.c.h.b16 %v4776
    %v5011 = vunpack.c.l.b16 %v4777
    %v5012 = vunpack.c.h.b16 %v4777
    %v5013 = vunpack.c.l.b16 %v4778
    %v5014 = vunpack.c.h.b16 %v4778
    %v5015 = vunpack.c.l.b16 %v4779
    %v5016 = vunpack.c.h.b16 %v4779
    %v5017 = vunpack.c.l.b16 %v4780
    %v5018 = vunpack.c.h.b16 %v4780
    %v5019 = vunpack.c.l.b16 %v4781
    %v5020 = vunpack.c.h.b16 %v4781
    %v5021 = vunpack.c.l.b16 %v4782
    %v5022 = vunpack.c.h.b16 %v4782
    %v5023 = vunpack.c.l.b16 %v4783
    %v5024 = vunpack.c.h.b16 %v4783
    %v5025 = vunpack.c.l.b16 %v4784
    %v5026 = vunpack.c.h.b16 %v4784
    %v5027 = vunpack.c.l.b16 %v4785
    %v5028 = vunpack.c.h.b16 %v4785
    %v5029 = vunpack.c.l.b16 %v4786
    %v5030 = vunpack.c.h.b16 %v4786
    %v5031 = vunpack.c.l.b16 %v4787
    %v5032 = vunpack.c.h.b16 %v4787
    %v5033 = vunpack.c.l.b16 %v4788
    %v5034 = vunpack.c.h.b16 %v4788
    %v5035 = vunpack.c.l.b16 %v4789
    %v5036 = vunpack.c.h.b16 %v4789
    %v5037 = vunpack.c.l.b16 %v4790
    %v5038 = vunpack.c.h.b16 %v4790
    %v5039 = vunpack.c.l.b16 %v4791
    %v5040 = vunpack.c.h.b16 %v4791
    %v5041 = vunpack.c.l.b16 %v4792
    %v5042 = vunpack.c.h.b16 %v4792
    %v5043 = vunpack.c.l.b16 %v4793
    %v5044 = vunpack.c.h.b16 %v4793
    %v5045 = vunpack.c.l.b16 %v4794
    %v5046 = vunpack.c.h.b16 %v4794
    %v5047 = vunpack.c.l.b16 %v4795
    %v5048 = vunpack.c.h.b16 %v4795
    %v5049 = vunpack.c.l.b16 %v4796
    %v5050 = vunpack.c.h.b16 %v4796
    %v5051 = vunpack.c.l.b16 %v4797
    %v5052 = vunpack.c.h.b16 %v4797
    %v5053 = vunpack.c.l.b16 %v4798
    %v5054 = vunpack.c.h.b16 %v4798
    %v5055 = vunpack.c.l.b16 %v4799
    %v5056 = vunpack.c.h.b16 %v4799
    %v5057 = vunpack.c.l.b16 %v4800
    %v5058 = vunpack.c.h.b16 %v4800
    %v5059 = vunpack.c.l.b16 %v4801
    %v5060 = vunpack.c.h.b16 %v4801
    %v5061 = vunpack.c.l.b16 %v4802
    %v5062 = vunpack.c.h.b16 %v4802
    %v5063 = vunpack.c.l.b16 %v4803
    %v5064 = vunpack.c.h.b16 %v4803
    %v5065 = vunpack.c.l.b16 %v4804
    %v5066 = vunpack.c.h.b16 %v4804
    %v5067 = vunpack.c.l.b16 %v4805
    %v5068 = vunpack.c.h.b16 %v4805
    %v5069 = vunpack.c.l.b16 %v4806
    %v5070 = vunpack.c.h.b16 %v4806
    %v5071 = vunpack.c.l.b16 %v4807
    %v5072 = vunpack.c.h.b16 %v4807
    %v5073 = vunpack.c.l.b16 %v4808
    %v5074 = vunpack.c.h.b16 %v4808
    %v5075 = vunpack.c.l.b16 %v4809
    %v5076 = vunpack.c.h.b16 %v4809
    %v5077 = vunpack.c.l.b16 %v4810
    %v5078 = vunpack.c.h.b16 %v4810
    %v5079 = vunpack.c.l.b16 %v4811
    %v5080 = vunpack.c.h.b16 %v4811
    %v5081 = vunpack.c.l.b16 %v4812
    %v5082 = vunpack.c.h.b16 %v4812
    %v5083 = vunpack.c.l.b16 %v4813
    %v5084 = vunpack.c.h.b16 %v4813
    %v5085 = vunpack.c.l.b16 %v4814
    %v5086 = vunpack.c.h.b16 %v4814
    %v5087 = vunpack.c.l.b16 %v4815
    %v5088 = vunpack.c.h.b16 %v4815
    %v5089 = vunpack.c.l.b16 %v4816
    %v5090 = vunpack.c.h.b16 %v4816
    %v5091 = vunpack.c.l.b16 %v4817
    %v5092 = vunpack.c.h.b16 %v4817
    %v5093 = vunpack.c.l.b16 %v4818
    %v5094 = vunpack.c.h.b16 %v4818
    %v5095 = vunpack.c.l.b16 %v4819
    %v5096 = vunpack.c.h.b16 %v4819
    %v5097 = vunpack.c.l.b16 %v4820
    %v5098 = vunpack.c.h.b16 %v4820
    %v5099 = vunpack.c.l.b16 %v4821
    %v5100 = vunpack.c.h.b16 %v4821
    %v5101 = vunpack.c.l.b16 %v4822
    %v5102 = vunpack.c.h.b16 %v4822
    %v5103 = vunpack.c.l.b16 %v4823
    %v5104 = vunpack.c.h.b16 %v4823
    %v5105 = vunpack.c.l.b16 %v4824
    %v5106 = vunpack.c.h.b16 %v4824
    %v5107 = vunpack.c.l.b16 %v4825
    %v5108 = vunpack.c.h.b16 %v4825
    %v5109 = vunpack.c.l.b16 %v4826
    %v5110 = vunpack.c.h.b16 %v4826
    %v5111 = vunpack.c.l.b16 %v4827
    %v5112 = vunpack.c.h.b16 %v4827
    %v5113 = vunpack.c.l.b16 %v4828
    %v5114 = vunpack.c.h.b16 %v4828
    %v5115 = vunpack.c.l.b16 %v4829
    %v5116 = vunpack.c.h.b16 %v4829
    %v5117 = vunpack.c.l.b16 %v4830
    %v5118 = vunpack.c.h.b16 %v4830
    %v5119 = vunpack.c.l.b16 %v4831
    %v5120 = vunpack.c.h.b16 %v4831
    %v5121 = vunpack.c.l.b16 %v4832
    %v5122 = vunpack.c.h.b16 %v4832
    %v5123 = vunpack.c.l.b16 %v4833
    %v5124 = vunpack.c.h.b16 %v4833
    %v5125 = vunpack.c.l.b16 %v4834
    %v5126 = vunpack.c.h.b16 %v4834
    %v5127 = vunpack.c.l.b16 %v4835
    %v5128 = vunpack.c.h.b16 %v4835
    %v5129 = vunpack.c.l.b16 %v4836
    %v5130 = vunpack.c.h.b16 %v4836
    %v5131 = vunpack.c.l.b16 %v4837
    %v5132 = vunpack.c.h.b16 %v4837
    %v5133 = vunpack.c.l.b16 %v4838
    %v5134 = vunpack.c.h.b16 %v4838
    %v5135 = vunpack.c.l.b16 %v4839
    %v5136 = vunpack.c.h.b16 %v4839
    %v5137 = vunpack.c.l.b16 %v4840
    %v5138 = vunpack.c.h.b16 %v4840
    %v5139 = vunpack.c.l.b16 %v4841
    %v5140 = vunpack.c.h.b16 %v4841
    %v5141 = vunpack.c.l.b16 %v4842
    %v5142 = vunpack.c.h.b16 %v4842
    %v5143 = vunpack.c.l.b16 %v4843
    %v5144 = vunpack.c.h.b16 %v4843
    %v5145 = vunpack.c.l.b16 %v4844
    %v5146 = vunpack.c.h.b16 %v4844
    %v5147 = vunpack.c.l.b16 %v4845
    %v5148 = vunpack.c.h.b16 %v4845
    %v5149 = vunpack.c.l.b16 %v4846
    %v5150 = vunpack.c.h.b16 %v4846
    %v5151 = vpack.c.b16 %v4965, %v4959
    %v5152 = vpack.c.b16 %v4966, %v4960
    %v5153 = vpack.c.b16 %v4967, %v4961
    %v5154 = vpack.c.b16 %v4968, %v4962
    %v5155 = vpack.c.b16 %v4969, %v4963
    %v5156 = vpack.c.b16 %v4970, %v4964
    %v5157 = vpack.c.b16 %v4977, %v4971
    %v5158 = vpack.c.b16 %v4978, %v4972
    %v5159 = vpack.c.b16 %v4979, %v4973
    %v5160 = vpack.c.b16 %v4980, %v4974
    %v5161 = vpack.c.b16 %v4981, %v4975
    %v5162 = vpack.c.b16 %v4982, %v4976
    %v5163 = vpack.c.b16 %v4989, %v4983
    %v5164 = vpack.c.b16 %v4990, %v4984
    %v5165 = vpack.c.b16 %v4991, %v4985
    %v5166 = vpack.c.b16 %v4992, %v4986
    %v5167 = vpack.c.b16 %v4993, %v4987
    %v5168 = vpack.c.b16 %v4994, %v4988
    %v5169 = vpack.c.b16 %v5001, %v4995
    %v5170 = vpack.c.b16 %v5002, %v4996
    %v5171 = vpack.c.b16 %v5003, %v4997
    %v5172 = vpack.c.b16 %v5004, %v4998
    %v5173 = vpack.c.b16 %v5005, %v4999
    %v5174 = vpack.c.b16 %v5006, %v5000
    %v5175 = vpack.c.b16 %v5013, %v5007
    %v5176 = vpack.c.b16 %v5014, %v5008
    %v5177 = vpack.c.b16 %v5015, %v5009
    %v5178 = vpack.c.b16 %v5016, %v5010
    %v5179 = vpack.c.b16 %v5017, %v5011
    %v5180 = vpack.c.b16 %v5018, %v5012
    %v5181 = vpack.c.b16 %v5025, %v5019
    %v5182 = vpack.c.b16 %v5026, %v5020
    %v5183 = vpack.c.b16 %v5027, %v5021
    %v5184 = vpack.c.b16 %v5028, %v5022
    %v5185 = vpack.c.b16 %v5029, %v5023
    %v5186 = vpack.c.b16 %v5030, %v5024
    %v5187 = vpack.c.b16 %v5037, %v5031
    %v5188 = vpack.c.b16 %v5038, %v5032
    %v5189 = vpack.c.b16 %v5039, %v5033
    %v5190 = vpack.c.b16 %v5040, %v5034
    %v5191 = vpack.c.b16 %v5041, %v5035
    %v5192 = vpack.c.b16 %v5042, %v5036
    %v5193 = vpack.c.b16 %v5049, %v5043
    %v5194 = vpack.c.b16 %v5050, %v5044
    %v5195 = vpack.c.b16 %v5051, %v5045
    %v5196 = vpack.c.b16 %v5052, %v5046
    %v5197 = vpack.c.b16 %v5053, %v5047
    %v5198 = vpack.c.b16 %v5054, %v5048
    %v5199 = vpack.c.b16 %v5061, %v5055
    %v5200 = vpack.c.b16 %v5062, %v5056
    %v5201 = vpack.c.b16 %v5063, %v5057
    %v5202 = vpack.c.b16 %v5064, %v5058
    %v5203 = vpack.c.b16 %v5065, %v5059
    %v5204 = vpack.c.b16 %v5066, %v5060
    %v5205 = vpack.c.b16 %v5073, %v5067
    %v5206 = vpack.c.b16 %v5074, %v5068
    %v5207 = vpack.c.b16 %v5075, %v5069
    %v5208 = vpack.c.b16 %v5076, %v5070
    %v5209 = vpack.c.b16 %v5077, %v5071
    %v5210 = vpack.c.b16 %v5078, %v5072
    %v5211 = vpack.c.b16 %v5085, %v5079
    %v5212 = vpack.c.b16 %v5086, %v5080
    %v5213 = vpack.c.b16 %v5087, %v5081
    %v5214 = vpack.c.b16 %v5088, %v5082
    %v5215 = vpack.c.b16 %v5089, %v5083
    %v5216 = vpack.c.b16 %v5090, %v5084
    %v5217 = vpack.c.b16 %v5097, %v5091
    %v5218 = vpack.c.b16 %v5098, %v5092
    %v5219 = vpack.c.b16 %v5099, %v5093
    %v5220 = vpack.c.b16 %v5100, %v5094
    %v5221 = vpack.c.b16 %v5101, %v5095
    %v5222 = vpack.c.b16 %v5102, %v5096
    %v5223 = vpack.c.b16 %v5109, %v5103
    %v5224 = vpack.c.b16 %v5110, %v5104
    %v5225 = vpack.c.b16 %v5111, %v5105
    %v5226 = vpack.c.b16 %v5112, %v5106
    %v5227 = vpack.c.b16 %v5113, %v5107
    %v5228 = vpack.c.b16 %v5114, %v5108
    %v5229 = vpack.c.b16 %v5121, %v5115
    %v5230 = vpack.c.b16 %v5122, %v5116
    %v5231 = vpack.c.b16 %v5123, %v5117
    %v5232 = vpack.c.b16 %v5124, %v5118
    %v5233 = vpack.c.b16 %v5125, %v5119
    %v5234 = vpack.c.b16 %v5126, %v5120
    %v5235 = vpack.c.b16 %v5133, %v5127
    %v5236 = vpack.c.b16 %v5134, %v5128
    %v5237 = vpack.c.b16 %v5135, %v5129
    %v5238 = vpack.c.b16 %v5136, %v5130
    %v5239 = vpack.c.b16 %v5137, %v5131
    %v5240 = vpack.c.b16 %v5138, %v5132
    %v5241 = vpack.c.b16 %v5145, %v5139
    %v5242 = vpack.c.b16 %v5146, %v5140
    %v5243 = vpack.c.b16 %v5147, %v5141
    %v5244 = vpack.c.b16 %v5148, %v5142
    %v5245 = vpack.c.b16 %v5149, %v5143
    %v5246 = vpack.c.b16 %v5150, %v5144
    %5343 = vmatpush.bf16.msra.mxu0 %v5193
    %5344 = vmatpush.bf16.msra.mxu0 %v5187
    %5345 = vmatpush.bf16.msra.mxu0 %v5181
    %5346 = vmatpush.bf16.msra.mxu0 %v5175
    %5347 = vmatpush.bf16.msra.mxu0 %v5169
    %5348 = vmatpush.bf16.msra.mxu0 %v5163
    %5349 = vmatpush.bf16.msra.mxu0 %v5157
    %5350 = vmatpush.bf16.msra.mxu0 %v5151
    %5351 = vmatmul.bf16.gmra.mxu0 %v4853
    %v5352 = vpop.f32.mrf.mxu0
    %v5353 = vadd.f32 0.0, %v5352
    %v5354 = vpop.f32.mrf.mxu0
    %v5355 = vadd.f32 0.0, %v5354
    %5356 = vdwg.mxu0
    %5357 = vmatpush.bf16.msra.mxu0 %v5241
    %5358 = vmatpush.bf16.msra.mxu0 %v5235
    %5359 = vmatpush.bf16.msra.mxu0 %v5229
    %5360 = vmatpush.bf16.msra.mxu0 %v5223
    %5361 = vmatpush.bf16.msra.mxu0 %v5217
    %5362 = vmatpush.bf16.msra.mxu0 %v5211
    %5363 = vmatpush.bf16.msra.mxu0 %v5205
    %5364 = vmatpush.bf16.msra.mxu0 %v5199
    %5365 = vmatmul.bf16.gmra.mxu0 %v4860
    %v5366 = vpop.f32.mrf.mxu0
    %v5367 = vadd.f32 %v5353, %v5366
    %v5368 = vpop.f32.mrf.mxu0
    %v5369 = vadd.f32 %v5355, %v5368
    %5370 = vdwg.mxu0
    %5371 = vmatpush.bf16.msra.mxu0 %v5194
    %5372 = vmatpush.bf16.msra.mxu0 %v5188
    %5373 = vmatpush.bf16.msra.mxu0 %v5182
    %5374 = vmatpush.bf16.msra.mxu0 %v5176
    %5375 = vmatpush.bf16.msra.mxu0 %v5170
    %5376 = vmatpush.bf16.msra.mxu0 %v5164
    %5377 = vmatpush.bf16.msra.mxu0 %v5158
    %5378 = vmatpush.bf16.msra.mxu0 %v5152
    %5379 = vmatmul.bf16.gmra.mxu0 %v4853
    %v5380 = vpop.f32.mrf.mxu0
    %v5381 = vadd.f32 0.0, %v5380
    %v5382 = vpop.f32.mrf.mxu0
    %v5383 = vadd.f32 0.0, %v5382
    %5384 = vdwg.mxu0
    %5385 = vmatpush.bf16.msra.mxu0 %v5242
    %5386 = vmatpush.bf16.msra.mxu0 %v5236
    %5387 = vmatpush.bf16.msra.mxu0 %v5230
    %5388 = vmatpush.bf16.msra.mxu0 %v5224
    %5389 = vmatpush.bf16.msra.mxu0 %v5218
    %5390 = vmatpush.bf16.msra.mxu0 %v5212
    %5391 = vmatpush.bf16.msra.mxu0 %v5206
    %5392 = vmatpush.bf16.msra.mxu0 %v5200
    %5393 = vmatmul.bf16.gmra.mxu0 %v4860
    %v5394 = vpop.f32.mrf.mxu0
    %v5395 = vadd.f32 %v5381, %v5394
    %v5396 = vpop.f32.mrf.mxu0
    %v5397 = vadd.f32 %v5383, %v5396
    %5398 = vdwg.mxu0
    %5399 = vmatpush.bf16.msra.mxu0 %v5195
    %5400 = vmatpush.bf16.msra.mxu0 %v5189
    %5401 = vmatpush.bf16.msra.mxu0 %v5183
    %5402 = vmatpush.bf16.msra.mxu0 %v5177
    %5403 = vmatpush.bf16.msra.mxu0 %v5171
    %5404 = vmatpush.bf16.msra.mxu0 %v5165
    %5405 = vmatpush.bf16.msra.mxu0 %v5159
    %5406 = vmatpush.bf16.msra.mxu0 %v5153
    %5407 = vmatmul.bf16.gmra.mxu0 %v4853
    %v5408 = vpop.f32.mrf.mxu0
    %v5409 = vadd.f32 0.0, %v5408
    %v5410 = vpop.f32.mrf.mxu0
    %v5411 = vadd.f32 0.0, %v5410
    %5412 = vdwg.mxu0
    %5413 = vmatpush.bf16.msra.mxu0 %v5243
    %5414 = vmatpush.bf16.msra.mxu0 %v5237
    %5415 = vmatpush.bf16.msra.mxu0 %v5231
    %5416 = vmatpush.bf16.msra.mxu0 %v5225
    %5417 = vmatpush.bf16.msra.mxu0 %v5219
    %5418 = vmatpush.bf16.msra.mxu0 %v5213
    %5419 = vmatpush.bf16.msra.mxu0 %v5207
    %5420 = vmatpush.bf16.msra.mxu0 %v5201
    %5421 = vmatmul.bf16.gmra.mxu0 %v4860
    %v5422 = vpop.f32.mrf.mxu0
    %v5423 = vadd.f32 %v5409, %v5422
    %v5424 = vpop.f32.mrf.mxu0
    %v5425 = vadd.f32 %v5411, %v5424
    %5426 = vdwg.mxu0
    %5427 = vmatpush.bf16.msra.mxu0 %v5196
    %5428 = vmatpush.bf16.msra.mxu0 %v5190
    %5429 = vmatpush.bf16.msra.mxu0 %v5184
    %5430 = vmatpush.bf16.msra.mxu0 %v5178
    %5431 = vmatpush.bf16.msra.mxu0 %v5172
    %5432 = vmatpush.bf16.msra.mxu0 %v5166
    %5433 = vmatpush.bf16.msra.mxu0 %v5160
    %5434 = vmatpush.bf16.msra.mxu0 %v5154
    %5435 = vmatmul.bf16.gmra.mxu0 %v4853
    %v5436 = vpop.f32.mrf.mxu0
    %v5437 = vadd.f32 0.0, %v5436
    %v5438 = vpop.f32.mrf.mxu0
    %v5439 = vadd.f32 0.0, %v5438
    %5440 = vdwg.mxu0
    %5441 = vmatpush.bf16.msra.mxu0 %v5244
    %5442 = vmatpush.bf16.msra.mxu0 %v5238
    %5443 = vmatpush.bf16.msra.mxu0 %v5232
    %5444 = vmatpush.bf16.msra.mxu0 %v5226
    %5445 = vmatpush.bf16.msra.mxu0 %v5220
    %5446 = vmatpush.bf16.msra.mxu0 %v5214
    %5447 = vmatpush.bf16.msra.mxu0 %v5208
    %5448 = vmatpush.bf16.msra.mxu0 %v5202
    %5449 = vmatmul.bf16.gmra.mxu0 %v4860
    %v5450 = vpop.f32.mrf.mxu0
    %v5451 = vadd.f32 %v5437, %v5450
    %v5452 = vpop.f32.mrf.mxu0
    %v5453 = vadd.f32 %v5439, %v5452
    %5454 = vdwg.mxu0
    %5455 = vmatpush.bf16.msra.mxu0 %v5197
    %5456 = vmatpush.bf16.msra.mxu0 %v5191
    %5457 = vmatpush.bf16.msra.mxu0 %v5185
    %5458 = vmatpush.bf16.msra.mxu0 %v5179
    %5459 = vmatpush.bf16.msra.mxu0 %v5173
    %5460 = vmatpush.bf16.msra.mxu0 %v5167
    %5461 = vmatpush.bf16.msra.mxu0 %v5161
    %5462 = vmatpush.bf16.msra.mxu0 %v5155
    %5463 = vmatmul.bf16.gmra.mxu0 %v4853
    %v5464 = vpop.f32.mrf.mxu0
    %v5465 = vadd.f32 0.0, %v5464
    %v5466 = vpop.f32.mrf.mxu0
    %v5467 = vadd.f32 0.0, %v5466
    %5468 = vdwg.mxu0
    %5469 = vmatpush.bf16.msra.mxu0 %v5245
    %5470 = vmatpush.bf16.msra.mxu0 %v5239
    %5471 = vmatpush.bf16.msra.mxu0 %v5233
    %5472 = vmatpush.bf16.msra.mxu0 %v5227
    %5473 = vmatpush.bf16.msra.mxu0 %v5221
    %5474 = vmatpush.bf16.msra.mxu0 %v5215
    %5475 = vmatpush.bf16.msra.mxu0 %v5209
    %5476 = vmatpush.bf16.msra.mxu0 %v5203
    %5477 = vmatmul.bf16.gmra.mxu0 %v4860
    %v5478 = vpop.f32.mrf.mxu0
    %v5479 = vadd.f32 %v5465, %v5478
    %v5480 = vpop.f32.mrf.mxu0
    %v5481 = vadd.f32 %v5467, %v5480
    %5482 = vdwg.mxu0
    %5483 = vmatpush.bf16.msra.mxu0 %v5198
    %5484 = vmatpush.bf16.msra.mxu0 %v5192
    %5485 = vmatpush.bf16.msra.mxu0 %v5186
    %5486 = vmatpush.bf16.msra.mxu0 %v5180
    %5487 = vmatpush.bf16.msra.mxu0 %v5174
    %5488 = vmatpush.bf16.msra.mxu0 %v5168
    %5489 = vmatpush.bf16.msra.mxu0 %v5162
    %5490 = vmatpush.bf16.msra.mxu0 %v5156
    %5491 = vmatmul.bf16.gmra.mxu0 %v4853
    %v5492 = vpop.f32.mrf.mxu0
    %v5493 = vadd.f32 0.0, %v5492
    %v5494 = vpop.f32.mrf.mxu0
    %v5495 = vadd.f32 0.0, %v5494
    %5496 = vdwg.mxu0
    %5497 = vmatpush.bf16.msra.mxu0 %v5246
    %5498 = vmatpush.bf16.msra.mxu0 %v5240
    %5499 = vmatpush.bf16.msra.mxu0 %v5234
    %5500 = vmatpush.bf16.msra.mxu0 %v5228
    %5501 = vmatpush.bf16.msra.mxu0 %v5222
    %5502 = vmatpush.bf16.msra.mxu0 %v5216
    %5503 = vmatpush.bf16.msra.mxu0 %v5210
    %5504 = vmatpush.bf16.msra.mxu0 %v5204
    %5505 = vmatmul.bf16.gmra.mxu0 %v4860
    %v5506 = vpop.f32.mrf.mxu0
    %v5507 = vadd.f32 %v5493, %v5506
    %v5508 = vpop.f32.mrf.mxu0
    %v5509 = vadd.f32 %v5495, %v5508
    %5510 = vdwg.mxu0
    %v5607 = vunpack.c.l.b16 %v4655
    %v5608 = vunpack.c.h.b16 %v4655
    %v5609 = vunpack.c.l.b16 %v4656
    %v5610 = vunpack.c.h.b16 %v4656
    %v5611 = vunpack.c.l.b16 %v4657
    %v5612 = vunpack.c.h.b16 %v4657
    %v5613 = vunpack.c.l.b16 %v4658
    %v5614 = vunpack.c.h.b16 %v4658
    %v5615 = vunpack.c.l.b16 %v4659
    %v5616 = vunpack.c.h.b16 %v4659
    %v5617 = vunpack.c.l.b16 %v4660
    %v5618 = vunpack.c.h.b16 %v4660
    %v5619 = vunpack.c.l.b16 %v4661
    %v5620 = vunpack.c.h.b16 %v4661
    %v5621 = vunpack.c.l.b16 %v4662
    %v5622 = vunpack.c.h.b16 %v4662
    %v5623 = vunpack.c.l.b16 %v4663
    %v5624 = vunpack.c.h.b16 %v4663
    %v5625 = vunpack.c.l.b16 %v4664
    %v5626 = vunpack.c.h.b16 %v4664
    %v5627 = vunpack.c.l.b16 %v4665
    %v5628 = vunpack.c.h.b16 %v4665
    %v5629 = vunpack.c.l.b16 %v4666
    %v5630 = vunpack.c.h.b16 %v4666
    %v5631 = vunpack.c.l.b16 %v4667
    %v5632 = vunpack.c.h.b16 %v4667
    %v5633 = vunpack.c.l.b16 %v4668
    %v5634 = vunpack.c.h.b16 %v4668
    %v5635 = vunpack.c.l.b16 %v4669
    %v5636 = vunpack.c.h.b16 %v4669
    %v5637 = vunpack.c.l.b16 %v4670
    %v5638 = vunpack.c.h.b16 %v4670
    %v5639 = vunpack.c.l.b16 %v4671
    %v5640 = vunpack.c.h.b16 %v4671
    %v5641 = vunpack.c.l.b16 %v4672
    %v5642 = vunpack.c.h.b16 %v4672
    %v5643 = vunpack.c.l.b16 %v4673
    %v5644 = vunpack.c.h.b16 %v4673
    %v5645 = vunpack.c.l.b16 %v4674
    %v5646 = vunpack.c.h.b16 %v4674
    %v5647 = vunpack.c.l.b16 %v4675
    %v5648 = vunpack.c.h.b16 %v4675
    %v5649 = vunpack.c.l.b16 %v4676
    %v5650 = vunpack.c.h.b16 %v4676
    %v5651 = vunpack.c.l.b16 %v4677
    %v5652 = vunpack.c.h.b16 %v4677
    %v5653 = vunpack.c.l.b16 %v4678
    %v5654 = vunpack.c.h.b16 %v4678
    %v5655 = vunpack.c.l.b16 %v4679
    %v5656 = vunpack.c.h.b16 %v4679
    %v5657 = vunpack.c.l.b16 %v4680
    %v5658 = vunpack.c.h.b16 %v4680
    %v5659 = vunpack.c.l.b16 %v4681
    %v5660 = vunpack.c.h.b16 %v4681
    %v5661 = vunpack.c.l.b16 %v4682
    %v5662 = vunpack.c.h.b16 %v4682
    %v5663 = vunpack.c.l.b16 %v4683
    %v5664 = vunpack.c.h.b16 %v4683
    %v5665 = vunpack.c.l.b16 %v4684
    %v5666 = vunpack.c.h.b16 %v4684
    %v5667 = vunpack.c.l.b16 %v4685
    %v5668 = vunpack.c.h.b16 %v4685
    %v5669 = vunpack.c.l.b16 %v4686
    %v5670 = vunpack.c.h.b16 %v4686
    %v5671 = vunpack.c.l.b16 %v4687
    %v5672 = vunpack.c.h.b16 %v4687
    %v5673 = vunpack.c.l.b16 %v4688
    %v5674 = vunpack.c.h.b16 %v4688
    %v5675 = vunpack.c.l.b16 %v4689
    %v5676 = vunpack.c.h.b16 %v4689
    %v5677 = vunpack.c.l.b16 %v4690
    %v5678 = vunpack.c.h.b16 %v4690
    %v5679 = vunpack.c.l.b16 %v4691
    %v5680 = vunpack.c.h.b16 %v4691
    %v5681 = vunpack.c.l.b16 %v4692
    %v5682 = vunpack.c.h.b16 %v4692
    %v5683 = vunpack.c.l.b16 %v4693
    %v5684 = vunpack.c.h.b16 %v4693
    %v5685 = vunpack.c.l.b16 %v4694
    %v5686 = vunpack.c.h.b16 %v4694
    %v5687 = vunpack.c.l.b16 %v4695
    %v5688 = vunpack.c.h.b16 %v4695
    %v5689 = vunpack.c.l.b16 %v4696
    %v5690 = vunpack.c.h.b16 %v4696
    %v5691 = vunpack.c.l.b16 %v4697
    %v5692 = vunpack.c.h.b16 %v4697
    %v5693 = vunpack.c.l.b16 %v4698
    %v5694 = vunpack.c.h.b16 %v4698
    %v5695 = vunpack.c.l.b16 %v4699
    %v5696 = vunpack.c.h.b16 %v4699
    %v5697 = vunpack.c.l.b16 %v4700
    %v5698 = vunpack.c.h.b16 %v4700
    %v5699 = vunpack.c.l.b16 %v4701
    %v5700 = vunpack.c.h.b16 %v4701
    %v5701 = vunpack.c.l.b16 %v4702
    %v5702 = vunpack.c.h.b16 %v4702
    %v5703 = vunpack.c.l.b16 %v4703
    %v5704 = vunpack.c.h.b16 %v4703
    %v5705 = vunpack.c.l.b16 %v4704
    %v5706 = vunpack.c.h.b16 %v4704
    %v5707 = vunpack.c.l.b16 %v4705
    %v5708 = vunpack.c.h.b16 %v4705
    %v5709 = vunpack.c.l.b16 %v4706
    %v5710 = vunpack.c.h.b16 %v4706
    %v5711 = vunpack.c.l.b16 %v4707
    %v5712 = vunpack.c.h.b16 %v4707
    %v5713 = vunpack.c.l.b16 %v4708
    %v5714 = vunpack.c.h.b16 %v4708
    %v5715 = vunpack.c.l.b16 %v4709
    %v5716 = vunpack.c.h.b16 %v4709
    %v5717 = vunpack.c.l.b16 %v4710
    %v5718 = vunpack.c.h.b16 %v4710
    %v5719 = vunpack.c.l.b16 %v4711
    %v5720 = vunpack.c.h.b16 %v4711
    %v5721 = vunpack.c.l.b16 %v4712
    %v5722 = vunpack.c.h.b16 %v4712
    %v5723 = vunpack.c.l.b16 %v4713
    %v5724 = vunpack.c.h.b16 %v4713
    %v5725 = vunpack.c.l.b16 %v4714
    %v5726 = vunpack.c.h.b16 %v4714
    %v5727 = vunpack.c.l.b16 %v4715
    %v5728 = vunpack.c.h.b16 %v4715
    %v5729 = vunpack.c.l.b16 %v4716
    %v5730 = vunpack.c.h.b16 %v4716
    %v5731 = vunpack.c.l.b16 %v4717
    %v5732 = vunpack.c.h.b16 %v4717
    %v5733 = vunpack.c.l.b16 %v4718
    %v5734 = vunpack.c.h.b16 %v4718
    %v5735 = vunpack.c.l.b16 %v4719
    %v5736 = vunpack.c.h.b16 %v4719
    %v5737 = vunpack.c.l.b16 %v4720
    %v5738 = vunpack.c.h.b16 %v4720
    %v5739 = vunpack.c.l.b16 %v4721
    %v5740 = vunpack.c.h.b16 %v4721
    %v5741 = vunpack.c.l.b16 %v4722
    %v5742 = vunpack.c.h.b16 %v4722
    %v5743 = vunpack.c.l.b16 %v4723
    %v5744 = vunpack.c.h.b16 %v4723
    %v5745 = vunpack.c.l.b16 %v4724
    %v5746 = vunpack.c.h.b16 %v4724
    %v5747 = vunpack.c.l.b16 %v4725
    %v5748 = vunpack.c.h.b16 %v4725
    %v5749 = vunpack.c.l.b16 %v4726
    %v5750 = vunpack.c.h.b16 %v4726
    %v5751 = vunpack.c.l.b16 %v4727
    %v5752 = vunpack.c.h.b16 %v4727
    %v5753 = vunpack.c.l.b16 %v4728
    %v5754 = vunpack.c.h.b16 %v4728
    %v5755 = vunpack.c.l.b16 %v4729
    %v5756 = vunpack.c.h.b16 %v4729
    %v5757 = vunpack.c.l.b16 %v4730
    %v5758 = vunpack.c.h.b16 %v4730
    %v5759 = vunpack.c.l.b16 %v4731
    %v5760 = vunpack.c.h.b16 %v4731
    %v5761 = vunpack.c.l.b16 %v4732
    %v5762 = vunpack.c.h.b16 %v4732
    %v5763 = vunpack.c.l.b16 %v4733
    %v5764 = vunpack.c.h.b16 %v4733
    %v5765 = vunpack.c.l.b16 %v4734
    %v5766 = vunpack.c.h.b16 %v4734
    %v5767 = vunpack.c.l.b16 %v4735
    %v5768 = vunpack.c.h.b16 %v4735
    %v5769 = vunpack.c.l.b16 %v4736
    %v5770 = vunpack.c.h.b16 %v4736
    %v5771 = vunpack.c.l.b16 %v4737
    %v5772 = vunpack.c.h.b16 %v4737
    %v5773 = vunpack.c.l.b16 %v4738
    %v5774 = vunpack.c.h.b16 %v4738
    %v5775 = vunpack.c.l.b16 %v4739
    %v5776 = vunpack.c.h.b16 %v4739
    %v5777 = vunpack.c.l.b16 %v4740
    %v5778 = vunpack.c.h.b16 %v4740
    %v5779 = vunpack.c.l.b16 %v4741
    %v5780 = vunpack.c.h.b16 %v4741
    %v5781 = vunpack.c.l.b16 %v4742
    %v5782 = vunpack.c.h.b16 %v4742
    %v5783 = vunpack.c.l.b16 %v4743
    %v5784 = vunpack.c.h.b16 %v4743
    %v5785 = vunpack.c.l.b16 %v4744
    %v5786 = vunpack.c.h.b16 %v4744
    %v5787 = vunpack.c.l.b16 %v4745
    %v5788 = vunpack.c.h.b16 %v4745
    %v5789 = vunpack.c.l.b16 %v4746
    %v5790 = vunpack.c.h.b16 %v4746
    %v5791 = vunpack.c.l.b16 %v4747
    %v5792 = vunpack.c.h.b16 %v4747
    %v5793 = vunpack.c.l.b16 %v4748
    %v5794 = vunpack.c.h.b16 %v4748
    %v5795 = vunpack.c.l.b16 %v4749
    %v5796 = vunpack.c.h.b16 %v4749
    %v5797 = vunpack.c.l.b16 %v4750
    %v5798 = vunpack.c.h.b16 %v4750
    %v5799 = vpack.c.b16 %v5613, %v5607
    %v5800 = vpack.c.b16 %v5614, %v5608
    %v5801 = vpack.c.b16 %v5615, %v5609
    %v5802 = vpack.c.b16 %v5616, %v5610
    %v5803 = vpack.c.b16 %v5617, %v5611
    %v5804 = vpack.c.b16 %v5618, %v5612
    %v5805 = vpack.c.b16 %v5625, %v5619
    %v5806 = vpack.c.b16 %v5626, %v5620
    %v5807 = vpack.c.b16 %v5627, %v5621
    %v5808 = vpack.c.b16 %v5628, %v5622
    %v5809 = vpack.c.b16 %v5629, %v5623
    %v5810 = vpack.c.b16 %v5630, %v5624
    %v5811 = vpack.c.b16 %v5637, %v5631
    %v5812 = vpack.c.b16 %v5638, %v5632
    %v5813 = vpack.c.b16 %v5639, %v5633
    %v5814 = vpack.c.b16 %v5640, %v5634
    %v5815 = vpack.c.b16 %v5641, %v5635
    %v5816 = vpack.c.b16 %v5642, %v5636
    %v5817 = vpack.c.b16 %v5649, %v5643
    %v5818 = vpack.c.b16 %v5650, %v5644
    %v5819 = vpack.c.b16 %v5651, %v5645
    %v5820 = vpack.c.b16 %v5652, %v5646
    %v5821 = vpack.c.b16 %v5653, %v5647
    %v5822 = vpack.c.b16 %v5654, %v5648
    %v5823 = vpack.c.b16 %v5661, %v5655
    %v5824 = vpack.c.b16 %v5662, %v5656
    %v5825 = vpack.c.b16 %v5663, %v5657
    %v5826 = vpack.c.b16 %v5664, %v5658
    %v5827 = vpack.c.b16 %v5665, %v5659
    %v5828 = vpack.c.b16 %v5666, %v5660
    %v5829 = vpack.c.b16 %v5673, %v5667
    %v5830 = vpack.c.b16 %v5674, %v5668
    %v5831 = vpack.c.b16 %v5675, %v5669
    %v5832 = vpack.c.b16 %v5676, %v5670
    %v5833 = vpack.c.b16 %v5677, %v5671
    %v5834 = vpack.c.b16 %v5678, %v5672
    %v5835 = vpack.c.b16 %v5685, %v5679
    %v5836 = vpack.c.b16 %v5686, %v5680
    %v5837 = vpack.c.b16 %v5687, %v5681
    %v5838 = vpack.c.b16 %v5688, %v5682
    %v5839 = vpack.c.b16 %v5689, %v5683
    %v5840 = vpack.c.b16 %v5690, %v5684
    %v5841 = vpack.c.b16 %v5697, %v5691
    %v5842 = vpack.c.b16 %v5698, %v5692
    %v5843 = vpack.c.b16 %v5699, %v5693
    %v5844 = vpack.c.b16 %v5700, %v5694
    %v5845 = vpack.c.b16 %v5701, %v5695
    %v5846 = vpack.c.b16 %v5702, %v5696
    %v5847 = vpack.c.b16 %v5709, %v5703
    %v5848 = vpack.c.b16 %v5710, %v5704
    %v5849 = vpack.c.b16 %v5711, %v5705
    %v5850 = vpack.c.b16 %v5712, %v5706
    %v5851 = vpack.c.b16 %v5713, %v5707
    %v5852 = vpack.c.b16 %v5714, %v5708
    %v5853 = vpack.c.b16 %v5721, %v5715
    %v5854 = vpack.c.b16 %v5722, %v5716
    %v5855 = vpack.c.b16 %v5723, %v5717
    %v5856 = vpack.c.b16 %v5724, %v5718
    %v5857 = vpack.c.b16 %v5725, %v5719
    %v5858 = vpack.c.b16 %v5726, %v5720
    %v5859 = vpack.c.b16 %v5733, %v5727
    %v5860 = vpack.c.b16 %v5734, %v5728
    %v5861 = vpack.c.b16 %v5735, %v5729
    %v5862 = vpack.c.b16 %v5736, %v5730
    %v5863 = vpack.c.b16 %v5737, %v5731
    %v5864 = vpack.c.b16 %v5738, %v5732
    %v5865 = vpack.c.b16 %v5745, %v5739
    %v5866 = vpack.c.b16 %v5746, %v5740
    %v5867 = vpack.c.b16 %v5747, %v5741
    %v5868 = vpack.c.b16 %v5748, %v5742
    %v5869 = vpack.c.b16 %v5749, %v5743
    %v5870 = vpack.c.b16 %v5750, %v5744
    %v5871 = vpack.c.b16 %v5757, %v5751
    %v5872 = vpack.c.b16 %v5758, %v5752
    %v5873 = vpack.c.b16 %v5759, %v5753
    %v5874 = vpack.c.b16 %v5760, %v5754
    %v5875 = vpack.c.b16 %v5761, %v5755
    %v5876 = vpack.c.b16 %v5762, %v5756
    %v5877 = vpack.c.b16 %v5769, %v5763
    %v5878 = vpack.c.b16 %v5770, %v5764
    %v5879 = vpack.c.b16 %v5771, %v5765
    %v5880 = vpack.c.b16 %v5772, %v5766
    %v5881 = vpack.c.b16 %v5773, %v5767
    %v5882 = vpack.c.b16 %v5774, %v5768
    %v5883 = vpack.c.b16 %v5781, %v5775
    %v5884 = vpack.c.b16 %v5782, %v5776
    %v5885 = vpack.c.b16 %v5783, %v5777
    %v5886 = vpack.c.b16 %v5784, %v5778
    %v5887 = vpack.c.b16 %v5785, %v5779
    %v5888 = vpack.c.b16 %v5786, %v5780
    %v5889 = vpack.c.b16 %v5793, %v5787
    %v5890 = vpack.c.b16 %v5794, %v5788
    %v5891 = vpack.c.b16 %v5795, %v5789
    %v5892 = vpack.c.b16 %v5796, %v5790
    %v5893 = vpack.c.b16 %v5797, %v5791
    %v5894 = vpack.c.b16 %v5798, %v5792
    %5991 = vmatpush.bf16.msra.mxu0 %v5841
    %5992 = vmatpush.bf16.msra.mxu0 %v5835
    %5993 = vmatpush.bf16.msra.mxu0 %v5829
    %5994 = vmatpush.bf16.msra.mxu0 %v5823
    %5995 = vmatpush.bf16.msra.mxu0 %v5817
    %5996 = vmatpush.bf16.msra.mxu0 %v5811
    %5997 = vmatpush.bf16.msra.mxu0 %v5805
    %5998 = vmatpush.bf16.msra.mxu0 %v5799
    %5999 = vmatmul.bf16.gmra.mxu0 %v4653
    %v6000 = vpop.f32.mrf.mxu0
    %v6001 = vadd.f32 %v5367, %v6000
    %v6002 = vpop.f32.mrf.mxu0
    %v6003 = vadd.f32 %v5369, %v6002
    %6004 = vdwg.mxu0
    %6005 = vmatpush.bf16.msra.mxu0 %v5889
    %6006 = vmatpush.bf16.msra.mxu0 %v5883
    %6007 = vmatpush.bf16.msra.mxu0 %v5877
    %6008 = vmatpush.bf16.msra.mxu0 %v5871
    %6009 = vmatpush.bf16.msra.mxu0 %v5865
    %6010 = vmatpush.bf16.msra.mxu0 %v5859
    %6011 = vmatpush.bf16.msra.mxu0 %v5853
    %6012 = vmatpush.bf16.msra.mxu0 %v5847
    %6013 = vmatmul.bf16.gmra.mxu0 %v4654
    %v6014 = vpop.f32.mrf.mxu0
    %v6015 = vadd.f32 %v6001, %v6014
    %v6016 = vpop.f32.mrf.mxu0
    %v6017 = vadd.f32 %v6003, %v6016
    %6018 = vdwg.mxu0
    %6019 = vmatpush.bf16.msra.mxu0 %v5842
    %6020 = vmatpush.bf16.msra.mxu0 %v5836
    %6021 = vmatpush.bf16.msra.mxu0 %v5830
    %6022 = vmatpush.bf16.msra.mxu0 %v5824
    %6023 = vmatpush.bf16.msra.mxu0 %v5818
    %6024 = vmatpush.bf16.msra.mxu0 %v5812
    %6025 = vmatpush.bf16.msra.mxu0 %v5806
    %6026 = vmatpush.bf16.msra.mxu0 %v5800
    %6027 = vmatmul.bf16.gmra.mxu0 %v4653
    %v6028 = vpop.f32.mrf.mxu0
    %v6029 = vadd.f32 %v5395, %v6028
    %v6030 = vpop.f32.mrf.mxu0
    %v6031 = vadd.f32 %v5397, %v6030
    %6032 = vdwg.mxu0
    %6033 = vmatpush.bf16.msra.mxu0 %v5890
    %6034 = vmatpush.bf16.msra.mxu0 %v5884
    %6035 = vmatpush.bf16.msra.mxu0 %v5878
    %6036 = vmatpush.bf16.msra.mxu0 %v5872
    %6037 = vmatpush.bf16.msra.mxu0 %v5866
    %6038 = vmatpush.bf16.msra.mxu0 %v5860
    %6039 = vmatpush.bf16.msra.mxu0 %v5854
    %6040 = vmatpush.bf16.msra.mxu0 %v5848
    %6041 = vmatmul.bf16.gmra.mxu0 %v4654
    %v6042 = vpop.f32.mrf.mxu0
    %v6043 = vadd.f32 %v6029, %v6042
    %v6044 = vpop.f32.mrf.mxu0
    %v6045 = vadd.f32 %v6031, %v6044
    %6046 = vdwg.mxu0
    %6047 = vmatpush.bf16.msra.mxu0 %v5843
    %6048 = vmatpush.bf16.msra.mxu0 %v5837
    %6049 = vmatpush.bf16.msra.mxu0 %v5831
    %6050 = vmatpush.bf16.msra.mxu0 %v5825
    %6051 = vmatpush.bf16.msra.mxu0 %v5819
    %6052 = vmatpush.bf16.msra.mxu0 %v5813
    %6053 = vmatpush.bf16.msra.mxu0 %v5807
    %6054 = vmatpush.bf16.msra.mxu0 %v5801
    %6055 = vmatmul.bf16.gmra.mxu0 %v4653
    %v6056 = vpop.f32.mrf.mxu0
    %v6057 = vadd.f32 %v5423, %v6056
    %v6058 = vpop.f32.mrf.mxu0
    %v6059 = vadd.f32 %v5425, %v6058
    %6060 = vdwg.mxu0
    %6061 = vmatpush.bf16.msra.mxu0 %v5891
    %6062 = vmatpush.bf16.msra.mxu0 %v5885
    %6063 = vmatpush.bf16.msra.mxu0 %v5879
    %6064 = vmatpush.bf16.msra.mxu0 %v5873
    %6065 = vmatpush.bf16.msra.mxu0 %v5867
    %6066 = vmatpush.bf16.msra.mxu0 %v5861
    %6067 = vmatpush.bf16.msra.mxu0 %v5855
    %6068 = vmatpush.bf16.msra.mxu0 %v5849
    %6069 = vmatmul.bf16.gmra.mxu0 %v4654
    %v6070 = vpop.f32.mrf.mxu0
    %v6071 = vadd.f32 %v6057, %v6070
    %v6072 = vpop.f32.mrf.mxu0
    %v6073 = vadd.f32 %v6059, %v6072
    %6074 = vdwg.mxu0
    %6075 = vmatpush.bf16.msra.mxu0 %v5844
    %6076 = vmatpush.bf16.msra.mxu0 %v5838
    %6077 = vmatpush.bf16.msra.mxu0 %v5832
    %6078 = vmatpush.bf16.msra.mxu0 %v5826
    %6079 = vmatpush.bf16.msra.mxu0 %v5820
    %6080 = vmatpush.bf16.msra.mxu0 %v5814
    %6081 = vmatpush.bf16.msra.mxu0 %v5808
    %6082 = vmatpush.bf16.msra.mxu0 %v5802
    %6083 = vmatmul.bf16.gmra.mxu0 %v4653
    %v6084 = vpop.f32.mrf.mxu0
    %v6085 = vadd.f32 %v5451, %v6084
    %v6086 = vpop.f32.mrf.mxu0
    %v6087 = vadd.f32 %v5453, %v6086
    %6088 = vdwg.mxu0
    %6089 = vmatpush.bf16.msra.mxu0 %v5892
    %6090 = vmatpush.bf16.msra.mxu0 %v5886
    %6091 = vmatpush.bf16.msra.mxu0 %v5880
    %6092 = vmatpush.bf16.msra.mxu0 %v5874
    %6093 = vmatpush.bf16.msra.mxu0 %v5868
    %6094 = vmatpush.bf16.msra.mxu0 %v5862
    %6095 = vmatpush.bf16.msra.mxu0 %v5856
    %6096 = vmatpush.bf16.msra.mxu0 %v5850
    %6097 = vmatmul.bf16.gmra.mxu0 %v4654
    %v6098 = vpop.f32.mrf.mxu0
    %v6099 = vadd.f32 %v6085, %v6098
    %v6100 = vpop.f32.mrf.mxu0
    %v6101 = vadd.f32 %v6087, %v6100
    %6102 = vdwg.mxu0
    %6103 = vmatpush.bf16.msra.mxu0 %v5845
    %6104 = vmatpush.bf16.msra.mxu0 %v5839
    %6105 = vmatpush.bf16.msra.mxu0 %v5833
    %6106 = vmatpush.bf16.msra.mxu0 %v5827
    %6107 = vmatpush.bf16.msra.mxu0 %v5821
    %6108 = vmatpush.bf16.msra.mxu0 %v5815
    %6109 = vmatpush.bf16.msra.mxu0 %v5809
    %6110 = vmatpush.bf16.msra.mxu0 %v5803
    %6111 = vmatmul.bf16.gmra.mxu0 %v4653
    %v6112 = vpop.f32.mrf.mxu0
    %v6113 = vadd.f32 %v5479, %v6112
    %v6114 = vpop.f32.mrf.mxu0
    %v6115 = vadd.f32 %v5481, %v6114
    %6116 = vdwg.mxu0
    %6117 = vmatpush.bf16.msra.mxu0 %v5893
    %6118 = vmatpush.bf16.msra.mxu0 %v5887
    %6119 = vmatpush.bf16.msra.mxu0 %v5881
    %6120 = vmatpush.bf16.msra.mxu0 %v5875
    %6121 = vmatpush.bf16.msra.mxu0 %v5869
    %6122 = vmatpush.bf16.msra.mxu0 %v5863
    %6123 = vmatpush.bf16.msra.mxu0 %v5857
    %6124 = vmatpush.bf16.msra.mxu0 %v5851
    %6125 = vmatmul.bf16.gmra.mxu0 %v4654
    %v6126 = vpop.f32.mrf.mxu0
    %v6127 = vadd.f32 %v6113, %v6126
    %v6128 = vpop.f32.mrf.mxu0
    %v6129 = vadd.f32 %v6115, %v6128
    %6130 = vdwg.mxu0
    %6131 = vmatpush.bf16.msra.mxu0 %v5846
    %6132 = vmatpush.bf16.msra.mxu0 %v5840
    %6133 = vmatpush.bf16.msra.mxu0 %v5834
    %6134 = vmatpush.bf16.msra.mxu0 %v5828
    %6135 = vmatpush.bf16.msra.mxu0 %v5822
    %6136 = vmatpush.bf16.msra.mxu0 %v5816
    %6137 = vmatpush.bf16.msra.mxu0 %v5810
    %6138 = vmatpush.bf16.msra.mxu0 %v5804
    %6139 = vmatmul.bf16.gmra.mxu0 %v4653
    %v6140 = vpop.f32.mrf.mxu0
    %v6141 = vadd.f32 %v5507, %v6140
    %v6142 = vpop.f32.mrf.mxu0
    %v6143 = vadd.f32 %v5509, %v6142
    %6144 = vdwg.mxu0
    %6145 = vmatpush.bf16.msra.mxu0 %v5894
    %6146 = vmatpush.bf16.msra.mxu0 %v5888
    %6147 = vmatpush.bf16.msra.mxu0 %v5882
    %6148 = vmatpush.bf16.msra.mxu0 %v5876
    %6149 = vmatpush.bf16.msra.mxu0 %v5870
    %6150 = vmatpush.bf16.msra.mxu0 %v5864
    %6151 = vmatpush.bf16.msra.mxu0 %v5858
    %6152 = vmatpush.bf16.msra.mxu0 %v5852
    %6153 = vmatmul.bf16.gmra.mxu0 %v4654
    %v6154 = vpop.f32.mrf.mxu0
    %v6155 = vadd.f32 %v6141, %v6154
    %v6156 = vpop.f32.mrf.mxu0
    %v6157 = vadd.f32 %v6143, %v6156
    %6158 = vdwg.mxu0
    %v6159 = vld [vmem:[%s3614] sm:$0xff]
    %v6160 = vld [vmem:[%s3614 + $0x8] sm:$0xff]
    %v6161 = vld [vmem:[%s3614 + $0x10] sm:$0xff]
    %v6162 = vld [vmem:[%s3614 + $0x18] sm:$0xff]
    %v6163 = vld [vmem:[%s3614 + $0x20] sm:$0xff]
    %v6164 = vld [vmem:[%s3614 + $0x28] sm:$0xff]
    %v6165 = vld [vmem:[%s3614 + $0x30] sm:$0xff]
    %v6166 = vld [vmem:[%s3614 + $0x38] sm:$0xff]
    %v6167 = vld [vmem:[%s3614 + $0x40] sm:$0xff]
    %v6168 = vld [vmem:[%s3614 + $0x48] sm:$0xff]
    %v6169 = vld [vmem:[%s3614 + $0x50] sm:$0xff]
    %v6170 = vld [vmem:[%s3614 + $0x58] sm:$0xff]
    %v6171 = vld [vmem:[%s3614 + $0x60] sm:$0xff]
    %v6172 = vld [vmem:[%s3614 + $0x68] sm:$0xff]
    %v6173 = vld [vmem:[%s3614 + $0x70] sm:$0xff]
    %v6174 = vld [vmem:[%s3614 + $0x78] sm:$0xff]
    %v6175 = vld [vmem:[%s3614 + $0x80] sm:$0xff]
    %v6176 = vld [vmem:[%s3614 + $0x88] sm:$0xff]
    %v6177 = vld [vmem:[%s3614 + $0x90] sm:$0xff]
    %v6178 = vld [vmem:[%s3614 + $0x98] sm:$0xff]
    %v6179 = vld [vmem:[%s3614 + $0xa0] sm:$0xff]
    %v6180 = vld [vmem:[%s3614 + $0xa8] sm:$0xff]
    %v6181 = vld [vmem:[%s3614 + $0xb0] sm:$0xff]
    %v6182 = vld [vmem:[%s3614 + $0xb8] sm:$0xff]
    %v6183 = vld [vmem:[%s3614 + $0xc0] sm:$0xff]
    %v6184 = vld [vmem:[%s3614 + $0xc8] sm:$0xff]
    %v6185 = vld [vmem:[%s3614 + $0xd0] sm:$0xff]
    %v6186 = vld [vmem:[%s3614 + $0xd8] sm:$0xff]
    %v6187 = vld [vmem:[%s3614 + $0xe0] sm:$0xff]
    %v6188 = vld [vmem:[%s3614 + $0xe8] sm:$0xff]
    %v6189 = vld [vmem:[%s3614 + $0xf0] sm:$0xff]
    %v6190 = vld [vmem:[%s3614 + $0xf8] sm:$0xff]
    %v6191 = vld [vmem:[%s3614 + $0x100] sm:$0xff]
    %v6192 = vld [vmem:[%s3614 + $0x108] sm:$0xff]
    %v6193 = vld [vmem:[%s3614 + $0x110] sm:$0xff]
    %v6194 = vld [vmem:[%s3614 + $0x118] sm:$0xff]
    %v6195 = vld [vmem:[%s3614 + $0x120] sm:$0xff]
    %v6196 = vld [vmem:[%s3614 + $0x128] sm:$0xff]
    %v6197 = vld [vmem:[%s3614 + $0x130] sm:$0xff]
    %v6198 = vld [vmem:[%s3614 + $0x138] sm:$0xff]
    %v6199 = vld [vmem:[%s3614 + $0x140] sm:$0xff]
    %v6200 = vld [vmem:[%s3614 + $0x148] sm:$0xff]
    %v6201 = vld [vmem:[%s3614 + $0x150] sm:$0xff]
    %v6202 = vld [vmem:[%s3614 + $0x158] sm:$0xff]
    %v6203 = vld [vmem:[%s3614 + $0x160] sm:$0xff]
    %v6204 = vld [vmem:[%s3614 + $0x168] sm:$0xff]
    %v6205 = vld [vmem:[%s3614 + $0x170] sm:$0xff]
    %v6206 = vld [vmem:[%s3614 + $0x178] sm:$0xff]
    %v6207 = vld [vmem:[%s3614 + $0x180] sm:$0xff]
    %v6208 = vld [vmem:[%s3614 + $0x188] sm:$0xff]
    %v6209 = vld [vmem:[%s3614 + $0x190] sm:$0xff]
    %v6210 = vld [vmem:[%s3614 + $0x198] sm:$0xff]
    %v6211 = vld [vmem:[%s3614 + $0x1a0] sm:$0xff]
    %v6212 = vld [vmem:[%s3614 + $0x1a8] sm:$0xff]
    %v6213 = vld [vmem:[%s3614 + $0x1b0] sm:$0xff]
    %v6214 = vld [vmem:[%s3614 + $0x1b8] sm:$0xff]
    %v6215 = vld [vmem:[%s3614 + $0x1c0] sm:$0xff]
    %v6216 = vld [vmem:[%s3614 + $0x1c8] sm:$0xff]
    %v6217 = vld [vmem:[%s3614 + $0x1d0] sm:$0xff]
    %v6218 = vld [vmem:[%s3614 + $0x1d8] sm:$0xff]
    %v6219 = vld [vmem:[%s3614 + $0x1e0] sm:$0xff]
    %v6220 = vld [vmem:[%s3614 + $0x1e8] sm:$0xff]
    %v6221 = vld [vmem:[%s3614 + $0x1f0] sm:$0xff]
    %v6222 = vld [vmem:[%s3614 + $0x1f8] sm:$0xff]
    %v6223 = vld [vmem:[%s3614 + $0x200] sm:$0xff]
    %v6224 = vld [vmem:[%s3614 + $0x208] sm:$0xff]
    %v6225 = vld [vmem:[%s3614 + $0x210] sm:$0xff]
    %v6226 = vld [vmem:[%s3614 + $0x218] sm:$0xff]
    %v6227 = vld [vmem:[%s3614 + $0x220] sm:$0xff]
    %v6228 = vld [vmem:[%s3614 + $0x228] sm:$0xff]
    %v6229 = vld [vmem:[%s3614 + $0x230] sm:$0xff]
    %v6230 = vld [vmem:[%s3614 + $0x238] sm:$0xff]
    %v6231 = vld [vmem:[%s3614 + $0x240] sm:$0xff]
    %v6232 = vld [vmem:[%s3614 + $0x248] sm:$0xff]
    %v6233 = vld [vmem:[%s3614 + $0x250] sm:$0xff]
    %v6234 = vld [vmem:[%s3614 + $0x258] sm:$0xff]
    %v6235 = vld [vmem:[%s3614 + $0x260] sm:$0xff]
    %v6236 = vld [vmem:[%s3614 + $0x268] sm:$0xff]
    %v6237 = vld [vmem:[%s3614 + $0x270] sm:$0xff]
    %v6238 = vld [vmem:[%s3614 + $0x278] sm:$0xff]
    %v6239 = vld [vmem:[%s3614 + $0x280] sm:$0xff]
    %v6240 = vld [vmem:[%s3614 + $0x288] sm:$0xff]
    %v6241 = vld [vmem:[%s3614 + $0x290] sm:$0xff]
    %v6242 = vld [vmem:[%s3614 + $0x298] sm:$0xff]
    %v6243 = vld [vmem:[%s3614 + $0x2a0] sm:$0xff]
    %v6244 = vld [vmem:[%s3614 + $0x2a8] sm:$0xff]
    %v6245 = vld [vmem:[%s3614 + $0x2b0] sm:$0xff]
    %v6246 = vld [vmem:[%s3614 + $0x2b8] sm:$0xff]
    %v6247 = vld [vmem:[%s3614 + $0x2c0] sm:$0xff]
    %v6248 = vld [vmem:[%s3614 + $0x2c8] sm:$0xff]
    %v6249 = vld [vmem:[%s3614 + $0x2d0] sm:$0xff]
    %v6250 = vld [vmem:[%s3614 + $0x2d8] sm:$0xff]
    %v6251 = vld [vmem:[%s3614 + $0x2e0] sm:$0xff]
    %v6252 = vld [vmem:[%s3614 + $0x2e8] sm:$0xff]
    %v6253 = vld [vmem:[%s3614 + $0x2f0] sm:$0xff]
    %v6254 = vld [vmem:[%s3614 + $0x2f8] sm:$0xff]
    %v6257 = vrot.slane %v4653, 1
    %v6258 = vrot.slane %v4654, 1
    %v6357 = vunpack.c.l.b16 %v6159
    %v6358 = vunpack.c.h.b16 %v6159
    %v6359 = vunpack.c.l.b16 %v6160
    %v6360 = vunpack.c.h.b16 %v6160
    %v6361 = vunpack.c.l.b16 %v6161
    %v6362 = vunpack.c.h.b16 %v6161
    %v6363 = vunpack.c.l.b16 %v6162
    %v6364 = vunpack.c.h.b16 %v6162
    %v6365 = vunpack.c.l.b16 %v6163
    %v6366 = vunpack.c.h.b16 %v6163
    %v6367 = vunpack.c.l.b16 %v6164
    %v6368 = vunpack.c.h.b16 %v6164
    %v6369 = vunpack.c.l.b16 %v6165
    %v6370 = vunpack.c.h.b16 %v6165
    %v6371 = vunpack.c.l.b16 %v6166
    %v6372 = vunpack.c.h.b16 %v6166
    %v6373 = vunpack.c.l.b16 %v6167
    %v6374 = vunpack.c.h.b16 %v6167
    %v6375 = vunpack.c.l.b16 %v6168
    %v6376 = vunpack.c.h.b16 %v6168
    %v6377 = vunpack.c.l.b16 %v6169
    %v6378 = vunpack.c.h.b16 %v6169
    %v6379 = vunpack.c.l.b16 %v6170
    %v6380 = vunpack.c.h.b16 %v6170
    %v6381 = vunpack.c.l.b16 %v6171
    %v6382 = vunpack.c.h.b16 %v6171
    %v6383 = vunpack.c.l.b16 %v6172
    %v6384 = vunpack.c.h.b16 %v6172
    %v6385 = vunpack.c.l.b16 %v6173
    %v6386 = vunpack.c.h.b16 %v6173
    %v6387 = vunpack.c.l.b16 %v6174
    %v6388 = vunpack.c.h.b16 %v6174
    %v6389 = vunpack.c.l.b16 %v6175
    %v6390 = vunpack.c.h.b16 %v6175
    %v6391 = vunpack.c.l.b16 %v6176
    %v6392 = vunpack.c.h.b16 %v6176
    %v6393 = vunpack.c.l.b16 %v6177
    %v6394 = vunpack.c.h.b16 %v6177
    %v6395 = vunpack.c.l.b16 %v6178
    %v6396 = vunpack.c.h.b16 %v6178
    %v6397 = vunpack.c.l.b16 %v6179
    %v6398 = vunpack.c.h.b16 %v6179
    %v6399 = vunpack.c.l.b16 %v6180
    %v6400 = vunpack.c.h.b16 %v6180
    %v6401 = vunpack.c.l.b16 %v6181
    %v6402 = vunpack.c.h.b16 %v6181
    %v6403 = vunpack.c.l.b16 %v6182
    %v6404 = vunpack.c.h.b16 %v6182
    %v6405 = vunpack.c.l.b16 %v6183
    %v6406 = vunpack.c.h.b16 %v6183
    %v6407 = vunpack.c.l.b16 %v6184
    %v6408 = vunpack.c.h.b16 %v6184
    %v6409 = vunpack.c.l.b16 %v6185
    %v6410 = vunpack.c.h.b16 %v6185
    %v6411 = vunpack.c.l.b16 %v6186
    %v6412 = vunpack.c.h.b16 %v6186
    %v6413 = vunpack.c.l.b16 %v6187
    %v6414 = vunpack.c.h.b16 %v6187
    %v6415 = vunpack.c.l.b16 %v6188
    %v6416 = vunpack.c.h.b16 %v6188
    %v6417 = vunpack.c.l.b16 %v6189
    %v6418 = vunpack.c.h.b16 %v6189
    %v6419 = vunpack.c.l.b16 %v6190
    %v6420 = vunpack.c.h.b16 %v6190
    %v6421 = vunpack.c.l.b16 %v6191
    %v6422 = vunpack.c.h.b16 %v6191
    %v6423 = vunpack.c.l.b16 %v6192
    %v6424 = vunpack.c.h.b16 %v6192
    %v6425 = vunpack.c.l.b16 %v6193
    %v6426 = vunpack.c.h.b16 %v6193
    %v6427 = vunpack.c.l.b16 %v6194
    %v6428 = vunpack.c.h.b16 %v6194
    %v6429 = vunpack.c.l.b16 %v6195
    %v6430 = vunpack.c.h.b16 %v6195
    %v6431 = vunpack.c.l.b16 %v6196
    %v6432 = vunpack.c.h.b16 %v6196
    %v6433 = vunpack.c.l.b16 %v6197
    %v6434 = vunpack.c.h.b16 %v6197
    %v6435 = vunpack.c.l.b16 %v6198
    %v6436 = vunpack.c.h.b16 %v6198
    %v6437 = vunpack.c.l.b16 %v6199
    %v6438 = vunpack.c.h.b16 %v6199
    %v6439 = vunpack.c.l.b16 %v6200
    %v6440 = vunpack.c.h.b16 %v6200
    %v6441 = vunpack.c.l.b16 %v6201
    %v6442 = vunpack.c.h.b16 %v6201
    %v6443 = vunpack.c.l.b16 %v6202
    %v6444 = vunpack.c.h.b16 %v6202
    %v6445 = vunpack.c.l.b16 %v6203
    %v6446 = vunpack.c.h.b16 %v6203
    %v6447 = vunpack.c.l.b16 %v6204
    %v6448 = vunpack.c.h.b16 %v6204
    %v6449 = vunpack.c.l.b16 %v6205
    %v6450 = vunpack.c.h.b16 %v6205
    %v6451 = vunpack.c.l.b16 %v6206
    %v6452 = vunpack.c.h.b16 %v6206
    %v6453 = vunpack.c.l.b16 %v6207
    %v6454 = vunpack.c.h.b16 %v6207
    %v6455 = vunpack.c.l.b16 %v6208
    %v6456 = vunpack.c.h.b16 %v6208
    %v6457 = vunpack.c.l.b16 %v6209
    %v6458 = vunpack.c.h.b16 %v6209
    %v6459 = vunpack.c.l.b16 %v6210
    %v6460 = vunpack.c.h.b16 %v6210
    %v6461 = vunpack.c.l.b16 %v6211
    %v6462 = vunpack.c.h.b16 %v6211
    %v6463 = vunpack.c.l.b16 %v6212
    %v6464 = vunpack.c.h.b16 %v6212
    %v6465 = vunpack.c.l.b16 %v6213
    %v6466 = vunpack.c.h.b16 %v6213
    %v6467 = vunpack.c.l.b16 %v6214
    %v6468 = vunpack.c.h.b16 %v6214
    %v6469 = vunpack.c.l.b16 %v6215
    %v6470 = vunpack.c.h.b16 %v6215
    %v6471 = vunpack.c.l.b16 %v6216
    %v6472 = vunpack.c.h.b16 %v6216
    %v6473 = vunpack.c.l.b16 %v6217
    %v6474 = vunpack.c.h.b16 %v6217
    %v6475 = vunpack.c.l.b16 %v6218
    %v6476 = vunpack.c.h.b16 %v6218
    %v6477 = vunpack.c.l.b16 %v6219
    %v6478 = vunpack.c.h.b16 %v6219
    %v6479 = vunpack.c.l.b16 %v6220
    %v6480 = vunpack.c.h.b16 %v6220
    %v6481 = vunpack.c.l.b16 %v6221
    %v6482 = vunpack.c.h.b16 %v6221
    %v6483 = vunpack.c.l.b16 %v6222
    %v6484 = vunpack.c.h.b16 %v6222
    %v6485 = vunpack.c.l.b16 %v6223
    %v6486 = vunpack.c.h.b16 %v6223
    %v6487 = vunpack.c.l.b16 %v6224
    %v6488 = vunpack.c.h.b16 %v6224
    %v6489 = vunpack.c.l.b16 %v6225
    %v6490 = vunpack.c.h.b16 %v6225
    %v6491 = vunpack.c.l.b16 %v6226
    %v6492 = vunpack.c.h.b16 %v6226
    %v6493 = vunpack.c.l.b16 %v6227
    %v6494 = vunpack.c.h.b16 %v6227
    %v6495 = vunpack.c.l.b16 %v6228
    %v6496 = vunpack.c.h.b16 %v6228
    %v6497 = vunpack.c.l.b16 %v6229
    %v6498 = vunpack.c.h.b16 %v6229
    %v6499 = vunpack.c.l.b16 %v6230
    %v6500 = vunpack.c.h.b16 %v6230
    %v6501 = vunpack.c.l.b16 %v6231
    %v6502 = vunpack.c.h.b16 %v6231
    %v6503 = vunpack.c.l.b16 %v6232
    %v6504 = vunpack.c.h.b16 %v6232
    %v6505 = vunpack.c.l.b16 %v6233
    %v6506 = vunpack.c.h.b16 %v6233
    %v6507 = vunpack.c.l.b16 %v6234
    %v6508 = vunpack.c.h.b16 %v6234
    %v6509 = vunpack.c.l.b16 %v6235
    %v6510 = vunpack.c.h.b16 %v6235
    %v6511 = vunpack.c.l.b16 %v6236
    %v6512 = vunpack.c.h.b16 %v6236
    %v6513 = vunpack.c.l.b16 %v6237
    %v6514 = vunpack.c.h.b16 %v6237
    %v6515 = vunpack.c.l.b16 %v6238
    %v6516 = vunpack.c.h.b16 %v6238
    %v6517 = vunpack.c.l.b16 %v6239
    %v6518 = vunpack.c.h.b16 %v6239
    %v6519 = vunpack.c.l.b16 %v6240
    %v6520 = vunpack.c.h.b16 %v6240
    %v6521 = vunpack.c.l.b16 %v6241
    %v6522 = vunpack.c.h.b16 %v6241
    %v6523 = vunpack.c.l.b16 %v6242
    %v6524 = vunpack.c.h.b16 %v6242
    %v6525 = vunpack.c.l.b16 %v6243
    %v6526 = vunpack.c.h.b16 %v6243
    %v6527 = vunpack.c.l.b16 %v6244
    %v6528 = vunpack.c.h.b16 %v6244
    %v6529 = vunpack.c.l.b16 %v6245
    %v6530 = vunpack.c.h.b16 %v6245
    %v6531 = vunpack.c.l.b16 %v6246
    %v6532 = vunpack.c.h.b16 %v6246
    %v6533 = vunpack.c.l.b16 %v6247
    %v6534 = vunpack.c.h.b16 %v6247
    %v6535 = vunpack.c.l.b16 %v6248
    %v6536 = vunpack.c.h.b16 %v6248
    %v6537 = vunpack.c.l.b16 %v6249
    %v6538 = vunpack.c.h.b16 %v6249
    %v6539 = vunpack.c.l.b16 %v6250
    %v6540 = vunpack.c.h.b16 %v6250
    %v6541 = vunpack.c.l.b16 %v6251
    %v6542 = vunpack.c.h.b16 %v6251
    %v6543 = vunpack.c.l.b16 %v6252
    %v6544 = vunpack.c.h.b16 %v6252
    %v6545 = vunpack.c.l.b16 %v6253
    %v6546 = vunpack.c.h.b16 %v6253
    %v6547 = vunpack.c.l.b16 %v6254
    %v6548 = vunpack.c.h.b16 %v6254
    %v6549 = vpack.c.b16 %v6363, %v6357
    %v6550 = vpack.c.b16 %v6364, %v6358
    %v6551 = vpack.c.b16 %v6365, %v6359
    %v6552 = vpack.c.b16 %v6366, %v6360
    %v6553 = vpack.c.b16 %v6367, %v6361
    %v6554 = vpack.c.b16 %v6368, %v6362
    %v6555 = vpack.c.b16 %v6375, %v6369
    %v6556 = vpack.c.b16 %v6376, %v6370
    %v6557 = vpack.c.b16 %v6377, %v6371
    %v6558 = vpack.c.b16 %v6378, %v6372
    %v6559 = vpack.c.b16 %v6379, %v6373
    %v6560 = vpack.c.b16 %v6380, %v6374
    %v6561 = vpack.c.b16 %v6387, %v6381
    %v6562 = vpack.c.b16 %v6388, %v6382
    %v6563 = vpack.c.b16 %v6389, %v6383
    %v6564 = vpack.c.b16 %v6390, %v6384
    %v6565 = vpack.c.b16 %v6391, %v6385
    %v6566 = vpack.c.b16 %v6392, %v6386
    %v6567 = vpack.c.b16 %v6399, %v6393
    %v6568 = vpack.c.b16 %v6400, %v6394
    %v6569 = vpack.c.b16 %v6401, %v6395
    %v6570 = vpack.c.b16 %v6402, %v6396
    %v6571 = vpack.c.b16 %v6403, %v6397
    %v6572 = vpack.c.b16 %v6404, %v6398
    %v6573 = vpack.c.b16 %v6411, %v6405
    %v6574 = vpack.c.b16 %v6412, %v6406
    %v6575 = vpack.c.b16 %v6413, %v6407
    %v6576 = vpack.c.b16 %v6414, %v6408
    %v6577 = vpack.c.b16 %v6415, %v6409
    %v6578 = vpack.c.b16 %v6416, %v6410
    %v6579 = vpack.c.b16 %v6423, %v6417
    %v6580 = vpack.c.b16 %v6424, %v6418
    %v6581 = vpack.c.b16 %v6425, %v6419
    %v6582 = vpack.c.b16 %v6426, %v6420
    %v6583 = vpack.c.b16 %v6427, %v6421
    %v6584 = vpack.c.b16 %v6428, %v6422
    %v6585 = vpack.c.b16 %v6435, %v6429
    %v6586 = vpack.c.b16 %v6436, %v6430
    %v6587 = vpack.c.b16 %v6437, %v6431
    %v6588 = vpack.c.b16 %v6438, %v6432
    %v6589 = vpack.c.b16 %v6439, %v6433
    %v6590 = vpack.c.b16 %v6440, %v6434
    %v6591 = vpack.c.b16 %v6447, %v6441
    %v6592 = vpack.c.b16 %v6448, %v6442
    %v6593 = vpack.c.b16 %v6449, %v6443
    %v6594 = vpack.c.b16 %v6450, %v6444
    %v6595 = vpack.c.b16 %v6451, %v6445
    %v6596 = vpack.c.b16 %v6452, %v6446
    %v6597 = vpack.c.b16 %v6459, %v6453
    %v6598 = vpack.c.b16 %v6460, %v6454
    %v6599 = vpack.c.b16 %v6461, %v6455
    %v6600 = vpack.c.b16 %v6462, %v6456
    %v6601 = vpack.c.b16 %v6463, %v6457
    %v6602 = vpack.c.b16 %v6464, %v6458
    %v6603 = vpack.c.b16 %v6471, %v6465
    %v6604 = vpack.c.b16 %v6472, %v6466
    %v6605 = vpack.c.b16 %v6473, %v6467
    %v6606 = vpack.c.b16 %v6474, %v6468
    %v6607 = vpack.c.b16 %v6475, %v6469
    %v6608 = vpack.c.b16 %v6476, %v6470
    %v6609 = vpack.c.b16 %v6483, %v6477
    %v6610 = vpack.c.b16 %v6484, %v6478
    %v6611 = vpack.c.b16 %v6485, %v6479
    %v6612 = vpack.c.b16 %v6486, %v6480
    %v6613 = vpack.c.b16 %v6487, %v6481
    %v6614 = vpack.c.b16 %v6488, %v6482
    %v6615 = vpack.c.b16 %v6495, %v6489
    %v6616 = vpack.c.b16 %v6496, %v6490
    %v6617 = vpack.c.b16 %v6497, %v6491
    %v6618 = vpack.c.b16 %v6498, %v6492
    %v6619 = vpack.c.b16 %v6499, %v6493
    %v6620 = vpack.c.b16 %v6500, %v6494
    %v6621 = vpack.c.b16 %v6507, %v6501
    %v6622 = vpack.c.b16 %v6508, %v6502
    %v6623 = vpack.c.b16 %v6509, %v6503
    %v6624 = vpack.c.b16 %v6510, %v6504
    %v6625 = vpack.c.b16 %v6511, %v6505
    %v6626 = vpack.c.b16 %v6512, %v6506
    %v6627 = vpack.c.b16 %v6519, %v6513
    %v6628 = vpack.c.b16 %v6520, %v6514
    %v6629 = vpack.c.b16 %v6521, %v6515
    %v6630 = vpack.c.b16 %v6522, %v6516
    %v6631 = vpack.c.b16 %v6523, %v6517
    %v6632 = vpack.c.b16 %v6524, %v6518
    %v6633 = vpack.c.b16 %v6531, %v6525
    %v6634 = vpack.c.b16 %v6532, %v6526
    %v6635 = vpack.c.b16 %v6533, %v6527
    %v6636 = vpack.c.b16 %v6534, %v6528
    %v6637 = vpack.c.b16 %v6535, %v6529
    %v6638 = vpack.c.b16 %v6536, %v6530
    %v6639 = vpack.c.b16 %v6543, %v6537
    %v6640 = vpack.c.b16 %v6544, %v6538
    %v6641 = vpack.c.b16 %v6545, %v6539
    %v6642 = vpack.c.b16 %v6546, %v6540
    %v6643 = vpack.c.b16 %v6547, %v6541
    %v6644 = vpack.c.b16 %v6548, %v6542
    %6741 = vmatpush.bf16.msra.mxu0 %v6591
    %6742 = vmatpush.bf16.msra.mxu0 %v6585
    %6743 = vmatpush.bf16.msra.mxu0 %v6579
    %6744 = vmatpush.bf16.msra.mxu0 %v6573
    %6745 = vmatpush.bf16.msra.mxu0 %v6567
    %6746 = vmatpush.bf16.msra.mxu0 %v6561
    %6747 = vmatpush.bf16.msra.mxu0 %v6555
    %6748 = vmatpush.bf16.msra.mxu0 %v6549
    %6749 = vmatmul.bf16.gmra.mxu0 %v6257
    %v6750 = vpop.f32.mrf.mxu0
    %v6751 = vadd.f32 0.0, %v6750
    %v6752 = vpop.f32.mrf.mxu0
    %v6753 = vadd.f32 0.0, %v6752
    %6754 = vdwg.mxu0
    %6755 = vmatpush.bf16.msra.mxu0 %v6639
    %6756 = vmatpush.bf16.msra.mxu0 %v6633
    %6757 = vmatpush.bf16.msra.mxu0 %v6627
    %6758 = vmatpush.bf16.msra.mxu0 %v6621
    %6759 = vmatpush.bf16.msra.mxu0 %v6615
    %6760 = vmatpush.bf16.msra.mxu0 %v6609
    %6761 = vmatpush.bf16.msra.mxu0 %v6603
    %6762 = vmatpush.bf16.msra.mxu0 %v6597
    %6763 = vmatmul.bf16.gmra.mxu0 %v6258
    %v6764 = vpop.f32.mrf.mxu0
    %v6765 = vadd.f32 %v6751, %v6764
    %v6766 = vpop.f32.mrf.mxu0
    %v6767 = vadd.f32 %v6753, %v6766
    %6768 = vdwg.mxu0
    %6769 = vmatpush.bf16.msra.mxu0 %v6592
    %6770 = vmatpush.bf16.msra.mxu0 %v6586
    %6771 = vmatpush.bf16.msra.mxu0 %v6580
    %6772 = vmatpush.bf16.msra.mxu0 %v6574
    %6773 = vmatpush.bf16.msra.mxu0 %v6568
    %6774 = vmatpush.bf16.msra.mxu0 %v6562
    %6775 = vmatpush.bf16.msra.mxu0 %v6556
    %6776 = vmatpush.bf16.msra.mxu0 %v6550
    %6777 = vmatmul.bf16.gmra.mxu0 %v6257
    %v6778 = vpop.f32.mrf.mxu0
    %v6779 = vadd.f32 0.0, %v6778
    %v6780 = vpop.f32.mrf.mxu0
    %v6781 = vadd.f32 0.0, %v6780
    %6782 = vdwg.mxu0
    %6783 = vmatpush.bf16.msra.mxu0 %v6640
    %6784 = vmatpush.bf16.msra.mxu0 %v6634
    %6785 = vmatpush.bf16.msra.mxu0 %v6628
    %6786 = vmatpush.bf16.msra.mxu0 %v6622
    %6787 = vmatpush.bf16.msra.mxu0 %v6616
    %6788 = vmatpush.bf16.msra.mxu0 %v6610
    %6789 = vmatpush.bf16.msra.mxu0 %v6604
    %6790 = vmatpush.bf16.msra.mxu0 %v6598
    %6791 = vmatmul.bf16.gmra.mxu0 %v6258
    %v6792 = vpop.f32.mrf.mxu0
    %v6793 = vadd.f32 %v6779, %v6792
    %v6794 = vpop.f32.mrf.mxu0
    %v6795 = vadd.f32 %v6781, %v6794
    %6796 = vdwg.mxu0
    %6797 = vmatpush.bf16.msra.mxu0 %v6593
    %6798 = vmatpush.bf16.msra.mxu0 %v6587
    %6799 = vmatpush.bf16.msra.mxu0 %v6581
    %6800 = vmatpush.bf16.msra.mxu0 %v6575
    %6801 = vmatpush.bf16.msra.mxu0 %v6569
    %6802 = vmatpush.bf16.msra.mxu0 %v6563
    %6803 = vmatpush.bf16.msra.mxu0 %v6557
    %6804 = vmatpush.bf16.msra.mxu0 %v6551
    %6805 = vmatmul.bf16.gmra.mxu0 %v6257
    %v6806 = vpop.f32.mrf.mxu0
    %v6807 = vadd.f32 0.0, %v6806
    %v6808 = vpop.f32.mrf.mxu0
    %v6809 = vadd.f32 0.0, %v6808
    %6810 = vdwg.mxu0
    %6811 = vmatpush.bf16.msra.mxu0 %v6641
    %6812 = vmatpush.bf16.msra.mxu0 %v6635
    %6813 = vmatpush.bf16.msra.mxu0 %v6629
    %6814 = vmatpush.bf16.msra.mxu0 %v6623
    %6815 = vmatpush.bf16.msra.mxu0 %v6617
    %6816 = vmatpush.bf16.msra.mxu0 %v6611
    %6817 = vmatpush.bf16.msra.mxu0 %v6605
    %6818 = vmatpush.bf16.msra.mxu0 %v6599
    %6819 = vmatmul.bf16.gmra.mxu0 %v6258
    %v6820 = vpop.f32.mrf.mxu0
    %v6821 = vadd.f32 %v6807, %v6820
    %v6822 = vpop.f32.mrf.mxu0
    %v6823 = vadd.f32 %v6809, %v6822
    %6824 = vdwg.mxu0
    %6825 = vmatpush.bf16.msra.mxu0 %v6594
    %6826 = vmatpush.bf16.msra.mxu0 %v6588
    %6827 = vmatpush.bf16.msra.mxu0 %v6582
    %6828 = vmatpush.bf16.msra.mxu0 %v6576
    %6829 = vmatpush.bf16.msra.mxu0 %v6570
    %6830 = vmatpush.bf16.msra.mxu0 %v6564
    %6831 = vmatpush.bf16.msra.mxu0 %v6558
    %6832 = vmatpush.bf16.msra.mxu0 %v6552
    %6833 = vmatmul.bf16.gmra.mxu0 %v6257
    %v6834 = vpop.f32.mrf.mxu0
    %v6835 = vadd.f32 0.0, %v6834
    %v6836 = vpop.f32.mrf.mxu0
    %v6837 = vadd.f32 0.0, %v6836
    %6838 = vdwg.mxu0
    %6839 = vmatpush.bf16.msra.mxu0 %v6642
    %6840 = vmatpush.bf16.msra.mxu0 %v6636
    %6841 = vmatpush.bf16.msra.mxu0 %v6630
    %6842 = vmatpush.bf16.msra.mxu0 %v6624
    %6843 = vmatpush.bf16.msra.mxu0 %v6618
    %6844 = vmatpush.bf16.msra.mxu0 %v6612
    %6845 = vmatpush.bf16.msra.mxu0 %v6606
    %6846 = vmatpush.bf16.msra.mxu0 %v6600
    %6847 = vmatmul.bf16.gmra.mxu0 %v6258
    %v6848 = vpop.f32.mrf.mxu0
    %v6849 = vadd.f32 %v6835, %v6848
    %v6850 = vpop.f32.mrf.mxu0
    %v6851 = vadd.f32 %v6837, %v6850
    %6852 = vdwg.mxu0
    %6853 = vmatpush.bf16.msra.mxu0 %v6595
    %6854 = vmatpush.bf16.msra.mxu0 %v6589
    %6855 = vmatpush.bf16.msra.mxu0 %v6583
    %6856 = vmatpush.bf16.msra.mxu0 %v6577
    %6857 = vmatpush.bf16.msra.mxu0 %v6571
    %6858 = vmatpush.bf16.msra.mxu0 %v6565
    %6859 = vmatpush.bf16.msra.mxu0 %v6559
    %6860 = vmatpush.bf16.msra.mxu0 %v6553
    %6861 = vmatmul.bf16.gmra.mxu0 %v6257
    %v6862 = vpop.f32.mrf.mxu0
    %v6863 = vadd.f32 0.0, %v6862
    %v6864 = vpop.f32.mrf.mxu0
    %v6865 = vadd.f32 0.0, %v6864
    %6866 = vdwg.mxu0
    %6867 = vmatpush.bf16.msra.mxu0 %v6643
    %6868 = vmatpush.bf16.msra.mxu0 %v6637
    %6869 = vmatpush.bf16.msra.mxu0 %v6631
    %6870 = vmatpush.bf16.msra.mxu0 %v6625
    %6871 = vmatpush.bf16.msra.mxu0 %v6619
    %6872 = vmatpush.bf16.msra.mxu0 %v6613
    %6873 = vmatpush.bf16.msra.mxu0 %v6607
    %6874 = vmatpush.bf16.msra.mxu0 %v6601
    %6875 = vmatmul.bf16.gmra.mxu0 %v6258
    %v6876 = vpop.f32.mrf.mxu0
    %v6877 = vadd.f32 %v6863, %v6876
    %v6878 = vpop.f32.mrf.mxu0
    %v6879 = vadd.f32 %v6865, %v6878
    %6880 = vdwg.mxu0
    %6881 = vmatpush.bf16.msra.mxu0 %v6596
    %6882 = vmatpush.bf16.msra.mxu0 %v6590
    %6883 = vmatpush.bf16.msra.mxu0 %v6584
    %6884 = vmatpush.bf16.msra.mxu0 %v6578
    %6885 = vmatpush.bf16.msra.mxu0 %v6572
    %6886 = vmatpush.bf16.msra.mxu0 %v6566
    %6887 = vmatpush.bf16.msra.mxu0 %v6560
    %6888 = vmatpush.bf16.msra.mxu0 %v6554
    %6889 = vmatmul.bf16.gmra.mxu0 %v6257
    %v6890 = vpop.f32.mrf.mxu0
    %v6891 = vadd.f32 0.0, %v6890
    %v6892 = vpop.f32.mrf.mxu0
    %v6893 = vadd.f32 0.0, %v6892
    %6894 = vdwg.mxu0
    %6895 = vmatpush.bf16.msra.mxu0 %v6644
    %6896 = vmatpush.bf16.msra.mxu0 %v6638
    %6897 = vmatpush.bf16.msra.mxu0 %v6632
    %6898 = vmatpush.bf16.msra.mxu0 %v6626
    %6899 = vmatpush.bf16.msra.mxu0 %v6620
    %6900 = vmatpush.bf16.msra.mxu0 %v6614
    %6901 = vmatpush.bf16.msra.mxu0 %v6608
    %6902 = vmatpush.bf16.msra.mxu0 %v6602
    %6903 = vmatmul.bf16.gmra.mxu0 %v6258
    %v6904 = vpop.f32.mrf.mxu0
    %v6905 = vadd.f32 %v6891, %v6904
    %v6906 = vpop.f32.mrf.mxu0
    %v6907 = vadd.f32 %v6893, %v6906
    %6908 = vdwg.mxu0
    %v6909 = vadd.f32 %v6015, %v6765
    %v6910 = vadd.f32 %v6043, %v6793
    %v6911 = vadd.f32 %v6071, %v6821
    %v6912 = vadd.f32 %v6099, %v6849
    %v6913 = vadd.f32 %v6127, %v6877
    %v6914 = vadd.f32 %v6155, %v6905
    %v6915 = vadd.f32 %v6017, %v6767
    %v6916 = vadd.f32 %v6045, %v6795
    %v6917 = vadd.f32 %v6073, %v6823
    %v6918 = vadd.f32 %v6101, %v6851
    %v6919 = vadd.f32 %v6129, %v6879
    %v6920 = vadd.f32 %v6157, %v6907
    %s6921 = scalar_lea.vmem [#allocation3], 96
    %6922 = vst [vmem:[%s6921] sm:$0xff] %v6909
    %6923 = vst [vmem:[%s6921 + $0x8] sm:$0xff] %v6910
    %6924 = vst [vmem:[%s6921 + $0x10] sm:$0xff] %v6911
    %6925 = vst [vmem:[%s6921 + $0x18] sm:$0xff] %v6912
    %6926 = vst [vmem:[%s6921 + $0x20] sm:$0xff] %v6913
    %6927 = vst [vmem:[%s6921 + $0x28] sm:$0xff] %v6914
    %6928 = vst [vmem:[%s6921 + $0x30] sm:$0x7] %v6915
    %6929 = vst [vmem:[%s6921 + $0x38] sm:$0x7] %v6916
    %6930 = vst [vmem:[%s6921 + $0x40] sm:$0x7] %v6917
    %6931 = vst [vmem:[%s6921 + $0x48] sm:$0x7] %v6918
    %6932 = vst [vmem:[%s6921 + $0x50] sm:$0x7] %v6919
    %6933 = vst [vmem:[%s6921 + $0x58] sm:$0x7] %v6920
    %v6934 = vsel %vm2088, %v6915, 0.0
    %v6935 = vadd.f32 %v6909, %v6934
    %v6936 = vrot.slane %v6935, 4
    %v6937 = vadd.f32 %v6935, %v6936
    %v6938 = vrot.slane %v6937, 2
    %v6939 = vadd.f32 %v6937, %v6938
    %v6940 = vrot.slane %v6939, 1
    %v6941 = vadd.f32 %v6939, %v6940
    %v6942 = vsel %vm2088, %v6916, 0.0
    %v6943 = vadd.f32 %v6910, %v6942
    %v6944 = vrot.slane %v6943, 4
    %v6945 = vadd.f32 %v6943, %v6944
    %v6946 = vrot.slane %v6945, 2
    %v6947 = vadd.f32 %v6945, %v6946
    %v6948 = vrot.slane %v6947, 1
    %v6949 = vadd.f32 %v6947, %v6948
    %v6950 = vsel %vm2088, %v6917, 0.0
    %v6951 = vadd.f32 %v6911, %v6950
    %v6952 = vrot.slane %v6951, 4
    %v6953 = vadd.f32 %v6951, %v6952
    %v6954 = vrot.slane %v6953, 2
    %v6955 = vadd.f32 %v6953, %v6954
    %v6956 = vrot.slane %v6955, 1
    %v6957 = vadd.f32 %v6955, %v6956
    %v6958 = vsel %vm2088, %v6918, 0.0
    %v6959 = vadd.f32 %v6912, %v6958
    %v6960 = vrot.slane %v6959, 4
    %v6961 = vadd.f32 %v6959, %v6960
    %v6962 = vrot.slane %v6961, 2
    %v6963 = vadd.f32 %v6961, %v6962
    %v6964 = vrot.slane %v6963, 1
    %v6965 = vadd.f32 %v6963, %v6964
    %v6966 = vsel %vm2088, %v6919, 0.0
    %v6967 = vadd.f32 %v6913, %v6966
    %v6968 = vrot.slane %v6967, 4
    %v6969 = vadd.f32 %v6967, %v6968
    %v6970 = vrot.slane %v6969, 2
    %v6971 = vadd.f32 %v6969, %v6970
    %v6972 = vrot.slane %v6971, 1
    %v6973 = vadd.f32 %v6971, %v6972
    %v6974 = vsel %vm2088, %v6920, 0.0
    %v6975 = vadd.f32 %v6914, %v6974
    %v6976 = vrot.slane %v6975, 4
    %v6977 = vadd.f32 %v6975, %v6976
    %v6978 = vrot.slane %v6977, 2
    %v6979 = vadd.f32 %v6977, %v6978
    %v6980 = vrot.slane %v6979, 1
    %v6981 = vadd.f32 %v6979, %v6980
    %v6982 = vadd.f32 %v4437, %v6941
    %v6983 = vadd.f32 %v4438, %v6949
    %v6984 = vadd.f32 %v4439, %v6957
    %v6985 = vadd.f32 %v4440, %v6965
    %v6986 = vadd.f32 %v4441, %v6973
    %v6987 = vadd.f32 %v4442, %v6981
    %v6988 = vmul.f32 %v6909, %v6909
    %v6989 = vmul.f32 %v6910, %v6910
    %v6990 = vmul.f32 %v6911, %v6911
    %v6991 = vmul.f32 %v6912, %v6912
    %v6992 = vmul.f32 %v6913, %v6913
    %v6993 = vmul.f32 %v6914, %v6914
    %v6994 = vmul.f32 %v6915, %v6915
    %v6995 = vmul.f32 %v6916, %v6916
    %v6996 = vmul.f32 %v6917, %v6917
    %v6997 = vmul.f32 %v6918, %v6918
    %v6998 = vmul.f32 %v6919, %v6919
    %v6999 = vmul.f32 %v6920, %v6920
    %v7000 = vsel %vm2088, %v6994, 0.0
    %v7001 = vadd.f32 %v6988, %v7000
    %v7002 = vrot.slane %v7001, 4
    %v7003 = vadd.f32 %v7001, %v7002
    %v7004 = vrot.slane %v7003, 2
    %v7005 = vadd.f32 %v7003, %v7004
    %v7006 = vrot.slane %v7005, 1
    %v7007 = vadd.f32 %v7005, %v7006
    %v7008 = vsel %vm2088, %v6995, 0.0
    %v7009 = vadd.f32 %v6989, %v7008
    %v7010 = vrot.slane %v7009, 4
    %v7011 = vadd.f32 %v7009, %v7010
    %v7012 = vrot.slane %v7011, 2
    %v7013 = vadd.f32 %v7011, %v7012
    %v7014 = vrot.slane %v7013, 1
    %v7015 = vadd.f32 %v7013, %v7014
    %v7016 = vsel %vm2088, %v6996, 0.0
    %v7017 = vadd.f32 %v6990, %v7016
    %v7018 = vrot.slane %v7017, 4
    %v7019 = vadd.f32 %v7017, %v7018
    %v7020 = vrot.slane %v7019, 2
    %v7021 = vadd.f32 %v7019, %v7020
    %v7022 = vrot.slane %v7021, 1
    %v7023 = vadd.f32 %v7021, %v7022
    %v7024 = vsel %vm2088, %v6997, 0.0
    %v7025 = vadd.f32 %v6991, %v7024
    %v7026 = vrot.slane %v7025, 4
    %v7027 = vadd.f32 %v7025, %v7026
    %v7028 = vrot.slane %v7027, 2
    %v7029 = vadd.f32 %v7027, %v7028
    %v7030 = vrot.slane %v7029, 1
    %v7031 = vadd.f32 %v7029, %v7030
    %v7032 = vsel %vm2088, %v6998, 0.0
    %v7033 = vadd.f32 %v6992, %v7032
    %v7034 = vrot.slane %v7033, 4
    %v7035 = vadd.f32 %v7033, %v7034
    %v7036 = vrot.slane %v7035, 2
    %v7037 = vadd.f32 %v7035, %v7036
    %v7038 = vrot.slane %v7037, 1
    %v7039 = vadd.f32 %v7037, %v7038
    %v7040 = vsel %vm2088, %v6999, 0.0
    %v7041 = vadd.f32 %v6993, %v7040
    %v7042 = vrot.slane %v7041, 4
    %v7043 = vadd.f32 %v7041, %v7042
    %v7044 = vrot.slane %v7043, 2
    %v7045 = vadd.f32 %v7043, %v7044
    %v7046 = vrot.slane %v7045, 1
    %v7047 = vadd.f32 %v7045, %v7046
    %v7048 = vadd.f32 %v4503, %v7007
    %v7049 = vadd.f32 %v4504, %v7015
    %v7050 = vadd.f32 %v4505, %v7023
    %v7051 = vadd.f32 %v4506, %v7031
    %v7052 = vadd.f32 %v4507, %v7039
    %v7053 = vadd.f32 %v4508, %v7047
    %v7054 = vpack.c.bf16 %v6982, %v6982
    %v7055 = vpack.c.bf16 %v6983, %v6983
    %v7056 = vpack.c.bf16 %v6984, %v6984
    %v7057 = vpack.c.bf16 %v6985, %v6985
    %v7058 = vpack.c.bf16 %v6986, %v6986
    %v7059 = vpack.c.bf16 %v6987, %v6987
    %v7060 = vld [vmem:[%s6] sm:$0xf]
    %v7061 = vld [vmem:[%s6 + $0x4] sm:$0xf]
    %v7062 = vld [vmem:[%s6 + $0x8] sm:$0xf]
    %v7063 = vld [vmem:[%s6 + $0xc] sm:$0xf]
    %v7064 = vld [vmem:[%s6 + $0x10] sm:$0xf]
    %v7065 = vld [vmem:[%s6 + $0x14] sm:$0xf]
    %v7066 = vld [vmem:[%s6 + $0x18] sm:$0xf]
    %v7067 = vld [vmem:[%s6 + $0x1c] sm:$0xf]
    %v7068 = vld [vmem:[%s6 + $0x20] sm:$0xf]
    %v7069 = vld [vmem:[%s6 + $0x24] sm:$0xf]
    %v7070 = vld [vmem:[%s6 + $0x28] sm:$0xf]
    %v7071 = vld [vmem:[%s6 + $0x2c] sm:$0xf]
    %v7072 = vld [vmem:[%s6 + $0x30] sm:$0xf]
    %v7073 = vld [vmem:[%s6 + $0x34] sm:$0xf]
    %v7074 = vld [vmem:[%s6 + $0x38] sm:$0xf]
    %v7075 = vld [vmem:[%s6 + $0x3c] sm:$0xf]
    %v7076 = vld [vmem:[%s6 + $0x40] sm:$0xf]
    %v7077 = vld [vmem:[%s6 + $0x44] sm:$0xf]
    %v7078 = vld [vmem:[%s6 + $0x48] sm:$0xf]
    %v7079 = vld [vmem:[%s6 + $0x4c] sm:$0xf]
    %v7080 = vld [vmem:[%s6 + $0x50] sm:$0xf]
    %v7081 = vld [vmem:[%s6 + $0x54] sm:$0xf]
    %v7082 = vld [vmem:[%s6 + $0x58] sm:$0xf]
    %v7083 = vld [vmem:[%s6 + $0x5c] sm:$0xf]
    %v7084 = vld [vmem:[%s6 + $0x60] sm:$0xf]
    %v7085 = vld [vmem:[%s6 + $0x64] sm:$0xf]
    %v7086 = vld [vmem:[%s6 + $0x68] sm:$0xf]
    %v7087 = vld [vmem:[%s6 + $0x6c] sm:$0xf]
    %v7088 = vld [vmem:[%s6 + $0x70] sm:$0xf]
    %v7089 = vld [vmem:[%s6 + $0x74] sm:$0xf]
    %v7090 = vld [vmem:[%s6 + $0x78] sm:$0xf]
    %v7091 = vld [vmem:[%s6 + $0x7c] sm:$0xf]
    %v7092 = vld [vmem:[%s6 + $0x80] sm:$0xf]
    %v7093 = vld [vmem:[%s6 + $0x84] sm:$0xf]
    %v7094 = vld [vmem:[%s6 + $0x88] sm:$0xf]
    %v7095 = vld [vmem:[%s6 + $0x8c] sm:$0xf]
    %v7096 = vld [vmem:[%s6 + $0x90] sm:$0xf]
    %v7097 = vld [vmem:[%s6 + $0x94] sm:$0xf]
    %v7098 = vld [vmem:[%s6 + $0x98] sm:$0xf]
    %v7099 = vld [vmem:[%s6 + $0x9c] sm:$0xf]
    %v7100 = vld [vmem:[%s6 + $0xa0] sm:$0xf]
    %v7101 = vld [vmem:[%s6 + $0xa4] sm:$0xf]
    %v7102 = vld [vmem:[%s6 + $0xa8] sm:$0xf]
    %v7103 = vld [vmem:[%s6 + $0xac] sm:$0xf]
    %v7104 = vld [vmem:[%s6 + $0xb0] sm:$0xf]
    %v7105 = vld [vmem:[%s6 + $0xb4] sm:$0xf]
    %v7106 = vld [vmem:[%s6 + $0xb8] sm:$0xf]
    %v7107 = vld [vmem:[%s6 + $0xbc] sm:$0xf]
    %v7108 = vld [vmem:[%s6 + $0xc0] sm:$0xf]
    %v7109 = vld [vmem:[%s6 + $0xc4] sm:$0xf]
    %v7110 = vld [vmem:[%s6 + $0xc8] sm:$0xf]
    %v7111 = vld [vmem:[%s6 + $0xcc] sm:$0xf]
    %v7112 = vld [vmem:[%s6 + $0xd0] sm:$0xf]
    %v7113 = vld [vmem:[%s6 + $0xd4] sm:$0xf]
    %v7114 = vld [vmem:[%s6 + $0xd8] sm:$0xf]
    %v7115 = vld [vmem:[%s6 + $0xdc] sm:$0xf]
    %v7116 = vld [vmem:[%s6 + $0xe0] sm:$0xf]
    %v7117 = vld [vmem:[%s6 + $0xe4] sm:$0xf]
    %v7118 = vld [vmem:[%s6 + $0xe8] sm:$0xf]
    %v7119 = vld [vmem:[%s6 + $0xec] sm:$0xf]
    %v7120 = vld [vmem:[%s6 + $0xf0] sm:$0xf]
    %v7121 = vld [vmem:[%s6 + $0xf4] sm:$0xf]
    %v7122 = vld [vmem:[%s6 + $0xf8] sm:$0xf]
    %v7123 = vld [vmem:[%s6 + $0xfc] sm:$0xf]
    %v7124 = vld [vmem:[%s6 + $0x100] sm:$0xf]
    %v7125 = vld [vmem:[%s6 + $0x104] sm:$0xf]
    %v7126 = vld [vmem:[%s6 + $0x108] sm:$0xf]
    %v7127 = vld [vmem:[%s6 + $0x10c] sm:$0xf]
    %v7128 = vld [vmem:[%s6 + $0x110] sm:$0xf]
    %v7129 = vld [vmem:[%s6 + $0x114] sm:$0xf]
    %v7130 = vld [vmem:[%s6 + $0x118] sm:$0xf]
    %v7131 = vld [vmem:[%s6 + $0x11c] sm:$0xf]
    %v7132 = vld [vmem:[%s6 + $0x120] sm:$0xf]
    %v7133 = vld [vmem:[%s6 + $0x124] sm:$0xf]
    %v7134 = vld [vmem:[%s6 + $0x128] sm:$0xf]
    %v7135 = vld [vmem:[%s6 + $0x12c] sm:$0xf]
    %v7136 = vld [vmem:[%s6 + $0x130] sm:$0xf]
    %v7137 = vld [vmem:[%s6 + $0x134] sm:$0xf]
    %v7138 = vld [vmem:[%s6 + $0x138] sm:$0xf]
    %v7139 = vld [vmem:[%s6 + $0x13c] sm:$0xf]
    %v7140 = vld [vmem:[%s6 + $0x140] sm:$0xf]
    %v7141 = vld [vmem:[%s6 + $0x144] sm:$0xf]
    %v7142 = vld [vmem:[%s6 + $0x148] sm:$0xf]
    %v7143 = vld [vmem:[%s6 + $0x14c] sm:$0xf]
    %v7144 = vld [vmem:[%s6 + $0x150] sm:$0xf]
    %v7145 = vld [vmem:[%s6 + $0x154] sm:$0xf]
    %v7146 = vld [vmem:[%s6 + $0x158] sm:$0xf]
    %v7147 = vld [vmem:[%s6 + $0x15c] sm:$0xf]
    %v7148 = vld [vmem:[%s6 + $0x160] sm:$0xf]
    %v7149 = vld [vmem:[%s6 + $0x164] sm:$0xf]
    %v7150 = vld [vmem:[%s6 + $0x168] sm:$0xf]
    %v7151 = vld [vmem:[%s6 + $0x16c] sm:$0xf]
    %v7152 = vld [vmem:[%s6 + $0x170] sm:$0xf]
    %v7153 = vld [vmem:[%s6 + $0x174] sm:$0xf]
    %v7154 = vld [vmem:[%s6 + $0x178] sm:$0xf]
    %v7155 = vld [vmem:[%s6 + $0x17c] sm:$0xf]
    %v7252 = vunpack.c.l.b16 %v7060
    %v7253 = vunpack.c.l.b16 %v7061
    %v7254 = vunpack.c.l.b16 %v7062
    %v7255 = vunpack.c.l.b16 %v7063
    %v7256 = vunpack.c.l.b16 %v7064
    %v7257 = vunpack.c.l.b16 %v7065
    %v7258 = vunpack.c.l.b16 %v7066
    %v7259 = vunpack.c.l.b16 %v7067
    %v7260 = vunpack.c.l.b16 %v7068
    %v7261 = vunpack.c.l.b16 %v7069
    %v7262 = vunpack.c.l.b16 %v7070
    %v7263 = vunpack.c.l.b16 %v7071
    %v7264 = vunpack.c.l.b16 %v7072
    %v7265 = vunpack.c.l.b16 %v7073
    %v7266 = vunpack.c.l.b16 %v7074
    %v7267 = vunpack.c.l.b16 %v7075
    %v7268 = vunpack.c.l.b16 %v7076
    %v7269 = vunpack.c.l.b16 %v7077
    %v7270 = vunpack.c.l.b16 %v7078
    %v7271 = vunpack.c.l.b16 %v7079
    %v7272 = vunpack.c.l.b16 %v7080
    %v7273 = vunpack.c.l.b16 %v7081
    %v7274 = vunpack.c.l.b16 %v7082
    %v7275 = vunpack.c.l.b16 %v7083
    %v7276 = vunpack.c.l.b16 %v7084
    %v7277 = vunpack.c.l.b16 %v7085
    %v7278 = vunpack.c.l.b16 %v7086
    %v7279 = vunpack.c.l.b16 %v7087
    %v7280 = vunpack.c.l.b16 %v7088
    %v7281 = vunpack.c.l.b16 %v7089
    %v7282 = vunpack.c.l.b16 %v7090
    %v7283 = vunpack.c.l.b16 %v7091
    %v7284 = vunpack.c.l.b16 %v7092
    %v7285 = vunpack.c.l.b16 %v7093
    %v7286 = vunpack.c.l.b16 %v7094
    %v7287 = vunpack.c.l.b16 %v7095
    %v7288 = vunpack.c.l.b16 %v7096
    %v7289 = vunpack.c.l.b16 %v7097
    %v7290 = vunpack.c.l.b16 %v7098
    %v7291 = vunpack.c.l.b16 %v7099
    %v7292 = vunpack.c.l.b16 %v7100
    %v7293 = vunpack.c.l.b16 %v7101
    %v7294 = vunpack.c.l.b16 %v7102
    %v7295 = vunpack.c.l.b16 %v7103
    %v7296 = vunpack.c.l.b16 %v7104
    %v7297 = vunpack.c.l.b16 %v7105
    %v7298 = vunpack.c.l.b16 %v7106
    %v7299 = vunpack.c.l.b16 %v7107
    %v7300 = vunpack.c.l.b16 %v7108
    %v7301 = vunpack.c.l.b16 %v7109
    %v7302 = vunpack.c.l.b16 %v7110
    %v7303 = vunpack.c.l.b16 %v7111
    %v7304 = vunpack.c.l.b16 %v7112
    %v7305 = vunpack.c.l.b16 %v7113
    %v7306 = vunpack.c.l.b16 %v7114
    %v7307 = vunpack.c.l.b16 %v7115
    %v7308 = vunpack.c.l.b16 %v7116
    %v7309 = vunpack.c.l.b16 %v7117
    %v7310 = vunpack.c.l.b16 %v7118
    %v7311 = vunpack.c.l.b16 %v7119
    %v7312 = vunpack.c.l.b16 %v7120
    %v7313 = vunpack.c.l.b16 %v7121
    %v7314 = vunpack.c.l.b16 %v7122
    %v7315 = vunpack.c.l.b16 %v7123
    %v7316 = vunpack.c.l.b16 %v7124
    %v7317 = vunpack.c.l.b16 %v7125
    %v7318 = vunpack.c.l.b16 %v7126
    %v7319 = vunpack.c.l.b16 %v7127
    %v7320 = vunpack.c.l.b16 %v7128
    %v7321 = vunpack.c.l.b16 %v7129
    %v7322 = vunpack.c.l.b16 %v7130
    %v7323 = vunpack.c.l.b16 %v7131
    %v7324 = vunpack.c.l.b16 %v7132
    %v7325 = vunpack.c.l.b16 %v7133
    %v7326 = vunpack.c.l.b16 %v7134
    %v7327 = vunpack.c.l.b16 %v7135
    %v7328 = vunpack.c.l.b16 %v7136
    %v7329 = vunpack.c.l.b16 %v7137
    %v7330 = vunpack.c.l.b16 %v7138
    %v7331 = vunpack.c.l.b16 %v7139
    %v7332 = vunpack.c.l.b16 %v7140
    %v7333 = vunpack.c.l.b16 %v7141
    %v7334 = vunpack.c.l.b16 %v7142
    %v7335 = vunpack.c.l.b16 %v7143
    %v7336 = vunpack.c.l.b16 %v7144
    %v7337 = vunpack.c.l.b16 %v7145
    %v7338 = vunpack.c.l.b16 %v7146
    %v7339 = vunpack.c.l.b16 %v7147
    %v7340 = vunpack.c.l.b16 %v7148
    %v7341 = vunpack.c.l.b16 %v7149
    %v7342 = vunpack.c.l.b16 %v7150
    %v7343 = vunpack.c.l.b16 %v7151
    %v7344 = vunpack.c.l.b16 %v7152
    %v7345 = vunpack.c.l.b16 %v7153
    %v7346 = vunpack.c.l.b16 %v7154
    %v7347 = vunpack.c.l.b16 %v7155
    %v7348 = vpack.c.b16 %v7253, %v7252
    %v7349 = vpack.c.b16 %v7255, %v7254
    %v7350 = vpack.c.b16 %v7257, %v7256
    %v7351 = vpack.c.b16 %v7259, %v7258
    %v7352 = vpack.c.b16 %v7261, %v7260
    %v7353 = vpack.c.b16 %v7263, %v7262
    %v7354 = vpack.c.b16 %v7265, %v7264
    %v7355 = vpack.c.b16 %v7267, %v7266
    %v7356 = vpack.c.b16 %v7269, %v7268
    %v7357 = vpack.c.b16 %v7271, %v7270
    %v7358 = vpack.c.b16 %v7273, %v7272
    %v7359 = vpack.c.b16 %v7275, %v7274
    %v7360 = vpack.c.b16 %v7277, %v7276
    %v7361 = vpack.c.b16 %v7279, %v7278
    %v7362 = vpack.c.b16 %v7281, %v7280
    %v7363 = vpack.c.b16 %v7283, %v7282
    %v7364 = vpack.c.b16 %v7285, %v7284
    %v7365 = vpack.c.b16 %v7287, %v7286
    %v7366 = vpack.c.b16 %v7289, %v7288
    %v7367 = vpack.c.b16 %v7291, %v7290
    %v7368 = vpack.c.b16 %v7293, %v7292
    %v7369 = vpack.c.b16 %v7295, %v7294
    %v7370 = vpack.c.b16 %v7297, %v7296
    %v7371 = vpack.c.b16 %v7299, %v7298
    %v7372 = vpack.c.b16 %v7301, %v7300
    %v7373 = vpack.c.b16 %v7303, %v7302
    %v7374 = vpack.c.b16 %v7305, %v7304
    %v7375 = vpack.c.b16 %v7307, %v7306
    %v7376 = vpack.c.b16 %v7309, %v7308
    %v7377 = vpack.c.b16 %v7311, %v7310
    %v7378 = vpack.c.b16 %v7313, %v7312
    %v7379 = vpack.c.b16 %v7315, %v7314
    %v7380 = vpack.c.b16 %v7317, %v7316
    %v7381 = vpack.c.b16 %v7319, %v7318
    %v7382 = vpack.c.b16 %v7321, %v7320
    %v7383 = vpack.c.b16 %v7323, %v7322
    %v7384 = vpack.c.b16 %v7325, %v7324
    %v7385 = vpack.c.b16 %v7327, %v7326
    %v7386 = vpack.c.b16 %v7329, %v7328
    %v7387 = vpack.c.b16 %v7331, %v7330
    %v7388 = vpack.c.b16 %v7333, %v7332
    %v7389 = vpack.c.b16 %v7335, %v7334
    %v7390 = vpack.c.b16 %v7337, %v7336
    %v7391 = vpack.c.b16 %v7339, %v7338
    %v7392 = vpack.c.b16 %v7341, %v7340
    %v7393 = vpack.c.b16 %v7343, %v7342
    %v7394 = vpack.c.b16 %v7345, %v7344
    %v7395 = vpack.c.b16 %v7347, %v7346
    %7444 = vmatpush.bf16.msra.mxu0 %v7355
    %7445 = vmatpush.bf16.msra.mxu0 %v7354
    %7446 = vmatpush.bf16.msra.mxu0 %v7353
    %7447 = vmatpush.bf16.msra.mxu0 %v7352
    %7448 = vmatpush.bf16.msra.mxu0 %v7351
    %7449 = vmatpush.bf16.msra.mxu0 %v7350
    %7450 = vmatpush.bf16.msra.mxu0 %v7349
    %7451 = vmatpush.bf16.msra.mxu0 %v7348
    %7452 = vmatmul.bf16.gmra.mxu0 %v7054
    %v7453 = vpop.f32.mrf.mxu0
    %v7454 = vadd.f32 0.0, %v7453
    %v7455 = vpop.f32.mrf.mxu0
    %7456 = vdwg.mxu0
    %7457 = vmatpush.bf16.msra.mxu0 %v7363
    %7458 = vmatpush.bf16.msra.mxu0 %v7362
    %7459 = vmatpush.bf16.msra.mxu0 %v7361
    %7460 = vmatpush.bf16.msra.mxu0 %v7360
    %7461 = vmatpush.bf16.msra.mxu0 %v7359
    %7462 = vmatpush.bf16.msra.mxu0 %v7358
    %7463 = vmatpush.bf16.msra.mxu0 %v7357
    %7464 = vmatpush.bf16.msra.mxu0 %v7356
    %7465 = vmatmul.bf16.gmra.mxu0 %v7055
    %v7466 = vpop.f32.mrf.mxu0
    %v7467 = vadd.f32 %v7454, %v7466
    %v7468 = vpop.f32.mrf.mxu0
    %7469 = vdwg.mxu0
    %7470 = vmatpush.bf16.msra.mxu0 %v7371
    %7471 = vmatpush.bf16.msra.mxu0 %v7370
    %7472 = vmatpush.bf16.msra.mxu0 %v7369
    %7473 = vmatpush.bf16.msra.mxu0 %v7368
    %7474 = vmatpush.bf16.msra.mxu0 %v7367
    %7475 = vmatpush.bf16.msra.mxu0 %v7366
    %7476 = vmatpush.bf16.msra.mxu0 %v7365
    %7477 = vmatpush.bf16.msra.mxu0 %v7364
    %7478 = vmatmul.bf16.gmra.mxu0 %v7056
    %v7479 = vpop.f32.mrf.mxu0
    %v7480 = vadd.f32 %v7467, %v7479
    %v7481 = vpop.f32.mrf.mxu0
    %7482 = vdwg.mxu0
    %7483 = vmatpush.bf16.msra.mxu0 %v7379
    %7484 = vmatpush.bf16.msra.mxu0 %v7378
    %7485 = vmatpush.bf16.msra.mxu0 %v7377
    %7486 = vmatpush.bf16.msra.mxu0 %v7376
    %7487 = vmatpush.bf16.msra.mxu0 %v7375
    %7488 = vmatpush.bf16.msra.mxu0 %v7374
    %7489 = vmatpush.bf16.msra.mxu0 %v7373
    %7490 = vmatpush.bf16.msra.mxu0 %v7372
    %7491 = vmatmul.bf16.gmra.mxu0 %v7057
    %v7492 = vpop.f32.mrf.mxu0
    %v7493 = vadd.f32 %v7480, %v7492
    %v7494 = vpop.f32.mrf.mxu0
    %7495 = vdwg.mxu0
    %7496 = vmatpush.bf16.msra.mxu0 %v7387
    %7497 = vmatpush.bf16.msra.mxu0 %v7386
    %7498 = vmatpush.bf16.msra.mxu0 %v7385
    %7499 = vmatpush.bf16.msra.mxu0 %v7384
    %7500 = vmatpush.bf16.msra.mxu0 %v7383
    %7501 = vmatpush.bf16.msra.mxu0 %v7382
    %7502 = vmatpush.bf16.msra.mxu0 %v7381
    %7503 = vmatpush.bf16.msra.mxu0 %v7380
    %7504 = vmatmul.bf16.gmra.mxu0 %v7058
    %v7505 = vpop.f32.mrf.mxu0
    %v7506 = vadd.f32 %v7493, %v7505
    %v7507 = vpop.f32.mrf.mxu0
    %7508 = vdwg.mxu0
    %7509 = vmatpush.bf16.msra.mxu0 %v7395
    %7510 = vmatpush.bf16.msra.mxu0 %v7394
    %7511 = vmatpush.bf16.msra.mxu0 %v7393
    %7512 = vmatpush.bf16.msra.mxu0 %v7392
    %7513 = vmatpush.bf16.msra.mxu0 %v7391
    %7514 = vmatpush.bf16.msra.mxu0 %v7390
    %7515 = vmatpush.bf16.msra.mxu0 %v7389
    %7516 = vmatpush.bf16.msra.mxu0 %v7388
    %7517 = vmatmul.bf16.gmra.mxu0 %v7059
    %v7518 = vpop.f32.mrf.mxu0
    %v7519 = vadd.f32 %v7506, %v7518
    %v7520 = vpop.f32.mrf.mxu0
    %7521 = vdwg.mxu0
    %v7522 = vpack.c.bf16 %v7048, %v7048
    %v7523 = vpack.c.bf16 %v7049, %v7049
    %v7524 = vpack.c.bf16 %v7050, %v7050
    %v7525 = vpack.c.bf16 %v7051, %v7051
    %v7526 = vpack.c.bf16 %v7052, %v7052
    %v7527 = vpack.c.bf16 %v7053, %v7053
    %7528 = vmatpush.bf16.msra.mxu0 %v7355
    %7529 = vmatpush.bf16.msra.mxu0 %v7354
    %7530 = vmatpush.bf16.msra.mxu0 %v7353
    %7531 = vmatpush.bf16.msra.mxu0 %v7352
    %7532 = vmatpush.bf16.msra.mxu0 %v7351
    %7533 = vmatpush.bf16.msra.mxu0 %v7350
    %7534 = vmatpush.bf16.msra.mxu0 %v7349
    %7535 = vmatpush.bf16.msra.mxu0 %v7348
    %7536 = vmatmul.bf16.gmra.mxu0 %v7522
    %v7537 = vpop.f32.mrf.mxu0
    %v7538 = vadd.f32 0.0, %v7537
    %v7539 = vpop.f32.mrf.mxu0
    %7540 = vdwg.mxu0
    %7541 = vmatpush.bf16.msra.mxu0 %v7363
    %7542 = vmatpush.bf16.msra.mxu0 %v7362
    %7543 = vmatpush.bf16.msra.mxu0 %v7361
    %7544 = vmatpush.bf16.msra.mxu0 %v7360
    %7545 = vmatpush.bf16.msra.mxu0 %v7359
    %7546 = vmatpush.bf16.msra.mxu0 %v7358
    %7547 = vmatpush.bf16.msra.mxu0 %v7357
    %7548 = vmatpush.bf16.msra.mxu0 %v7356
    %7549 = vmatmul.bf16.gmra.mxu0 %v7523
    %v7550 = vpop.f32.mrf.mxu0
    %v7551 = vadd.f32 %v7538, %v7550
    %v7552 = vpop.f32.mrf.mxu0
    %7553 = vdwg.mxu0
    %7554 = vmatpush.bf16.msra.mxu0 %v7371
    %7555 = vmatpush.bf16.msra.mxu0 %v7370
    %7556 = vmatpush.bf16.msra.mxu0 %v7369
    %7557 = vmatpush.bf16.msra.mxu0 %v7368
    %7558 = vmatpush.bf16.msra.mxu0 %v7367
    %7559 = vmatpush.bf16.msra.mxu0 %v7366
    %7560 = vmatpush.bf16.msra.mxu0 %v7365
    %7561 = vmatpush.bf16.msra.mxu0 %v7364
    %7562 = vmatmul.bf16.gmra.mxu0 %v7524
    %v7563 = vpop.f32.mrf.mxu0
    %v7564 = vadd.f32 %v7551, %v7563
    %v7565 = vpop.f32.mrf.mxu0
    %7566 = vdwg.mxu0
    %7567 = vmatpush.bf16.msra.mxu0 %v7379
    %7568 = vmatpush.bf16.msra.mxu0 %v7378
    %7569 = vmatpush.bf16.msra.mxu0 %v7377
    %7570 = vmatpush.bf16.msra.mxu0 %v7376
    %7571 = vmatpush.bf16.msra.mxu0 %v7375
    %7572 = vmatpush.bf16.msra.mxu0 %v7374
    %7573 = vmatpush.bf16.msra.mxu0 %v7373
    %7574 = vmatpush.bf16.msra.mxu0 %v7372
    %7575 = vmatmul.bf16.gmra.mxu0 %v7525
    %v7576 = vpop.f32.mrf.mxu0
    %v7577 = vadd.f32 %v7564, %v7576
    %v7578 = vpop.f32.mrf.mxu0
    %7579 = vdwg.mxu0
    %7580 = vmatpush.bf16.msra.mxu0 %v7387
    %7581 = vmatpush.bf16.msra.mxu0 %v7386
    %7582 = vmatpush.bf16.msra.mxu0 %v7385
    %7583 = vmatpush.bf16.msra.mxu0 %v7384
    %7584 = vmatpush.bf16.msra.mxu0 %v7383
    %7585 = vmatpush.bf16.msra.mxu0 %v7382
    %7586 = vmatpush.bf16.msra.mxu0 %v7381
    %7587 = vmatpush.bf16.msra.mxu0 %v7380
    %7588 = vmatmul.bf16.gmra.mxu0 %v7526
    %v7589 = vpop.f32.mrf.mxu0
    %v7590 = vadd.f32 %v7577, %v7589
    %v7591 = vpop.f32.mrf.mxu0
    %7592 = vdwg.mxu0
    %7593 = vmatpush.bf16.msra.mxu0 %v7395
    %7594 = vmatpush.bf16.msra.mxu0 %v7394
    %7595 = vmatpush.bf16.msra.mxu0 %v7393
    %7596 = vmatpush.bf16.msra.mxu0 %v7392
    %7597 = vmatpush.bf16.msra.mxu0 %v7391
    %7598 = vmatpush.bf16.msra.mxu0 %v7390
    %7599 = vmatpush.bf16.msra.mxu0 %v7389
    %7600 = vmatpush.bf16.msra.mxu0 %v7388
    %7601 = vmatmul.bf16.gmra.mxu0 %v7527
    %v7602 = vpop.f32.mrf.mxu0
    %v7603 = vadd.f32 %v7590, %v7602
    %v7604 = vpop.f32.mrf.mxu0
    %7605 = vdwg.mxu0
    %v7606 = vmul.f32 %v7519, 0.004132231
    %v7607 = vmul.f32 %v7603, 0.004132231
    %v7608 = vmul.f32 %v7606, %v7606
    %v7609 = vsub.f32 %v7607, %v7608
    %v7610 = vld [vmem:[#allocation20] sm:$0x1]
    %v7611 = vadd.f32 %v7609, 1e-05
    %v7612 = vrsqrt.pop %v7611
    %v7613 = vmul.f32 %v7612, %v7611
    %v7614 = vmul.f32 %v7613, %v7612
    %v7615 = vmul.f32 0.5, %v7614
    %v7616 = vsub.f32 1.5, %v7615
    %v7617 = vmul.f32 %v7612, %v7616
    %vm7618 = vweird.f32 %v7611
    %vm7619 = vweird.f32 %v7612
    %vm7620 = vmor %vm7618, %vm7619
    %v7621 = vsel %vm7620, %v7612, %v7617
    %v7622 = vmul.f32 %v7610, %v7621
    %v7623 = vld [vmem:[#allocation22] sm:$0x1]
    %v7624 = vmul.f32 %v7606, %v7622
    %v7625 = vsub.f32 %v7623, %v7624
    %v7626 = vpack.c.bf16 %v7622, %v7622
    %v7627 = vld [vmem:[#allocation13] sm:$0xff]
    %v7628 = vld [vmem:[#allocation13 + $0x8] sm:$0xff]
    %v7629 = vld [vmem:[#allocation13 + $0x10] sm:$0xff]
    %v7630 = vld [vmem:[#allocation13 + $0x18] sm:$0xff]
    %v7631 = vld [vmem:[#allocation13 + $0x20] sm:$0xff]
    %v7632 = vld [vmem:[#allocation13 + $0x28] sm:$0xff]
    %v7633 = vld [vmem:[#allocation13 + $0x30] sm:$0xff]
    %v7634 = vld [vmem:[#allocation13 + $0x38] sm:$0xff]
    %v7635 = vld [vmem:[#allocation13 + $0x40] sm:$0xff]
    %v7636 = vld [vmem:[#allocation13 + $0x48] sm:$0xff]
    %v7637 = vld [vmem:[#allocation13 + $0x50] sm:$0xff]
    %v7638 = vld [vmem:[#allocation13 + $0x58] sm:$0xff]
    %v7639 = vld [vmem:[#allocation13 + $0x60] sm:$0xff]
    %v7640 = vld [vmem:[#allocation13 + $0x68] sm:$0xff]
    %v7641 = vld [vmem:[#allocation13 + $0x70] sm:$0xff]
    %v7642 = vld [vmem:[#allocation13 + $0x78] sm:$0xff]
    %v7643 = vld [vmem:[#allocation13 + $0x80] sm:$0xff]
    %v7644 = vld [vmem:[#allocation13 + $0x88] sm:$0xff]
    %v7645 = vld [vmem:[#allocation13 + $0x90] sm:$0xff]
    %v7646 = vld [vmem:[#allocation13 + $0x98] sm:$0xff]
    %v7647 = vld [vmem:[#allocation13 + $0xa0] sm:$0xff]
    %v7648 = vld [vmem:[#allocation13 + $0xa8] sm:$0xff]
    %v7649 = vld [vmem:[#allocation13 + $0xb0] sm:$0xff]
    %v7650 = vld [vmem:[#allocation13 + $0xb8] sm:$0xff]
    %v7675 = vunpack.c.l.b16 %v7627
    %v7676 = vunpack.c.h.b16 %v7627
    %v7677 = vunpack.c.l.b16 %v7628
    %v7678 = vunpack.c.h.b16 %v7628
    %v7679 = vunpack.c.l.b16 %v7629
    %v7680 = vunpack.c.h.b16 %v7629
    %v7681 = vunpack.c.l.b16 %v7630
    %v7682 = vunpack.c.h.b16 %v7630
    %v7683 = vunpack.c.l.b16 %v7631
    %v7684 = vunpack.c.h.b16 %v7631
    %v7685 = vunpack.c.l.b16 %v7632
    %v7686 = vunpack.c.h.b16 %v7632
    %v7687 = vunpack.c.l.b16 %v7633
    %v7688 = vunpack.c.h.b16 %v7633
    %v7689 = vunpack.c.l.b16 %v7634
    %v7690 = vunpack.c.h.b16 %v7634
    %v7691 = vunpack.c.l.b16 %v7635
    %v7692 = vunpack.c.h.b16 %v7635
    %v7693 = vunpack.c.l.b16 %v7636
    %v7694 = vunpack.c.h.b16 %v7636
    %v7695 = vunpack.c.l.b16 %v7637
    %v7696 = vunpack.c.h.b16 %v7637
    %v7697 = vunpack.c.l.b16 %v7638
    %v7698 = vunpack.c.h.b16 %v7638
    %v7699 = vunpack.c.l.b16 %v7639
    %v7700 = vunpack.c.h.b16 %v7639
    %v7701 = vunpack.c.l.b16 %v7640
    %v7702 = vunpack.c.h.b16 %v7640
    %v7703 = vunpack.c.l.b16 %v7641
    %v7704 = vunpack.c.h.b16 %v7641
    %v7705 = vunpack.c.l.b16 %v7642
    %v7706 = vunpack.c.h.b16 %v7642
    %v7707 = vunpack.c.l.b16 %v7643
    %v7708 = vunpack.c.h.b16 %v7643
    %v7709 = vunpack.c.l.b16 %v7644
    %v7710 = vunpack.c.h.b16 %v7644
    %v7711 = vunpack.c.l.b16 %v7645
    %v7712 = vunpack.c.h.b16 %v7645
    %v7713 = vunpack.c.l.b16 %v7646
    %v7714 = vunpack.c.h.b16 %v7646
    %v7715 = vunpack.c.l.b16 %v7647
    %v7716 = vunpack.c.h.b16 %v7647
    %v7717 = vunpack.c.l.b16 %v7648
    %v7718 = vunpack.c.h.b16 %v7648
    %v7719 = vunpack.c.l.b16 %v7649
    %v7720 = vunpack.c.h.b16 %v7649
    %v7721 = vunpack.c.l.b16 %v7650
    %v7722 = vunpack.c.h.b16 %v7650
    %v7723 = vpack.c.b16 %v7681, %v7675
    %v7724 = vpack.c.b16 %v7682, %v7676
    %v7725 = vpack.c.b16 %v7683, %v7677
    %v7726 = vpack.c.b16 %v7684, %v7678
    %v7727 = vpack.c.b16 %v7685, %v7679
    %v7728 = vpack.c.b16 %v7686, %v7680
    %v7729 = vpack.c.b16 %v7693, %v7687
    %v7730 = vpack.c.b16 %v7694, %v7688
    %v7731 = vpack.c.b16 %v7695, %v7689
    %v7732 = vpack.c.b16 %v7696, %v7690
    %v7733 = vpack.c.b16 %v7697, %v7691
    %v7734 = vpack.c.b16 %v7698, %v7692
    %v7735 = vpack.c.b16 %v7705, %v7699
    %v7736 = vpack.c.b16 %v7706, %v7700
    %v7737 = vpack.c.b16 %v7707, %v7701
    %v7738 = vpack.c.b16 %v7708, %v7702
    %v7739 = vpack.c.b16 %v7709, %v7703
    %v7740 = vpack.c.b16 %v7710, %v7704
    %v7741 = vpack.c.b16 %v7717, %v7711
    %v7742 = vpack.c.b16 %v7718, %v7712
    %v7743 = vpack.c.b16 %v7719, %v7713
    %v7744 = vpack.c.b16 %v7720, %v7714
    %v7745 = vpack.c.b16 %v7721, %v7715
    %v7746 = vpack.c.b16 %v7722, %v7716
    %vm7771 = vcmask 523264
    %v7773 = vsel %vm7771, %v7626, 0
    %7775 = vmatpush.bf16.msra.mxu0 0
    %7776 = vmatpush.bf16.msra.mxu0 0
    %7777 = vmatpush.bf16.msra.mxu0 0
    %7778 = vmatpush.bf16.msra.mxu0 0
    %7779 = vmatpush.bf16.msra.mxu0 %v7741
    %7780 = vmatpush.bf16.msra.mxu0 %v7735
    %7781 = vmatpush.bf16.msra.mxu0 %v7729
    %7782 = vmatpush.bf16.msra.mxu0 %v7723
    %7783 = vmatmul.bf16.gmra.mxu0 %v7773
    %v7784 = vpop.f32.mrf.mxu0
    %v7785 = vadd.f32 0.0, %v7784
    %v7786 = vpop.f32.mrf.mxu0
    %7787 = vdwg.mxu0
    %7788 = vmatpush.bf16.msra.mxu0 0
    %7789 = vmatpush.bf16.msra.mxu0 0
    %7790 = vmatpush.bf16.msra.mxu0 0
    %7791 = vmatpush.bf16.msra.mxu0 0
    %7792 = vmatpush.bf16.msra.mxu0 %v7742
    %7793 = vmatpush.bf16.msra.mxu0 %v7736
    %7794 = vmatpush.bf16.msra.mxu0 %v7730
    %7795 = vmatpush.bf16.msra.mxu0 %v7724
    %7796 = vmatmul.bf16.gmra.mxu0 %v7773
    %v7797 = vpop.f32.mrf.mxu0
    %v7798 = vadd.f32 0.0, %v7797
    %v7799 = vpop.f32.mrf.mxu0
    %7800 = vdwg.mxu0
    %7801 = vmatpush.bf16.msra.mxu0 0
    %7802 = vmatpush.bf16.msra.mxu0 0
    %7803 = vmatpush.bf16.msra.mxu0 0
    %7804 = vmatpush.bf16.msra.mxu0 0
    %7805 = vmatpush.bf16.msra.mxu0 %v7743
    %7806 = vmatpush.bf16.msra.mxu0 %v7737
    %7807 = vmatpush.bf16.msra.mxu0 %v7731
    %7808 = vmatpush.bf16.msra.mxu0 %v7725
    %7809 = vmatmul.bf16.gmra.mxu0 %v7773
    %v7810 = vpop.f32.mrf.mxu0
    %v7811 = vadd.f32 0.0, %v7810
    %v7812 = vpop.f32.mrf.mxu0
    %7813 = vdwg.mxu0
    %7814 = vmatpush.bf16.msra.mxu0 0
    %7815 = vmatpush.bf16.msra.mxu0 0
    %7816 = vmatpush.bf16.msra.mxu0 0
    %7817 = vmatpush.bf16.msra.mxu0 0
    %7818 = vmatpush.bf16.msra.mxu0 %v7744
    %7819 = vmatpush.bf16.msra.mxu0 %v7738
    %7820 = vmatpush.bf16.msra.mxu0 %v7732
    %7821 = vmatpush.bf16.msra.mxu0 %v7726
    %7822 = vmatmul.bf16.gmra.mxu0 %v7773
    %v7823 = vpop.f32.mrf.mxu0
    %v7824 = vadd.f32 0.0, %v7823
    %v7825 = vpop.f32.mrf.mxu0
    %7826 = vdwg.mxu0
    %7827 = vmatpush.bf16.msra.mxu0 0
    %7828 = vmatpush.bf16.msra.mxu0 0
    %7829 = vmatpush.bf16.msra.mxu0 0
    %7830 = vmatpush.bf16.msra.mxu0 0
    %7831 = vmatpush.bf16.msra.mxu0 %v7745
    %7832 = vmatpush.bf16.msra.mxu0 %v7739
    %7833 = vmatpush.bf16.msra.mxu0 %v7733
    %7834 = vmatpush.bf16.msra.mxu0 %v7727
    %7835 = vmatmul.bf16.gmra.mxu0 %v7773
    %v7836 = vpop.f32.mrf.mxu0
    %v7837 = vadd.f32 0.0, %v7836
    %v7838 = vpop.f32.mrf.mxu0
    %7839 = vdwg.mxu0
    %7840 = vmatpush.bf16.msra.mxu0 0
    %7841 = vmatpush.bf16.msra.mxu0 0
    %7842 = vmatpush.bf16.msra.mxu0 0
    %7843 = vmatpush.bf16.msra.mxu0 0
    %7844 = vmatpush.bf16.msra.mxu0 %v7746
    %7845 = vmatpush.bf16.msra.mxu0 %v7740
    %7846 = vmatpush.bf16.msra.mxu0 %v7734
    %7847 = vmatpush.bf16.msra.mxu0 %v7728
    %7848 = vmatmul.bf16.gmra.mxu0 %v7773
    %v7849 = vpop.f32.mrf.mxu0
    %v7850 = vadd.f32 0.0, %v7849
    %v7851 = vpop.f32.mrf.mxu0
    %7852 = vdwg.mxu0
    %v7853 = vpack.c.bf16 %v7625, %v7625
    %v7855 = vsel %vm7771, %v7853, 0
    %7857 = vmatpush.bf16.msra.mxu0 0
    %7858 = vmatpush.bf16.msra.mxu0 0
    %7859 = vmatpush.bf16.msra.mxu0 0
    %7860 = vmatpush.bf16.msra.mxu0 0
    %7861 = vmatpush.bf16.msra.mxu0 %v7741
    %7862 = vmatpush.bf16.msra.mxu0 %v7735
    %7863 = vmatpush.bf16.msra.mxu0 %v7729
    %7864 = vmatpush.bf16.msra.mxu0 %v7723
    %7865 = vmatmul.bf16.gmra.mxu0 %v7855
    %v7866 = vpop.f32.mrf.mxu0
    %v7867 = vadd.f32 0.0, %v7866
    %v7868 = vpop.f32.mrf.mxu0
    %7869 = vdwg.mxu0
    %7870 = vmatpush.bf16.msra.mxu0 0
    %7871 = vmatpush.bf16.msra.mxu0 0
    %7872 = vmatpush.bf16.msra.mxu0 0
    %7873 = vmatpush.bf16.msra.mxu0 0
    %7874 = vmatpush.bf16.msra.mxu0 %v7742
    %7875 = vmatpush.bf16.msra.mxu0 %v7736
    %7876 = vmatpush.bf16.msra.mxu0 %v7730
    %7877 = vmatpush.bf16.msra.mxu0 %v7724
    %7878 = vmatmul.bf16.gmra.mxu0 %v7855
    %v7879 = vpop.f32.mrf.mxu0
    %v7880 = vadd.f32 0.0, %v7879
    %v7881 = vpop.f32.mrf.mxu0
    %7882 = vdwg.mxu0
    %7883 = vmatpush.bf16.msra.mxu0 0
    %7884 = vmatpush.bf16.msra.mxu0 0
    %7885 = vmatpush.bf16.msra.mxu0 0
    %7886 = vmatpush.bf16.msra.mxu0 0
    %7887 = vmatpush.bf16.msra.mxu0 %v7743
    %7888 = vmatpush.bf16.msra.mxu0 %v7737
    %7889 = vmatpush.bf16.msra.mxu0 %v7731
    %7890 = vmatpush.bf16.msra.mxu0 %v7725
    %7891 = vmatmul.bf16.gmra.mxu0 %v7855
    %v7892 = vpop.f32.mrf.mxu0
    %v7893 = vadd.f32 0.0, %v7892
    %v7894 = vpop.f32.mrf.mxu0
    %7895 = vdwg.mxu0
    %7896 = vmatpush.bf16.msra.mxu0 0
    %7897 = vmatpush.bf16.msra.mxu0 0
    %7898 = vmatpush.bf16.msra.mxu0 0
    %7899 = vmatpush.bf16.msra.mxu0 0
    %7900 = vmatpush.bf16.msra.mxu0 %v7744
    %7901 = vmatpush.bf16.msra.mxu0 %v7738
    %7902 = vmatpush.bf16.msra.mxu0 %v7732
    %7903 = vmatpush.bf16.msra.mxu0 %v7726
    %7904 = vmatmul.bf16.gmra.mxu0 %v7855
    %v7905 = vpop.f32.mrf.mxu0
    %v7906 = vadd.f32 0.0, %v7905
    %v7907 = vpop.f32.mrf.mxu0
    %7908 = vdwg.mxu0
    %7909 = vmatpush.bf16.msra.mxu0 0
    %7910 = vmatpush.bf16.msra.mxu0 0
    %7911 = vmatpush.bf16.msra.mxu0 0
    %7912 = vmatpush.bf16.msra.mxu0 0
    %7913 = vmatpush.bf16.msra.mxu0 %v7745
    %7914 = vmatpush.bf16.msra.mxu0 %v7739
    %7915 = vmatpush.bf16.msra.mxu0 %v7733
    %7916 = vmatpush.bf16.msra.mxu0 %v7727
    %7917 = vmatmul.bf16.gmra.mxu0 %v7855
    %v7918 = vpop.f32.mrf.mxu0
    %v7919 = vadd.f32 0.0, %v7918
    %v7920 = vpop.f32.mrf.mxu0
    %7921 = vdwg.mxu0
    %7922 = vmatpush.bf16.msra.mxu0 0
    %7923 = vmatpush.bf16.msra.mxu0 0
    %7924 = vmatpush.bf16.msra.mxu0 0
    %7925 = vmatpush.bf16.msra.mxu0 0
    %7926 = vmatpush.bf16.msra.mxu0 %v7746
    %7927 = vmatpush.bf16.msra.mxu0 %v7740
    %7928 = vmatpush.bf16.msra.mxu0 %v7734
    %7929 = vmatpush.bf16.msra.mxu0 %v7728
    %7930 = vmatmul.bf16.gmra.mxu0 %v7855
    %v7931 = vpop.f32.mrf.mxu0
    %v7932 = vadd.f32 0.0, %v7931
    %v7933 = vpop.f32.mrf.mxu0
    %7934 = vdwg.mxu0
    %v7935 = vld [vmem:[#allocation23] sm:$0x3]
    %v7936 = vld [vmem:[#allocation3] sm:$0xff]
    %v7937 = vld [vmem:[#allocation3 + $0x8] sm:$0xff]
    %v7938 = vld [vmem:[#allocation3 + $0x10] sm:$0xff]
    %v7939 = vld [vmem:[#allocation3 + $0x18] sm:$0xff]
    %v7940 = vld [vmem:[#allocation3 + $0x20] sm:$0xff]
    %v7941 = vld [vmem:[#allocation3 + $0x28] sm:$0xff]
    %v7942 = vld [vmem:[#allocation3 + $0x30] sm:$0x7]
    %v7943 = vld [vmem:[#allocation3 + $0x38] sm:$0x7]
    %v7944 = vld [vmem:[#allocation3 + $0x40] sm:$0x7]
    %v7945 = vld [vmem:[#allocation3 + $0x48] sm:$0x7]
    %v7946 = vld [vmem:[#allocation3 + $0x50] sm:$0x7]
    %v7947 = vld [vmem:[#allocation3 + $0x58] sm:$0x7]
    %v7948 = vperm.slane %v7785, 0
    %v7949 = vperm.slane %v7798, 0
    %v7950 = vperm.slane %v7811, 0
    %v7951 = vperm.slane %v7824, 0
    %v7952 = vperm.slane %v7837, 0
    %v7953 = vperm.slane %v7850, 0
    %v7954 = vmul.f32 %v7936, %v7948
    %v7955 = vmul.f32 %v7937, %v7949
    %v7956 = vmul.f32 %v7938, %v7950
    %v7957 = vmul.f32 %v7939, %v7951
    %v7958 = vmul.f32 %v7940, %v7952
    %v7959 = vmul.f32 %v7941, %v7953
    %v7960 = vmul.f32 %v7942, %v7948
    %v7961 = vmul.f32 %v7943, %v7949
    %v7962 = vmul.f32 %v7944, %v7950
    %v7963 = vmul.f32 %v7945, %v7951
    %v7964 = vmul.f32 %v7946, %v7952
    %v7965 = vmul.f32 %v7947, %v7953
    %v7966 = vperm.slane %v7867, 0
    %v7967 = vperm.slane %v7880, 0
    %v7968 = vperm.slane %v7893, 0
    %v7969 = vperm.slane %v7906, 0
    %v7970 = vperm.slane %v7919, 0
    %v7971 = vperm.slane %v7932, 0
    %v7972 = vadd.f32 %v7954, %v7966
    %v7973 = vadd.f32 %v7955, %v7967
    %v7974 = vadd.f32 %v7956, %v7968
    %v7975 = vadd.f32 %v7957, %v7969
    %v7976 = vadd.f32 %v7958, %v7970
    %v7977 = vadd.f32 %v7959, %v7971
    %v7978 = vadd.f32 %v7960, %v7966
    %v7979 = vadd.f32 %v7961, %v7967
    %v7980 = vadd.f32 %v7962, %v7968
    %v7981 = vadd.f32 %v7963, %v7969
    %v7982 = vadd.f32 %v7964, %v7970
    %v7983 = vadd.f32 %v7965, %v7971
    %v7984 = vmax.f32 %v7972, 0.0
    %v7985 = vmax.f32 %v7973, 0.0
    %v7986 = vmax.f32 %v7974, 0.0
    %v7987 = vmax.f32 %v7975, 0.0
    %v7988 = vmax.f32 %v7976, 0.0
    %v7989 = vmax.f32 %v7977, 0.0
    %v7990 = vmax.f32 %v7978, 0.0
    %v7991 = vmax.f32 %v7979, 0.0
    %v7992 = vmax.f32 %v7980, 0.0
    %v7993 = vmax.f32 %v7981, 0.0
    %v7994 = vmax.f32 %v7982, 0.0
    %v7995 = vmax.f32 %v7983, 0.0
    %v7996 = vmax.f32 %v7984, %v7987
    %v7997 = vmax.f32 %v7985, %v7988
    %v7998 = vmax.f32 %v7986, %v7989
    %v7999 = vmax.f32 %v7990, %v7993
    %v8000 = vmax.f32 %v7991, %v7994
    %v8001 = vmax.f32 %v7992, %v7995
    %v8002 = vpack.c.bf16 %v7999, %v7996
    %v8003 = vpack.c.bf16 %v8000, %v7997
    %v8004 = vpack.c.bf16 %v8001, %v7998
    %v8007 = vunpack.c.l.b16 %v1934
    %v8008 = vunpack.c.l.b16 %v1935
    %v8009 = vpack.c.b16 %v8008, %v8007
    %vm8010 = vcmask 89088
    %v8012 = vsel %vm8010, %v8009, 0
    %v8014 = vsel %vm2037, 4294967295, 65535
    %v8015 = vsel %vm330, %v8014, 0
    %v8017 = vand.u32 %v8002, %v8015
    %v8020 = vand.u32 %v8003, %v8015
    %v8023 = vand.u32 %v8004, %v8015
    %8025 = vmatpush.bf16.msra.mxu0 0
    %8026 = vmatpush.bf16.msra.mxu0 0
    %8027 = vmatpush.bf16.msra.mxu0 0
    %8028 = vmatpush.bf16.msra.mxu0 0
    %8029 = vmatpush.bf16.msra.mxu0 0
    %8030 = vmatpush.bf16.msra.mxu0 0
    %8031 = vmatpush.bf16.msra.mxu0 0
    %8032 = vmatpush.bf16.msra.mxu0 %v8017
    %8033 = vmatmul.bf16.gmra.mxu0 %v8012
    %v8034 = vpop.f32.mrf.mxu0
    %v8035 = vadd.f32 0.0, %v8034
    %v8036 = vpop.f32.mrf.mxu0
    %v8037 = vadd.f32 0.0, %v8036
    %8038 = vdwg.mxu0
    %8039 = vmatpush.bf16.msra.mxu0 0
    %8040 = vmatpush.bf16.msra.mxu0 0
    %8041 = vmatpush.bf16.msra.mxu0 0
    %8042 = vmatpush.bf16.msra.mxu0 0
    %8043 = vmatpush.bf16.msra.mxu0 0
    %8044 = vmatpush.bf16.msra.mxu0 0
    %8045 = vmatpush.bf16.msra.mxu0 0
    %8046 = vmatpush.bf16.msra.mxu0 %v8020
    %8047 = vmatmul.bf16.gmra.mxu0 %v8012
    %v8048 = vpop.f32.mrf.mxu0
    %v8049 = vadd.f32 0.0, %v8048
    %v8050 = vpop.f32.mrf.mxu0
    %v8051 = vadd.f32 0.0, %v8050
    %8052 = vdwg.mxu0
    %8053 = vmatpush.bf16.msra.mxu0 0
    %8054 = vmatpush.bf16.msra.mxu0 0
    %8055 = vmatpush.bf16.msra.mxu0 0
    %8056 = vmatpush.bf16.msra.mxu0 0
    %8057 = vmatpush.bf16.msra.mxu0 0
    %8058 = vmatpush.bf16.msra.mxu0 0
    %8059 = vmatpush.bf16.msra.mxu0 0
    %8060 = vmatpush.bf16.msra.mxu0 %v8023
    %8061 = vmatmul.bf16.gmra.mxu0 %v8012
    %v8062 = vpop.f32.mrf.mxu0
    %v8063 = vadd.f32 0.0, %v8062
    %v8064 = vpop.f32.mrf.mxu0
    %v8065 = vadd.f32 0.0, %v8064
    %8066 = vdwg.mxu0
    %v8073 = vrot.slane %v8035, 5
    %v8074 = vrot.slane %v8037, 5
    %v8075 = vsel %vm2088, %v8073, %v8074
    %v8076 = vrot.slane %v8049, 5
    %v8077 = vrot.slane %v8051, 5
    %v8078 = vsel %vm2088, %v8076, %v8077
    %v8079 = vrot.slane %v8063, 5
    %v8080 = vrot.slane %v8065, 5
    %v8081 = vsel %vm2088, %v8079, %v8080
    %v8085 = vmax.f32 %v8035, %v8075
    %v8086 = vmax.f32 %v8049, %v8078
    %v8087 = vmax.f32 %v8063, %v8081
    %v8088 = vpack.c.bf16 %v8085, %v8085
    %v8089 = vpack.c.bf16 %v8086, %v8086
    %v8090 = vpack.c.bf16 %v8087, %v8087
    %v8091 = vld [vmem:[#allocation10] sm:$0xff]
    %v8092 = vld [vmem:[#allocation10 + $0x8] sm:$0xff]
    %v8093 = vld [vmem:[#allocation10 + $0x10] sm:$0xff]
    %v8094 = vld [vmem:[#allocation10 + $0x18] sm:$0xff]
    %v8095 = vld [vmem:[#allocation10 + $0x20] sm:$0xff]
    %v8096 = vld [vmem:[#allocation10 + $0x28] sm:$0xff]
    %v8097 = vld [vmem:[#allocation10 + $0x30] sm:$0xff]
    %v8098 = vld [vmem:[#allocation10 + $0x38] sm:$0xff]
    %v8099 = vld [vmem:[#allocation10 + $0x40] sm:$0xff]
    %v8100 = vld [vmem:[#allocation10 + $0x48] sm:$0xff]
    %v8101 = vld [vmem:[#allocation10 + $0x50] sm:$0xff]
    %v8102 = vld [vmem:[#allocation10 + $0x58] sm:$0xff]
    %v8103 = vld [vmem:[#allocation10 + $0x60] sm:$0xff]
    %v8104 = vld [vmem:[#allocation10 + $0x68] sm:$0xff]
    %v8105 = vld [vmem:[#allocation10 + $0x70] sm:$0xff]
    %v8106 = vld [vmem:[#allocation10 + $0x78] sm:$0xff]
    %v8107 = vld [vmem:[#allocation10 + $0x80] sm:$0xff]
    %v8108 = vld [vmem:[#allocation10 + $0x88] sm:$0xff]
    %v8109 = vld [vmem:[#allocation10 + $0x90] sm:$0xff]
    %v8110 = vld [vmem:[#allocation10 + $0x98] sm:$0xff]
    %v8111 = vld [vmem:[#allocation10 + $0xa0] sm:$0xff]
    %v8112 = vld [vmem:[#allocation10 + $0xa8] sm:$0xff]
    %v8113 = vld [vmem:[#allocation10 + $0xb0] sm:$0xff]
    %v8114 = vld [vmem:[#allocation10 + $0xb8] sm:$0xff]
    %v8115 = vld [vmem:[#allocation10 + $0xc0] sm:$0xff]
    %v8116 = vld [vmem:[#allocation10 + $0xc8] sm:$0xff]
    %v8117 = vld [vmem:[#allocation10 + $0xd0] sm:$0xff]
    %v8118 = vld [vmem:[#allocation10 + $0xd8] sm:$0xff]
    %v8119 = vld [vmem:[#allocation10 + $0xe0] sm:$0xff]
    %v8120 = vld [vmem:[#allocation10 + $0xe8] sm:$0xff]
    %v8121 = vld [vmem:[#allocation10 + $0xf0] sm:$0xff]
    %v8122 = vld [vmem:[#allocation10 + $0xf8] sm:$0xff]
    %v8123 = vld [vmem:[#allocation10 + $0x100] sm:$0xff]
    %v8124 = vld [vmem:[#allocation10 + $0x108] sm:$0xff]
    %v8125 = vld [vmem:[#allocation10 + $0x110] sm:$0xff]
    %v8126 = vld [vmem:[#allocation10 + $0x118] sm:$0xff]
    %v8127 = vld [vmem:[#allocation10 + $0x120] sm:$0xff]
    %v8128 = vld [vmem:[#allocation10 + $0x128] sm:$0xff]
    %v8129 = vld [vmem:[#allocation10 + $0x130] sm:$0xff]
    %v8130 = vld [vmem:[#allocation10 + $0x138] sm:$0xff]
    %v8131 = vld [vmem:[#allocation10 + $0x140] sm:$0xff]
    %v8132 = vld [vmem:[#allocation10 + $0x148] sm:$0xff]
    %v8133 = vld [vmem:[#allocation10 + $0x150] sm:$0xff]
    %v8134 = vld [vmem:[#allocation10 + $0x158] sm:$0xff]
    %v8135 = vld [vmem:[#allocation10 + $0x160] sm:$0xff]
    %v8136 = vld [vmem:[#allocation10 + $0x168] sm:$0xff]
    %v8137 = vld [vmem:[#allocation10 + $0x170] sm:$0xff]
    %v8138 = vld [vmem:[#allocation10 + $0x178] sm:$0xff]
    %s8139 = scalar_lea.vmem [#allocation10], 384
    %v8140 = vld [vmem:[%s8139] sm:$0xff]
    %v8141 = vld [vmem:[%s8139 + $0x8] sm:$0xff]
    %v8142 = vld [vmem:[%s8139 + $0x10] sm:$0xff]
    %v8143 = vld [vmem:[%s8139 + $0x18] sm:$0xff]
    %v8144 = vld [vmem:[%s8139 + $0x20] sm:$0xff]
    %v8145 = vld [vmem:[%s8139 + $0x28] sm:$0xff]
    %v8146 = vld [vmem:[%s8139 + $0x30] sm:$0xff]
    %v8147 = vld [vmem:[%s8139 + $0x38] sm:$0xff]
    %v8148 = vld [vmem:[%s8139 + $0x40] sm:$0xff]
    %v8149 = vld [vmem:[%s8139 + $0x48] sm:$0xff]
    %v8150 = vld [vmem:[%s8139 + $0x50] sm:$0xff]
    %v8151 = vld [vmem:[%s8139 + $0x58] sm:$0xff]
    %v8152 = vld [vmem:[%s8139 + $0x60] sm:$0xff]
    %v8153 = vld [vmem:[%s8139 + $0x68] sm:$0xff]
    %v8154 = vld [vmem:[%s8139 + $0x70] sm:$0xff]
    %v8155 = vld [vmem:[%s8139 + $0x78] sm:$0xff]
    %v8156 = vld [vmem:[%s8139 + $0x80] sm:$0xff]
    %v8157 = vld [vmem:[%s8139 + $0x88] sm:$0xff]
    %v8158 = vld [vmem:[%s8139 + $0x90] sm:$0xff]
    %v8159 = vld [vmem:[%s8139 + $0x98] sm:$0xff]
    %v8160 = vld [vmem:[%s8139 + $0xa0] sm:$0xff]
    %v8161 = vld [vmem:[%s8139 + $0xa8] sm:$0xff]
    %v8162 = vld [vmem:[%s8139 + $0xb0] sm:$0xff]
    %v8163 = vld [vmem:[%s8139 + $0xb8] sm:$0xff]
    %v8164 = vld [vmem:[%s8139 + $0xc0] sm:$0xff]
    %v8165 = vld [vmem:[%s8139 + $0xc8] sm:$0xff]
    %v8166 = vld [vmem:[%s8139 + $0xd0] sm:$0xff]
    %v8167 = vld [vmem:[%s8139 + $0xd8] sm:$0xff]
    %v8168 = vld [vmem:[%s8139 + $0xe0] sm:$0xff]
    %v8169 = vld [vmem:[%s8139 + $0xe8] sm:$0xff]
    %v8170 = vld [vmem:[%s8139 + $0xf0] sm:$0xff]
    %v8171 = vld [vmem:[%s8139 + $0xf8] sm:$0xff]
    %v8172 = vld [vmem:[%s8139 + $0x100] sm:$0xff]
    %v8173 = vld [vmem:[%s8139 + $0x108] sm:$0xff]
    %v8174 = vld [vmem:[%s8139 + $0x110] sm:$0xff]
    %v8175 = vld [vmem:[%s8139 + $0x118] sm:$0xff]
    %v8176 = vld [vmem:[%s8139 + $0x120] sm:$0xff]
    %v8177 = vld [vmem:[%s8139 + $0x128] sm:$0xff]
    %v8178 = vld [vmem:[%s8139 + $0x130] sm:$0xff]
    %v8179 = vld [vmem:[%s8139 + $0x138] sm:$0xff]
    %v8180 = vld [vmem:[%s8139 + $0x140] sm:$0xff]
    %v8181 = vld [vmem:[%s8139 + $0x148] sm:$0xff]
    %v8182 = vld [vmem:[%s8139 + $0x150] sm:$0xff]
    %v8183 = vld [vmem:[%s8139 + $0x158] sm:$0xff]
    %v8184 = vld [vmem:[%s8139 + $0x160] sm:$0xff]
    %v8185 = vld [vmem:[%s8139 + $0x168] sm:$0xff]
    %v8186 = vld [vmem:[%s8139 + $0x170] sm:$0xff]
    %v8187 = vld [vmem:[%s8139 + $0x178] sm:$0xff]
    %v8189 = vshrl.u32 %v8088, 16
    %v8192 = vshrl.u32 %v8089, 16
    %v8195 = vshrl.u32 %v8090, 16
    %v8248 = vunpack.c.l.b16 %v8140
    %v8249 = vunpack.c.h.b16 %v8140
    %v8250 = vunpack.c.l.b16 %v8141
    %v8251 = vunpack.c.h.b16 %v8141
    %v8252 = vunpack.c.l.b16 %v8142
    %v8253 = vunpack.c.h.b16 %v8142
    %v8254 = vunpack.c.l.b16 %v8143
    %v8255 = vunpack.c.h.b16 %v8143
    %v8256 = vunpack.c.l.b16 %v8144
    %v8257 = vunpack.c.h.b16 %v8144
    %v8258 = vunpack.c.l.b16 %v8145
    %v8259 = vunpack.c.h.b16 %v8145
    %v8260 = vunpack.c.l.b16 %v8146
    %v8261 = vunpack.c.h.b16 %v8146
    %v8262 = vunpack.c.l.b16 %v8147
    %v8263 = vunpack.c.h.b16 %v8147
    %v8264 = vunpack.c.l.b16 %v8148
    %v8265 = vunpack.c.h.b16 %v8148
    %v8266 = vunpack.c.l.b16 %v8149
    %v8267 = vunpack.c.h.b16 %v8149
    %v8268 = vunpack.c.l.b16 %v8150
    %v8269 = vunpack.c.h.b16 %v8150
    %v8270 = vunpack.c.l.b16 %v8151
    %v8271 = vunpack.c.h.b16 %v8151
    %v8272 = vunpack.c.l.b16 %v8152
    %v8273 = vunpack.c.h.b16 %v8152
    %v8274 = vunpack.c.l.b16 %v8153
    %v8275 = vunpack.c.h.b16 %v8153
    %v8276 = vunpack.c.l.b16 %v8154
    %v8277 = vunpack.c.h.b16 %v8154
    %v8278 = vunpack.c.l.b16 %v8155
    %v8279 = vunpack.c.h.b16 %v8155
    %v8280 = vunpack.c.l.b16 %v8156
    %v8281 = vunpack.c.h.b16 %v8156
    %v8282 = vunpack.c.l.b16 %v8157
    %v8283 = vunpack.c.h.b16 %v8157
    %v8284 = vunpack.c.l.b16 %v8158
    %v8285 = vunpack.c.h.b16 %v8158
    %v8286 = vunpack.c.l.b16 %v8159
    %v8287 = vunpack.c.h.b16 %v8159
    %v8288 = vunpack.c.l.b16 %v8160
    %v8289 = vunpack.c.h.b16 %v8160
    %v8290 = vunpack.c.l.b16 %v8161
    %v8291 = vunpack.c.h.b16 %v8161
    %v8292 = vunpack.c.l.b16 %v8162
    %v8293 = vunpack.c.h.b16 %v8162
    %v8294 = vunpack.c.l.b16 %v8163
    %v8295 = vunpack.c.h.b16 %v8163
    %v8296 = vunpack.c.l.b16 %v8164
    %v8297 = vunpack.c.h.b16 %v8164
    %v8298 = vunpack.c.l.b16 %v8165
    %v8299 = vunpack.c.h.b16 %v8165
    %v8300 = vunpack.c.l.b16 %v8166
    %v8301 = vunpack.c.h.b16 %v8166
    %v8302 = vunpack.c.l.b16 %v8167
    %v8303 = vunpack.c.h.b16 %v8167
    %v8304 = vunpack.c.l.b16 %v8168
    %v8305 = vunpack.c.h.b16 %v8168
    %v8306 = vunpack.c.l.b16 %v8169
    %v8307 = vunpack.c.h.b16 %v8169
    %v8308 = vunpack.c.l.b16 %v8170
    %v8309 = vunpack.c.h.b16 %v8170
    %v8310 = vunpack.c.l.b16 %v8171
    %v8311 = vunpack.c.h.b16 %v8171
    %v8312 = vunpack.c.l.b16 %v8172
    %v8313 = vunpack.c.h.b16 %v8172
    %v8314 = vunpack.c.l.b16 %v8173
    %v8315 = vunpack.c.h.b16 %v8173
    %v8316 = vunpack.c.l.b16 %v8174
    %v8317 = vunpack.c.h.b16 %v8174
    %v8318 = vunpack.c.l.b16 %v8175
    %v8319 = vunpack.c.h.b16 %v8175
    %v8320 = vunpack.c.l.b16 %v8176
    %v8321 = vunpack.c.h.b16 %v8176
    %v8322 = vunpack.c.l.b16 %v8177
    %v8323 = vunpack.c.h.b16 %v8177
    %v8324 = vunpack.c.l.b16 %v8178
    %v8325 = vunpack.c.h.b16 %v8178
    %v8326 = vunpack.c.l.b16 %v8179
    %v8327 = vunpack.c.h.b16 %v8179
    %v8328 = vunpack.c.l.b16 %v8180
    %v8329 = vunpack.c.h.b16 %v8180
    %v8330 = vunpack.c.l.b16 %v8181
    %v8331 = vunpack.c.h.b16 %v8181
    %v8332 = vunpack.c.l.b16 %v8182
    %v8333 = vunpack.c.h.b16 %v8182
    %v8334 = vunpack.c.l.b16 %v8183
    %v8335 = vunpack.c.h.b16 %v8183
    %v8336 = vunpack.c.l.b16 %v8184
    %v8337 = vunpack.c.h.b16 %v8184
    %v8338 = vunpack.c.l.b16 %v8185
    %v8339 = vunpack.c.h.b16 %v8185
    %v8340 = vunpack.c.l.b16 %v8186
    %v8341 = vunpack.c.h.b16 %v8186
    %v8342 = vunpack.c.l.b16 %v8187
    %v8343 = vunpack.c.h.b16 %v8187
    %v8344 = vpack.c.b16 %v8250, %v8248
    %v8345 = vpack.c.b16 %v8251, %v8249
    %v8346 = vpack.c.b16 %v8254, %v8252
    %v8347 = vpack.c.b16 %v8255, %v8253
    %v8348 = vpack.c.b16 %v8258, %v8256
    %v8349 = vpack.c.b16 %v8259, %v8257
    %v8350 = vpack.c.b16 %v8262, %v8260
    %v8351 = vpack.c.b16 %v8263, %v8261
    %v8352 = vpack.c.b16 %v8266, %v8264
    %v8353 = vpack.c.b16 %v8267, %v8265
    %v8354 = vpack.c.b16 %v8270, %v8268
    %v8355 = vpack.c.b16 %v8271, %v8269
    %v8356 = vpack.c.b16 %v8274, %v8272
    %v8357 = vpack.c.b16 %v8275, %v8273
    %v8358 = vpack.c.b16 %v8278, %v8276
    %v8359 = vpack.c.b16 %v8279, %v8277
    %v8360 = vpack.c.b16 %v8282, %v8280
    %v8361 = vpack.c.b16 %v8283, %v8281
    %v8362 = vpack.c.b16 %v8286, %v8284
    %v8363 = vpack.c.b16 %v8287, %v8285
    %v8364 = vpack.c.b16 %v8290, %v8288
    %v8365 = vpack.c.b16 %v8291, %v8289
    %v8366 = vpack.c.b16 %v8294, %v8292
    %v8367 = vpack.c.b16 %v8295, %v8293
    %v8368 = vpack.c.b16 %v8298, %v8296
    %v8369 = vpack.c.b16 %v8299, %v8297
    %v8370 = vpack.c.b16 %v8302, %v8300
    %v8371 = vpack.c.b16 %v8303, %v8301
    %v8372 = vpack.c.b16 %v8306, %v8304
    %v8373 = vpack.c.b16 %v8307, %v8305
    %v8374 = vpack.c.b16 %v8310, %v8308
    %v8375 = vpack.c.b16 %v8311, %v8309
    %v8376 = vpack.c.b16 %v8314, %v8312
    %v8377 = vpack.c.b16 %v8315, %v8313
    %v8378 = vpack.c.b16 %v8318, %v8316
    %v8379 = vpack.c.b16 %v8319, %v8317
    %v8380 = vpack.c.b16 %v8322, %v8320
    %v8381 = vpack.c.b16 %v8323, %v8321
    %v8382 = vpack.c.b16 %v8326, %v8324
    %v8383 = vpack.c.b16 %v8327, %v8325
    %v8384 = vpack.c.b16 %v8330, %v8328
    %v8385 = vpack.c.b16 %v8331, %v8329
    %v8386 = vpack.c.b16 %v8334, %v8332
    %v8387 = vpack.c.b16 %v8335, %v8333
    %v8388 = vpack.c.b16 %v8338, %v8336
    %v8389 = vpack.c.b16 %v8339, %v8337
    %v8390 = vpack.c.b16 %v8342, %v8340
    %v8391 = vpack.c.b16 %v8343, %v8341
    %8440 = vmatpush.bf16.msra.mxu0 %v8358
    %8441 = vmatpush.bf16.msra.mxu0 %v8356
    %8442 = vmatpush.bf16.msra.mxu0 %v8354
    %8443 = vmatpush.bf16.msra.mxu0 %v8352
    %8444 = vmatpush.bf16.msra.mxu0 %v8350
    %8445 = vmatpush.bf16.msra.mxu0 %v8348
    %8446 = vmatpush.bf16.msra.mxu0 %v8346
    %8447 = vmatpush.bf16.msra.mxu0 %v8344
    %8448 = vmatmul.bf16.gmra.mxu0 %v8189
    %v8449 = vpop.f32.mrf.mxu0
    %v8450 = vadd.f32 0.0, %v8449
    %v8451 = vpop.f32.mrf.mxu0
    %8452 = vdwg.mxu0
    %8453 = vmatpush.bf16.msra.mxu0 %v8374
    %8454 = vmatpush.bf16.msra.mxu0 %v8372
    %8455 = vmatpush.bf16.msra.mxu0 %v8370
    %8456 = vmatpush.bf16.msra.mxu0 %v8368
    %8457 = vmatpush.bf16.msra.mxu0 %v8366
    %8458 = vmatpush.bf16.msra.mxu0 %v8364
    %8459 = vmatpush.bf16.msra.mxu0 %v8362
    %8460 = vmatpush.bf16.msra.mxu0 %v8360
    %8461 = vmatmul.bf16.gmra.mxu0 %v8192
    %v8462 = vpop.f32.mrf.mxu0
    %v8463 = vadd.f32 %v8450, %v8462
    %v8464 = vpop.f32.mrf.mxu0
    %8465 = vdwg.mxu0
    %8466 = vmatpush.bf16.msra.mxu0 %v8390
    %8467 = vmatpush.bf16.msra.mxu0 %v8388
    %8468 = vmatpush.bf16.msra.mxu0 %v8386
    %8469 = vmatpush.bf16.msra.mxu0 %v8384
    %8470 = vmatpush.bf16.msra.mxu0 %v8382
    %8471 = vmatpush.bf16.msra.mxu0 %v8380
    %8472 = vmatpush.bf16.msra.mxu0 %v8378
    %8473 = vmatpush.bf16.msra.mxu0 %v8376
    %8474 = vmatmul.bf16.gmra.mxu0 %v8195
    %v8475 = vpop.f32.mrf.mxu0
    %v8476 = vadd.f32 %v8463, %v8475
    %v8477 = vpop.f32.mrf.mxu0
    %8478 = vdwg.mxu0
    %8479 = vmatpush.bf16.msra.mxu0 %v8359
    %8480 = vmatpush.bf16.msra.mxu0 %v8357
    %8481 = vmatpush.bf16.msra.mxu0 %v8355
    %8482 = vmatpush.bf16.msra.mxu0 %v8353
    %8483 = vmatpush.bf16.msra.mxu0 %v8351
    %8484 = vmatpush.bf16.msra.mxu0 %v8349
    %8485 = vmatpush.bf16.msra.mxu0 %v8347
    %8486 = vmatpush.bf16.msra.mxu0 %v8345
    %8487 = vmatmul.bf16.gmra.mxu0 %v8189
    %v8488 = vpop.f32.mrf.mxu0
    %v8489 = vadd.f32 0.0, %v8488
    %v8490 = vpop.f32.mrf.mxu0
    %8491 = vdwg.mxu0
    %8492 = vmatpush.bf16.msra.mxu0 %v8375
    %8493 = vmatpush.bf16.msra.mxu0 %v8373
    %8494 = vmatpush.bf16.msra.mxu0 %v8371
    %8495 = vmatpush.bf16.msra.mxu0 %v8369
    %8496 = vmatpush.bf16.msra.mxu0 %v8367
    %8497 = vmatpush.bf16.msra.mxu0 %v8365
    %8498 = vmatpush.bf16.msra.mxu0 %v8363
    %8499 = vmatpush.bf16.msra.mxu0 %v8361
    %8500 = vmatmul.bf16.gmra.mxu0 %v8192
    %v8501 = vpop.f32.mrf.mxu0
    %v8502 = vadd.f32 %v8489, %v8501
    %v8503 = vpop.f32.mrf.mxu0
    %8504 = vdwg.mxu0
    %8505 = vmatpush.bf16.msra.mxu0 %v8391
    %8506 = vmatpush.bf16.msra.mxu0 %v8389
    %8507 = vmatpush.bf16.msra.mxu0 %v8387
    %8508 = vmatpush.bf16.msra.mxu0 %v8385
    %8509 = vmatpush.bf16.msra.mxu0 %v8383
    %8510 = vmatpush.bf16.msra.mxu0 %v8381
    %8511 = vmatpush.bf16.msra.mxu0 %v8379
    %8512 = vmatpush.bf16.msra.mxu0 %v8377
    %8513 = vmatmul.bf16.gmra.mxu0 %v8195
    %v8514 = vpop.f32.mrf.mxu0
    %v8515 = vadd.f32 %v8502, %v8514
    %v8516 = vpop.f32.mrf.mxu0
    %8517 = vdwg.mxu0
    %v8566 = vunpack.c.l.b16 %v8091
    %v8567 = vunpack.c.h.b16 %v8091
    %v8568 = vunpack.c.l.b16 %v8092
    %v8569 = vunpack.c.h.b16 %v8092
    %v8570 = vunpack.c.l.b16 %v8093
    %v8571 = vunpack.c.h.b16 %v8093
    %v8572 = vunpack.c.l.b16 %v8094
    %v8573 = vunpack.c.h.b16 %v8094
    %v8574 = vunpack.c.l.b16 %v8095
    %v8575 = vunpack.c.h.b16 %v8095
    %v8576 = vunpack.c.l.b16 %v8096
    %v8577 = vunpack.c.h.b16 %v8096
    %v8578 = vunpack.c.l.b16 %v8097
    %v8579 = vunpack.c.h.b16 %v8097
    %v8580 = vunpack.c.l.b16 %v8098
    %v8581 = vunpack.c.h.b16 %v8098
    %v8582 = vunpack.c.l.b16 %v8099
    %v8583 = vunpack.c.h.b16 %v8099
    %v8584 = vunpack.c.l.b16 %v8100
    %v8585 = vunpack.c.h.b16 %v8100
    %v8586 = vunpack.c.l.b16 %v8101
    %v8587 = vunpack.c.h.b16 %v8101
    %v8588 = vunpack.c.l.b16 %v8102
    %v8589 = vunpack.c.h.b16 %v8102
    %v8590 = vunpack.c.l.b16 %v8103
    %v8591 = vunpack.c.h.b16 %v8103
    %v8592 = vunpack.c.l.b16 %v8104
    %v8593 = vunpack.c.h.b16 %v8104
    %v8594 = vunpack.c.l.b16 %v8105
    %v8595 = vunpack.c.h.b16 %v8105
    %v8596 = vunpack.c.l.b16 %v8106
    %v8597 = vunpack.c.h.b16 %v8106
    %v8598 = vunpack.c.l.b16 %v8107
    %v8599 = vunpack.c.h.b16 %v8107
    %v8600 = vunpack.c.l.b16 %v8108
    %v8601 = vunpack.c.h.b16 %v8108
    %v8602 = vunpack.c.l.b16 %v8109
    %v8603 = vunpack.c.h.b16 %v8109
    %v8604 = vunpack.c.l.b16 %v8110
    %v8605 = vunpack.c.h.b16 %v8110
    %v8606 = vunpack.c.l.b16 %v8111
    %v8607 = vunpack.c.h.b16 %v8111
    %v8608 = vunpack.c.l.b16 %v8112
    %v8609 = vunpack.c.h.b16 %v8112
    %v8610 = vunpack.c.l.b16 %v8113
    %v8611 = vunpack.c.h.b16 %v8113
    %v8612 = vunpack.c.l.b16 %v8114
    %v8613 = vunpack.c.h.b16 %v8114
    %v8614 = vunpack.c.l.b16 %v8115
    %v8615 = vunpack.c.h.b16 %v8115
    %v8616 = vunpack.c.l.b16 %v8116
    %v8617 = vunpack.c.h.b16 %v8116
    %v8618 = vunpack.c.l.b16 %v8117
    %v8619 = vunpack.c.h.b16 %v8117
    %v8620 = vunpack.c.l.b16 %v8118
    %v8621 = vunpack.c.h.b16 %v8118
    %v8622 = vunpack.c.l.b16 %v8119
    %v8623 = vunpack.c.h.b16 %v8119
    %v8624 = vunpack.c.l.b16 %v8120
    %v8625 = vunpack.c.h.b16 %v8120
    %v8626 = vunpack.c.l.b16 %v8121
    %v8627 = vunpack.c.h.b16 %v8121
    %v8628 = vunpack.c.l.b16 %v8122
    %v8629 = vunpack.c.h.b16 %v8122
    %v8630 = vunpack.c.l.b16 %v8123
    %v8631 = vunpack.c.h.b16 %v8123
    %v8632 = vunpack.c.l.b16 %v8124
    %v8633 = vunpack.c.h.b16 %v8124
    %v8634 = vunpack.c.l.b16 %v8125
    %v8635 = vunpack.c.h.b16 %v8125
    %v8636 = vunpack.c.l.b16 %v8126
    %v8637 = vunpack.c.h.b16 %v8126
    %v8638 = vunpack.c.l.b16 %v8127
    %v8639 = vunpack.c.h.b16 %v8127
    %v8640 = vunpack.c.l.b16 %v8128
    %v8641 = vunpack.c.h.b16 %v8128
    %v8642 = vunpack.c.l.b16 %v8129
    %v8643 = vunpack.c.h.b16 %v8129
    %v8644 = vunpack.c.l.b16 %v8130
    %v8645 = vunpack.c.h.b16 %v8130
    %v8646 = vunpack.c.l.b16 %v8131
    %v8647 = vunpack.c.h.b16 %v8131
    %v8648 = vunpack.c.l.b16 %v8132
    %v8649 = vunpack.c.h.b16 %v8132
    %v8650 = vunpack.c.l.b16 %v8133
    %v8651 = vunpack.c.h.b16 %v8133
    %v8652 = vunpack.c.l.b16 %v8134
    %v8653 = vunpack.c.h.b16 %v8134
    %v8654 = vunpack.c.l.b16 %v8135
    %v8655 = vunpack.c.h.b16 %v8135
    %v8656 = vunpack.c.l.b16 %v8136
    %v8657 = vunpack.c.h.b16 %v8136
    %v8658 = vunpack.c.l.b16 %v8137
    %v8659 = vunpack.c.h.b16 %v8137
    %v8660 = vunpack.c.l.b16 %v8138
    %v8661 = vunpack.c.h.b16 %v8138
    %v8662 = vpack.c.b16 %v8568, %v8566
    %v8663 = vpack.c.b16 %v8569, %v8567
    %v8664 = vpack.c.b16 %v8572, %v8570
    %v8665 = vpack.c.b16 %v8573, %v8571
    %v8666 = vpack.c.b16 %v8576, %v8574
    %v8667 = vpack.c.b16 %v8577, %v8575
    %v8668 = vpack.c.b16 %v8580, %v8578
    %v8669 = vpack.c.b16 %v8581, %v8579
    %v8670 = vpack.c.b16 %v8584, %v8582
    %v8671 = vpack.c.b16 %v8585, %v8583
    %v8672 = vpack.c.b16 %v8588, %v8586
    %v8673 = vpack.c.b16 %v8589, %v8587
    %v8674 = vpack.c.b16 %v8592, %v8590
    %v8675 = vpack.c.b16 %v8593, %v8591
    %v8676 = vpack.c.b16 %v8596, %v8594
    %v8677 = vpack.c.b16 %v8597, %v8595
    %v8678 = vpack.c.b16 %v8600, %v8598
    %v8679 = vpack.c.b16 %v8601, %v8599
    %v8680 = vpack.c.b16 %v8604, %v8602
    %v8681 = vpack.c.b16 %v8605, %v8603
    %v8682 = vpack.c.b16 %v8608, %v8606
    %v8683 = vpack.c.b16 %v8609, %v8607
    %v8684 = vpack.c.b16 %v8612, %v8610
    %v8685 = vpack.c.b16 %v8613, %v8611
    %v8686 = vpack.c.b16 %v8616, %v8614
    %v8687 = vpack.c.b16 %v8617, %v8615
    %v8688 = vpack.c.b16 %v8620, %v8618
    %v8689 = vpack.c.b16 %v8621, %v8619
    %v8690 = vpack.c.b16 %v8624, %v8622
    %v8691 = vpack.c.b16 %v8625, %v8623
    %v8692 = vpack.c.b16 %v8628, %v8626
    %v8693 = vpack.c.b16 %v8629, %v8627
    %v8694 = vpack.c.b16 %v8632, %v8630
    %v8695 = vpack.c.b16 %v8633, %v8631
    %v8696 = vpack.c.b16 %v8636, %v8634
    %v8697 = vpack.c.b16 %v8637, %v8635
    %v8698 = vpack.c.b16 %v8640, %v8638
    %v8699 = vpack.c.b16 %v8641, %v8639
    %v8700 = vpack.c.b16 %v8644, %v8642
    %v8701 = vpack.c.b16 %v8645, %v8643
    %v8702 = vpack.c.b16 %v8648, %v8646
    %v8703 = vpack.c.b16 %v8649, %v8647
    %v8704 = vpack.c.b16 %v8652, %v8650
    %v8705 = vpack.c.b16 %v8653, %v8651
    %v8706 = vpack.c.b16 %v8656, %v8654
    %v8707 = vpack.c.b16 %v8657, %v8655
    %v8708 = vpack.c.b16 %v8660, %v8658
    %v8709 = vpack.c.b16 %v8661, %v8659
    %8758 = vmatpush.bf16.msra.mxu0 %v8676
    %8759 = vmatpush.bf16.msra.mxu0 %v8674
    %8760 = vmatpush.bf16.msra.mxu0 %v8672
    %8761 = vmatpush.bf16.msra.mxu0 %v8670
    %8762 = vmatpush.bf16.msra.mxu0 %v8668
    %8763 = vmatpush.bf16.msra.mxu0 %v8666
    %8764 = vmatpush.bf16.msra.mxu0 %v8664
    %8765 = vmatpush.bf16.msra.mxu0 %v8662
    %8766 = vmatmul.bf16.gmra.mxu0 %v8088
    %v8767 = vpop.f32.mrf.mxu0
    %v8768 = vadd.f32 %v8476, %v8767
    %v8769 = vpop.f32.mrf.mxu0
    %8770 = vdwg.mxu0
    %8771 = vmatpush.bf16.msra.mxu0 %v8692
    %8772 = vmatpush.bf16.msra.mxu0 %v8690
    %8773 = vmatpush.bf16.msra.mxu0 %v8688
    %8774 = vmatpush.bf16.msra.mxu0 %v8686
    %8775 = vmatpush.bf16.msra.mxu0 %v8684
    %8776 = vmatpush.bf16.msra.mxu0 %v8682
    %8777 = vmatpush.bf16.msra.mxu0 %v8680
    %8778 = vmatpush.bf16.msra.mxu0 %v8678
    %8779 = vmatmul.bf16.gmra.mxu0 %v8089
    %v8780 = vpop.f32.mrf.mxu0
    %v8781 = vadd.f32 %v8768, %v8780
    %v8782 = vpop.f32.mrf.mxu0
    %8783 = vdwg.mxu0
    %8784 = vmatpush.bf16.msra.mxu0 %v8708
    %8785 = vmatpush.bf16.msra.mxu0 %v8706
    %8786 = vmatpush.bf16.msra.mxu0 %v8704
    %8787 = vmatpush.bf16.msra.mxu0 %v8702
    %8788 = vmatpush.bf16.msra.mxu0 %v8700
    %8789 = vmatpush.bf16.msra.mxu0 %v8698
    %8790 = vmatpush.bf16.msra.mxu0 %v8696
    %8791 = vmatpush.bf16.msra.mxu0 %v8694
    %8792 = vmatmul.bf16.gmra.mxu0 %v8090
    %v8793 = vpop.f32.mrf.mxu0
    %v8794 = vadd.f32 %v8781, %v8793
    %v8795 = vpop.f32.mrf.mxu0
    %8796 = vdwg.mxu0
    %8797 = vmatpush.bf16.msra.mxu0 %v8677
    %8798 = vmatpush.bf16.msra.mxu0 %v8675
    %8799 = vmatpush.bf16.msra.mxu0 %v8673
    %8800 = vmatpush.bf16.msra.mxu0 %v8671
    %8801 = vmatpush.bf16.msra.mxu0 %v8669
    %8802 = vmatpush.bf16.msra.mxu0 %v8667
    %8803 = vmatpush.bf16.msra.mxu0 %v8665
    %8804 = vmatpush.bf16.msra.mxu0 %v8663
    %8805 = vmatmul.bf16.gmra.mxu0 %v8088
    %v8806 = vpop.f32.mrf.mxu0
    %v8807 = vadd.f32 %v8515, %v8806
    %v8808 = vpop.f32.mrf.mxu0
    %8809 = vdwg.mxu0
    %8810 = vmatpush.bf16.msra.mxu0 %v8693
    %8811 = vmatpush.bf16.msra.mxu0 %v8691
    %8812 = vmatpush.bf16.msra.mxu0 %v8689
    %8813 = vmatpush.bf16.msra.mxu0 %v8687
    %8814 = vmatpush.bf16.msra.mxu0 %v8685
    %8815 = vmatpush.bf16.msra.mxu0 %v8683
    %8816 = vmatpush.bf16.msra.mxu0 %v8681
    %8817 = vmatpush.bf16.msra.mxu0 %v8679
    %8818 = vmatmul.bf16.gmra.mxu0 %v8089
    %v8819 = vpop.f32.mrf.mxu0
    %v8820 = vadd.f32 %v8807, %v8819
    %v8821 = vpop.f32.mrf.mxu0
    %8822 = vdwg.mxu0
    %8823 = vmatpush.bf16.msra.mxu0 %v8709
    %8824 = vmatpush.bf16.msra.mxu0 %v8707
    %8825 = vmatpush.bf16.msra.mxu0 %v8705
    %8826 = vmatpush.bf16.msra.mxu0 %v8703
    %8827 = vmatpush.bf16.msra.mxu0 %v8701
    %8828 = vmatpush.bf16.msra.mxu0 %v8699
    %8829 = vmatpush.bf16.msra.mxu0 %v8697
    %8830 = vmatpush.bf16.msra.mxu0 %v8695
    %8831 = vmatmul.bf16.gmra.mxu0 %v8090
    %v8832 = vpop.f32.mrf.mxu0
    %v8833 = vadd.f32 %v8820, %v8832
    %v8834 = vpop.f32.mrf.mxu0
    %8835 = vdwg.mxu0
    %s8836 = scalar_lea.vmem [#allocation10], 768
    %v8837 = vld [vmem:[%s8836] sm:$0xff]
    %v8838 = vld [vmem:[%s8836 + $0x8] sm:$0xff]
    %v8839 = vld [vmem:[%s8836 + $0x10] sm:$0xff]
    %v8840 = vld [vmem:[%s8836 + $0x18] sm:$0xff]
    %v8841 = vld [vmem:[%s8836 + $0x20] sm:$0xff]
    %v8842 = vld [vmem:[%s8836 + $0x28] sm:$0xff]
    %v8843 = vld [vmem:[%s8836 + $0x30] sm:$0xff]
    %v8844 = vld [vmem:[%s8836 + $0x38] sm:$0xff]
    %v8845 = vld [vmem:[%s8836 + $0x40] sm:$0xff]
    %v8846 = vld [vmem:[%s8836 + $0x48] sm:$0xff]
    %v8847 = vld [vmem:[%s8836 + $0x50] sm:$0xff]
    %v8848 = vld [vmem:[%s8836 + $0x58] sm:$0xff]
    %v8849 = vld [vmem:[%s8836 + $0x60] sm:$0xff]
    %v8850 = vld [vmem:[%s8836 + $0x68] sm:$0xff]
    %v8851 = vld [vmem:[%s8836 + $0x70] sm:$0xff]
    %v8852 = vld [vmem:[%s8836 + $0x78] sm:$0xff]
    %v8853 = vld [vmem:[%s8836 + $0x80] sm:$0xff]
    %v8854 = vld [vmem:[%s8836 + $0x88] sm:$0xff]
    %v8855 = vld [vmem:[%s8836 + $0x90] sm:$0xff]
    %v8856 = vld [vmem:[%s8836 + $0x98] sm:$0xff]
    %v8857 = vld [vmem:[%s8836 + $0xa0] sm:$0xff]
    %v8858 = vld [vmem:[%s8836 + $0xa8] sm:$0xff]
    %v8859 = vld [vmem:[%s8836 + $0xb0] sm:$0xff]
    %v8860 = vld [vmem:[%s8836 + $0xb8] sm:$0xff]
    %v8861 = vld [vmem:[%s8836 + $0xc0] sm:$0xff]
    %v8862 = vld [vmem:[%s8836 + $0xc8] sm:$0xff]
    %v8863 = vld [vmem:[%s8836 + $0xd0] sm:$0xff]
    %v8864 = vld [vmem:[%s8836 + $0xd8] sm:$0xff]
    %v8865 = vld [vmem:[%s8836 + $0xe0] sm:$0xff]
    %v8866 = vld [vmem:[%s8836 + $0xe8] sm:$0xff]
    %v8867 = vld [vmem:[%s8836 + $0xf0] sm:$0xff]
    %v8868 = vld [vmem:[%s8836 + $0xf8] sm:$0xff]
    %v8869 = vld [vmem:[%s8836 + $0x100] sm:$0xff]
    %v8870 = vld [vmem:[%s8836 + $0x108] sm:$0xff]
    %v8871 = vld [vmem:[%s8836 + $0x110] sm:$0xff]
    %v8872 = vld [vmem:[%s8836 + $0x118] sm:$0xff]
    %v8873 = vld [vmem:[%s8836 + $0x120] sm:$0xff]
    %v8874 = vld [vmem:[%s8836 + $0x128] sm:$0xff]
    %v8875 = vld [vmem:[%s8836 + $0x130] sm:$0xff]
    %v8876 = vld [vmem:[%s8836 + $0x138] sm:$0xff]
    %v8877 = vld [vmem:[%s8836 + $0x140] sm:$0xff]
    %v8878 = vld [vmem:[%s8836 + $0x148] sm:$0xff]
    %v8879 = vld [vmem:[%s8836 + $0x150] sm:$0xff]
    %v8880 = vld [vmem:[%s8836 + $0x158] sm:$0xff]
    %v8881 = vld [vmem:[%s8836 + $0x160] sm:$0xff]
    %v8882 = vld [vmem:[%s8836 + $0x168] sm:$0xff]
    %v8883 = vld [vmem:[%s8836 + $0x170] sm:$0xff]
    %v8884 = vld [vmem:[%s8836 + $0x178] sm:$0xff]
    %v8888 = vrot.slane %v8088, 1
    %v8889 = vrot.slane %v8089, 1
    %v8890 = vrot.slane %v8090, 1
    %v8942 = vunpack.c.l.b16 %v8837
    %v8943 = vunpack.c.h.b16 %v8837
    %v8944 = vunpack.c.l.b16 %v8838
    %v8945 = vunpack.c.h.b16 %v8838
    %v8946 = vunpack.c.l.b16 %v8839
    %v8947 = vunpack.c.h.b16 %v8839
    %v8948 = vunpack.c.l.b16 %v8840
    %v8949 = vunpack.c.h.b16 %v8840
    %v8950 = vunpack.c.l.b16 %v8841
    %v8951 = vunpack.c.h.b16 %v8841
    %v8952 = vunpack.c.l.b16 %v8842
    %v8953 = vunpack.c.h.b16 %v8842
    %v8954 = vunpack.c.l.b16 %v8843
    %v8955 = vunpack.c.h.b16 %v8843
    %v8956 = vunpack.c.l.b16 %v8844
    %v8957 = vunpack.c.h.b16 %v8844
    %v8958 = vunpack.c.l.b16 %v8845
    %v8959 = vunpack.c.h.b16 %v8845
    %v8960 = vunpack.c.l.b16 %v8846
    %v8961 = vunpack.c.h.b16 %v8846
    %v8962 = vunpack.c.l.b16 %v8847
    %v8963 = vunpack.c.h.b16 %v8847
    %v8964 = vunpack.c.l.b16 %v8848
    %v8965 = vunpack.c.h.b16 %v8848
    %v8966 = vunpack.c.l.b16 %v8849
    %v8967 = vunpack.c.h.b16 %v8849
    %v8968 = vunpack.c.l.b16 %v8850
    %v8969 = vunpack.c.h.b16 %v8850
    %v8970 = vunpack.c.l.b16 %v8851
    %v8971 = vunpack.c.h.b16 %v8851
    %v8972 = vunpack.c.l.b16 %v8852
    %v8973 = vunpack.c.h.b16 %v8852
    %v8974 = vunpack.c.l.b16 %v8853
    %v8975 = vunpack.c.h.b16 %v8853
    %v8976 = vunpack.c.l.b16 %v8854
    %v8977 = vunpack.c.h.b16 %v8854
    %v8978 = vunpack.c.l.b16 %v8855
    %v8979 = vunpack.c.h.b16 %v8855
    %v8980 = vunpack.c.l.b16 %v8856
    %v8981 = vunpack.c.h.b16 %v8856
    %v8982 = vunpack.c.l.b16 %v8857
    %v8983 = vunpack.c.h.b16 %v8857
    %v8984 = vunpack.c.l.b16 %v8858
    %v8985 = vunpack.c.h.b16 %v8858
    %v8986 = vunpack.c.l.b16 %v8859
    %v8987 = vunpack.c.h.b16 %v8859
    %v8988 = vunpack.c.l.b16 %v8860
    %v8989 = vunpack.c.h.b16 %v8860
    %v8990 = vunpack.c.l.b16 %v8861
    %v8991 = vunpack.c.h.b16 %v8861
    %v8992 = vunpack.c.l.b16 %v8862
    %v8993 = vunpack.c.h.b16 %v8862
    %v8994 = vunpack.c.l.b16 %v8863
    %v8995 = vunpack.c.h.b16 %v8863
    %v8996 = vunpack.c.l.b16 %v8864
    %v8997 = vunpack.c.h.b16 %v8864
    %v8998 = vunpack.c.l.b16 %v8865
    %v8999 = vunpack.c.h.b16 %v8865
    %v9000 = vunpack.c.l.b16 %v8866
    %v9001 = vunpack.c.h.b16 %v8866
    %v9002 = vunpack.c.l.b16 %v8867
    %v9003 = vunpack.c.h.b16 %v8867
    %v9004 = vunpack.c.l.b16 %v8868
    %v9005 = vunpack.c.h.b16 %v8868
    %v9006 = vunpack.c.l.b16 %v8869
    %v9007 = vunpack.c.h.b16 %v8869
    %v9008 = vunpack.c.l.b16 %v8870
    %v9009 = vunpack.c.h.b16 %v8870
    %v9010 = vunpack.c.l.b16 %v8871
    %v9011 = vunpack.c.h.b16 %v8871
    %v9012 = vunpack.c.l.b16 %v8872
    %v9013 = vunpack.c.h.b16 %v8872
    %v9014 = vunpack.c.l.b16 %v8873
    %v9015 = vunpack.c.h.b16 %v8873
    %v9016 = vunpack.c.l.b16 %v8874
    %v9017 = vunpack.c.h.b16 %v8874
    %v9018 = vunpack.c.l.b16 %v8875
    %v9019 = vunpack.c.h.b16 %v8875
    %v9020 = vunpack.c.l.b16 %v8876
    %v9021 = vunpack.c.h.b16 %v8876
    %v9022 = vunpack.c.l.b16 %v8877
    %v9023 = vunpack.c.h.b16 %v8877
    %v9024 = vunpack.c.l.b16 %v8878
    %v9025 = vunpack.c.h.b16 %v8878
    %v9026 = vunpack.c.l.b16 %v8879
    %v9027 = vunpack.c.h.b16 %v8879
    %v9028 = vunpack.c.l.b16 %v8880
    %v9029 = vunpack.c.h.b16 %v8880
    %v9030 = vunpack.c.l.b16 %v8881
    %v9031 = vunpack.c.h.b16 %v8881
    %v9032 = vunpack.c.l.b16 %v8882
    %v9033 = vunpack.c.h.b16 %v8882
    %v9034 = vunpack.c.l.b16 %v8883
    %v9035 = vunpack.c.h.b16 %v8883
    %v9036 = vunpack.c.l.b16 %v8884
    %v9037 = vunpack.c.h.b16 %v8884
    %v9038 = vpack.c.b16 %v8944, %v8942
    %v9039 = vpack.c.b16 %v8945, %v8943
    %v9040 = vpack.c.b16 %v8948, %v8946
    %v9041 = vpack.c.b16 %v8949, %v8947
    %v9042 = vpack.c.b16 %v8952, %v8950
    %v9043 = vpack.c.b16 %v8953, %v8951
    %v9044 = vpack.c.b16 %v8956, %v8954
    %v9045 = vpack.c.b16 %v8957, %v8955
    %v9046 = vpack.c.b16 %v8960, %v8958
    %v9047 = vpack.c.b16 %v8961, %v8959
    %v9048 = vpack.c.b16 %v8964, %v8962
    %v9049 = vpack.c.b16 %v8965, %v8963
    %v9050 = vpack.c.b16 %v8968, %v8966
    %v9051 = vpack.c.b16 %v8969, %v8967
    %v9052 = vpack.c.b16 %v8972, %v8970
    %v9053 = vpack.c.b16 %v8973, %v8971
    %v9054 = vpack.c.b16 %v8976, %v8974
    %v9055 = vpack.c.b16 %v8977, %v8975
    %v9056 = vpack.c.b16 %v8980, %v8978
    %v9057 = vpack.c.b16 %v8981, %v8979
    %v9058 = vpack.c.b16 %v8984, %v8982
    %v9059 = vpack.c.b16 %v8985, %v8983
    %v9060 = vpack.c.b16 %v8988, %v8986
    %v9061 = vpack.c.b16 %v8989, %v8987
    %v9062 = vpack.c.b16 %v8992, %v8990
    %v9063 = vpack.c.b16 %v8993, %v8991
    %v9064 = vpack.c.b16 %v8996, %v8994
    %v9065 = vpack.c.b16 %v8997, %v8995
    %v9066 = vpack.c.b16 %v9000, %v8998
    %v9067 = vpack.c.b16 %v9001, %v8999
    %v9068 = vpack.c.b16 %v9004, %v9002
    %v9069 = vpack.c.b16 %v9005, %v9003
    %v9070 = vpack.c.b16 %v9008, %v9006
    %v9071 = vpack.c.b16 %v9009, %v9007
    %v9072 = vpack.c.b16 %v9012, %v9010
    %v9073 = vpack.c.b16 %v9013, %v9011
    %v9074 = vpack.c.b16 %v9016, %v9014
    %v9075 = vpack.c.b16 %v9017, %v9015
    %v9076 = vpack.c.b16 %v9020, %v9018
    %v9077 = vpack.c.b16 %v9021, %v9019
    %v9078 = vpack.c.b16 %v9024, %v9022
    %v9079 = vpack.c.b16 %v9025, %v9023
    %v9080 = vpack.c.b16 %v9028, %v9026
    %v9081 = vpack.c.b16 %v9029, %v9027
    %v9082 = vpack.c.b16 %v9032, %v9030
    %v9083 = vpack.c.b16 %v9033, %v9031
    %v9084 = vpack.c.b16 %v9036, %v9034
    %v9085 = vpack.c.b16 %v9037, %v9035
    %9134 = vmatpush.bf16.msra.mxu0 %v9052
    %9135 = vmatpush.bf16.msra.mxu0 %v9050
    %9136 = vmatpush.bf16.msra.mxu0 %v9048
    %9137 = vmatpush.bf16.msra.mxu0 %v9046
    %9138 = vmatpush.bf16.msra.mxu0 %v9044
    %9139 = vmatpush.bf16.msra.mxu0 %v9042
    %9140 = vmatpush.bf16.msra.mxu0 %v9040
    %9141 = vmatpush.bf16.msra.mxu0 %v9038
    %9142 = vmatmul.bf16.gmra.mxu0 %v8888
    %v9143 = vpop.f32.mrf.mxu0
    %v9144 = vadd.f32 0.0, %v9143
    %v9145 = vpop.f32.mrf.mxu0
    %9146 = vdwg.mxu0
    %9147 = vmatpush.bf16.msra.mxu0 %v9068
    %9148 = vmatpush.bf16.msra.mxu0 %v9066
    %9149 = vmatpush.bf16.msra.mxu0 %v9064
    %9150 = vmatpush.bf16.msra.mxu0 %v9062
    %9151 = vmatpush.bf16.msra.mxu0 %v9060
    %9152 = vmatpush.bf16.msra.mxu0 %v9058
    %9153 = vmatpush.bf16.msra.mxu0 %v9056
    %9154 = vmatpush.bf16.msra.mxu0 %v9054
    %9155 = vmatmul.bf16.gmra.mxu0 %v8889
    %v9156 = vpop.f32.mrf.mxu0
    %v9157 = vadd.f32 %v9144, %v9156
    %v9158 = vpop.f32.mrf.mxu0
    %9159 = vdwg.mxu0
    %9160 = vmatpush.bf16.msra.mxu0 %v9084
    %9161 = vmatpush.bf16.msra.mxu0 %v9082
    %9162 = vmatpush.bf16.msra.mxu0 %v9080
    %9163 = vmatpush.bf16.msra.mxu0 %v9078
    %9164 = vmatpush.bf16.msra.mxu0 %v9076
    %9165 = vmatpush.bf16.msra.mxu0 %v9074
    %9166 = vmatpush.bf16.msra.mxu0 %v9072
    %9167 = vmatpush.bf16.msra.mxu0 %v9070
    %9168 = vmatmul.bf16.gmra.mxu0 %v8890
    %v9169 = vpop.f32.mrf.mxu0
    %v9170 = vadd.f32 %v9157, %v9169
    %v9171 = vpop.f32.mrf.mxu0
    %9172 = vdwg.mxu0
    %9173 = vmatpush.bf16.msra.mxu0 %v9053
    %9174 = vmatpush.bf16.msra.mxu0 %v9051
    %9175 = vmatpush.bf16.msra.mxu0 %v9049
    %9176 = vmatpush.bf16.msra.mxu0 %v9047
    %9177 = vmatpush.bf16.msra.mxu0 %v9045
    %9178 = vmatpush.bf16.msra.mxu0 %v9043
    %9179 = vmatpush.bf16.msra.mxu0 %v9041
    %9180 = vmatpush.bf16.msra.mxu0 %v9039
    %9181 = vmatmul.bf16.gmra.mxu0 %v8888
    %v9182 = vpop.f32.mrf.mxu0
    %v9183 = vadd.f32 0.0, %v9182
    %v9184 = vpop.f32.mrf.mxu0
    %9185 = vdwg.mxu0
    %9186 = vmatpush.bf16.msra.mxu0 %v9069
    %9187 = vmatpush.bf16.msra.mxu0 %v9067
    %9188 = vmatpush.bf16.msra.mxu0 %v9065
    %9189 = vmatpush.bf16.msra.mxu0 %v9063
    %9190 = vmatpush.bf16.msra.mxu0 %v9061
    %9191 = vmatpush.bf16.msra.mxu0 %v9059
    %9192 = vmatpush.bf16.msra.mxu0 %v9057
    %9193 = vmatpush.bf16.msra.mxu0 %v9055
    %9194 = vmatmul.bf16.gmra.mxu0 %v8889
    %v9195 = vpop.f32.mrf.mxu0
    %v9196 = vadd.f32 %v9183, %v9195
    %v9197 = vpop.f32.mrf.mxu0
    %9198 = vdwg.mxu0
    %9199 = vmatpush.bf16.msra.mxu0 %v9085
    %9200 = vmatpush.bf16.msra.mxu0 %v9083
    %9201 = vmatpush.bf16.msra.mxu0 %v9081
    %9202 = vmatpush.bf16.msra.mxu0 %v9079
    %9203 = vmatpush.bf16.msra.mxu0 %v9077
    %9204 = vmatpush.bf16.msra.mxu0 %v9075
    %9205 = vmatpush.bf16.msra.mxu0 %v9073
    %9206 = vmatpush.bf16.msra.mxu0 %v9071
    %9207 = vmatmul.bf16.gmra.mxu0 %v8890
    %v9208 = vpop.f32.mrf.mxu0
    %v9209 = vadd.f32 %v9196, %v9208
    %v9210 = vpop.f32.mrf.mxu0
    %9211 = vdwg.mxu0
    %v9212 = vadd.f32 %v8794, %v9170
    %v9213 = vadd.f32 %v8833, %v9209
    %s9214 = scalar_lea.vmem [#allocation10], 1152
    %v9215 = vld [vmem:[%s9214] sm:$0xff]
    %v9216 = vld [vmem:[%s9214 + $0x8] sm:$0xff]
    %v9217 = vld [vmem:[%s9214 + $0x10] sm:$0xff]
    %v9218 = vld [vmem:[%s9214 + $0x18] sm:$0xff]
    %v9219 = vld [vmem:[%s9214 + $0x20] sm:$0xff]
    %v9220 = vld [vmem:[%s9214 + $0x28] sm:$0xff]
    %v9221 = vld [vmem:[%s9214 + $0x30] sm:$0xff]
    %v9222 = vld [vmem:[%s9214 + $0x38] sm:$0xff]
    %v9223 = vld [vmem:[%s9214 + $0x40] sm:$0xff]
    %v9224 = vld [vmem:[%s9214 + $0x48] sm:$0xff]
    %v9225 = vld [vmem:[%s9214 + $0x50] sm:$0xff]
    %v9226 = vld [vmem:[%s9214 + $0x58] sm:$0xff]
    %v9227 = vld [vmem:[%s9214 + $0x60] sm:$0xff]
    %v9228 = vld [vmem:[%s9214 + $0x68] sm:$0xff]
    %v9229 = vld [vmem:[%s9214 + $0x70] sm:$0xff]
    %v9230 = vld [vmem:[%s9214 + $0x78] sm:$0xff]
    %v9231 = vld [vmem:[%s9214 + $0x80] sm:$0xff]
    %v9232 = vld [vmem:[%s9214 + $0x88] sm:$0xff]
    %v9233 = vld [vmem:[%s9214 + $0x90] sm:$0xff]
    %v9234 = vld [vmem:[%s9214 + $0x98] sm:$0xff]
    %v9235 = vld [vmem:[%s9214 + $0xa0] sm:$0xff]
    %v9236 = vld [vmem:[%s9214 + $0xa8] sm:$0xff]
    %v9237 = vld [vmem:[%s9214 + $0xb0] sm:$0xff]
    %v9238 = vld [vmem:[%s9214 + $0xb8] sm:$0xff]
    %v9239 = vld [vmem:[%s9214 + $0xc0] sm:$0xff]
    %v9240 = vld [vmem:[%s9214 + $0xc8] sm:$0xff]
    %v9241 = vld [vmem:[%s9214 + $0xd0] sm:$0xff]
    %v9242 = vld [vmem:[%s9214 + $0xd8] sm:$0xff]
    %v9243 = vld [vmem:[%s9214 + $0xe0] sm:$0xff]
    %v9244 = vld [vmem:[%s9214 + $0xe8] sm:$0xff]
    %v9245 = vld [vmem:[%s9214 + $0xf0] sm:$0xff]
    %v9246 = vld [vmem:[%s9214 + $0xf8] sm:$0xff]
    %v9247 = vld [vmem:[%s9214 + $0x100] sm:$0xff]
    %v9248 = vld [vmem:[%s9214 + $0x108] sm:$0xff]
    %v9249 = vld [vmem:[%s9214 + $0x110] sm:$0xff]
    %v9250 = vld [vmem:[%s9214 + $0x118] sm:$0xff]
    %v9251 = vld [vmem:[%s9214 + $0x120] sm:$0xff]
    %v9252 = vld [vmem:[%s9214 + $0x128] sm:$0xff]
    %v9253 = vld [vmem:[%s9214 + $0x130] sm:$0xff]
    %v9254 = vld [vmem:[%s9214 + $0x138] sm:$0xff]
    %v9255 = vld [vmem:[%s9214 + $0x140] sm:$0xff]
    %v9256 = vld [vmem:[%s9214 + $0x148] sm:$0xff]
    %v9257 = vld [vmem:[%s9214 + $0x150] sm:$0xff]
    %v9258 = vld [vmem:[%s9214 + $0x158] sm:$0xff]
    %v9259 = vld [vmem:[%s9214 + $0x160] sm:$0xff]
    %v9260 = vld [vmem:[%s9214 + $0x168] sm:$0xff]
    %v9261 = vld [vmem:[%s9214 + $0x170] sm:$0xff]
    %v9262 = vld [vmem:[%s9214 + $0x178] sm:$0xff]
    %v9263 = vrot.slane %v8189, 1
    %v9264 = vrot.slane %v8192, 1
    %v9265 = vrot.slane %v8195, 1
    %v9317 = vunpack.c.l.b16 %v9215
    %v9318 = vunpack.c.h.b16 %v9215
    %v9319 = vunpack.c.l.b16 %v9216
    %v9320 = vunpack.c.h.b16 %v9216
    %v9321 = vunpack.c.l.b16 %v9217
    %v9322 = vunpack.c.h.b16 %v9217
    %v9323 = vunpack.c.l.b16 %v9218
    %v9324 = vunpack.c.h.b16 %v9218
    %v9325 = vunpack.c.l.b16 %v9219
    %v9326 = vunpack.c.h.b16 %v9219
    %v9327 = vunpack.c.l.b16 %v9220
    %v9328 = vunpack.c.h.b16 %v9220
    %v9329 = vunpack.c.l.b16 %v9221
    %v9330 = vunpack.c.h.b16 %v9221
    %v9331 = vunpack.c.l.b16 %v9222
    %v9332 = vunpack.c.h.b16 %v9222
    %v9333 = vunpack.c.l.b16 %v9223
    %v9334 = vunpack.c.h.b16 %v9223
    %v9335 = vunpack.c.l.b16 %v9224
    %v9336 = vunpack.c.h.b16 %v9224
    %v9337 = vunpack.c.l.b16 %v9225
    %v9338 = vunpack.c.h.b16 %v9225
    %v9339 = vunpack.c.l.b16 %v9226
    %v9340 = vunpack.c.h.b16 %v9226
    %v9341 = vunpack.c.l.b16 %v9227
    %v9342 = vunpack.c.h.b16 %v9227
    %v9343 = vunpack.c.l.b16 %v9228
    %v9344 = vunpack.c.h.b16 %v9228
    %v9345 = vunpack.c.l.b16 %v9229
    %v9346 = vunpack.c.h.b16 %v9229
    %v9347 = vunpack.c.l.b16 %v9230
    %v9348 = vunpack.c.h.b16 %v9230
    %v9349 = vunpack.c.l.b16 %v9231
    %v9350 = vunpack.c.h.b16 %v9231
    %v9351 = vunpack.c.l.b16 %v9232
    %v9352 = vunpack.c.h.b16 %v9232
    %v9353 = vunpack.c.l.b16 %v9233
    %v9354 = vunpack.c.h.b16 %v9233
    %v9355 = vunpack.c.l.b16 %v9234
    %v9356 = vunpack.c.h.b16 %v9234
    %v9357 = vunpack.c.l.b16 %v9235
    %v9358 = vunpack.c.h.b16 %v9235
    %v9359 = vunpack.c.l.b16 %v9236
    %v9360 = vunpack.c.h.b16 %v9236
    %v9361 = vunpack.c.l.b16 %v9237
    %v9362 = vunpack.c.h.b16 %v9237
    %v9363 = vunpack.c.l.b16 %v9238
    %v9364 = vunpack.c.h.b16 %v9238
    %v9365 = vunpack.c.l.b16 %v9239
    %v9366 = vunpack.c.h.b16 %v9239
    %v9367 = vunpack.c.l.b16 %v9240
    %v9368 = vunpack.c.h.b16 %v9240
    %v9369 = vunpack.c.l.b16 %v9241
    %v9370 = vunpack.c.h.b16 %v9241
    %v9371 = vunpack.c.l.b16 %v9242
    %v9372 = vunpack.c.h.b16 %v9242
    %v9373 = vunpack.c.l.b16 %v9243
    %v9374 = vunpack.c.h.b16 %v9243
    %v9375 = vunpack.c.l.b16 %v9244
    %v9376 = vunpack.c.h.b16 %v9244
    %v9377 = vunpack.c.l.b16 %v9245
    %v9378 = vunpack.c.h.b16 %v9245
    %v9379 = vunpack.c.l.b16 %v9246
    %v9380 = vunpack.c.h.b16 %v9246
    %v9381 = vunpack.c.l.b16 %v9247
    %v9382 = vunpack.c.h.b16 %v9247
    %v9383 = vunpack.c.l.b16 %v9248
    %v9384 = vunpack.c.h.b16 %v9248
    %v9385 = vunpack.c.l.b16 %v9249
    %v9386 = vunpack.c.h.b16 %v9249
    %v9387 = vunpack.c.l.b16 %v9250
    %v9388 = vunpack.c.h.b16 %v9250
    %v9389 = vunpack.c.l.b16 %v9251
    %v9390 = vunpack.c.h.b16 %v9251
    %v9391 = vunpack.c.l.b16 %v9252
    %v9392 = vunpack.c.h.b16 %v9252
    %v9393 = vunpack.c.l.b16 %v9253
    %v9394 = vunpack.c.h.b16 %v9253
    %v9395 = vunpack.c.l.b16 %v9254
    %v9396 = vunpack.c.h.b16 %v9254
    %v9397 = vunpack.c.l.b16 %v9255
    %v9398 = vunpack.c.h.b16 %v9255
    %v9399 = vunpack.c.l.b16 %v9256
    %v9400 = vunpack.c.h.b16 %v9256
    %v9401 = vunpack.c.l.b16 %v9257
    %v9402 = vunpack.c.h.b16 %v9257
    %v9403 = vunpack.c.l.b16 %v9258
    %v9404 = vunpack.c.h.b16 %v9258
    %v9405 = vunpack.c.l.b16 %v9259
    %v9406 = vunpack.c.h.b16 %v9259
    %v9407 = vunpack.c.l.b16 %v9260
    %v9408 = vunpack.c.h.b16 %v9260
    %v9409 = vunpack.c.l.b16 %v9261
    %v9410 = vunpack.c.h.b16 %v9261
    %v9411 = vunpack.c.l.b16 %v9262
    %v9412 = vunpack.c.h.b16 %v9262
    %v9413 = vpack.c.b16 %v9319, %v9317
    %v9414 = vpack.c.b16 %v9320, %v9318
    %v9415 = vpack.c.b16 %v9323, %v9321
    %v9416 = vpack.c.b16 %v9324, %v9322
    %v9417 = vpack.c.b16 %v9327, %v9325
    %v9418 = vpack.c.b16 %v9328, %v9326
    %v9419 = vpack.c.b16 %v9331, %v9329
    %v9420 = vpack.c.b16 %v9332, %v9330
    %v9421 = vpack.c.b16 %v9335, %v9333
    %v9422 = vpack.c.b16 %v9336, %v9334
    %v9423 = vpack.c.b16 %v9339, %v9337
    %v9424 = vpack.c.b16 %v9340, %v9338
    %v9425 = vpack.c.b16 %v9343, %v9341
    %v9426 = vpack.c.b16 %v9344, %v9342
    %v9427 = vpack.c.b16 %v9347, %v9345
    %v9428 = vpack.c.b16 %v9348, %v9346
    %v9429 = vpack.c.b16 %v9351, %v9349
    %v9430 = vpack.c.b16 %v9352, %v9350
    %v9431 = vpack.c.b16 %v9355, %v9353
    %v9432 = vpack.c.b16 %v9356, %v9354
    %v9433 = vpack.c.b16 %v9359, %v9357
    %v9434 = vpack.c.b16 %v9360, %v9358
    %v9435 = vpack.c.b16 %v9363, %v9361
    %v9436 = vpack.c.b16 %v9364, %v9362
    %v9437 = vpack.c.b16 %v9367, %v9365
    %v9438 = vpack.c.b16 %v9368, %v9366
    %v9439 = vpack.c.b16 %v9371, %v9369
    %v9440 = vpack.c.b16 %v9372, %v9370
    %v9441 = vpack.c.b16 %v9375, %v9373
    %v9442 = vpack.c.b16 %v9376, %v9374
    %v9443 = vpack.c.b16 %v9379, %v9377
    %v9444 = vpack.c.b16 %v9380, %v9378
    %v9445 = vpack.c.b16 %v9383, %v9381
    %v9446 = vpack.c.b16 %v9384, %v9382
    %v9447 = vpack.c.b16 %v9387, %v9385
    %v9448 = vpack.c.b16 %v9388, %v9386
    %v9449 = vpack.c.b16 %v9391, %v9389
    %v9450 = vpack.c.b16 %v9392, %v9390
    %v9451 = vpack.c.b16 %v9395, %v9393
    %v9452 = vpack.c.b16 %v9396, %v9394
    %v9453 = vpack.c.b16 %v9399, %v9397
    %v9454 = vpack.c.b16 %v9400, %v9398
    %v9455 = vpack.c.b16 %v9403, %v9401
    %v9456 = vpack.c.b16 %v9404, %v9402
    %v9457 = vpack.c.b16 %v9407, %v9405
    %v9458 = vpack.c.b16 %v9408, %v9406
    %v9459 = vpack.c.b16 %v9411, %v9409
    %v9460 = vpack.c.b16 %v9412, %v9410
    %9509 = vmatpush.bf16.msra.mxu0 %v9427
    %9510 = vmatpush.bf16.msra.mxu0 %v9425
    %9511 = vmatpush.bf16.msra.mxu0 %v9423
    %9512 = vmatpush.bf16.msra.mxu0 %v9421
    %9513 = vmatpush.bf16.msra.mxu0 %v9419
    %9514 = vmatpush.bf16.msra.mxu0 %v9417
    %9515 = vmatpush.bf16.msra.mxu0 %v9415
    %9516 = vmatpush.bf16.msra.mxu0 %v9413
    %9517 = vmatmul.bf16.gmra.mxu0 %v9263
    %v9518 = vpop.f32.mrf.mxu0
    %v9519 = vadd.f32 0.0, %v9518
    %v9520 = vpop.f32.mrf.mxu0
    %9521 = vdwg.mxu0
    %9522 = vmatpush.bf16.msra.mxu0 %v9443
    %9523 = vmatpush.bf16.msra.mxu0 %v9441
    %9524 = vmatpush.bf16.msra.mxu0 %v9439
    %9525 = vmatpush.bf16.msra.mxu0 %v9437
    %9526 = vmatpush.bf16.msra.mxu0 %v9435
    %9527 = vmatpush.bf16.msra.mxu0 %v9433
    %9528 = vmatpush.bf16.msra.mxu0 %v9431
    %9529 = vmatpush.bf16.msra.mxu0 %v9429
    %9530 = vmatmul.bf16.gmra.mxu0 %v9264
    %v9531 = vpop.f32.mrf.mxu0
    %v9532 = vadd.f32 %v9519, %v9531
    %v9533 = vpop.f32.mrf.mxu0
    %9534 = vdwg.mxu0
    %9535 = vmatpush.bf16.msra.mxu0 %v9459
    %9536 = vmatpush.bf16.msra.mxu0 %v9457
    %9537 = vmatpush.bf16.msra.mxu0 %v9455
    %9538 = vmatpush.bf16.msra.mxu0 %v9453
    %9539 = vmatpush.bf16.msra.mxu0 %v9451
    %9540 = vmatpush.bf16.msra.mxu0 %v9449
    %9541 = vmatpush.bf16.msra.mxu0 %v9447
    %9542 = vmatpush.bf16.msra.mxu0 %v9445
    %9543 = vmatmul.bf16.gmra.mxu0 %v9265
    %v9544 = vpop.f32.mrf.mxu0
    %v9545 = vadd.f32 %v9532, %v9544
    %v9546 = vpop.f32.mrf.mxu0
    %9547 = vdwg.mxu0
    %9548 = vmatpush.bf16.msra.mxu0 %v9428
    %9549 = vmatpush.bf16.msra.mxu0 %v9426
    %9550 = vmatpush.bf16.msra.mxu0 %v9424
    %9551 = vmatpush.bf16.msra.mxu0 %v9422
    %9552 = vmatpush.bf16.msra.mxu0 %v9420
    %9553 = vmatpush.bf16.msra.mxu0 %v9418
    %9554 = vmatpush.bf16.msra.mxu0 %v9416
    %9555 = vmatpush.bf16.msra.mxu0 %v9414
    %9556 = vmatmul.bf16.gmra.mxu0 %v9263
    %v9557 = vpop.f32.mrf.mxu0
    %v9558 = vadd.f32 0.0, %v9557
    %v9559 = vpop.f32.mrf.mxu0
    %9560 = vdwg.mxu0
    %9561 = vmatpush.bf16.msra.mxu0 %v9444
    %9562 = vmatpush.bf16.msra.mxu0 %v9442
    %9563 = vmatpush.bf16.msra.mxu0 %v9440
    %9564 = vmatpush.bf16.msra.mxu0 %v9438
    %9565 = vmatpush.bf16.msra.mxu0 %v9436
    %9566 = vmatpush.bf16.msra.mxu0 %v9434
    %9567 = vmatpush.bf16.msra.mxu0 %v9432
    %9568 = vmatpush.bf16.msra.mxu0 %v9430
    %9569 = vmatmul.bf16.gmra.mxu0 %v9264
    %v9570 = vpop.f32.mrf.mxu0
    %v9571 = vadd.f32 %v9558, %v9570
    %v9572 = vpop.f32.mrf.mxu0
    %9573 = vdwg.mxu0
    %9574 = vmatpush.bf16.msra.mxu0 %v9460
    %9575 = vmatpush.bf16.msra.mxu0 %v9458
    %9576 = vmatpush.bf16.msra.mxu0 %v9456
    %9577 = vmatpush.bf16.msra.mxu0 %v9454
    %9578 = vmatpush.bf16.msra.mxu0 %v9452
    %9579 = vmatpush.bf16.msra.mxu0 %v9450
    %9580 = vmatpush.bf16.msra.mxu0 %v9448
    %9581 = vmatpush.bf16.msra.mxu0 %v9446
    %9582 = vmatmul.bf16.gmra.mxu0 %v9265
    %v9583 = vpop.f32.mrf.mxu0
    %v9584 = vadd.f32 %v9571, %v9583
    %v9585 = vpop.f32.mrf.mxu0
    %9586 = vdwg.mxu0
    %v9587 = vadd.f32 %v9212, %v9545
    %v9588 = vadd.f32 %v9213, %v9584
    %s9589 = scalar_lea.vmem [#allocation10], 1536
    %v9590 = vld [vmem:[%s9589] sm:$0xff]
    %v9591 = vld [vmem:[%s9589 + $0x8] sm:$0xff]
    %v9592 = vld [vmem:[%s9589 + $0x10] sm:$0xff]
    %v9593 = vld [vmem:[%s9589 + $0x18] sm:$0xff]
    %v9594 = vld [vmem:[%s9589 + $0x20] sm:$0xff]
    %v9595 = vld [vmem:[%s9589 + $0x28] sm:$0xff]
    %v9596 = vld [vmem:[%s9589 + $0x30] sm:$0xff]
    %v9597 = vld [vmem:[%s9589 + $0x38] sm:$0xff]
    %v9598 = vld [vmem:[%s9589 + $0x40] sm:$0xff]
    %v9599 = vld [vmem:[%s9589 + $0x48] sm:$0xff]
    %v9600 = vld [vmem:[%s9589 + $0x50] sm:$0xff]
    %v9601 = vld [vmem:[%s9589 + $0x58] sm:$0xff]
    %v9602 = vld [vmem:[%s9589 + $0x60] sm:$0xff]
    %v9603 = vld [vmem:[%s9589 + $0x68] sm:$0xff]
    %v9604 = vld [vmem:[%s9589 + $0x70] sm:$0xff]
    %v9605 = vld [vmem:[%s9589 + $0x78] sm:$0xff]
    %v9606 = vld [vmem:[%s9589 + $0x80] sm:$0xff]
    %v9607 = vld [vmem:[%s9589 + $0x88] sm:$0xff]
    %v9608 = vld [vmem:[%s9589 + $0x90] sm:$0xff]
    %v9609 = vld [vmem:[%s9589 + $0x98] sm:$0xff]
    %v9610 = vld [vmem:[%s9589 + $0xa0] sm:$0xff]
    %v9611 = vld [vmem:[%s9589 + $0xa8] sm:$0xff]
    %v9612 = vld [vmem:[%s9589 + $0xb0] sm:$0xff]
    %v9613 = vld [vmem:[%s9589 + $0xb8] sm:$0xff]
    %v9614 = vld [vmem:[%s9589 + $0xc0] sm:$0xff]
    %v9615 = vld [vmem:[%s9589 + $0xc8] sm:$0xff]
    %v9616 = vld [vmem:[%s9589 + $0xd0] sm:$0xff]
    %v9617 = vld [vmem:[%s9589 + $0xd8] sm:$0xff]
    %v9618 = vld [vmem:[%s9589 + $0xe0] sm:$0xff]
    %v9619 = vld [vmem:[%s9589 + $0xe8] sm:$0xff]
    %v9620 = vld [vmem:[%s9589 + $0xf0] sm:$0xff]
    %v9621 = vld [vmem:[%s9589 + $0xf8] sm:$0xff]
    %v9622 = vld [vmem:[%s9589 + $0x100] sm:$0xff]
    %v9623 = vld [vmem:[%s9589 + $0x108] sm:$0xff]
    %v9624 = vld [vmem:[%s9589 + $0x110] sm:$0xff]
    %v9625 = vld [vmem:[%s9589 + $0x118] sm:$0xff]
    %v9626 = vld [vmem:[%s9589 + $0x120] sm:$0xff]
    %v9627 = vld [vmem:[%s9589 + $0x128] sm:$0xff]
    %v9628 = vld [vmem:[%s9589 + $0x130] sm:$0xff]
    %v9629 = vld [vmem:[%s9589 + $0x138] sm:$0xff]
    %v9630 = vld [vmem:[%s9589 + $0x140] sm:$0xff]
    %v9631 = vld [vmem:[%s9589 + $0x148] sm:$0xff]
    %v9632 = vld [vmem:[%s9589 + $0x150] sm:$0xff]
    %v9633 = vld [vmem:[%s9589 + $0x158] sm:$0xff]
    %v9634 = vld [vmem:[%s9589 + $0x160] sm:$0xff]
    %v9635 = vld [vmem:[%s9589 + $0x168] sm:$0xff]
    %v9636 = vld [vmem:[%s9589 + $0x170] sm:$0xff]
    %v9637 = vld [vmem:[%s9589 + $0x178] sm:$0xff]
    %v9638 = vrot.slane %v8088, 2
    %v9639 = vrot.slane %v8089, 2
    %v9640 = vrot.slane %v8090, 2
    %v9692 = vunpack.c.l.b16 %v9590
    %v9693 = vunpack.c.h.b16 %v9590
    %v9694 = vunpack.c.l.b16 %v9591
    %v9695 = vunpack.c.h.b16 %v9591
    %v9696 = vunpack.c.l.b16 %v9592
    %v9697 = vunpack.c.h.b16 %v9592
    %v9698 = vunpack.c.l.b16 %v9593
    %v9699 = vunpack.c.h.b16 %v9593
    %v9700 = vunpack.c.l.b16 %v9594
    %v9701 = vunpack.c.h.b16 %v9594
    %v9702 = vunpack.c.l.b16 %v9595
    %v9703 = vunpack.c.h.b16 %v9595
    %v9704 = vunpack.c.l.b16 %v9596
    %v9705 = vunpack.c.h.b16 %v9596
    %v9706 = vunpack.c.l.b16 %v9597
    %v9707 = vunpack.c.h.b16 %v9597
    %v9708 = vunpack.c.l.b16 %v9598
    %v9709 = vunpack.c.h.b16 %v9598
    %v9710 = vunpack.c.l.b16 %v9599
    %v9711 = vunpack.c.h.b16 %v9599
    %v9712 = vunpack.c.l.b16 %v9600
    %v9713 = vunpack.c.h.b16 %v9600
    %v9714 = vunpack.c.l.b16 %v9601
    %v9715 = vunpack.c.h.b16 %v9601
    %v9716 = vunpack.c.l.b16 %v9602
    %v9717 = vunpack.c.h.b16 %v9602
    %v9718 = vunpack.c.l.b16 %v9603
    %v9719 = vunpack.c.h.b16 %v9603
    %v9720 = vunpack.c.l.b16 %v9604
    %v9721 = vunpack.c.h.b16 %v9604
    %v9722 = vunpack.c.l.b16 %v9605
    %v9723 = vunpack.c.h.b16 %v9605
    %v9724 = vunpack.c.l.b16 %v9606
    %v9725 = vunpack.c.h.b16 %v9606
    %v9726 = vunpack.c.l.b16 %v9607
    %v9727 = vunpack.c.h.b16 %v9607
    %v9728 = vunpack.c.l.b16 %v9608
    %v9729 = vunpack.c.h.b16 %v9608
    %v9730 = vunpack.c.l.b16 %v9609
    %v9731 = vunpack.c.h.b16 %v9609
    %v9732 = vunpack.c.l.b16 %v9610
    %v9733 = vunpack.c.h.b16 %v9610
    %v9734 = vunpack.c.l.b16 %v9611
    %v9735 = vunpack.c.h.b16 %v9611
    %v9736 = vunpack.c.l.b16 %v9612
    %v9737 = vunpack.c.h.b16 %v9612
    %v9738 = vunpack.c.l.b16 %v9613
    %v9739 = vunpack.c.h.b16 %v9613
    %v9740 = vunpack.c.l.b16 %v9614
    %v9741 = vunpack.c.h.b16 %v9614
    %v9742 = vunpack.c.l.b16 %v9615
    %v9743 = vunpack.c.h.b16 %v9615
    %v9744 = vunpack.c.l.b16 %v9616
    %v9745 = vunpack.c.h.b16 %v9616
    %v9746 = vunpack.c.l.b16 %v9617
    %v9747 = vunpack.c.h.b16 %v9617
    %v9748 = vunpack.c.l.b16 %v9618
    %v9749 = vunpack.c.h.b16 %v9618
    %v9750 = vunpack.c.l.b16 %v9619
    %v9751 = vunpack.c.h.b16 %v9619
    %v9752 = vunpack.c.l.b16 %v9620
    %v9753 = vunpack.c.h.b16 %v9620
    %v9754 = vunpack.c.l.b16 %v9621
    %v9755 = vunpack.c.h.b16 %v9621
    %v9756 = vunpack.c.l.b16 %v9622
    %v9757 = vunpack.c.h.b16 %v9622
    %v9758 = vunpack.c.l.b16 %v9623
    %v9759 = vunpack.c.h.b16 %v9623
    %v9760 = vunpack.c.l.b16 %v9624
    %v9761 = vunpack.c.h.b16 %v9624
    %v9762 = vunpack.c.l.b16 %v9625
    %v9763 = vunpack.c.h.b16 %v9625
    %v9764 = vunpack.c.l.b16 %v9626
    %v9765 = vunpack.c.h.b16 %v9626
    %v9766 = vunpack.c.l.b16 %v9627
    %v9767 = vunpack.c.h.b16 %v9627
    %v9768 = vunpack.c.l.b16 %v9628
    %v9769 = vunpack.c.h.b16 %v9628
    %v9770 = vunpack.c.l.b16 %v9629
    %v9771 = vunpack.c.h.b16 %v9629
    %v9772 = vunpack.c.l.b16 %v9630
    %v9773 = vunpack.c.h.b16 %v9630
    %v9774 = vunpack.c.l.b16 %v9631
    %v9775 = vunpack.c.h.b16 %v9631
    %v9776 = vunpack.c.l.b16 %v9632
    %v9777 = vunpack.c.h.b16 %v9632
    %v9778 = vunpack.c.l.b16 %v9633
    %v9779 = vunpack.c.h.b16 %v9633
    %v9780 = vunpack.c.l.b16 %v9634
    %v9781 = vunpack.c.h.b16 %v9634
    %v9782 = vunpack.c.l.b16 %v9635
    %v9783 = vunpack.c.h.b16 %v9635
    %v9784 = vunpack.c.l.b16 %v9636
    %v9785 = vunpack.c.h.b16 %v9636
    %v9786 = vunpack.c.l.b16 %v9637
    %v9787 = vunpack.c.h.b16 %v9637
    %v9788 = vpack.c.b16 %v9694, %v9692
    %v9789 = vpack.c.b16 %v9695, %v9693
    %v9790 = vpack.c.b16 %v9698, %v9696
    %v9791 = vpack.c.b16 %v9699, %v9697
    %v9792 = vpack.c.b16 %v9702, %v9700
    %v9793 = vpack.c.b16 %v9703, %v9701
    %v9794 = vpack.c.b16 %v9706, %v9704
    %v9795 = vpack.c.b16 %v9707, %v9705
    %v9796 = vpack.c.b16 %v9710, %v9708
    %v9797 = vpack.c.b16 %v9711, %v9709
    %v9798 = vpack.c.b16 %v9714, %v9712
    %v9799 = vpack.c.b16 %v9715, %v9713
    %v9800 = vpack.c.b16 %v9718, %v9716
    %v9801 = vpack.c.b16 %v9719, %v9717
    %v9802 = vpack.c.b16 %v9722, %v9720
    %v9803 = vpack.c.b16 %v9723, %v9721
    %v9804 = vpack.c.b16 %v9726, %v9724
    %v9805 = vpack.c.b16 %v9727, %v9725
    %v9806 = vpack.c.b16 %v9730, %v9728
    %v9807 = vpack.c.b16 %v9731, %v9729
    %v9808 = vpack.c.b16 %v9734, %v9732
    %v9809 = vpack.c.b16 %v9735, %v9733
    %v9810 = vpack.c.b16 %v9738, %v9736
    %v9811 = vpack.c.b16 %v9739, %v9737
    %v9812 = vpack.c.b16 %v9742, %v9740
    %v9813 = vpack.c.b16 %v9743, %v9741
    %v9814 = vpack.c.b16 %v9746, %v9744
    %v9815 = vpack.c.b16 %v9747, %v9745
    %v9816 = vpack.c.b16 %v9750, %v9748
    %v9817 = vpack.c.b16 %v9751, %v9749
    %v9818 = vpack.c.b16 %v9754, %v9752
    %v9819 = vpack.c.b16 %v9755, %v9753
    %v9820 = vpack.c.b16 %v9758, %v9756
    %v9821 = vpack.c.b16 %v9759, %v9757
    %v9822 = vpack.c.b16 %v9762, %v9760
    %v9823 = vpack.c.b16 %v9763, %v9761
    %v9824 = vpack.c.b16 %v9766, %v9764
    %v9825 = vpack.c.b16 %v9767, %v9765
    %v9826 = vpack.c.b16 %v9770, %v9768
    %v9827 = vpack.c.b16 %v9771, %v9769
    %v9828 = vpack.c.b16 %v9774, %v9772
    %v9829 = vpack.c.b16 %v9775, %v9773
    %v9830 = vpack.c.b16 %v9778, %v9776
    %v9831 = vpack.c.b16 %v9779, %v9777
    %v9832 = vpack.c.b16 %v9782, %v9780
    %v9833 = vpack.c.b16 %v9783, %v9781
    %v9834 = vpack.c.b16 %v9786, %v9784
    %v9835 = vpack.c.b16 %v9787, %v9785
    %9884 = vmatpush.bf16.msra.mxu0 %v9802
    %9885 = vmatpush.bf16.msra.mxu0 %v9800
    %9886 = vmatpush.bf16.msra.mxu0 %v9798
    %9887 = vmatpush.bf16.msra.mxu0 %v9796
    %9888 = vmatpush.bf16.msra.mxu0 %v9794
    %9889 = vmatpush.bf16.msra.mxu0 %v9792
    %9890 = vmatpush.bf16.msra.mxu0 %v9790
    %9891 = vmatpush.bf16.msra.mxu0 %v9788
    %9892 = vmatmul.bf16.gmra.mxu0 %v9638
    %v9893 = vpop.f32.mrf.mxu0
    %v9894 = vadd.f32 0.0, %v9893
    %v9895 = vpop.f32.mrf.mxu0
    %9896 = vdwg.mxu0
    %9897 = vmatpush.bf16.msra.mxu0 %v9818
    %9898 = vmatpush.bf16.msra.mxu0 %v9816
    %9899 = vmatpush.bf16.msra.mxu0 %v9814
    %9900 = vmatpush.bf16.msra.mxu0 %v9812
    %9901 = vmatpush.bf16.msra.mxu0 %v9810
    %9902 = vmatpush.bf16.msra.mxu0 %v9808
    %9903 = vmatpush.bf16.msra.mxu0 %v9806
    %9904 = vmatpush.bf16.msra.mxu0 %v9804
    %9905 = vmatmul.bf16.gmra.mxu0 %v9639
    %v9906 = vpop.f32.mrf.mxu0
    %v9907 = vadd.f32 %v9894, %v9906
    %v9908 = vpop.f32.mrf.mxu0
    %9909 = vdwg.mxu0
    %9910 = vmatpush.bf16.msra.mxu0 %v9834
    %9911 = vmatpush.bf16.msra.mxu0 %v9832
    %9912 = vmatpush.bf16.msra.mxu0 %v9830
    %9913 = vmatpush.bf16.msra.mxu0 %v9828
    %9914 = vmatpush.bf16.msra.mxu0 %v9826
    %9915 = vmatpush.bf16.msra.mxu0 %v9824
    %9916 = vmatpush.bf16.msra.mxu0 %v9822
    %9917 = vmatpush.bf16.msra.mxu0 %v9820
    %9918 = vmatmul.bf16.gmra.mxu0 %v9640
    %v9919 = vpop.f32.mrf.mxu0
    %v9920 = vadd.f32 %v9907, %v9919
    %v9921 = vpop.f32.mrf.mxu0
    %9922 = vdwg.mxu0
    %9923 = vmatpush.bf16.msra.mxu0 %v9803
    %9924 = vmatpush.bf16.msra.mxu0 %v9801
    %9925 = vmatpush.bf16.msra.mxu0 %v9799
    %9926 = vmatpush.bf16.msra.mxu0 %v9797
    %9927 = vmatpush.bf16.msra.mxu0 %v9795
    %9928 = vmatpush.bf16.msra.mxu0 %v9793
    %9929 = vmatpush.bf16.msra.mxu0 %v9791
    %9930 = vmatpush.bf16.msra.mxu0 %v9789
    %9931 = vmatmul.bf16.gmra.mxu0 %v9638
    %v9932 = vpop.f32.mrf.mxu0
    %v9933 = vadd.f32 0.0, %v9932
    %v9934 = vpop.f32.mrf.mxu0
    %9935 = vdwg.mxu0
    %9936 = vmatpush.bf16.msra.mxu0 %v9819
    %9937 = vmatpush.bf16.msra.mxu0 %v9817
    %9938 = vmatpush.bf16.msra.mxu0 %v9815
    %9939 = vmatpush.bf16.msra.mxu0 %v9813
    %9940 = vmatpush.bf16.msra.mxu0 %v9811
    %9941 = vmatpush.bf16.msra.mxu0 %v9809
    %9942 = vmatpush.bf16.msra.mxu0 %v9807
    %9943 = vmatpush.bf16.msra.mxu0 %v9805
    %9944 = vmatmul.bf16.gmra.mxu0 %v9639
    %v9945 = vpop.f32.mrf.mxu0
    %v9946 = vadd.f32 %v9933, %v9945
    %v9947 = vpop.f32.mrf.mxu0
    %9948 = vdwg.mxu0
    %9949 = vmatpush.bf16.msra.mxu0 %v9835
    %9950 = vmatpush.bf16.msra.mxu0 %v9833
    %9951 = vmatpush.bf16.msra.mxu0 %v9831
    %9952 = vmatpush.bf16.msra.mxu0 %v9829
    %9953 = vmatpush.bf16.msra.mxu0 %v9827
    %9954 = vmatpush.bf16.msra.mxu0 %v9825
    %9955 = vmatpush.bf16.msra.mxu0 %v9823
    %9956 = vmatpush.bf16.msra.mxu0 %v9821
    %9957 = vmatmul.bf16.gmra.mxu0 %v9640
    %v9958 = vpop.f32.mrf.mxu0
    %v9959 = vadd.f32 %v9946, %v9958
    %v9960 = vpop.f32.mrf.mxu0
    %9961 = vdwg.mxu0
    %v9962 = vadd.f32 %v9587, %v9920
    %v9963 = vadd.f32 %v9588, %v9959
    %v9965 = vperm.slane %v7935, 0
    %v9966 = vperm.slane %v7935, 1
    %v9969 = vadd.f32 %v9962, %v9965
    %v9970 = vadd.f32 %v9963, %v9966
    %v9971 = vmax.f32 %v9969, 0.0
    %v9972 = vmax.f32 %v9970, 0.0
    %v9975 = vrot.slane %v9972, 7
    %vm9976 = vcmask 1040384
    %v9977 = vsel %vm9976, %v9971, %v9975
    %v9979 = vlaneseq
    %vm9980 = vcmp.ge.s32.totalorder %v9979, 0
    %vm9981 = vcmp.lt.s32.totalorder %v9979, 256
    %vm9982 = vmand %vm9980, %vm9981
    %9983 = vst.msk [vmem:[#allocation4] ss:$2 sm:$0x3] %vm9982, %v9977
    %v9984 = vld [vmem:[%s6921] sm:$0xff]
    %v9985 = vld [vmem:[%s6921 + $0x8] sm:$0xff]
    %v9986 = vld [vmem:[%s6921 + $0x10] sm:$0xff]
    %v9987 = vld [vmem:[%s6921 + $0x18] sm:$0xff]
    %v9988 = vld [vmem:[%s6921 + $0x20] sm:$0xff]
    %v9989 = vld [vmem:[%s6921 + $0x28] sm:$0xff]
    %v9990 = vld [vmem:[%s6921 + $0x30] sm:$0x7]
    %v9991 = vld [vmem:[%s6921 + $0x38] sm:$0x7]
    %v9992 = vld [vmem:[%s6921 + $0x40] sm:$0x7]
    %v9993 = vld [vmem:[%s6921 + $0x48] sm:$0x7]
    %v9994 = vld [vmem:[%s6921 + $0x50] sm:$0x7]
    %v9995 = vld [vmem:[%s6921 + $0x58] sm:$0x7]
    %v9996 = vmul.f32 %v9984, %v7948
    %v9997 = vmul.f32 %v9985, %v7949
    %v9998 = vmul.f32 %v9986, %v7950
    %v9999 = vmul.f32 %v9987, %v7951
    %v10000 = vmul.f32 %v9988, %v7952
    %v10001 = vmul.f32 %v9989, %v7953
    %v10002 = vmul.f32 %v9990, %v7948
    %v10003 = vmul.f32 %v9991, %v7949
    %v10004 = vmul.f32 %v9992, %v7950
    %v10005 = vmul.f32 %v9993, %v7951
    %v10006 = vmul.f32 %v9994, %v7952
    %v10007 = vmul.f32 %v9995, %v7953
    %v10008 = vadd.f32 %v9996, %v7966
    %v10009 = vadd.f32 %v9997, %v7967
    %v10010 = vadd.f32 %v9998, %v7968
    %v10011 = vadd.f32 %v9999, %v7969
    %v10012 = vadd.f32 %v10000, %v7970
    %v10013 = vadd.f32 %v10001, %v7971
    %v10014 = vadd.f32 %v10002, %v7966
    %v10015 = vadd.f32 %v10003, %v7967
    %v10016 = vadd.f32 %v10004, %v7968
    %v10017 = vadd.f32 %v10005, %v7969
    %v10018 = vadd.f32 %v10006, %v7970
    %v10019 = vadd.f32 %v10007, %v7971
    %v10020 = vmax.f32 %v10008, 0.0
    %v10021 = vmax.f32 %v10009, 0.0
    %v10022 = vmax.f32 %v10010, 0.0
    %v10023 = vmax.f32 %v10011, 0.0
    %v10024 = vmax.f32 %v10012, 0.0
    %v10025 = vmax.f32 %v10013, 0.0
    %v10026 = vmax.f32 %v10014, 0.0
    %v10027 = vmax.f32 %v10015, 0.0
    %v10028 = vmax.f32 %v10016, 0.0
    %v10029 = vmax.f32 %v10017, 0.0
    %v10030 = vmax.f32 %v10018, 0.0
    %v10031 = vmax.f32 %v10019, 0.0
    %v10032 = vmax.f32 %v10020, %v10023
    %v10033 = vmax.f32 %v10021, %v10024
    %v10034 = vmax.f32 %v10022, %v10025
    %v10035 = vmax.f32 %v10026, %v10029
    %v10036 = vmax.f32 %v10027, %v10030
    %v10037 = vmax.f32 %v10028, %v10031
    %v10038 = vpack.c.bf16 %v10035, %v10032
    %v10039 = vpack.c.bf16 %v10036, %v10033
    %v10040 = vpack.c.bf16 %v10037, %v10034
    %v10042 = vand.u32 %v10038, %v8015
    %v10045 = vand.u32 %v10039, %v8015
    %v10048 = vand.u32 %v10040, %v8015
    %10050 = vmatpush.bf16.msra.mxu0 0
    %10051 = vmatpush.bf16.msra.mxu0 0
    %10052 = vmatpush.bf16.msra.mxu0 0
    %10053 = vmatpush.bf16.msra.mxu0 0
    %10054 = vmatpush.bf16.msra.mxu0 0
    %10055 = vmatpush.bf16.msra.mxu0 0
    %10056 = vmatpush.bf16.msra.mxu0 0
    %10057 = vmatpush.bf16.msra.mxu0 %v10042
    %10058 = vmatmul.bf16.gmra.mxu0 %v8012
    %v10059 = vpop.f32.mrf.mxu0
    %v10060 = vadd.f32 0.0, %v10059
    %v10061 = vpop.f32.mrf.mxu0
    %v10062 = vadd.f32 0.0, %v10061
    %10063 = vdwg.mxu0
    %10064 = vmatpush.bf16.msra.mxu0 0
    %10065 = vmatpush.bf16.msra.mxu0 0
    %10066 = vmatpush.bf16.msra.mxu0 0
    %10067 = vmatpush.bf16.msra.mxu0 0
    %10068 = vmatpush.bf16.msra.mxu0 0
    %10069 = vmatpush.bf16.msra.mxu0 0
    %10070 = vmatpush.bf16.msra.mxu0 0
    %10071 = vmatpush.bf16.msra.mxu0 %v10045
    %10072 = vmatmul.bf16.gmra.mxu0 %v8012
    %v10073 = vpop.f32.mrf.mxu0
    %v10074 = vadd.f32 0.0, %v10073
    %v10075 = vpop.f32.mrf.mxu0
    %v10076 = vadd.f32 0.0, %v10075
    %10077 = vdwg.mxu0
    %10078 = vmatpush.bf16.msra.mxu0 0
    %10079 = vmatpush.bf16.msra.mxu0 0
    %10080 = vmatpush.bf16.msra.mxu0 0
    %10081 = vmatpush.bf16.msra.mxu0 0
    %10082 = vmatpush.bf16.msra.mxu0 0
    %10083 = vmatpush.bf16.msra.mxu0 0
    %10084 = vmatpush.bf16.msra.mxu0 0
    %10085 = vmatpush.bf16.msra.mxu0 %v10048
    %10086 = vmatmul.bf16.gmra.mxu0 %v8012
    %v10087 = vpop.f32.mrf.mxu0
    %v10088 = vadd.f32 0.0, %v10087
    %v10089 = vpop.f32.mrf.mxu0
    %v10090 = vadd.f32 0.0, %v10089
    %10091 = vdwg.mxu0
    %v10098 = vrot.slane %v10060, 5
    %v10099 = vrot.slane %v10062, 5
    %v10100 = vsel %vm2088, %v10098, %v10099
    %v10101 = vrot.slane %v10074, 5
    %v10102 = vrot.slane %v10076, 5
    %v10103 = vsel %vm2088, %v10101, %v10102
    %v10104 = vrot.slane %v10088, 5
    %v10105 = vrot.slane %v10090, 5
    %v10106 = vsel %vm2088, %v10104, %v10105
    %v10110 = vmax.f32 %v10060, %v10100
    %v10111 = vmax.f32 %v10074, %v10103
    %v10112 = vmax.f32 %v10088, %v10106
    %v10113 = vpack.c.bf16 %v10110, %v10110
    %v10114 = vpack.c.bf16 %v10111, %v10111
    %v10115 = vpack.c.bf16 %v10112, %v10112
    %v10116 = vld [vmem:[#allocation10] sm:$0xff]
    %v10117 = vld [vmem:[#allocation10 + $0x8] sm:$0xff]
    %v10118 = vld [vmem:[#allocation10 + $0x10] sm:$0xff]
    %v10119 = vld [vmem:[#allocation10 + $0x18] sm:$0xff]
    %v10120 = vld [vmem:[#allocation10 + $0x20] sm:$0xff]
    %v10121 = vld [vmem:[#allocation10 + $0x28] sm:$0xff]
    %v10122 = vld [vmem:[#allocation10 + $0x30] sm:$0xff]
    %v10123 = vld [vmem:[#allocation10 + $0x38] sm:$0xff]
    %v10124 = vld [vmem:[#allocation10 + $0x40] sm:$0xff]
    %v10125 = vld [vmem:[#allocation10 + $0x48] sm:$0xff]
    %v10126 = vld [vmem:[#allocation10 + $0x50] sm:$0xff]
    %v10127 = vld [vmem:[#allocation10 + $0x58] sm:$0xff]
    %v10128 = vld [vmem:[#allocation10 + $0x60] sm:$0xff]
    %v10129 = vld [vmem:[#allocation10 + $0x68] sm:$0xff]
    %v10130 = vld [vmem:[#allocation10 + $0x70] sm:$0xff]
    %v10131 = vld [vmem:[#allocation10 + $0x78] sm:$0xff]
    %v10132 = vld [vmem:[#allocation10 + $0x80] sm:$0xff]
    %v10133 = vld [vmem:[#allocation10 + $0x88] sm:$0xff]
    %v10134 = vld [vmem:[#allocation10 + $0x90] sm:$0xff]
    %v10135 = vld [vmem:[#allocation10 + $0x98] sm:$0xff]
    %v10136 = vld [vmem:[#allocation10 + $0xa0] sm:$0xff]
    %v10137 = vld [vmem:[#allocation10 + $0xa8] sm:$0xff]
    %v10138 = vld [vmem:[#allocation10 + $0xb0] sm:$0xff]
    %v10139 = vld [vmem:[#allocation10 + $0xb8] sm:$0xff]
    %v10140 = vld [vmem:[#allocation10 + $0xc0] sm:$0xff]
    %v10141 = vld [vmem:[#allocation10 + $0xc8] sm:$0xff]
    %v10142 = vld [vmem:[#allocation10 + $0xd0] sm:$0xff]
    %v10143 = vld [vmem:[#allocation10 + $0xd8] sm:$0xff]
    %v10144 = vld [vmem:[#allocation10 + $0xe0] sm:$0xff]
    %v10145 = vld [vmem:[#allocation10 + $0xe8] sm:$0xff]
    %v10146 = vld [vmem:[#allocation10 + $0xf0] sm:$0xff]
    %v10147 = vld [vmem:[#allocation10 + $0xf8] sm:$0xff]
    %v10148 = vld [vmem:[#allocation10 + $0x100] sm:$0xff]
    %v10149 = vld [vmem:[#allocation10 + $0x108] sm:$0xff]
    %v10150 = vld [vmem:[#allocation10 + $0x110] sm:$0xff]
    %v10151 = vld [vmem:[#allocation10 + $0x118] sm:$0xff]
    %v10152 = vld [vmem:[#allocation10 + $0x120] sm:$0xff]
    %v10153 = vld [vmem:[#allocation10 + $0x128] sm:$0xff]
    %v10154 = vld [vmem:[#allocation10 + $0x130] sm:$0xff]
    %v10155 = vld [vmem:[#allocation10 + $0x138] sm:$0xff]
    %v10156 = vld [vmem:[#allocation10 + $0x140] sm:$0xff]
    %v10157 = vld [vmem:[#allocation10 + $0x148] sm:$0xff]
    %v10158 = vld [vmem:[#allocation10 + $0x150] sm:$0xff]
    %v10159 = vld [vmem:[#allocation10 + $0x158] sm:$0xff]
    %v10160 = vld [vmem:[#allocation10 + $0x160] sm:$0xff]
    %v10161 = vld [vmem:[#allocation10 + $0x168] sm:$0xff]
    %v10162 = vld [vmem:[#allocation10 + $0x170] sm:$0xff]
    %v10163 = vld [vmem:[#allocation10 + $0x178] sm:$0xff]
    %v10164 = vld [vmem:[%s8139] sm:$0xff]
    %v10165 = vld [vmem:[%s8139 + $0x8] sm:$0xff]
    %v10166 = vld [vmem:[%s8139 + $0x10] sm:$0xff]
    %v10167 = vld [vmem:[%s8139 + $0x18] sm:$0xff]
    %v10168 = vld [vmem:[%s8139 + $0x20] sm:$0xff]
    %v10169 = vld [vmem:[%s8139 + $0x28] sm:$0xff]
    %v10170 = vld [vmem:[%s8139 + $0x30] sm:$0xff]
    %v10171 = vld [vmem:[%s8139 + $0x38] sm:$0xff]
    %v10172 = vld [vmem:[%s8139 + $0x40] sm:$0xff]
    %v10173 = vld [vmem:[%s8139 + $0x48] sm:$0xff]
    %v10174 = vld [vmem:[%s8139 + $0x50] sm:$0xff]
    %v10175 = vld [vmem:[%s8139 + $0x58] sm:$0xff]
    %v10176 = vld [vmem:[%s8139 + $0x60] sm:$0xff]
    %v10177 = vld [vmem:[%s8139 + $0x68] sm:$0xff]
    %v10178 = vld [vmem:[%s8139 + $0x70] sm:$0xff]
    %v10179 = vld [vmem:[%s8139 + $0x78] sm:$0xff]
    %v10180 = vld [vmem:[%s8139 + $0x80] sm:$0xff]
    %v10181 = vld [vmem:[%s8139 + $0x88] sm:$0xff]
    %v10182 = vld [vmem:[%s8139 + $0x90] sm:$0xff]
    %v10183 = vld [vmem:[%s8139 + $0x98] sm:$0xff]
    %v10184 = vld [vmem:[%s8139 + $0xa0] sm:$0xff]
    %v10185 = vld [vmem:[%s8139 + $0xa8] sm:$0xff]
    %v10186 = vld [vmem:[%s8139 + $0xb0] sm:$0xff]
    %v10187 = vld [vmem:[%s8139 + $0xb8] sm:$0xff]
    %v10188 = vld [vmem:[%s8139 + $0xc0] sm:$0xff]
    %v10189 = vld [vmem:[%s8139 + $0xc8] sm:$0xff]
    %v10190 = vld [vmem:[%s8139 + $0xd0] sm:$0xff]
    %v10191 = vld [vmem:[%s8139 + $0xd8] sm:$0xff]
    %v10192 = vld [vmem:[%s8139 + $0xe0] sm:$0xff]
    %v10193 = vld [vmem:[%s8139 + $0xe8] sm:$0xff]
    %v10194 = vld [vmem:[%s8139 + $0xf0] sm:$0xff]
    %v10195 = vld [vmem:[%s8139 + $0xf8] sm:$0xff]
    %v10196 = vld [vmem:[%s8139 + $0x100] sm:$0xff]
    %v10197 = vld [vmem:[%s8139 + $0x108] sm:$0xff]
    %v10198 = vld [vmem:[%s8139 + $0x110] sm:$0xff]
    %v10199 = vld [vmem:[%s8139 + $0x118] sm:$0xff]
    %v10200 = vld [vmem:[%s8139 + $0x120] sm:$0xff]
    %v10201 = vld [vmem:[%s8139 + $0x128] sm:$0xff]
    %v10202 = vld [vmem:[%s8139 + $0x130] sm:$0xff]
    %v10203 = vld [vmem:[%s8139 + $0x138] sm:$0xff]
    %v10204 = vld [vmem:[%s8139 + $0x140] sm:$0xff]
    %v10205 = vld [vmem:[%s8139 + $0x148] sm:$0xff]
    %v10206 = vld [vmem:[%s8139 + $0x150] sm:$0xff]
    %v10207 = vld [vmem:[%s8139 + $0x158] sm:$0xff]
    %v10208 = vld [vmem:[%s8139 + $0x160] sm:$0xff]
    %v10209 = vld [vmem:[%s8139 + $0x168] sm:$0xff]
    %v10210 = vld [vmem:[%s8139 + $0x170] sm:$0xff]
    %v10211 = vld [vmem:[%s8139 + $0x178] sm:$0xff]
    %v10213 = vshrl.u32 %v10113, 16
    %v10216 = vshrl.u32 %v10114, 16
    %v10219 = vshrl.u32 %v10115, 16
    %v10272 = vunpack.c.l.b16 %v10164
    %v10273 = vunpack.c.h.b16 %v10164
    %v10274 = vunpack.c.l.b16 %v10165
    %v10275 = vunpack.c.h.b16 %v10165
    %v10276 = vunpack.c.l.b16 %v10166
    %v10277 = vunpack.c.h.b16 %v10166
    %v10278 = vunpack.c.l.b16 %v10167
    %v10279 = vunpack.c.h.b16 %v10167
    %v10280 = vunpack.c.l.b16 %v10168
    %v10281 = vunpack.c.h.b16 %v10168
    %v10282 = vunpack.c.l.b16 %v10169
    %v10283 = vunpack.c.h.b16 %v10169
    %v10284 = vunpack.c.l.b16 %v10170
    %v10285 = vunpack.c.h.b16 %v10170
    %v10286 = vunpack.c.l.b16 %v10171
    %v10287 = vunpack.c.h.b16 %v10171
    %v10288 = vunpack.c.l.b16 %v10172
    %v10289 = vunpack.c.h.b16 %v10172
    %v10290 = vunpack.c.l.b16 %v10173
    %v10291 = vunpack.c.h.b16 %v10173
    %v10292 = vunpack.c.l.b16 %v10174
    %v10293 = vunpack.c.h.b16 %v10174
    %v10294 = vunpack.c.l.b16 %v10175
    %v10295 = vunpack.c.h.b16 %v10175
    %v10296 = vunpack.c.l.b16 %v10176
    %v10297 = vunpack.c.h.b16 %v10176
    %v10298 = vunpack.c.l.b16 %v10177
    %v10299 = vunpack.c.h.b16 %v10177
    %v10300 = vunpack.c.l.b16 %v10178
    %v10301 = vunpack.c.h.b16 %v10178
    %v10302 = vunpack.c.l.b16 %v10179
    %v10303 = vunpack.c.h.b16 %v10179
    %v10304 = vunpack.c.l.b16 %v10180
    %v10305 = vunpack.c.h.b16 %v10180
    %v10306 = vunpack.c.l.b16 %v10181
    %v10307 = vunpack.c.h.b16 %v10181
    %v10308 = vunpack.c.l.b16 %v10182
    %v10309 = vunpack.c.h.b16 %v10182
    %v10310 = vunpack.c.l.b16 %v10183
    %v10311 = vunpack.c.h.b16 %v10183
    %v10312 = vunpack.c.l.b16 %v10184
    %v10313 = vunpack.c.h.b16 %v10184
    %v10314 = vunpack.c.l.b16 %v10185
    %v10315 = vunpack.c.h.b16 %v10185
    %v10316 = vunpack.c.l.b16 %v10186
    %v10317 = vunpack.c.h.b16 %v10186
    %v10318 = vunpack.c.l.b16 %v10187
    %v10319 = vunpack.c.h.b16 %v10187
    %v10320 = vunpack.c.l.b16 %v10188
    %v10321 = vunpack.c.h.b16 %v10188
    %v10322 = vunpack.c.l.b16 %v10189
    %v10323 = vunpack.c.h.b16 %v10189
    %v10324 = vunpack.c.l.b16 %v10190
    %v10325 = vunpack.c.h.b16 %v10190
    %v10326 = vunpack.c.l.b16 %v10191
    %v10327 = vunpack.c.h.b16 %v10191
    %v10328 = vunpack.c.l.b16 %v10192
    %v10329 = vunpack.c.h.b16 %v10192
    %v10330 = vunpack.c.l.b16 %v10193
    %v10331 = vunpack.c.h.b16 %v10193
    %v10332 = vunpack.c.l.b16 %v10194
    %v10333 = vunpack.c.h.b16 %v10194
    %v10334 = vunpack.c.l.b16 %v10195
    %v10335 = vunpack.c.h.b16 %v10195
    %v10336 = vunpack.c.l.b16 %v10196
    %v10337 = vunpack.c.h.b16 %v10196
    %v10338 = vunpack.c.l.b16 %v10197
    %v10339 = vunpack.c.h.b16 %v10197
    %v10340 = vunpack.c.l.b16 %v10198
    %v10341 = vunpack.c.h.b16 %v10198
    %v10342 = vunpack.c.l.b16 %v10199
    %v10343 = vunpack.c.h.b16 %v10199
    %v10344 = vunpack.c.l.b16 %v10200
    %v10345 = vunpack.c.h.b16 %v10200
    %v10346 = vunpack.c.l.b16 %v10201
    %v10347 = vunpack.c.h.b16 %v10201
    %v10348 = vunpack.c.l.b16 %v10202
    %v10349 = vunpack.c.h.b16 %v10202
    %v10350 = vunpack.c.l.b16 %v10203
    %v10351 = vunpack.c.h.b16 %v10203
    %v10352 = vunpack.c.l.b16 %v10204
    %v10353 = vunpack.c.h.b16 %v10204
    %v10354 = vunpack.c.l.b16 %v10205
    %v10355 = vunpack.c.h.b16 %v10205
    %v10356 = vunpack.c.l.b16 %v10206
    %v10357 = vunpack.c.h.b16 %v10206
    %v10358 = vunpack.c.l.b16 %v10207
    %v10359 = vunpack.c.h.b16 %v10207
    %v10360 = vunpack.c.l.b16 %v10208
    %v10361 = vunpack.c.h.b16 %v10208
    %v10362 = vunpack.c.l.b16 %v10209
    %v10363 = vunpack.c.h.b16 %v10209
    %v10364 = vunpack.c.l.b16 %v10210
    %v10365 = vunpack.c.h.b16 %v10210
    %v10366 = vunpack.c.l.b16 %v10211
    %v10367 = vunpack.c.h.b16 %v10211
    %v10368 = vpack.c.b16 %v10274, %v10272
    %v10369 = vpack.c.b16 %v10275, %v10273
    %v10370 = vpack.c.b16 %v10278, %v10276
    %v10371 = vpack.c.b16 %v10279, %v10277
    %v10372 = vpack.c.b16 %v10282, %v10280
    %v10373 = vpack.c.b16 %v10283, %v10281
    %v10374 = vpack.c.b16 %v10286, %v10284
    %v10375 = vpack.c.b16 %v10287, %v10285
    %v10376 = vpack.c.b16 %v10290, %v10288
    %v10377 = vpack.c.b16 %v10291, %v10289
    %v10378 = vpack.c.b16 %v10294, %v10292
    %v10379 = vpack.c.b16 %v10295, %v10293
    %v10380 = vpack.c.b16 %v10298, %v10296
    %v10381 = vpack.c.b16 %v10299, %v10297
    %v10382 = vpack.c.b16 %v10302, %v10300
    %v10383 = vpack.c.b16 %v10303, %v10301
    %v10384 = vpack.c.b16 %v10306, %v10304
    %v10385 = vpack.c.b16 %v10307, %v10305
    %v10386 = vpack.c.b16 %v10310, %v10308
    %v10387 = vpack.c.b16 %v10311, %v10309
    %v10388 = vpack.c.b16 %v10314, %v10312
    %v10389 = vpack.c.b16 %v10315, %v10313
    %v10390 = vpack.c.b16 %v10318, %v10316
    %v10391 = vpack.c.b16 %v10319, %v10317
    %v10392 = vpack.c.b16 %v10322, %v10320
    %v10393 = vpack.c.b16 %v10323, %v10321
    %v10394 = vpack.c.b16 %v10326, %v10324
    %v10395 = vpack.c.b16 %v10327, %v10325
    %v10396 = vpack.c.b16 %v10330, %v10328
    %v10397 = vpack.c.b16 %v10331, %v10329
    %v10398 = vpack.c.b16 %v10334, %v10332
    %v10399 = vpack.c.b16 %v10335, %v10333
    %v10400 = vpack.c.b16 %v10338, %v10336
    %v10401 = vpack.c.b16 %v10339, %v10337
    %v10402 = vpack.c.b16 %v10342, %v10340
    %v10403 = vpack.c.b16 %v10343, %v10341
    %v10404 = vpack.c.b16 %v10346, %v10344
    %v10405 = vpack.c.b16 %v10347, %v10345
    %v10406 = vpack.c.b16 %v10350, %v10348
    %v10407 = vpack.c.b16 %v10351, %v10349
    %v10408 = vpack.c.b16 %v10354, %v10352
    %v10409 = vpack.c.b16 %v10355, %v10353
    %v10410 = vpack.c.b16 %v10358, %v10356
    %v10411 = vpack.c.b16 %v10359, %v10357
    %v10412 = vpack.c.b16 %v10362, %v10360
    %v10413 = vpack.c.b16 %v10363, %v10361
    %v10414 = vpack.c.b16 %v10366, %v10364
    %v10415 = vpack.c.b16 %v10367, %v10365
    %10464 = vmatpush.bf16.msra.mxu0 %v10382
    %10465 = vmatpush.bf16.msra.mxu0 %v10380
    %10466 = vmatpush.bf16.msra.mxu0 %v10378
    %10467 = vmatpush.bf16.msra.mxu0 %v10376
    %10468 = vmatpush.bf16.msra.mxu0 %v10374
    %10469 = vmatpush.bf16.msra.mxu0 %v10372
    %10470 = vmatpush.bf16.msra.mxu0 %v10370
    %10471 = vmatpush.bf16.msra.mxu0 %v10368
    %10472 = vmatmul.bf16.gmra.mxu0 %v10213
    %v10473 = vpop.f32.mrf.mxu0
    %v10474 = vadd.f32 0.0, %v10473
    %v10475 = vpop.f32.mrf.mxu0
    %10476 = vdwg.mxu0
    %10477 = vmatpush.bf16.msra.mxu0 %v10398
    %10478 = vmatpush.bf16.msra.mxu0 %v10396
    %10479 = vmatpush.bf16.msra.mxu0 %v10394
    %10480 = vmatpush.bf16.msra.mxu0 %v10392
    %10481 = vmatpush.bf16.msra.mxu0 %v10390
    %10482 = vmatpush.bf16.msra.mxu0 %v10388
    %10483 = vmatpush.bf16.msra.mxu0 %v10386
    %10484 = vmatpush.bf16.msra.mxu0 %v10384
    %10485 = vmatmul.bf16.gmra.mxu0 %v10216
    %v10486 = vpop.f32.mrf.mxu0
    %v10487 = vadd.f32 %v10474, %v10486
    %v10488 = vpop.f32.mrf.mxu0
    %10489 = vdwg.mxu0
    %10490 = vmatpush.bf16.msra.mxu0 %v10414
    %10491 = vmatpush.bf16.msra.mxu0 %v10412
    %10492 = vmatpush.bf16.msra.mxu0 %v10410
    %10493 = vmatpush.bf16.msra.mxu0 %v10408
    %10494 = vmatpush.bf16.msra.mxu0 %v10406
    %10495 = vmatpush.bf16.msra.mxu0 %v10404
    %10496 = vmatpush.bf16.msra.mxu0 %v10402
    %10497 = vmatpush.bf16.msra.mxu0 %v10400
    %10498 = vmatmul.bf16.gmra.mxu0 %v10219
    %v10499 = vpop.f32.mrf.mxu0
    %v10500 = vadd.f32 %v10487, %v10499
    %v10501 = vpop.f32.mrf.mxu0
    %10502 = vdwg.mxu0
    %10503 = vmatpush.bf16.msra.mxu0 %v10383
    %10504 = vmatpush.bf16.msra.mxu0 %v10381
    %10505 = vmatpush.bf16.msra.mxu0 %v10379
    %10506 = vmatpush.bf16.msra.mxu0 %v10377
    %10507 = vmatpush.bf16.msra.mxu0 %v10375
    %10508 = vmatpush.bf16.msra.mxu0 %v10373
    %10509 = vmatpush.bf16.msra.mxu0 %v10371
    %10510 = vmatpush.bf16.msra.mxu0 %v10369
    %10511 = vmatmul.bf16.gmra.mxu0 %v10213
    %v10512 = vpop.f32.mrf.mxu0
    %v10513 = vadd.f32 0.0, %v10512
    %v10514 = vpop.f32.mrf.mxu0
    %10515 = vdwg.mxu0
    %10516 = vmatpush.bf16.msra.mxu0 %v10399
    %10517 = vmatpush.bf16.msra.mxu0 %v10397
    %10518 = vmatpush.bf16.msra.mxu0 %v10395
    %10519 = vmatpush.bf16.msra.mxu0 %v10393
    %10520 = vmatpush.bf16.msra.mxu0 %v10391
    %10521 = vmatpush.bf16.msra.mxu0 %v10389
    %10522 = vmatpush.bf16.msra.mxu0 %v10387
    %10523 = vmatpush.bf16.msra.mxu0 %v10385
    %10524 = vmatmul.bf16.gmra.mxu0 %v10216
    %v10525 = vpop.f32.mrf.mxu0
    %v10526 = vadd.f32 %v10513, %v10525
    %v10527 = vpop.f32.mrf.mxu0
    %10528 = vdwg.mxu0
    %10529 = vmatpush.bf16.msra.mxu0 %v10415
    %10530 = vmatpush.bf16.msra.mxu0 %v10413
    %10531 = vmatpush.bf16.msra.mxu0 %v10411
    %10532 = vmatpush.bf16.msra.mxu0 %v10409
    %10533 = vmatpush.bf16.msra.mxu0 %v10407
    %10534 = vmatpush.bf16.msra.mxu0 %v10405
    %10535 = vmatpush.bf16.msra.mxu0 %v10403
    %10536 = vmatpush.bf16.msra.mxu0 %v10401
    %10537 = vmatmul.bf16.gmra.mxu0 %v10219
    %v10538 = vpop.f32.mrf.mxu0
    %v10539 = vadd.f32 %v10526, %v10538
    %v10540 = vpop.f32.mrf.mxu0
    %10541 = vdwg.mxu0
    %v10590 = vunpack.c.l.b16 %v10116
    %v10591 = vunpack.c.h.b16 %v10116
    %v10592 = vunpack.c.l.b16 %v10117
    %v10593 = vunpack.c.h.b16 %v10117
    %v10594 = vunpack.c.l.b16 %v10118
    %v10595 = vunpack.c.h.b16 %v10118
    %v10596 = vunpack.c.l.b16 %v10119
    %v10597 = vunpack.c.h.b16 %v10119
    %v10598 = vunpack.c.l.b16 %v10120
    %v10599 = vunpack.c.h.b16 %v10120
    %v10600 = vunpack.c.l.b16 %v10121
    %v10601 = vunpack.c.h.b16 %v10121
    %v10602 = vunpack.c.l.b16 %v10122
    %v10603 = vunpack.c.h.b16 %v10122
    %v10604 = vunpack.c.l.b16 %v10123
    %v10605 = vunpack.c.h.b16 %v10123
    %v10606 = vunpack.c.l.b16 %v10124
    %v10607 = vunpack.c.h.b16 %v10124
    %v10608 = vunpack.c.l.b16 %v10125
    %v10609 = vunpack.c.h.b16 %v10125
    %v10610 = vunpack.c.l.b16 %v10126
    %v10611 = vunpack.c.h.b16 %v10126
    %v10612 = vunpack.c.l.b16 %v10127
    %v10613 = vunpack.c.h.b16 %v10127
    %v10614 = vunpack.c.l.b16 %v10128
    %v10615 = vunpack.c.h.b16 %v10128
    %v10616 = vunpack.c.l.b16 %v10129
    %v10617 = vunpack.c.h.b16 %v10129
    %v10618 = vunpack.c.l.b16 %v10130
    %v10619 = vunpack.c.h.b16 %v10130
    %v10620 = vunpack.c.l.b16 %v10131
    %v10621 = vunpack.c.h.b16 %v10131
    %v10622 = vunpack.c.l.b16 %v10132
    %v10623 = vunpack.c.h.b16 %v10132
    %v10624 = vunpack.c.l.b16 %v10133
    %v10625 = vunpack.c.h.b16 %v10133
    %v10626 = vunpack.c.l.b16 %v10134
    %v10627 = vunpack.c.h.b16 %v10134
    %v10628 = vunpack.c.l.b16 %v10135
    %v10629 = vunpack.c.h.b16 %v10135
    %v10630 = vunpack.c.l.b16 %v10136
    %v10631 = vunpack.c.h.b16 %v10136
    %v10632 = vunpack.c.l.b16 %v10137
    %v10633 = vunpack.c.h.b16 %v10137
    %v10634 = vunpack.c.l.b16 %v10138
    %v10635 = vunpack.c.h.b16 %v10138
    %v10636 = vunpack.c.l.b16 %v10139
    %v10637 = vunpack.c.h.b16 %v10139
    %v10638 = vunpack.c.l.b16 %v10140
    %v10639 = vunpack.c.h.b16 %v10140
    %v10640 = vunpack.c.l.b16 %v10141
    %v10641 = vunpack.c.h.b16 %v10141
    %v10642 = vunpack.c.l.b16 %v10142
    %v10643 = vunpack.c.h.b16 %v10142
    %v10644 = vunpack.c.l.b16 %v10143
    %v10645 = vunpack.c.h.b16 %v10143
    %v10646 = vunpack.c.l.b16 %v10144
    %v10647 = vunpack.c.h.b16 %v10144
    %v10648 = vunpack.c.l.b16 %v10145
    %v10649 = vunpack.c.h.b16 %v10145
    %v10650 = vunpack.c.l.b16 %v10146
    %v10651 = vunpack.c.h.b16 %v10146
    %v10652 = vunpack.c.l.b16 %v10147
    %v10653 = vunpack.c.h.b16 %v10147
    %v10654 = vunpack.c.l.b16 %v10148
    %v10655 = vunpack.c.h.b16 %v10148
    %v10656 = vunpack.c.l.b16 %v10149
    %v10657 = vunpack.c.h.b16 %v10149
    %v10658 = vunpack.c.l.b16 %v10150
    %v10659 = vunpack.c.h.b16 %v10150
    %v10660 = vunpack.c.l.b16 %v10151
    %v10661 = vunpack.c.h.b16 %v10151
    %v10662 = vunpack.c.l.b16 %v10152
    %v10663 = vunpack.c.h.b16 %v10152
    %v10664 = vunpack.c.l.b16 %v10153
    %v10665 = vunpack.c.h.b16 %v10153
    %v10666 = vunpack.c.l.b16 %v10154
    %v10667 = vunpack.c.h.b16 %v10154
    %v10668 = vunpack.c.l.b16 %v10155
    %v10669 = vunpack.c.h.b16 %v10155
    %v10670 = vunpack.c.l.b16 %v10156
    %v10671 = vunpack.c.h.b16 %v10156
    %v10672 = vunpack.c.l.b16 %v10157
    %v10673 = vunpack.c.h.b16 %v10157
    %v10674 = vunpack.c.l.b16 %v10158
    %v10675 = vunpack.c.h.b16 %v10158
    %v10676 = vunpack.c.l.b16 %v10159
    %v10677 = vunpack.c.h.b16 %v10159
    %v10678 = vunpack.c.l.b16 %v10160
    %v10679 = vunpack.c.h.b16 %v10160
    %v10680 = vunpack.c.l.b16 %v10161
    %v10681 = vunpack.c.h.b16 %v10161
    %v10682 = vunpack.c.l.b16 %v10162
    %v10683 = vunpack.c.h.b16 %v10162
    %v10684 = vunpack.c.l.b16 %v10163
    %v10685 = vunpack.c.h.b16 %v10163
    %v10686 = vpack.c.b16 %v10592, %v10590
    %v10687 = vpack.c.b16 %v10593, %v10591
    %v10688 = vpack.c.b16 %v10596, %v10594
    %v10689 = vpack.c.b16 %v10597, %v10595
    %v10690 = vpack.c.b16 %v10600, %v10598
    %v10691 = vpack.c.b16 %v10601, %v10599
    %v10692 = vpack.c.b16 %v10604, %v10602
    %v10693 = vpack.c.b16 %v10605, %v10603
    %v10694 = vpack.c.b16 %v10608, %v10606
    %v10695 = vpack.c.b16 %v10609, %v10607
    %v10696 = vpack.c.b16 %v10612, %v10610
    %v10697 = vpack.c.b16 %v10613, %v10611
    %v10698 = vpack.c.b16 %v10616, %v10614
    %v10699 = vpack.c.b16 %v10617, %v10615
    %v10700 = vpack.c.b16 %v10620, %v10618
    %v10701 = vpack.c.b16 %v10621, %v10619
    %v10702 = vpack.c.b16 %v10624, %v10622
    %v10703 = vpack.c.b16 %v10625, %v10623
    %v10704 = vpack.c.b16 %v10628, %v10626
    %v10705 = vpack.c.b16 %v10629, %v10627
    %v10706 = vpack.c.b16 %v10632, %v10630
    %v10707 = vpack.c.b16 %v10633, %v10631
    %v10708 = vpack.c.b16 %v10636, %v10634
    %v10709 = vpack.c.b16 %v10637, %v10635
    %v10710 = vpack.c.b16 %v10640, %v10638
    %v10711 = vpack.c.b16 %v10641, %v10639
    %v10712 = vpack.c.b16 %v10644, %v10642
    %v10713 = vpack.c.b16 %v10645, %v10643
    %v10714 = vpack.c.b16 %v10648, %v10646
    %v10715 = vpack.c.b16 %v10649, %v10647
    %v10716 = vpack.c.b16 %v10652, %v10650
    %v10717 = vpack.c.b16 %v10653, %v10651
    %v10718 = vpack.c.b16 %v10656, %v10654
    %v10719 = vpack.c.b16 %v10657, %v10655
    %v10720 = vpack.c.b16 %v10660, %v10658
    %v10721 = vpack.c.b16 %v10661, %v10659
    %v10722 = vpack.c.b16 %v10664, %v10662
    %v10723 = vpack.c.b16 %v10665, %v10663
    %v10724 = vpack.c.b16 %v10668, %v10666
    %v10725 = vpack.c.b16 %v10669, %v10667
    %v10726 = vpack.c.b16 %v10672, %v10670
    %v10727 = vpack.c.b16 %v10673, %v10671
    %v10728 = vpack.c.b16 %v10676, %v10674
    %v10729 = vpack.c.b16 %v10677, %v10675
    %v10730 = vpack.c.b16 %v10680, %v10678
    %v10731 = vpack.c.b16 %v10681, %v10679
    %v10732 = vpack.c.b16 %v10684, %v10682
    %v10733 = vpack.c.b16 %v10685, %v10683
    %10782 = vmatpush.bf16.msra.mxu0 %v10700
    %10783 = vmatpush.bf16.msra.mxu0 %v10698
    %10784 = vmatpush.bf16.msra.mxu0 %v10696
    %10785 = vmatpush.bf16.msra.mxu0 %v10694
    %10786 = vmatpush.bf16.msra.mxu0 %v10692
    %10787 = vmatpush.bf16.msra.mxu0 %v10690
    %10788 = vmatpush.bf16.msra.mxu0 %v10688
    %10789 = vmatpush.bf16.msra.mxu0 %v10686
    %10790 = vmatmul.bf16.gmra.mxu0 %v10113
    %v10791 = vpop.f32.mrf.mxu0
    %v10792 = vadd.f32 %v10500, %v10791
    %v10793 = vpop.f32.mrf.mxu0
    %10794 = vdwg.mxu0
    %10795 = vmatpush.bf16.msra.mxu0 %v10716
    %10796 = vmatpush.bf16.msra.mxu0 %v10714
    %10797 = vmatpush.bf16.msra.mxu0 %v10712
    %10798 = vmatpush.bf16.msra.mxu0 %v10710
    %10799 = vmatpush.bf16.msra.mxu0 %v10708
    %10800 = vmatpush.bf16.msra.mxu0 %v10706
    %10801 = vmatpush.bf16.msra.mxu0 %v10704
    %10802 = vmatpush.bf16.msra.mxu0 %v10702
    %10803 = vmatmul.bf16.gmra.mxu0 %v10114
    %v10804 = vpop.f32.mrf.mxu0
    %v10805 = vadd.f32 %v10792, %v10804
    %v10806 = vpop.f32.mrf.mxu0
    %10807 = vdwg.mxu0
    %10808 = vmatpush.bf16.msra.mxu0 %v10732
    %10809 = vmatpush.bf16.msra.mxu0 %v10730
    %10810 = vmatpush.bf16.msra.mxu0 %v10728
    %10811 = vmatpush.bf16.msra.mxu0 %v10726
    %10812 = vmatpush.bf16.msra.mxu0 %v10724
    %10813 = vmatpush.bf16.msra.mxu0 %v10722
    %10814 = vmatpush.bf16.msra.mxu0 %v10720
    %10815 = vmatpush.bf16.msra.mxu0 %v10718
    %10816 = vmatmul.bf16.gmra.mxu0 %v10115
    %v10817 = vpop.f32.mrf.mxu0
    %v10818 = vadd.f32 %v10805, %v10817
    %v10819 = vpop.f32.mrf.mxu0
    %10820 = vdwg.mxu0
    %10821 = vmatpush.bf16.msra.mxu0 %v10701
    %10822 = vmatpush.bf16.msra.mxu0 %v10699
    %10823 = vmatpush.bf16.msra.mxu0 %v10697
    %10824 = vmatpush.bf16.msra.mxu0 %v10695
    %10825 = vmatpush.bf16.msra.mxu0 %v10693
    %10826 = vmatpush.bf16.msra.mxu0 %v10691
    %10827 = vmatpush.bf16.msra.mxu0 %v10689
    %10828 = vmatpush.bf16.msra.mxu0 %v10687
    %10829 = vmatmul.bf16.gmra.mxu0 %v10113
    %v10830 = vpop.f32.mrf.mxu0
    %v10831 = vadd.f32 %v10539, %v10830
    %v10832 = vpop.f32.mrf.mxu0
    %10833 = vdwg.mxu0
    %10834 = vmatpush.bf16.msra.mxu0 %v10717
    %10835 = vmatpush.bf16.msra.mxu0 %v10715
    %10836 = vmatpush.bf16.msra.mxu0 %v10713
    %10837 = vmatpush.bf16.msra.mxu0 %v10711
    %10838 = vmatpush.bf16.msra.mxu0 %v10709
    %10839 = vmatpush.bf16.msra.mxu0 %v10707
    %10840 = vmatpush.bf16.msra.mxu0 %v10705
    %10841 = vmatpush.bf16.msra.mxu0 %v10703
    %10842 = vmatmul.bf16.gmra.mxu0 %v10114
    %v10843 = vpop.f32.mrf.mxu0
    %v10844 = vadd.f32 %v10831, %v10843
    %v10845 = vpop.f32.mrf.mxu0
    %10846 = vdwg.mxu0
    %10847 = vmatpush.bf16.msra.mxu0 %v10733
    %10848 = vmatpush.bf16.msra.mxu0 %v10731
    %10849 = vmatpush.bf16.msra.mxu0 %v10729
    %10850 = vmatpush.bf16.msra.mxu0 %v10727
    %10851 = vmatpush.bf16.msra.mxu0 %v10725
    %10852 = vmatpush.bf16.msra.mxu0 %v10723
    %10853 = vmatpush.bf16.msra.mxu0 %v10721
    %10854 = vmatpush.bf16.msra.mxu0 %v10719
    %10855 = vmatmul.bf16.gmra.mxu0 %v10115
    %v10856 = vpop.f32.mrf.mxu0
    %v10857 = vadd.f32 %v10844, %v10856
    %v10858 = vpop.f32.mrf.mxu0
    %10859 = vdwg.mxu0
    %v10860 = vld [vmem:[%s8836] sm:$0xff]
    %v10861 = vld [vmem:[%s8836 + $0x8] sm:$0xff]
    %v10862 = vld [vmem:[%s8836 + $0x10] sm:$0xff]
    %v10863 = vld [vmem:[%s8836 + $0x18] sm:$0xff]
    %v10864 = vld [vmem:[%s8836 + $0x20] sm:$0xff]
    %v10865 = vld [vmem:[%s8836 + $0x28] sm:$0xff]
    %v10866 = vld [vmem:[%s8836 + $0x30] sm:$0xff]
    %v10867 = vld [vmem:[%s8836 + $0x38] sm:$0xff]
    %v10868 = vld [vmem:[%s8836 + $0x40] sm:$0xff]
    %v10869 = vld [vmem:[%s8836 + $0x48] sm:$0xff]
    %v10870 = vld [vmem:[%s8836 + $0x50] sm:$0xff]
    %v10871 = vld [vmem:[%s8836 + $0x58] sm:$0xff]
    %v10872 = vld [vmem:[%s8836 + $0x60] sm:$0xff]
    %v10873 = vld [vmem:[%s8836 + $0x68] sm:$0xff]
    %v10874 = vld [vmem:[%s8836 + $0x70] sm:$0xff]
    %v10875 = vld [vmem:[%s8836 + $0x78] sm:$0xff]
    %v10876 = vld [vmem:[%s8836 + $0x80] sm:$0xff]
    %v10877 = vld [vmem:[%s8836 + $0x88] sm:$0xff]
    %v10878 = vld [vmem:[%s8836 + $0x90] sm:$0xff]
    %v10879 = vld [vmem:[%s8836 + $0x98] sm:$0xff]
    %v10880 = vld [vmem:[%s8836 + $0xa0] sm:$0xff]
    %v10881 = vld [vmem:[%s8836 + $0xa8] sm:$0xff]
    %v10882 = vld [vmem:[%s8836 + $0xb0] sm:$0xff]
    %v10883 = vld [vmem:[%s8836 + $0xb8] sm:$0xff]
    %v10884 = vld [vmem:[%s8836 + $0xc0] sm:$0xff]
    %v10885 = vld [vmem:[%s8836 + $0xc8] sm:$0xff]
    %v10886 = vld [vmem:[%s8836 + $0xd0] sm:$0xff]
    %v10887 = vld [vmem:[%s8836 + $0xd8] sm:$0xff]
    %v10888 = vld [vmem:[%s8836 + $0xe0] sm:$0xff]
    %v10889 = vld [vmem:[%s8836 + $0xe8] sm:$0xff]
    %v10890 = vld [vmem:[%s8836 + $0xf0] sm:$0xff]
    %v10891 = vld [vmem:[%s8836 + $0xf8] sm:$0xff]
    %v10892 = vld [vmem:[%s8836 + $0x100] sm:$0xff]
    %v10893 = vld [vmem:[%s8836 + $0x108] sm:$0xff]
    %v10894 = vld [vmem:[%s8836 + $0x110] sm:$0xff]
    %v10895 = vld [vmem:[%s8836 + $0x118] sm:$0xff]
    %v10896 = vld [vmem:[%s8836 + $0x120] sm:$0xff]
    %v10897 = vld [vmem:[%s8836 + $0x128] sm:$0xff]
    %v10898 = vld [vmem:[%s8836 + $0x130] sm:$0xff]
    %v10899 = vld [vmem:[%s8836 + $0x138] sm:$0xff]
    %v10900 = vld [vmem:[%s8836 + $0x140] sm:$0xff]
    %v10901 = vld [vmem:[%s8836 + $0x148] sm:$0xff]
    %v10902 = vld [vmem:[%s8836 + $0x150] sm:$0xff]
    %v10903 = vld [vmem:[%s8836 + $0x158] sm:$0xff]
    %v10904 = vld [vmem:[%s8836 + $0x160] sm:$0xff]
    %v10905 = vld [vmem:[%s8836 + $0x168] sm:$0xff]
    %v10906 = vld [vmem:[%s8836 + $0x170] sm:$0xff]
    %v10907 = vld [vmem:[%s8836 + $0x178] sm:$0xff]
    %v10911 = vrot.slane %v10113, 1
    %v10912 = vrot.slane %v10114, 1
    %v10913 = vrot.slane %v10115, 1
    %v10965 = vunpack.c.l.b16 %v10860
    %v10966 = vunpack.c.h.b16 %v10860
    %v10967 = vunpack.c.l.b16 %v10861
    %v10968 = vunpack.c.h.b16 %v10861
    %v10969 = vunpack.c.l.b16 %v10862
    %v10970 = vunpack.c.h.b16 %v10862
    %v10971 = vunpack.c.l.b16 %v10863
    %v10972 = vunpack.c.h.b16 %v10863
    %v10973 = vunpack.c.l.b16 %v10864
    %v10974 = vunpack.c.h.b16 %v10864
    %v10975 = vunpack.c.l.b16 %v10865
    %v10976 = vunpack.c.h.b16 %v10865
    %v10977 = vunpack.c.l.b16 %v10866
    %v10978 = vunpack.c.h.b16 %v10866
    %v10979 = vunpack.c.l.b16 %v10867
    %v10980 = vunpack.c.h.b16 %v10867
    %v10981 = vunpack.c.l.b16 %v10868
    %v10982 = vunpack.c.h.b16 %v10868
    %v10983 = vunpack.c.l.b16 %v10869
    %v10984 = vunpack.c.h.b16 %v10869
    %v10985 = vunpack.c.l.b16 %v10870
    %v10986 = vunpack.c.h.b16 %v10870
    %v10987 = vunpack.c.l.b16 %v10871
    %v10988 = vunpack.c.h.b16 %v10871
    %v10989 = vunpack.c.l.b16 %v10872
    %v10990 = vunpack.c.h.b16 %v10872
    %v10991 = vunpack.c.l.b16 %v10873
    %v10992 = vunpack.c.h.b16 %v10873
    %v10993 = vunpack.c.l.b16 %v10874
    %v10994 = vunpack.c.h.b16 %v10874
    %v10995 = vunpack.c.l.b16 %v10875
    %v10996 = vunpack.c.h.b16 %v10875
    %v10997 = vunpack.c.l.b16 %v10876
    %v10998 = vunpack.c.h.b16 %v10876
    %v10999 = vunpack.c.l.b16 %v10877
    %v11000 = vunpack.c.h.b16 %v10877
    %v11001 = vunpack.c.l.b16 %v10878
    %v11002 = vunpack.c.h.b16 %v10878
    %v11003 = vunpack.c.l.b16 %v10879
    %v11004 = vunpack.c.h.b16 %v10879
    %v11005 = vunpack.c.l.b16 %v10880
    %v11006 = vunpack.c.h.b16 %v10880
    %v11007 = vunpack.c.l.b16 %v10881
    %v11008 = vunpack.c.h.b16 %v10881
    %v11009 = vunpack.c.l.b16 %v10882
    %v11010 = vunpack.c.h.b16 %v10882
    %v11011 = vunpack.c.l.b16 %v10883
    %v11012 = vunpack.c.h.b16 %v10883
    %v11013 = vunpack.c.l.b16 %v10884
    %v11014 = vunpack.c.h.b16 %v10884
    %v11015 = vunpack.c.l.b16 %v10885
    %v11016 = vunpack.c.h.b16 %v10885
    %v11017 = vunpack.c.l.b16 %v10886
    %v11018 = vunpack.c.h.b16 %v10886
    %v11019 = vunpack.c.l.b16 %v10887
    %v11020 = vunpack.c.h.b16 %v10887
    %v11021 = vunpack.c.l.b16 %v10888
    %v11022 = vunpack.c.h.b16 %v10888
    %v11023 = vunpack.c.l.b16 %v10889
    %v11024 = vunpack.c.h.b16 %v10889
    %v11025 = vunpack.c.l.b16 %v10890
    %v11026 = vunpack.c.h.b16 %v10890
    %v11027 = vunpack.c.l.b16 %v10891
    %v11028 = vunpack.c.h.b16 %v10891
    %v11029 = vunpack.c.l.b16 %v10892
    %v11030 = vunpack.c.h.b16 %v10892
    %v11031 = vunpack.c.l.b16 %v10893
    %v11032 = vunpack.c.h.b16 %v10893
    %v11033 = vunpack.c.l.b16 %v10894
    %v11034 = vunpack.c.h.b16 %v10894
    %v11035 = vunpack.c.l.b16 %v10895
    %v11036 = vunpack.c.h.b16 %v10895
    %v11037 = vunpack.c.l.b16 %v10896
    %v11038 = vunpack.c.h.b16 %v10896
    %v11039 = vunpack.c.l.b16 %v10897
    %v11040 = vunpack.c.h.b16 %v10897
    %v11041 = vunpack.c.l.b16 %v10898
    %v11042 = vunpack.c.h.b16 %v10898
    %v11043 = vunpack.c.l.b16 %v10899
    %v11044 = vunpack.c.h.b16 %v10899
    %v11045 = vunpack.c.l.b16 %v10900
    %v11046 = vunpack.c.h.b16 %v10900
    %v11047 = vunpack.c.l.b16 %v10901
    %v11048 = vunpack.c.h.b16 %v10901
    %v11049 = vunpack.c.l.b16 %v10902
    %v11050 = vunpack.c.h.b16 %v10902
    %v11051 = vunpack.c.l.b16 %v10903
    %v11052 = vunpack.c.h.b16 %v10903
    %v11053 = vunpack.c.l.b16 %v10904
    %v11054 = vunpack.c.h.b16 %v10904
    %v11055 = vunpack.c.l.b16 %v10905
    %v11056 = vunpack.c.h.b16 %v10905
    %v11057 = vunpack.c.l.b16 %v10906
    %v11058 = vunpack.c.h.b16 %v10906
    %v11059 = vunpack.c.l.b16 %v10907
    %v11060 = vunpack.c.h.b16 %v10907
    %v11061 = vpack.c.b16 %v10967, %v10965
    %v11062 = vpack.c.b16 %v10968, %v10966
    %v11063 = vpack.c.b16 %v10971, %v10969
    %v11064 = vpack.c.b16 %v10972, %v10970
    %v11065 = vpack.c.b16 %v10975, %v10973
    %v11066 = vpack.c.b16 %v10976, %v10974
    %v11067 = vpack.c.b16 %v10979, %v10977
    %v11068 = vpack.c.b16 %v10980, %v10978
    %v11069 = vpack.c.b16 %v10983, %v10981
    %v11070 = vpack.c.b16 %v10984, %v10982
    %v11071 = vpack.c.b16 %v10987, %v10985
    %v11072 = vpack.c.b16 %v10988, %v10986
    %v11073 = vpack.c.b16 %v10991, %v10989
    %v11074 = vpack.c.b16 %v10992, %v10990
    %v11075 = vpack.c.b16 %v10995, %v10993
    %v11076 = vpack.c.b16 %v10996, %v10994
    %v11077 = vpack.c.b16 %v10999, %v10997
    %v11078 = vpack.c.b16 %v11000, %v10998
    %v11079 = vpack.c.b16 %v11003, %v11001
    %v11080 = vpack.c.b16 %v11004, %v11002
    %v11081 = vpack.c.b16 %v11007, %v11005
    %v11082 = vpack.c.b16 %v11008, %v11006
    %v11083 = vpack.c.b16 %v11011, %v11009
    %v11084 = vpack.c.b16 %v11012, %v11010
    %v11085 = vpack.c.b16 %v11015, %v11013
    %v11086 = vpack.c.b16 %v11016, %v11014
    %v11087 = vpack.c.b16 %v11019, %v11017
    %v11088 = vpack.c.b16 %v11020, %v11018
    %v11089 = vpack.c.b16 %v11023, %v11021
    %v11090 = vpack.c.b16 %v11024, %v11022
    %v11091 = vpack.c.b16 %v11027, %v11025
    %v11092 = vpack.c.b16 %v11028, %v11026
    %v11093 = vpack.c.b16 %v11031, %v11029
    %v11094 = vpack.c.b16 %v11032, %v11030
    %v11095 = vpack.c.b16 %v11035, %v11033
    %v11096 = vpack.c.b16 %v11036, %v11034
    %v11097 = vpack.c.b16 %v11039, %v11037
    %v11098 = vpack.c.b16 %v11040, %v11038
    %v11099 = vpack.c.b16 %v11043, %v11041
    %v11100 = vpack.c.b16 %v11044, %v11042
    %v11101 = vpack.c.b16 %v11047, %v11045
    %v11102 = vpack.c.b16 %v11048, %v11046
    %v11103 = vpack.c.b16 %v11051, %v11049
    %v11104 = vpack.c.b16 %v11052, %v11050
    %v11105 = vpack.c.b16 %v11055, %v11053
    %v11106 = vpack.c.b16 %v11056, %v11054
    %v11107 = vpack.c.b16 %v11059, %v11057
    %v11108 = vpack.c.b16 %v11060, %v11058
    %11157 = vmatpush.bf16.msra.mxu0 %v11075
    %11158 = vmatpush.bf16.msra.mxu0 %v11073
    %11159 = vmatpush.bf16.msra.mxu0 %v11071
    %11160 = vmatpush.bf16.msra.mxu0 %v11069
    %11161 = vmatpush.bf16.msra.mxu0 %v11067
    %11162 = vmatpush.bf16.msra.mxu0 %v11065
    %11163 = vmatpush.bf16.msra.mxu0 %v11063
    %11164 = vmatpush.bf16.msra.mxu0 %v11061
    %11165 = vmatmul.bf16.gmra.mxu0 %v10911
    %v11166 = vpop.f32.mrf.mxu0
    %v11167 = vadd.f32 0.0, %v11166
    %v11168 = vpop.f32.mrf.mxu0
    %11169 = vdwg.mxu0
    %11170 = vmatpush.bf16.msra.mxu0 %v11091
    %11171 = vmatpush.bf16.msra.mxu0 %v11089
    %11172 = vmatpush.bf16.msra.mxu0 %v11087
    %11173 = vmatpush.bf16.msra.mxu0 %v11085
    %11174 = vmatpush.bf16.msra.mxu0 %v11083
    %11175 = vmatpush.bf16.msra.mxu0 %v11081
    %11176 = vmatpush.bf16.msra.mxu0 %v11079
    %11177 = vmatpush.bf16.msra.mxu0 %v11077
    %11178 = vmatmul.bf16.gmra.mxu0 %v10912
    %v11179 = vpop.f32.mrf.mxu0
    %v11180 = vadd.f32 %v11167, %v11179
    %v11181 = vpop.f32.mrf.mxu0
    %11182 = vdwg.mxu0
    %11183 = vmatpush.bf16.msra.mxu0 %v11107
    %11184 = vmatpush.bf16.msra.mxu0 %v11105
    %11185 = vmatpush.bf16.msra.mxu0 %v11103
    %11186 = vmatpush.bf16.msra.mxu0 %v11101
    %11187 = vmatpush.bf16.msra.mxu0 %v11099
    %11188 = vmatpush.bf16.msra.mxu0 %v11097
    %11189 = vmatpush.bf16.msra.mxu0 %v11095
    %11190 = vmatpush.bf16.msra.mxu0 %v11093
    %11191 = vmatmul.bf16.gmra.mxu0 %v10913
    %v11192 = vpop.f32.mrf.mxu0
    %v11193 = vadd.f32 %v11180, %v11192
    %v11194 = vpop.f32.mrf.mxu0
    %11195 = vdwg.mxu0
    %11196 = vmatpush.bf16.msra.mxu0 %v11076
    %11197 = vmatpush.bf16.msra.mxu0 %v11074
    %11198 = vmatpush.bf16.msra.mxu0 %v11072
    %11199 = vmatpush.bf16.msra.mxu0 %v11070
    %11200 = vmatpush.bf16.msra.mxu0 %v11068
    %11201 = vmatpush.bf16.msra.mxu0 %v11066
    %11202 = vmatpush.bf16.msra.mxu0 %v11064
    %11203 = vmatpush.bf16.msra.mxu0 %v11062
    %11204 = vmatmul.bf16.gmra.mxu0 %v10911
    %v11205 = vpop.f32.mrf.mxu0
    %v11206 = vadd.f32 0.0, %v11205
    %v11207 = vpop.f32.mrf.mxu0
    %11208 = vdwg.mxu0
    %11209 = vmatpush.bf16.msra.mxu0 %v11092
    %11210 = vmatpush.bf16.msra.mxu0 %v11090
    %11211 = vmatpush.bf16.msra.mxu0 %v11088
    %11212 = vmatpush.bf16.msra.mxu0 %v11086
    %11213 = vmatpush.bf16.msra.mxu0 %v11084
    %11214 = vmatpush.bf16.msra.mxu0 %v11082
    %11215 = vmatpush.bf16.msra.mxu0 %v11080
    %11216 = vmatpush.bf16.msra.mxu0 %v11078
    %11217 = vmatmul.bf16.gmra.mxu0 %v10912
    %v11218 = vpop.f32.mrf.mxu0
    %v11219 = vadd.f32 %v11206, %v11218
    %v11220 = vpop.f32.mrf.mxu0
    %11221 = vdwg.mxu0
    %11222 = vmatpush.bf16.msra.mxu0 %v11108
    %11223 = vmatpush.bf16.msra.mxu0 %v11106
    %11224 = vmatpush.bf16.msra.mxu0 %v11104
    %11225 = vmatpush.bf16.msra.mxu0 %v11102
    %11226 = vmatpush.bf16.msra.mxu0 %v11100
    %11227 = vmatpush.bf16.msra.mxu0 %v11098
    %11228 = vmatpush.bf16.msra.mxu0 %v11096
    %11229 = vmatpush.bf16.msra.mxu0 %v11094
    %11230 = vmatmul.bf16.gmra.mxu0 %v10913
    %v11231 = vpop.f32.mrf.mxu0
    %v11232 = vadd.f32 %v11219, %v11231
    %v11233 = vpop.f32.mrf.mxu0
    %11234 = vdwg.mxu0
    %v11235 = vadd.f32 %v10818, %v11193
    %v11236 = vadd.f32 %v10857, %v11232
    %v11237 = vld [vmem:[%s9214] sm:$0xff]
    %v11238 = vld [vmem:[%s9214 + $0x8] sm:$0xff]
    %v11239 = vld [vmem:[%s9214 + $0x10] sm:$0xff]
    %v11240 = vld [vmem:[%s9214 + $0x18] sm:$0xff]
    %v11241 = vld [vmem:[%s9214 + $0x20] sm:$0xff]
    %v11242 = vld [vmem:[%s9214 + $0x28] sm:$0xff]
    %v11243 = vld [vmem:[%s9214 + $0x30] sm:$0xff]
    %v11244 = vld [vmem:[%s9214 + $0x38] sm:$0xff]
    %v11245 = vld [vmem:[%s9214 + $0x40] sm:$0xff]
    %v11246 = vld [vmem:[%s9214 + $0x48] sm:$0xff]
    %v11247 = vld [vmem:[%s9214 + $0x50] sm:$0xff]
    %v11248 = vld [vmem:[%s9214 + $0x58] sm:$0xff]
    %v11249 = vld [vmem:[%s9214 + $0x60] sm:$0xff]
    %v11250 = vld [vmem:[%s9214 + $0x68] sm:$0xff]
    %v11251 = vld [vmem:[%s9214 + $0x70] sm:$0xff]
    %v11252 = vld [vmem:[%s9214 + $0x78] sm:$0xff]
    %v11253 = vld [vmem:[%s9214 + $0x80] sm:$0xff]
    %v11254 = vld [vmem:[%s9214 + $0x88] sm:$0xff]
    %v11255 = vld [vmem:[%s9214 + $0x90] sm:$0xff]
    %v11256 = vld [vmem:[%s9214 + $0x98] sm:$0xff]
    %v11257 = vld [vmem:[%s9214 + $0xa0] sm:$0xff]
    %v11258 = vld [vmem:[%s9214 + $0xa8] sm:$0xff]
    %v11259 = vld [vmem:[%s9214 + $0xb0] sm:$0xff]
    %v11260 = vld [vmem:[%s9214 + $0xb8] sm:$0xff]
    %v11261 = vld [vmem:[%s9214 + $0xc0] sm:$0xff]
    %v11262 = vld [vmem:[%s9214 + $0xc8] sm:$0xff]
    %v11263 = vld [vmem:[%s9214 + $0xd0] sm:$0xff]
    %v11264 = vld [vmem:[%s9214 + $0xd8] sm:$0xff]
    %v11265 = vld [vmem:[%s9214 + $0xe0] sm:$0xff]
    %v11266 = vld [vmem:[%s9214 + $0xe8] sm:$0xff]
    %v11267 = vld [vmem:[%s9214 + $0xf0] sm:$0xff]
    %v11268 = vld [vmem:[%s9214 + $0xf8] sm:$0xff]
    %v11269 = vld [vmem:[%s9214 + $0x100] sm:$0xff]
    %v11270 = vld [vmem:[%s9214 + $0x108] sm:$0xff]
    %v11271 = vld [vmem:[%s9214 + $0x110] sm:$0xff]
    %v11272 = vld [vmem:[%s9214 + $0x118] sm:$0xff]
    %v11273 = vld [vmem:[%s9214 + $0x120] sm:$0xff]
    %v11274 = vld [vmem:[%s9214 + $0x128] sm:$0xff]
    %v11275 = vld [vmem:[%s9214 + $0x130] sm:$0xff]
    %v11276 = vld [vmem:[%s9214 + $0x138] sm:$0xff]
    %v11277 = vld [vmem:[%s9214 + $0x140] sm:$0xff]
    %v11278 = vld [vmem:[%s9214 + $0x148] sm:$0xff]
    %v11279 = vld [vmem:[%s9214 + $0x150] sm:$0xff]
    %v11280 = vld [vmem:[%s9214 + $0x158] sm:$0xff]
    %v11281 = vld [vmem:[%s9214 + $0x160] sm:$0xff]
    %v11282 = vld [vmem:[%s9214 + $0x168] sm:$0xff]
    %v11283 = vld [vmem:[%s9214 + $0x170] sm:$0xff]
    %v11284 = vld [vmem:[%s9214 + $0x178] sm:$0xff]
    %v11285 = vrot.slane %v10213, 1
    %v11286 = vrot.slane %v10216, 1
    %v11287 = vrot.slane %v10219, 1
    %v11339 = vunpack.c.l.b16 %v11237
    %v11340 = vunpack.c.h.b16 %v11237
    %v11341 = vunpack.c.l.b16 %v11238
    %v11342 = vunpack.c.h.b16 %v11238
    %v11343 = vunpack.c.l.b16 %v11239
    %v11344 = vunpack.c.h.b16 %v11239
    %v11345 = vunpack.c.l.b16 %v11240
    %v11346 = vunpack.c.h.b16 %v11240
    %v11347 = vunpack.c.l.b16 %v11241
    %v11348 = vunpack.c.h.b16 %v11241
    %v11349 = vunpack.c.l.b16 %v11242
    %v11350 = vunpack.c.h.b16 %v11242
    %v11351 = vunpack.c.l.b16 %v11243
    %v11352 = vunpack.c.h.b16 %v11243
    %v11353 = vunpack.c.l.b16 %v11244
    %v11354 = vunpack.c.h.b16 %v11244
    %v11355 = vunpack.c.l.b16 %v11245
    %v11356 = vunpack.c.h.b16 %v11245
    %v11357 = vunpack.c.l.b16 %v11246
    %v11358 = vunpack.c.h.b16 %v11246
    %v11359 = vunpack.c.l.b16 %v11247
    %v11360 = vunpack.c.h.b16 %v11247
    %v11361 = vunpack.c.l.b16 %v11248
    %v11362 = vunpack.c.h.b16 %v11248
    %v11363 = vunpack.c.l.b16 %v11249
    %v11364 = vunpack.c.h.b16 %v11249
    %v11365 = vunpack.c.l.b16 %v11250
    %v11366 = vunpack.c.h.b16 %v11250
    %v11367 = vunpack.c.l.b16 %v11251
    %v11368 = vunpack.c.h.b16 %v11251
    %v11369 = vunpack.c.l.b16 %v11252
    %v11370 = vunpack.c.h.b16 %v11252
    %v11371 = vunpack.c.l.b16 %v11253
    %v11372 = vunpack.c.h.b16 %v11253
    %v11373 = vunpack.c.l.b16 %v11254
    %v11374 = vunpack.c.h.b16 %v11254
    %v11375 = vunpack.c.l.b16 %v11255
    %v11376 = vunpack.c.h.b16 %v11255
    %v11377 = vunpack.c.l.b16 %v11256
    %v11378 = vunpack.c.h.b16 %v11256
    %v11379 = vunpack.c.l.b16 %v11257
    %v11380 = vunpack.c.h.b16 %v11257
    %v11381 = vunpack.c.l.b16 %v11258
    %v11382 = vunpack.c.h.b16 %v11258
    %v11383 = vunpack.c.l.b16 %v11259
    %v11384 = vunpack.c.h.b16 %v11259
    %v11385 = vunpack.c.l.b16 %v11260
    %v11386 = vunpack.c.h.b16 %v11260
    %v11387 = vunpack.c.l.b16 %v11261
    %v11388 = vunpack.c.h.b16 %v11261
    %v11389 = vunpack.c.l.b16 %v11262
    %v11390 = vunpack.c.h.b16 %v11262
    %v11391 = vunpack.c.l.b16 %v11263
    %v11392 = vunpack.c.h.b16 %v11263
    %v11393 = vunpack.c.l.b16 %v11264
    %v11394 = vunpack.c.h.b16 %v11264
    %v11395 = vunpack.c.l.b16 %v11265
    %v11396 = vunpack.c.h.b16 %v11265
    %v11397 = vunpack.c.l.b16 %v11266
    %v11398 = vunpack.c.h.b16 %v11266
    %v11399 = vunpack.c.l.b16 %v11267
    %v11400 = vunpack.c.h.b16 %v11267
    %v11401 = vunpack.c.l.b16 %v11268
    %v11402 = vunpack.c.h.b16 %v11268
    %v11403 = vunpack.c.l.b16 %v11269
    %v11404 = vunpack.c.h.b16 %v11269
    %v11405 = vunpack.c.l.b16 %v11270
    %v11406 = vunpack.c.h.b16 %v11270
    %v11407 = vunpack.c.l.b16 %v11271
    %v11408 = vunpack.c.h.b16 %v11271
    %v11409 = vunpack.c.l.b16 %v11272
    %v11410 = vunpack.c.h.b16 %v11272
    %v11411 = vunpack.c.l.b16 %v11273
    %v11412 = vunpack.c.h.b16 %v11273
    %v11413 = vunpack.c.l.b16 %v11274
    %v11414 = vunpack.c.h.b16 %v11274
    %v11415 = vunpack.c.l.b16 %v11275
    %v11416 = vunpack.c.h.b16 %v11275
    %v11417 = vunpack.c.l.b16 %v11276
    %v11418 = vunpack.c.h.b16 %v11276
    %v11419 = vunpack.c.l.b16 %v11277
    %v11420 = vunpack.c.h.b16 %v11277
    %v11421 = vunpack.c.l.b16 %v11278
    %v11422 = vunpack.c.h.b16 %v11278
    %v11423 = vunpack.c.l.b16 %v11279
    %v11424 = vunpack.c.h.b16 %v11279
    %v11425 = vunpack.c.l.b16 %v11280
    %v11426 = vunpack.c.h.b16 %v11280
    %v11427 = vunpack.c.l.b16 %v11281
    %v11428 = vunpack.c.h.b16 %v11281
    %v11429 = vunpack.c.l.b16 %v11282
    %v11430 = vunpack.c.h.b16 %v11282
    %v11431 = vunpack.c.l.b16 %v11283
    %v11432 = vunpack.c.h.b16 %v11283
    %v11433 = vunpack.c.l.b16 %v11284
    %v11434 = vunpack.c.h.b16 %v11284
    %v11435 = vpack.c.b16 %v11341, %v11339
    %v11436 = vpack.c.b16 %v11342, %v11340
    %v11437 = vpack.c.b16 %v11345, %v11343
    %v11438 = vpack.c.b16 %v11346, %v11344
    %v11439 = vpack.c.b16 %v11349, %v11347
    %v11440 = vpack.c.b16 %v11350, %v11348
    %v11441 = vpack.c.b16 %v11353, %v11351
    %v11442 = vpack.c.b16 %v11354, %v11352
    %v11443 = vpack.c.b16 %v11357, %v11355
    %v11444 = vpack.c.b16 %v11358, %v11356
    %v11445 = vpack.c.b16 %v11361, %v11359
    %v11446 = vpack.c.b16 %v11362, %v11360
    %v11447 = vpack.c.b16 %v11365, %v11363
    %v11448 = vpack.c.b16 %v11366, %v11364
    %v11449 = vpack.c.b16 %v11369, %v11367
    %v11450 = vpack.c.b16 %v11370, %v11368
    %v11451 = vpack.c.b16 %v11373, %v11371
    %v11452 = vpack.c.b16 %v11374, %v11372
    %v11453 = vpack.c.b16 %v11377, %v11375
    %v11454 = vpack.c.b16 %v11378, %v11376
    %v11455 = vpack.c.b16 %v11381, %v11379
    %v11456 = vpack.c.b16 %v11382, %v11380
    %v11457 = vpack.c.b16 %v11385, %v11383
    %v11458 = vpack.c.b16 %v11386, %v11384
    %v11459 = vpack.c.b16 %v11389, %v11387
    %v11460 = vpack.c.b16 %v11390, %v11388
    %v11461 = vpack.c.b16 %v11393, %v11391
    %v11462 = vpack.c.b16 %v11394, %v11392
    %v11463 = vpack.c.b16 %v11397, %v11395
    %v11464 = vpack.c.b16 %v11398, %v11396
    %v11465 = vpack.c.b16 %v11401, %v11399
    %v11466 = vpack.c.b16 %v11402, %v11400
    %v11467 = vpack.c.b16 %v11405, %v11403
    %v11468 = vpack.c.b16 %v11406, %v11404
    %v11469 = vpack.c.b16 %v11409, %v11407
    %v11470 = vpack.c.b16 %v11410, %v11408
    %v11471 = vpack.c.b16 %v11413, %v11411
    %v11472 = vpack.c.b16 %v11414, %v11412
    %v11473 = vpack.c.b16 %v11417, %v11415
    %v11474 = vpack.c.b16 %v11418, %v11416
    %v11475 = vpack.c.b16 %v11421, %v11419
    %v11476 = vpack.c.b16 %v11422, %v11420
    %v11477 = vpack.c.b16 %v11425, %v11423
    %v11478 = vpack.c.b16 %v11426, %v11424
    %v11479 = vpack.c.b16 %v11429, %v11427
    %v11480 = vpack.c.b16 %v11430, %v11428
    %v11481 = vpack.c.b16 %v11433, %v11431
    %v11482 = vpack.c.b16 %v11434, %v11432
    %11531 = vmatpush.bf16.msra.mxu0 %v11449
    %11532 = vmatpush.bf16.msra.mxu0 %v11447
    %11533 = vmatpush.bf16.msra.mxu0 %v11445
    %11534 = vmatpush.bf16.msra.mxu0 %v11443
    %11535 = vmatpush.bf16.msra.mxu0 %v11441
    %11536 = vmatpush.bf16.msra.mxu0 %v11439
    %11537 = vmatpush.bf16.msra.mxu0 %v11437
    %11538 = vmatpush.bf16.msra.mxu0 %v11435
    %11539 = vmatmul.bf16.gmra.mxu0 %v11285
    %v11540 = vpop.f32.mrf.mxu0
    %v11541 = vadd.f32 0.0, %v11540
    %v11542 = vpop.f32.mrf.mxu0
    %11543 = vdwg.mxu0
    %11544 = vmatpush.bf16.msra.mxu0 %v11465
    %11545 = vmatpush.bf16.msra.mxu0 %v11463
    %11546 = vmatpush.bf16.msra.mxu0 %v11461
    %11547 = vmatpush.bf16.msra.mxu0 %v11459
    %11548 = vmatpush.bf16.msra.mxu0 %v11457
    %11549 = vmatpush.bf16.msra.mxu0 %v11455
    %11550 = vmatpush.bf16.msra.mxu0 %v11453
    %11551 = vmatpush.bf16.msra.mxu0 %v11451
    %11552 = vmatmul.bf16.gmra.mxu0 %v11286
    %v11553 = vpop.f32.mrf.mxu0
    %v11554 = vadd.f32 %v11541, %v11553
    %v11555 = vpop.f32.mrf.mxu0
    %11556 = vdwg.mxu0
    %11557 = vmatpush.bf16.msra.mxu0 %v11481
    %11558 = vmatpush.bf16.msra.mxu0 %v11479
    %11559 = vmatpush.bf16.msra.mxu0 %v11477
    %11560 = vmatpush.bf16.msra.mxu0 %v11475
    %11561 = vmatpush.bf16.msra.mxu0 %v11473
    %11562 = vmatpush.bf16.msra.mxu0 %v11471
    %11563 = vmatpush.bf16.msra.mxu0 %v11469
    %11564 = vmatpush.bf16.msra.mxu0 %v11467
    %11565 = vmatmul.bf16.gmra.mxu0 %v11287
    %v11566 = vpop.f32.mrf.mxu0
    %v11567 = vadd.f32 %v11554, %v11566
    %v11568 = vpop.f32.mrf.mxu0
    %11569 = vdwg.mxu0
    %11570 = vmatpush.bf16.msra.mxu0 %v11450
    %11571 = vmatpush.bf16.msra.mxu0 %v11448
    %11572 = vmatpush.bf16.msra.mxu0 %v11446
    %11573 = vmatpush.bf16.msra.mxu0 %v11444
    %11574 = vmatpush.bf16.msra.mxu0 %v11442
    %11575 = vmatpush.bf16.msra.mxu0 %v11440
    %11576 = vmatpush.bf16.msra.mxu0 %v11438
    %11577 = vmatpush.bf16.msra.mxu0 %v11436
    %11578 = vmatmul.bf16.gmra.mxu0 %v11285
    %v11579 = vpop.f32.mrf.mxu0
    %v11580 = vadd.f32 0.0, %v11579
    %v11581 = vpop.f32.mrf.mxu0
    %11582 = vdwg.mxu0
    %11583 = vmatpush.bf16.msra.mxu0 %v11466
    %11584 = vmatpush.bf16.msra.mxu0 %v11464
    %11585 = vmatpush.bf16.msra.mxu0 %v11462
    %11586 = vmatpush.bf16.msra.mxu0 %v11460
    %11587 = vmatpush.bf16.msra.mxu0 %v11458
    %11588 = vmatpush.bf16.msra.mxu0 %v11456
    %11589 = vmatpush.bf16.msra.mxu0 %v11454
    %11590 = vmatpush.bf16.msra.mxu0 %v11452
    %11591 = vmatmul.bf16.gmra.mxu0 %v11286
    %v11592 = vpop.f32.mrf.mxu0
    %v11593 = vadd.f32 %v11580, %v11592
    %v11594 = vpop.f32.mrf.mxu0
    %11595 = vdwg.mxu0
    %11596 = vmatpush.bf16.msra.mxu0 %v11482
    %11597 = vmatpush.bf16.msra.mxu0 %v11480
    %11598 = vmatpush.bf16.msra.mxu0 %v11478
    %11599 = vmatpush.bf16.msra.mxu0 %v11476
    %11600 = vmatpush.bf16.msra.mxu0 %v11474
    %11601 = vmatpush.bf16.msra.mxu0 %v11472
    %11602 = vmatpush.bf16.msra.mxu0 %v11470
    %11603 = vmatpush.bf16.msra.mxu0 %v11468
    %11604 = vmatmul.bf16.gmra.mxu0 %v11287
    %v11605 = vpop.f32.mrf.mxu0
    %v11606 = vadd.f32 %v11593, %v11605
    %v11607 = vpop.f32.mrf.mxu0
    %11608 = vdwg.mxu0
    %v11609 = vadd.f32 %v11235, %v11567
    %v11610 = vadd.f32 %v11236, %v11606
    %v11611 = vld [vmem:[%s9589] sm:$0xff]
    %v11612 = vld [vmem:[%s9589 + $0x8] sm:$0xff]
    %v11613 = vld [vmem:[%s9589 + $0x10] sm:$0xff]
    %v11614 = vld [vmem:[%s9589 + $0x18] sm:$0xff]
    %v11615 = vld [vmem:[%s9589 + $0x20] sm:$0xff]
    %v11616 = vld [vmem:[%s9589 + $0x28] sm:$0xff]
    %v11617 = vld [vmem:[%s9589 + $0x30] sm:$0xff]
    %v11618 = vld [vmem:[%s9589 + $0x38] sm:$0xff]
    %v11619 = vld [vmem:[%s9589 + $0x40] sm:$0xff]
    %v11620 = vld [vmem:[%s9589 + $0x48] sm:$0xff]
    %v11621 = vld [vmem:[%s9589 + $0x50] sm:$0xff]
    %v11622 = vld [vmem:[%s9589 + $0x58] sm:$0xff]
    %v11623 = vld [vmem:[%s9589 + $0x60] sm:$0xff]
    %v11624 = vld [vmem:[%s9589 + $0x68] sm:$0xff]
    %v11625 = vld [vmem:[%s9589 + $0x70] sm:$0xff]
    %v11626 = vld [vmem:[%s9589 + $0x78] sm:$0xff]
    %v11627 = vld [vmem:[%s9589 + $0x80] sm:$0xff]
    %v11628 = vld [vmem:[%s9589 + $0x88] sm:$0xff]
    %v11629 = vld [vmem:[%s9589 + $0x90] sm:$0xff]
    %v11630 = vld [vmem:[%s9589 + $0x98] sm:$0xff]
    %v11631 = vld [vmem:[%s9589 + $0xa0] sm:$0xff]
    %v11632 = vld [vmem:[%s9589 + $0xa8] sm:$0xff]
    %v11633 = vld [vmem:[%s9589 + $0xb0] sm:$0xff]
    %v11634 = vld [vmem:[%s9589 + $0xb8] sm:$0xff]
    %v11635 = vld [vmem:[%s9589 + $0xc0] sm:$0xff]
    %v11636 = vld [vmem:[%s9589 + $0xc8] sm:$0xff]
    %v11637 = vld [vmem:[%s9589 + $0xd0] sm:$0xff]
    %v11638 = vld [vmem:[%s9589 + $0xd8] sm:$0xff]
    %v11639 = vld [vmem:[%s9589 + $0xe0] sm:$0xff]
    %v11640 = vld [vmem:[%s9589 + $0xe8] sm:$0xff]
    %v11641 = vld [vmem:[%s9589 + $0xf0] sm:$0xff]
    %v11642 = vld [vmem:[%s9589 + $0xf8] sm:$0xff]
    %v11643 = vld [vmem:[%s9589 + $0x100] sm:$0xff]
    %v11644 = vld [vmem:[%s9589 + $0x108] sm:$0xff]
    %v11645 = vld [vmem:[%s9589 + $0x110] sm:$0xff]
    %v11646 = vld [vmem:[%s9589 + $0x118] sm:$0xff]
    %v11647 = vld [vmem:[%s9589 + $0x120] sm:$0xff]
    %v11648 = vld [vmem:[%s9589 + $0x128] sm:$0xff]
    %v11649 = vld [vmem:[%s9589 + $0x130] sm:$0xff]
    %v11650 = vld [vmem:[%s9589 + $0x138] sm:$0xff]
    %v11651 = vld [vmem:[%s9589 + $0x140] sm:$0xff]
    %v11652 = vld [vmem:[%s9589 + $0x148] sm:$0xff]
    %v11653 = vld [vmem:[%s9589 + $0x150] sm:$0xff]
    %v11654 = vld [vmem:[%s9589 + $0x158] sm:$0xff]
    %v11655 = vld [vmem:[%s9589 + $0x160] sm:$0xff]
    %v11656 = vld [vmem:[%s9589 + $0x168] sm:$0xff]
    %v11657 = vld [vmem:[%s9589 + $0x170] sm:$0xff]
    %v11658 = vld [vmem:[%s9589 + $0x178] sm:$0xff]
    %v11659 = vrot.slane %v10113, 2
    %v11660 = vrot.slane %v10114, 2
    %v11661 = vrot.slane %v10115, 2
    %v11713 = vunpack.c.l.b16 %v11611
    %v11714 = vunpack.c.h.b16 %v11611
    %v11715 = vunpack.c.l.b16 %v11612
    %v11716 = vunpack.c.h.b16 %v11612
    %v11717 = vunpack.c.l.b16 %v11613
    %v11718 = vunpack.c.h.b16 %v11613
    %v11719 = vunpack.c.l.b16 %v11614
    %v11720 = vunpack.c.h.b16 %v11614
    %v11721 = vunpack.c.l.b16 %v11615
    %v11722 = vunpack.c.h.b16 %v11615
    %v11723 = vunpack.c.l.b16 %v11616
    %v11724 = vunpack.c.h.b16 %v11616
    %v11725 = vunpack.c.l.b16 %v11617
    %v11726 = vunpack.c.h.b16 %v11617
    %v11727 = vunpack.c.l.b16 %v11618
    %v11728 = vunpack.c.h.b16 %v11618
    %v11729 = vunpack.c.l.b16 %v11619
    %v11730 = vunpack.c.h.b16 %v11619
    %v11731 = vunpack.c.l.b16 %v11620
    %v11732 = vunpack.c.h.b16 %v11620
    %v11733 = vunpack.c.l.b16 %v11621
    %v11734 = vunpack.c.h.b16 %v11621
    %v11735 = vunpack.c.l.b16 %v11622
    %v11736 = vunpack.c.h.b16 %v11622
    %v11737 = vunpack.c.l.b16 %v11623
    %v11738 = vunpack.c.h.b16 %v11623
    %v11739 = vunpack.c.l.b16 %v11624
    %v11740 = vunpack.c.h.b16 %v11624
    %v11741 = vunpack.c.l.b16 %v11625
    %v11742 = vunpack.c.h.b16 %v11625
    %v11743 = vunpack.c.l.b16 %v11626
    %v11744 = vunpack.c.h.b16 %v11626
    %v11745 = vunpack.c.l.b16 %v11627
    %v11746 = vunpack.c.h.b16 %v11627
    %v11747 = vunpack.c.l.b16 %v11628
    %v11748 = vunpack.c.h.b16 %v11628
    %v11749 = vunpack.c.l.b16 %v11629
    %v11750 = vunpack.c.h.b16 %v11629
    %v11751 = vunpack.c.l.b16 %v11630
    %v11752 = vunpack.c.h.b16 %v11630
    %v11753 = vunpack.c.l.b16 %v11631
    %v11754 = vunpack.c.h.b16 %v11631
    %v11755 = vunpack.c.l.b16 %v11632
    %v11756 = vunpack.c.h.b16 %v11632
    %v11757 = vunpack.c.l.b16 %v11633
    %v11758 = vunpack.c.h.b16 %v11633
    %v11759 = vunpack.c.l.b16 %v11634
    %v11760 = vunpack.c.h.b16 %v11634
    %v11761 = vunpack.c.l.b16 %v11635
    %v11762 = vunpack.c.h.b16 %v11635
    %v11763 = vunpack.c.l.b16 %v11636
    %v11764 = vunpack.c.h.b16 %v11636
    %v11765 = vunpack.c.l.b16 %v11637
    %v11766 = vunpack.c.h.b16 %v11637
    %v11767 = vunpack.c.l.b16 %v11638
    %v11768 = vunpack.c.h.b16 %v11638
    %v11769 = vunpack.c.l.b16 %v11639
    %v11770 = vunpack.c.h.b16 %v11639
    %v11771 = vunpack.c.l.b16 %v11640
    %v11772 = vunpack.c.h.b16 %v11640
    %v11773 = vunpack.c.l.b16 %v11641
    %v11774 = vunpack.c.h.b16 %v11641
    %v11775 = vunpack.c.l.b16 %v11642
    %v11776 = vunpack.c.h.b16 %v11642
    %v11777 = vunpack.c.l.b16 %v11643
    %v11778 = vunpack.c.h.b16 %v11643
    %v11779 = vunpack.c.l.b16 %v11644
    %v11780 = vunpack.c.h.b16 %v11644
    %v11781 = vunpack.c.l.b16 %v11645
    %v11782 = vunpack.c.h.b16 %v11645
    %v11783 = vunpack.c.l.b16 %v11646
    %v11784 = vunpack.c.h.b16 %v11646
    %v11785 = vunpack.c.l.b16 %v11647
    %v11786 = vunpack.c.h.b16 %v11647
    %v11787 = vunpack.c.l.b16 %v11648
    %v11788 = vunpack.c.h.b16 %v11648
    %v11789 = vunpack.c.l.b16 %v11649
    %v11790 = vunpack.c.h.b16 %v11649
    %v11791 = vunpack.c.l.b16 %v11650
    %v11792 = vunpack.c.h.b16 %v11650
    %v11793 = vunpack.c.l.b16 %v11651
    %v11794 = vunpack.c.h.b16 %v11651
    %v11795 = vunpack.c.l.b16 %v11652
    %v11796 = vunpack.c.h.b16 %v11652
    %v11797 = vunpack.c.l.b16 %v11653
    %v11798 = vunpack.c.h.b16 %v11653
    %v11799 = vunpack.c.l.b16 %v11654
    %v11800 = vunpack.c.h.b16 %v11654
    %v11801 = vunpack.c.l.b16 %v11655
    %v11802 = vunpack.c.h.b16 %v11655
    %v11803 = vunpack.c.l.b16 %v11656
    %v11804 = vunpack.c.h.b16 %v11656
    %v11805 = vunpack.c.l.b16 %v11657
    %v11806 = vunpack.c.h.b16 %v11657
    %v11807 = vunpack.c.l.b16 %v11658
    %v11808 = vunpack.c.h.b16 %v11658
    %v11809 = vpack.c.b16 %v11715, %v11713
    %v11810 = vpack.c.b16 %v11716, %v11714
    %v11811 = vpack.c.b16 %v11719, %v11717
    %v11812 = vpack.c.b16 %v11720, %v11718
    %v11813 = vpack.c.b16 %v11723, %v11721
    %v11814 = vpack.c.b16 %v11724, %v11722
    %v11815 = vpack.c.b16 %v11727, %v11725
    %v11816 = vpack.c.b16 %v11728, %v11726
    %v11817 = vpack.c.b16 %v11731, %v11729
    %v11818 = vpack.c.b16 %v11732, %v11730
    %v11819 = vpack.c.b16 %v11735, %v11733
    %v11820 = vpack.c.b16 %v11736, %v11734
    %v11821 = vpack.c.b16 %v11739, %v11737
    %v11822 = vpack.c.b16 %v11740, %v11738
    %v11823 = vpack.c.b16 %v11743, %v11741
    %v11824 = vpack.c.b16 %v11744, %v11742
    %v11825 = vpack.c.b16 %v11747, %v11745
    %v11826 = vpack.c.b16 %v11748, %v11746
    %v11827 = vpack.c.b16 %v11751, %v11749
    %v11828 = vpack.c.b16 %v11752, %v11750
    %v11829 = vpack.c.b16 %v11755, %v11753
    %v11830 = vpack.c.b16 %v11756, %v11754
    %v11831 = vpack.c.b16 %v11759, %v11757
    %v11832 = vpack.c.b16 %v11760, %v11758
    %v11833 = vpack.c.b16 %v11763, %v11761
    %v11834 = vpack.c.b16 %v11764, %v11762
    %v11835 = vpack.c.b16 %v11767, %v11765
    %v11836 = vpack.c.b16 %v11768, %v11766
    %v11837 = vpack.c.b16 %v11771, %v11769
    %v11838 = vpack.c.b16 %v11772, %v11770
    %v11839 = vpack.c.b16 %v11775, %v11773
    %v11840 = vpack.c.b16 %v11776, %v11774
    %v11841 = vpack.c.b16 %v11779, %v11777
    %v11842 = vpack.c.b16 %v11780, %v11778
    %v11843 = vpack.c.b16 %v11783, %v11781
    %v11844 = vpack.c.b16 %v11784, %v11782
    %v11845 = vpack.c.b16 %v11787, %v11785
    %v11846 = vpack.c.b16 %v11788, %v11786
    %v11847 = vpack.c.b16 %v11791, %v11789
    %v11848 = vpack.c.b16 %v11792, %v11790
    %v11849 = vpack.c.b16 %v11795, %v11793
    %v11850 = vpack.c.b16 %v11796, %v11794
    %v11851 = vpack.c.b16 %v11799, %v11797
    %v11852 = vpack.c.b16 %v11800, %v11798
    %v11853 = vpack.c.b16 %v11803, %v11801
    %v11854 = vpack.c.b16 %v11804, %v11802
    %v11855 = vpack.c.b16 %v11807, %v11805
    %v11856 = vpack.c.b16 %v11808, %v11806
    %11905 = vmatpush.bf16.msra.mxu0 %v11823
    %11906 = vmatpush.bf16.msra.mxu0 %v11821
    %11907 = vmatpush.bf16.msra.mxu0 %v11819
    %11908 = vmatpush.bf16.msra.mxu0 %v11817
    %11909 = vmatpush.bf16.msra.mxu0 %v11815
    %11910 = vmatpush.bf16.msra.mxu0 %v11813
    %11911 = vmatpush.bf16.msra.mxu0 %v11811
    %11912 = vmatpush.bf16.msra.mxu0 %v11809
    %11913 = vmatmul.bf16.gmra.mxu0 %v11659
    %v11914 = vpop.f32.mrf.mxu0
    %v11915 = vadd.f32 0.0, %v11914
    %v11916 = vpop.f32.mrf.mxu0
    %11917 = vdwg.mxu0
    %11918 = vmatpush.bf16.msra.mxu0 %v11839
    %11919 = vmatpush.bf16.msra.mxu0 %v11837
    %11920 = vmatpush.bf16.msra.mxu0 %v11835
    %11921 = vmatpush.bf16.msra.mxu0 %v11833
    %11922 = vmatpush.bf16.msra.mxu0 %v11831
    %11923 = vmatpush.bf16.msra.mxu0 %v11829
    %11924 = vmatpush.bf16.msra.mxu0 %v11827
    %11925 = vmatpush.bf16.msra.mxu0 %v11825
    %11926 = vmatmul.bf16.gmra.mxu0 %v11660
    %v11927 = vpop.f32.mrf.mxu0
    %v11928 = vadd.f32 %v11915, %v11927
    %v11929 = vpop.f32.mrf.mxu0
    %11930 = vdwg.mxu0
    %11931 = vmatpush.bf16.msra.mxu0 %v11855
    %11932 = vmatpush.bf16.msra.mxu0 %v11853
    %11933 = vmatpush.bf16.msra.mxu0 %v11851
    %11934 = vmatpush.bf16.msra.mxu0 %v11849
    %11935 = vmatpush.bf16.msra.mxu0 %v11847
    %11936 = vmatpush.bf16.msra.mxu0 %v11845
    %11937 = vmatpush.bf16.msra.mxu0 %v11843
    %11938 = vmatpush.bf16.msra.mxu0 %v11841
    %11939 = vmatmul.bf16.gmra.mxu0 %v11661
    %v11940 = vpop.f32.mrf.mxu0
    %v11941 = vadd.f32 %v11928, %v11940
    %v11942 = vpop.f32.mrf.mxu0
    %11943 = vdwg.mxu0
    %11944 = vmatpush.bf16.msra.mxu0 %v11824
    %11945 = vmatpush.bf16.msra.mxu0 %v11822
    %11946 = vmatpush.bf16.msra.mxu0 %v11820
    %11947 = vmatpush.bf16.msra.mxu0 %v11818
    %11948 = vmatpush.bf16.msra.mxu0 %v11816
    %11949 = vmatpush.bf16.msra.mxu0 %v11814
    %11950 = vmatpush.bf16.msra.mxu0 %v11812
    %11951 = vmatpush.bf16.msra.mxu0 %v11810
    %11952 = vmatmul.bf16.gmra.mxu0 %v11659
    %v11953 = vpop.f32.mrf.mxu0
    %v11954 = vadd.f32 0.0, %v11953
    %v11955 = vpop.f32.mrf.mxu0
    %11956 = vdwg.mxu0
    %11957 = vmatpush.bf16.msra.mxu0 %v11840
    %11958 = vmatpush.bf16.msra.mxu0 %v11838
    %11959 = vmatpush.bf16.msra.mxu0 %v11836
    %11960 = vmatpush.bf16.msra.mxu0 %v11834
    %11961 = vmatpush.bf16.msra.mxu0 %v11832
    %11962 = vmatpush.bf16.msra.mxu0 %v11830
    %11963 = vmatpush.bf16.msra.mxu0 %v11828
    %11964 = vmatpush.bf16.msra.mxu0 %v11826
    %11965 = vmatmul.bf16.gmra.mxu0 %v11660
    %v11966 = vpop.f32.mrf.mxu0
    %v11967 = vadd.f32 %v11954, %v11966
    %v11968 = vpop.f32.mrf.mxu0
    %11969 = vdwg.mxu0
    %11970 = vmatpush.bf16.msra.mxu0 %v11856
    %11971 = vmatpush.bf16.msra.mxu0 %v11854
    %11972 = vmatpush.bf16.msra.mxu0 %v11852
    %11973 = vmatpush.bf16.msra.mxu0 %v11850
    %11974 = vmatpush.bf16.msra.mxu0 %v11848
    %11975 = vmatpush.bf16.msra.mxu0 %v11846
    %11976 = vmatpush.bf16.msra.mxu0 %v11844
    %11977 = vmatpush.bf16.msra.mxu0 %v11842
    %11978 = vmatmul.bf16.gmra.mxu0 %v11661
    %v11979 = vpop.f32.mrf.mxu0
    %v11980 = vadd.f32 %v11967, %v11979
    %v11981 = vpop.f32.mrf.mxu0
    %11982 = vdwg.mxu0
    %v11983 = vadd.f32 %v11609, %v11941
    %v11984 = vadd.f32 %v11610, %v11980
    %v11985 = vadd.f32 %v11983, %v9965
    %v11986 = vadd.f32 %v11984, %v9966
    %v11987 = vmax.f32 %v11985, 0.0
    %v11988 = vmax.f32 %v11986, 0.0
    %v11991 = vrot.slane %v11988, 7
    %v11992 = vsel %vm9976, %v11987, %v11991
    %s11994 = scalar_lea.vmem [#allocation4], 1
    %11995 = vst.msk [vmem:[%s11994] ss:$2 sm:$0x3] %vm9982, %v11992
    %v11996 = vld [vmem:[#allocation4] sm:$0xf]
    %v11997 = vld [vmem:[%s15] sm:$0xff]
    %v11998 = vld [vmem:[%s15 + $0x8] sm:$0xff]
    %v11999 = vld [vmem:[%s15 + $0x10] sm:$0xff]
    %v12000 = vld [vmem:[%s15 + $0x18] sm:$0xff]
    %v12001 = vld [vmem:[%s15 + $0x20] sm:$0xff]
    %v12002 = vld [vmem:[%s15 + $0x28] sm:$0xff]
    %v12003 = vld [vmem:[%s15 + $0x30] sm:$0xff]
    %v12004 = vld [vmem:[%s15 + $0x38] sm:$0xff]
    %v12005 = vld [vmem:[%s15 + $0x40] sm:$0xff]
    %v12006 = vld [vmem:[%s15 + $0x48] sm:$0xff]
    %v12007 = vld [vmem:[%s15 + $0x50] sm:$0xff]
    %v12008 = vld [vmem:[%s15 + $0x58] sm:$0xff]
    %v12009 = vld [vmem:[%s15 + $0x60] sm:$0xff]
    %v12010 = vld [vmem:[%s15 + $0x68] sm:$0xff]
    %v12011 = vld [vmem:[%s15 + $0x70] sm:$0xff]
    %v12012 = vld [vmem:[%s15 + $0x78] sm:$0xff]
    %v12013 = vld [vmem:[%s15 + $0x80] sm:$0xff]
    %v12014 = vld [vmem:[%s15 + $0x88] sm:$0xff]
    %v12015 = vld [vmem:[%s15 + $0x90] sm:$0xff]
    %v12016 = vld [vmem:[%s15 + $0x98] sm:$0xff]
    %v12017 = vld [vmem:[%s15 + $0xa0] sm:$0xff]
    %v12018 = vld [vmem:[%s15 + $0xa8] sm:$0xff]
    %v12019 = vld [vmem:[%s15 + $0xb0] sm:$0xff]
    %v12020 = vld [vmem:[%s15 + $0xb8] sm:$0xff]
    %v12021 = vld [vmem:[%s15 + $0xc0] sm:$0xff]
    %v12022 = vld [vmem:[%s15 + $0xc8] sm:$0xff]
    %v12023 = vld [vmem:[%s15 + $0xd0] sm:$0xff]
    %v12024 = vld [vmem:[%s15 + $0xd8] sm:$0xff]
    %v12025 = vld [vmem:[%s15 + $0xe0] sm:$0xff]
    %v12026 = vld [vmem:[%s15 + $0xe8] sm:$0xff]
    %v12027 = vld [vmem:[%s15 + $0xf0] sm:$0xff]
    %v12028 = vld [vmem:[%s15 + $0xf8] sm:$0xff]
    %v12029 = vld [vmem:[#allocation25] sm:$0x1]
    %v12031 = vperm.slane %v12029, 0
    %12034 = vst [vmem:[#allocation1] ss:$4 sm:$0xff] %v11996
    %v12035 = vld.sshfl [vmem:[#allocation1] sm:$0xff pattern:$0x73625140]
    %v12036 = vld.sshfl [vmem:[#allocation1 + $0x8] sm:$0xff pattern:$0x73625140]
    %12039 = vmatpush.msra.mxu0 %v12012
    %12040 = vmatpush.msra.mxu0 %v12011
    %12041 = vmatpush.msra.mxu0 %v12010
    %12042 = vmatpush.msra.mxu0 %v12009
    %12043 = vmatpush.msra.mxu0 %v12008
    %12044 = vmatpush.msra.mxu0 %v12007
    %12045 = vmatpush.msra.mxu0 %v12006
    %12046 = vmatpush.msra.mxu0 %v12005
    %12047 = vmatpush.msra.mxu0 %v12004
    %12048 = vmatpush.msra.mxu0 %v12003
    %12049 = vmatpush.msra.mxu0 %v12002
    %12050 = vmatpush.msra.mxu0 %v12001
    %12051 = vmatpush.msra.mxu0 %v12000
    %12052 = vmatpush.msra.mxu0 %v11999
    %12053 = vmatpush.msra.mxu0 %v11998
    %12054 = vmatpush.msra.mxu0 %v11997
    %12055 = vmatmul.f32.gmra.mxu0 %v12035
    %v12056 = vpop.f32.mrf.mxu0
    %v12057 = vadd.f32 %v12031, %v12056
    %12058 = vdwg.mxu0
    %12059 = vmatpush.msra.mxu0 %v12028
    %12060 = vmatpush.msra.mxu0 %v12027
    %12061 = vmatpush.msra.mxu0 %v12026
    %12062 = vmatpush.msra.mxu0 %v12025
    %12063 = vmatpush.msra.mxu0 %v12024
    %12064 = vmatpush.msra.mxu0 %v12023
    %12065 = vmatpush.msra.mxu0 %v12022
    %12066 = vmatpush.msra.mxu0 %v12021
    %12067 = vmatpush.msra.mxu0 %v12020
    %12068 = vmatpush.msra.mxu0 %v12019
    %12069 = vmatpush.msra.mxu0 %v12018
    %12070 = vmatpush.msra.mxu0 %v12017
    %12071 = vmatpush.msra.mxu0 %v12016
    %12072 = vmatpush.msra.mxu0 %v12015
    %12073 = vmatpush.msra.mxu0 %v12014
    %12074 = vmatpush.msra.mxu0 %v12013
    %12075 = vmatmul.f32.gmra.mxu0 %v12036
    %v12076 = vpop.f32.mrf.mxu0
    %v12077 = vadd.f32 %v12057, %v12076
    %12078 = vdwg.mxu0
    %vm12079 = vcmask 74752
    %12080 = vst.msk [vmem:[#allocation26] sm:$0x3] %vm12079, %v12077
    // Predicated region
    $region122: #{model_forward.1} parent=1 // pred_check
      _
    $region123: #{model_forward.1} parent=1 // pred_check_branch
      %12082 = sbr.rel (0) target = $region125
    $region124: #{model_forward.1} parent=1 // pred_region
      %12084 = vsyncadd [#allocation7], 0
      %s12086 = sshll.u32 [#allocation26], 4
      %s12087 = int_to_ptr.vmem [resolvable:$true] %s12086
      %s12088 = sshll.u32 %s17, 4
      %s12089 = int_to_ptr.hbm [resolvable:$true] %s12088
      %12091 = dma.vmem_to_hbm [thread:$0]  %s12087, 32, %s12089, [#allocation7]
    $region125: #{model_forward.1} parent=1 // pred_fallthru
      _
    // Predicated region
    $region126: #{model_forward.1} parent=1 // pred_check
      _
    $region127: #{model_forward.1} parent=1 // pred_check_branch
      %12093 = sbr.rel (0) target = $region129
    $region128: #{model_forward.1} parent=1 // pred_region
      %12095 = dma.done [#allocation7], 32
    $region129: #{model_forward.1} parent=1 // pred_fallthru
      _
    %12096 = vsyncpa [#allocation6], 1
    %12097 = vsyncpa [#allocation9], 1
    %12098 = vsyncpa [#allocation12], 1
    %12099 = vsyncpa [#allocation15], 1
    %12100 = vsyncpa [#allocation18], 1
    %12101 = vsyncpa [#allocation21], 1
    %12102 = vsyncpa [#allocation24], 1
    %12103 = vsyncpa [#allocation7], 1

</llo_original>
